<compile_context>
chip_gen: v7x
topology: tpu7x:2x2x1
jax: 0.10.0
libtpu: 0.0.40
codegen_flags: <defaults>
</compile_context>

<pallas_src>
import numpy as np
import jax
import jax.numpy as jnp
from jax.experimental import pallas as pl
from jax.experimental.pallas import tpu as pltpu


# ----------------------------- Pallas kernels ------------------------------

def _conv_relu_pool(xp_ref, t_ref, b_ref, H):
    """3x3 conv (3 row-shifted matmuls vs block-Toeplitz weights) + 2x2/2
    max-pool + bias + ReLU, entirely on VMEM-resident data.

    xp_ref: [H+2, W*C_in]        H-padded input rows (bf16); W-pad is folded
                                 into the Toeplitz weights.
    t_ref:  [3, W*C_in, W*C_out] Toeplitz weights, cols ordered [even w|odd w].
    b_ref:  [1, (W//2)*C_out]    bias tiled over pooled columns (f32).
    returns [H//2, (W//2)*C_out] f32 pooled activations.
    """
    half = t_ref.shape[2] // 2
    acc = jnp.dot(xp_ref[0:H, :], t_ref[0], preferred_element_type=jnp.float32)
    for kh in (1, 2):
        acc = acc + jnp.dot(xp_ref[kh:kh + H, :], t_ref[kh],
                            preferred_element_type=jnp.float32)
    # acc: [H, W*C_out], columns = [even w | odd w]  ->  W-direction pool.
    yw = jnp.maximum(acc[:, :half], acc[:, half:])                  # [H, half]
    # H-direction pool: gather even / odd rows once, single max.
    ev = jnp.concatenate([yw[2 * i:2 * i + 1, :] for i in range(H // 2)], 0)
    od = jnp.concatenate([yw[2 * i + 1:2 * i + 2, :] for i in range(H // 2)], 0)
    pooled = jnp.maximum(ev, od)                                    # [H//2, half]
    return jnp.maximum(pooled + b_ref[...], 0.0)                    # bias + ReLU


def _conv_tower_kernel(x_ref, t1_ref, bc1_ref, t2_ref, bc2_ref, o_ref,
                       xp1_ref, xp2_ref):
    """conv1+pool -> conv2+pool for ONE image; only 7x7x64 feats leave VMEM."""
    # Stage conv1 input with H-padding (W-padding folded into Toeplitz).
    zr1 = jnp.zeros((1, 28), jnp.bfloat16)
    xp1_ref[0:1, :] = zr1
    xp1_ref[29:30, :] = zr1
    xp1_ref[1:29, :] = x_ref[0].astype(jnp.bfloat16)

    act1 = _conv_relu_pool(xp1_ref, t1_ref, bc1_ref, H=28)          # [14, 448]

    # Stage conv2 input (H-pad) directly in VMEM — no HBM round-trip.
    zr2 = jnp.zeros((1, 448), jnp.bfloat16)
    xp2_ref[0:1, :] = zr2
    xp2_ref[15:16, :] = zr2
    xp2_ref[1:15, :] = act1.astype(jnp.bfloat16)

    act2 = _conv_relu_pool(xp2_ref, t2_ref, bc2_ref, H=14)          # [7, 448]
    o_ref[0] = act2.astype(o_ref.dtype)


def conv_tower(x, t1, bc1, t2, bc2):
    N = x.shape[0]
    return pl.pallas_call(
        _conv_tower_kernel,
        out_shape=jax.ShapeDtypeStruct((N, 7, 448), jnp.bfloat16),
        grid=(N,),
        in_specs=[
            pl.BlockSpec((1, 28, 28), lambda n: (n, 0, 0)),
            pl.BlockSpec(t1.shape, lambda n: (0, 0, 0)),     # weights resident
            pl.BlockSpec(bc1.shape, lambda n: (0, 0)),
            pl.BlockSpec(t2.shape, lambda n: (0, 0, 0)),
            pl.BlockSpec(bc2.shape, lambda n: (0, 0)),
        ],
        out_specs=pl.BlockSpec((1, 7, 448), lambda n: (n, 0, 0)),
        scratch_shapes=[
            pltpu.VMEM((30, 28), jnp.bfloat16),     # H-padded conv1 input
            pltpu.VMEM((16, 448), jnp.bfloat16),    # H-padded conv2 input
        ],
        compiler_params=pltpu.CompilerParams(dimension_semantics=("parallel",)),
    )(x, t1, bc1, t2, bc2)


def _fc_fused_kernel(x_ref, w1_ref, b1_ref, w2_ref, b2_ref, o_ref):
    h = jnp.dot(x_ref[...], w1_ref[...], preferred_element_type=jnp.float32)
    h = jnp.maximum(h + b1_ref[...], 0.0)
    o = jnp.dot(h, w2_ref[...], preferred_element_type=jnp.float32)
    o_ref[...] = (o + b2_ref[...]).astype(o_ref.dtype)


def fc1_relu_fc2(x, w1, b1, w2, b2):
    N, K1 = x.shape
    n_out = w2.shape[1]
    bm = 128 if N % 128 == 0 else N        # whole batch in one tile at small N
    return pl.pallas_call(
        _fc_fused_kernel,
        out_shape=jax.ShapeDtypeStruct((N, n_out), jnp.float32),
        grid=(N // bm,),
        in_specs=[
            pl.BlockSpec((bm, K1), lambda i: (i, 0)),
            pl.BlockSpec(w1.shape, lambda i: (0, 0)),
            pl.BlockSpec(b1.shape, lambda i: (0, 0)),
            pl.BlockSpec(w2.shape, lambda i: (0, 0)),
            pl.BlockSpec(b2.shape, lambda i: (0, 0)),
        ],
        out_specs=pl.BlockSpec((bm, n_out), lambda i: (i, 0)),
        compiler_params=pltpu.CompilerParams(dimension_semantics=("parallel",)),
    )(x, w1, b1, w2, b2)


# --------------------- one-time parameter preparation ----------------------

def init_params(key):
    """PyTorch-layout parameters, uniform(-1/sqrt(fan_in), 1/sqrt(fan_in))."""
    def uni(k, shape, fan_in):
        bound = 1.0 / np.sqrt(fan_in)
        return jax.random.uniform(k, shape, jnp.float32, -bound, bound)

    ks = jax.random.split(key, 8)
    return {
        "w1": uni(ks[0], (32, 1, 3, 3), 1 * 9),
        "b1": uni(ks[1], (32,), 1 * 9),
        "w2": uni(ks[2], (64, 32, 3, 3), 32 * 9),
        "b2": uni(ks[3], (64,), 32 * 9),
        "w_fc1": uni(ks[4], (128, 64 * 7 * 7), 64 * 7 * 7),
        "b_fc1": uni(ks[5], (128,), 64 * 7 * 7),
        "w_fc2": uni(ks[6], (10, 128), 128),
        "b_fc2": uni(ks[7], (10,), 128),
    }


def _build_toeplitz(wt, W):
    """[C_out,C_in,3,3] conv weight -> [3, W*C_in, W*C_out] block-Toeplitz
    matrices (padding=1 folded in: out-of-range taps dropped).  Output columns
    are ordered [even w | odd w] so the 2x2 W-pool is one lane-halving max."""
    wt = np.asarray(wt, dtype=np.float32)
    C_out, C_in, KH, KW = wt.shape
    half = (W // 2) * C_out
    T = np.zeros((KH, W * C_in, W * C_out), np.float32)
    for kh in range(KH):
        for kw in range(KW):
            blk = wt[:, :, kh, kw].T                      # [C_in, C_out]
            for w in range(W):
                iw = w + kw - 1                           # input column (pad=1)
                if iw < 0 or iw >= W:
                    continue                              # tap hits zero-pad
                r0 = iw * C_in
                c0 = (w // 2) * C_out + (half if (w % 2) else 0)
                T[kh, r0:r0 + C_in, c0:c0 + C_out] = blk
    return T


def prepare_params(params):
    """One-time repack of PyTorch-layout weights into kernel-friendly layouts."""
    t1 = jnp.asarray(_build_toeplitz(params["w1"], 28), dtype=jnp.bfloat16)  # [3,28,896]
    t2 = jnp.asarray(_build_toeplitz(params["w2"], 14), dtype=jnp.bfloat16)  # [3,448,896]
    bc1 = jnp.tile(params["b1"], 14).reshape(1, -1).astype(jnp.float32)      # [1,448]
    bc2 = jnp.tile(params["b2"], 7).reshape(1, -1).astype(jnp.float32)       # [1,448]

    # fc1: transpose to [3136,128] and permute its input axis from PyTorch's
    # NCHW flatten (c*49 + h*7 + w) to our NHWC feature order (h*448 + w*64 + c).
    idx = np.arange(64 * 7 * 7)
    h, rem = idx // (7 * 64), idx % (7 * 64)
    w, c = rem // 64, rem % 64
    pt_index = c * 49 + h * 7 + w
    wf1 = jnp.asarray(np.asarray(params["w_fc1"], np.float32).T[pt_index, :],
                      dtype=jnp.bfloat16)                                    # [3136,128]
    bf1 = params["b_fc1"].reshape(1, -1).astype(jnp.float32)                 # [1,128]
    wf2 = params["w_fc2"].T.astype(jnp.float32)                              # [128,10]
    bf2 = params["b_fc2"].reshape(1, -1).astype(jnp.float32)                 # [1,10]
    return {"t1": t1, "bc1": bc1, "t2": t2, "bc2": bc2,
            "wf1": wf1, "bf1": bf1, "wf2": wf2, "bf2": bf2}


# ------------------------------ forward pass --------------------------------

@jax.jit
def cnn_forward(x_nchw, prep):
    N = x_nchw.shape[0]
    x = x_nchw.reshape(N, 28, 28)          # C_in == 1 -> free reshape, no pad/transpose
    feats = conv_tower(x, prep["t1"], prep["bc1"], prep["t2"], prep["bc2"])  # [N,7,448]
    return fc1_relu_fc2(feats.reshape(N, 7 * 448),
                        prep["wf1"], prep["bf1"], prep["wf2"], prep["bf2"])


# --------------------------- pure-JAX reference -----------------------------

def cnn_reference(x, params):
    dn = ("NCHW", "OIHW", "NCHW")
    y = jax.lax.conv_general_dilated(x, params["w1"], (1, 1), ((1, 1), (1, 1)),
                                     dimension_numbers=dn)
    y = jax.nn.relu(y + params["b1"][None, :, None, None])
    y = jax.lax.reduce_window(y, -jnp.inf, jax.lax.max, (1, 1, 2, 2),
                              (1, 1, 2, 2), "VALID")
    y = jax.lax.conv_general_dilated(y, params["w2"], (1, 1), ((1, 1), (1, 1)),
                                     dimension_numbers=dn)
    y = jax.nn.relu(y + params["b2"][None, :, None, None])
    y = jax.lax.reduce_window(y, -jnp.inf, jax.lax.max, (1, 1, 2, 2),
                              (1, 1, 2, 2), "VALID")
    f = y.reshape(y.shape[0], -1)
    h = jax.nn.relu(f @ params["w_fc1"].T + params["b_fc1"])
    return h @ params["w_fc2"].T + params["b_fc2"]


if __name__ == "__main__":
    key = jax.random.PRNGKey(0)
    k_x, k_p = jax.random.split(key)
    # fc1 = Linear(64*7*7, 128) implies 1x28x28 inputs.
    x = jax.random.normal(k_x, (2, 1, 28, 28), dtype=jnp.float32)
    params = init_params(k_p)
    prep = prepare_params(params)          # one-time weight repack (outside jit)

    out = jax.block_until_ready(cnn_forward(x, prep))
    assert out.shape == (2, 10), out.shape

    ref = jax.block_until_ready(jax.jit(cnn_reference)(x, params))
    np.testing.assert_allclose(np.asarray(out), np.asarray(ref),
                               rtol=5e-2, atol=5e-2)
    print("KERNEL_OK")
</pallas_src>

<mosaic_0001>
module attributes {stable_mosaic.version = 11 : i64} {
  func.func @_conv_tower_kernel(%arg0: i32, %arg1: memref<1x28x28xf32, #tpu.memory_space<vmem>>, %arg2: memref<3x28x896xbf16, #tpu.memory_space<vmem>>, %arg3: memref<1x448xf32, #tpu.memory_space<vmem>>, %arg4: memref<3x448x896xbf16, #tpu.memory_space<vmem>>, %arg5: memref<1x448xf32, #tpu.memory_space<vmem>>, %arg6: memref<1x7x448xbf16, #tpu.memory_space<vmem>>, %arg7: memref<30x28xbf16, #tpu.memory_space<vmem>>, %arg8: memref<16x448xbf16, #tpu.memory_space<vmem>>) attributes {dimension_semantics = [#tpu.dimension_semantics<parallel>], iteration_bounds = array<i64: 2>, scalar_prefetch = 0 : i64, scratch_operands = 2 : i64, tpu.core_type = #tpu.core_type<tc>, window_params = [{transform_indices = @transform_0, window_bounds = array<i64: 1, 28, 28>}, {pipeline_mode = #tpu.pipeline_mode<synchronous>, transform_indices = @transform_1, window_bounds = array<i64: 3, 28, 896>}, {pipeline_mode = #tpu.pipeline_mode<synchronous>, transform_indices = @transform_2, window_bounds = array<i64: 1, 448>}, {pipeline_mode = #tpu.pipeline_mode<synchronous>, transform_indices = @transform_3, window_bounds = array<i64: 3, 448, 896>}, {pipeline_mode = #tpu.pipeline_mode<synchronous>, transform_indices = @transform_4, window_bounds = array<i64: 1, 448>}, {transform_indices = @transform_5, window_bounds = array<i64: 1, 7, 448>}]} {
    %cst = arith.constant 0.000000e+00 : bf16
    %0 = vector.broadcast %cst : bf16 to vector<1x28xbf16>
    %c0 = arith.constant 0 : index
    %c0_0 = arith.constant 0 : index
    %1 = vector.load %arg7[%c0, %c0_0] : memref<30x28xbf16, #tpu.memory_space<vmem>>, vector<1x28xbf16>
    tpu.vector_store %arg7[%c0, %c0_0], %0 {strides = array<i32>} : memref<30x28xbf16, #tpu.memory_space<vmem>>, vector<1x28xbf16>,
    %c29 = arith.constant 29 : index
    %c0_1 = arith.constant 0 : index
    %2 = vector.load %arg7[%c29, %c0_1] : memref<30x28xbf16, #tpu.memory_space<vmem>>, vector<1x28xbf16>
    tpu.vector_store %arg7[%c29, %c0_1], %0 {strides = array<i32>} : memref<30x28xbf16, #tpu.memory_space<vmem>>, vector<1x28xbf16>,
    %c0_2 = arith.constant 0 : index
    %c0_3 = arith.constant 0 : index
    %c0_4 = arith.constant 0 : index
    %3 = vector.load %arg1[%c0_2, %c0_3, %c0_4] : memref<1x28x28xf32, #tpu.memory_space<vmem>>, vector<1x28x28xf32>
    %4 = vector.shape_cast %3 : vector<1x28x28xf32> to vector<28x28xf32>
    %5 = arith.truncf %4 : vector<28x28xf32> to vector<28x28xbf16>
    %c1 = arith.constant 1 : index
    %c0_5 = arith.constant 0 : index
    %6 = vector.load %arg7[%c1, %c0_5] : memref<30x28xbf16, #tpu.memory_space<vmem>>, vector<28x28xbf16>
    tpu.vector_store %arg7[%c1, %c0_5], %5 {strides = array<i32>} : memref<30x28xbf16, #tpu.memory_space<vmem>>, vector<28x28xbf16>,
    %c0_6 = arith.constant 0 : index
    %c0_7 = arith.constant 0 : index
    %7 = vector.load %arg7[%c0_6, %c0_7] : memref<30x28xbf16, #tpu.memory_space<vmem>>, vector<28x28xbf16>
    %c0_8 = arith.constant 0 : index
    %c0_9 = arith.constant 0 : index
    %c0_10 = arith.constant 0 : index
    %8 = vector.load %arg2[%c0_8, %c0_9, %c0_10] : memref<3x28x896xbf16, #tpu.memory_space<vmem>>, vector<1x28x896xbf16>
    %9 = vector.shape_cast %8 : vector<1x28x896xbf16> to vector<28x896xbf16>
    %cst_11 = arith.constant dense<0.000000e+00> : vector<28x896xf32>
    %10 = tpu.matmul %7, %9, %cst_11 {dimension_numbers = #tpu.dot_dimension_numbers<[1], [0], [0], [1], [0, 0, 1, 1], [], []>} : vector<28x28xbf16>, vector<28x896xbf16>, vector<28x896xf32> -> vector<28x896xf32>
    %c1_12 = arith.constant 1 : index
    %c0_13 = arith.constant 0 : index
    %11 = vector.load %arg7[%c1_12, %c0_13] : memref<30x28xbf16, #tpu.memory_space<vmem>>, vector<28x28xbf16>
    %c1_14 = arith.constant 1 : index
    %c0_15 = arith.constant 0 : index
    %c0_16 = arith.constant 0 : index
    %12 = vector.load %arg2[%c1_14, %c0_15, %c0_16] : memref<3x28x896xbf16, #tpu.memory_space<vmem>>, vector<1x28x896xbf16>
    %13 = vector.shape_cast %12 : vector<1x28x896xbf16> to vector<28x896xbf16>
    %cst_17 = arith.constant dense<0.000000e+00> : vector<28x896xf32>
    %14 = tpu.matmul %11, %13, %cst_17 {dimension_numbers = #tpu.dot_dimension_numbers<[1], [0], [0], [1], [0, 0, 1, 1], [], []>} : vector<28x28xbf16>, vector<28x896xbf16>, vector<28x896xf32> -> vector<28x896xf32>
    %15 = arith.addf %10, %14 : vector<28x896xf32>
    %c2 = arith.constant 2 : index
    %c0_18 = arith.constant 0 : index
    %16 = vector.load %arg7[%c2, %c0_18] : memref<30x28xbf16, #tpu.memory_space<vmem>>, vector<28x28xbf16>
    %c2_19 = arith.constant 2 : index
    %c0_20 = arith.constant 0 : index
    %c0_21 = arith.constant 0 : index
    %17 = vector.load %arg2[%c2_19, %c0_20, %c0_21] : memref<3x28x896xbf16, #tpu.memory_space<vmem>>, vector<1x28x896xbf16>
    %18 = vector.shape_cast %17 : vector<1x28x896xbf16> to vector<28x896xbf16>
    %cst_22 = arith.constant dense<0.000000e+00> : vector<28x896xf32>
    %19 = tpu.matmul %16, %18, %cst_22 {dimension_numbers = #tpu.dot_dimension_numbers<[1], [0], [0], [1], [0, 0, 1, 1], [], []>} : vector<28x28xbf16>, vector<28x896xbf16>, vector<28x896xf32> -> vector<28x896xf32>
    %20 = arith.addf %15, %19 : vector<28x896xf32>
    %21 = vector.extract_strided_slice %20 {offsets = [0, 0], sizes = [28, 448], strides = [1, 1]} : vector<28x896xf32> to vector<28x448xf32>
    %22 = vector.extract_strided_slice %20 {offsets = [0, 448], sizes = [28, 448], strides = [1, 1]} : vector<28x896xf32> to vector<28x448xf32>
    %23 = arith.maximumf %21, %22 : vector<28x448xf32>
    %24 = vector.extract_strided_slice %23 {offsets = [0, 0], sizes = [1, 448], strides = [1, 1]} : vector<28x448xf32> to vector<1x448xf32>
    %25 = vector.extract_strided_slice %23 {offsets = [2, 0], sizes = [1, 448], strides = [1, 1]} : vector<28x448xf32> to vector<1x448xf32>
    %26 = vector.extract_strided_slice %23 {offsets = [4, 0], sizes = [1, 448], strides = [1, 1]} : vector<28x448xf32> to vector<1x448xf32>
    %27 = vector.extract_strided_slice %23 {offsets = [6, 0], sizes = [1, 448], strides = [1, 1]} : vector<28x448xf32> to vector<1x448xf32>
    %28 = vector.extract_strided_slice %23 {offsets = [8, 0], sizes = [1, 448], strides = [1, 1]} : vector<28x448xf32> to vector<1x448xf32>
    %29 = vector.extract_strided_slice %23 {offsets = [10, 0], sizes = [1, 448], strides = [1, 1]} : vector<28x448xf32> to vector<1x448xf32>
    %30 = vector.extract_strided_slice %23 {offsets = [12, 0], sizes = [1, 448], strides = [1, 1]} : vector<28x448xf32> to vector<1x448xf32>
    %31 = vector.extract_strided_slice %23 {offsets = [14, 0], sizes = [1, 448], strides = [1, 1]} : vector<28x448xf32> to vector<1x448xf32>
    %32 = vector.extract_strided_slice %23 {offsets = [16, 0], sizes = [1, 448], strides = [1, 1]} : vector<28x448xf32> to vector<1x448xf32>
    %33 = vector.extract_strided_slice %23 {offsets = [18, 0], sizes = [1, 448], strides = [1, 1]} : vector<28x448xf32> to vector<1x448xf32>
    %34 = vector.extract_strided_slice %23 {offsets = [20, 0], sizes = [1, 448], strides = [1, 1]} : vector<28x448xf32> to vector<1x448xf32>
    %35 = vector.extract_strided_slice %23 {offsets = [22, 0], sizes = [1, 448], strides = [1, 1]} : vector<28x448xf32> to vector<1x448xf32>
    %36 = vector.extract_strided_slice %23 {offsets = [24, 0], sizes = [1, 448], strides = [1, 1]} : vector<28x448xf32> to vector<1x448xf32>
    %37 = vector.extract_strided_slice %23 {offsets = [26, 0], sizes = [1, 448], strides = [1, 1]} : vector<28x448xf32> to vector<1x448xf32>
    %38 = tpu.concatenate %24, %25, %26, %27, %28, %29, %30, %31, %32, %33, %34, %35, %36, %37 in 0 : vector<1x448xf32>, vector<1x448xf32>, vector<1x448xf32>, vector<1x448xf32>, vector<1x448xf32>, vector<1x448xf32>, vector<1x448xf32>, vector<1x448xf32>, vector<1x448xf32>, vector<1x448xf32>, vector<1x448xf32>, vector<1x448xf32>, vector<1x448xf32>, vector<1x448xf32> -> vector<14x448xf32>
    %39 = vector.extract_strided_slice %23 {offsets = [1, 0], sizes = [1, 448], strides = [1, 1]} : vector<28x448xf32> to vector<1x448xf32>
    %40 = vector.extract_strided_slice %23 {offsets = [3, 0], sizes = [1, 448], strides = [1, 1]} : vector<28x448xf32> to vector<1x448xf32>
    %41 = vector.extract_strided_slice %23 {offsets = [5, 0], sizes = [1, 448], strides = [1, 1]} : vector<28x448xf32> to vector<1x448xf32>
    %42 = vector.extract_strided_slice %23 {offsets = [7, 0], sizes = [1, 448], strides = [1, 1]} : vector<28x448xf32> to vector<1x448xf32>
    %43 = vector.extract_strided_slice %23 {offsets = [9, 0], sizes = [1, 448], strides = [1, 1]} : vector<28x448xf32> to vector<1x448xf32>
    %44 = vector.extract_strided_slice %23 {offsets = [11, 0], sizes = [1, 448], strides = [1, 1]} : vector<28x448xf32> to vector<1x448xf32>
    %45 = vector.extract_strided_slice %23 {offsets = [13, 0], sizes = [1, 448], strides = [1, 1]} : vector<28x448xf32> to vector<1x448xf32>
    %46 = vector.extract_strided_slice %23 {offsets = [15, 0], sizes = [1, 448], strides = [1, 1]} : vector<28x448xf32> to vector<1x448xf32>
    %47 = vector.extract_strided_slice %23 {offsets = [17, 0], sizes = [1, 448], strides = [1, 1]} : vector<28x448xf32> to vector<1x448xf32>
    %48 = vector.extract_strided_slice %23 {offsets = [19, 0], sizes = [1, 448], strides = [1, 1]} : vector<28x448xf32> to vector<1x448xf32>
    %49 = vector.extract_strided_slice %23 {offsets = [21, 0], sizes = [1, 448], strides = [1, 1]} : vector<28x448xf32> to vector<1x448xf32>
    %50 = vector.extract_strided_slice %23 {offsets = [23, 0], sizes = [1, 448], strides = [1, 1]} : vector<28x448xf32> to vector<1x448xf32>
    %51 = vector.extract_strided_slice %23 {offsets = [25, 0], sizes = [1, 448], strides = [1, 1]} : vector<28x448xf32> to vector<1x448xf32>
    %52 = vector.extract_strided_slice %23 {offsets = [27, 0], sizes = [1, 448], strides = [1, 1]} : vector<28x448xf32> to vector<1x448xf32>
    %53 = tpu.concatenate %39, %40, %41, %42, %43, %44, %45, %46, %47, %48, %49, %50, %51, %52 in 0 : vector<1x448xf32>, vector<1x448xf32>, vector<1x448xf32>, vector<1x448xf32>, vector<1x448xf32>, vector<1x448xf32>, vector<1x448xf32>, vector<1x448xf32>, vector<1x448xf32>, vector<1x448xf32>, vector<1x448xf32>, vector<1x448xf32>, vector<1x448xf32>, vector<1x448xf32> -> vector<14x448xf32>
    %54 = arith.maximumf %38, %53 : vector<14x448xf32>
    %c0_23 = arith.constant 0 : index
    %c0_24 = arith.constant 0 : index
    %55 = vector.load %arg3[%c0_23, %c0_24] : memref<1x448xf32, #tpu.memory_space<vmem>>, vector<1x448xf32>
    %56 = vector.broadcast %55 : vector<1x448xf32> to vector<14x448xf32>
    %57 = arith.addf %54, %56 : vector<14x448xf32>
    %cst_25 = arith.constant 0.000000e+00 : f32
    %58 = vector.broadcast %cst_25 : f32 to vector<14x448xf32>
    %59 = arith.maximumf %57, %58 : vector<14x448xf32>
    %cst_26 = arith.constant 0.000000e+00 : bf16
    %60 = vector.broadcast %cst_26 : bf16 to vector<1x448xbf16>
    %c0_27 = arith.constant 0 : index
    %c0_28 = arith.constant 0 : index
    %61 = vector.load %arg8[%c0_27, %c0_28] : memref<16x448xbf16, #tpu.memory_space<vmem>>, vector<1x448xbf16>
    tpu.vector_store %arg8[%c0_27, %c0_28], %60 {strides = array<i32>} : memref<16x448xbf16, #tpu.memory_space<vmem>>, vector<1x448xbf16>,
    %c15 = arith.constant 15 : index
    %c0_29 = arith.constant 0 : index
    %62 = vector.load %arg8[%c15, %c0_29] : memref<16x448xbf16, #tpu.memory_space<vmem>>, vector<1x448xbf16>
    tpu.vector_store %arg8[%c15, %c0_29], %60 {strides = array<i32>} : memref<16x448xbf16, #tpu.memory_space<vmem>>, vector<1x448xbf16>,
    %63 = arith.truncf %59 : vector<14x448xf32> to vector<14x448xbf16>
    %c1_30 = arith.constant 1 : index
    %c0_31 = arith.constant 0 : index
    %64 = vector.load %arg8[%c1_30, %c0_31] : memref<16x448xbf16, #tpu.memory_space<vmem>>, vector<14x448xbf16>
    tpu.vector_store %arg8[%c1_30, %c0_31], %63 {strides = array<i32>} : memref<16x448xbf16, #tpu.memory_space<vmem>>, vector<14x448xbf16>,
    %c0_32 = arith.constant 0 : index
    %c0_33 = arith.constant 0 : index
    %65 = vector.load %arg8[%c0_32, %c0_33] : memref<16x448xbf16, #tpu.memory_space<vmem>>, vector<14x448xbf16>
    %c0_34 = arith.constant 0 : index
    %c0_35 = arith.constant 0 : index
    %c0_36 = arith.constant 0 : index
    %66 = vector.load %arg4[%c0_34, %c0_35, %c0_36] : memref<3x448x896xbf16, #tpu.memory_space<vmem>>, vector<1x448x896xbf16>
    %67 = vector.shape_cast %66 : vector<1x448x896xbf16> to vector<448x896xbf16>
    %cst_37 = arith.constant dense<0.000000e+00> : vector<14x896xf32>
    %68 = tpu.matmul %65, %67, %cst_37 {dimension_numbers = #tpu.dot_dimension_numbers<[1], [0], [0], [1], [0, 0, 1, 1], [], []>} : vector<14x448xbf16>, vector<448x896xbf16>, vector<14x896xf32> -> vector<14x896xf32>
    %c1_38 = arith.constant 1 : index
    %c0_39 = arith.constant 0 : index
    %69 = vector.load %arg8[%c1_38, %c0_39] : memref<16x448xbf16, #tpu.memory_space<vmem>>, vector<14x448xbf16>
    %c1_40 = arith.constant 1 : index
    %c0_41 = arith.constant 0 : index
    %c0_42 = arith.constant 0 : index
    %70 = vector.load %arg4[%c1_40, %c0_41, %c0_42] : memref<3x448x896xbf16, #tpu.memory_space<vmem>>, vector<1x448x896xbf16>
    %71 = vector.shape_cast %70 : vector<1x448x896xbf16> to vector<448x896xbf16>
    %cst_43 = arith.constant dense<0.000000e+00> : vector<14x896xf32>
    %72 = tpu.matmul %69, %71, %cst_43 {dimension_numbers = #tpu.dot_dimension_numbers<[1], [0], [0], [1], [0, 0, 1, 1], [], []>} : vector<14x448xbf16>, vector<448x896xbf16>, vector<14x896xf32> -> vector<14x896xf32>
    %73 = arith.addf %68, %72 : vector<14x896xf32>
    %c2_44 = arith.constant 2 : index
    %c0_45 = arith.constant 0 : index
    %74 = vector.load %arg8[%c2_44, %c0_45] : memref<16x448xbf16, #tpu.memory_space<vmem>>, vector<14x448xbf16>
    %c2_46 = arith.constant 2 : index
    %c0_47 = arith.constant 0 : index
    %c0_48 = arith.constant 0 : index
    %75 = vector.load %arg4[%c2_46, %c0_47, %c0_48] : memref<3x448x896xbf16, #tpu.memory_space<vmem>>, vector<1x448x896xbf16>
    %76 = vector.shape_cast %75 : vector<1x448x896xbf16> to vector<448x896xbf16>
    %cst_49 = arith.constant dense<0.000000e+00> : vector<14x896xf32>
    %77 = tpu.matmul %74, %76, %cst_49 {dimension_numbers = #tpu.dot_dimension_numbers<[1], [0], [0], [1], [0, 0, 1, 1], [], []>} : vector<14x448xbf16>, vector<448x896xbf16>, vector<14x896xf32> -> vector<14x896xf32>
    %78 = arith.addf %73, %77 : vector<14x896xf32>
    %79 = vector.extract_strided_slice %78 {offsets = [0, 0], sizes = [14, 448], strides = [1, 1]} : vector<14x896xf32> to vector<14x448xf32>
    %80 = vector.extract_strided_slice %78 {offsets = [0, 448], sizes = [14, 448], strides = [1, 1]} : vector<14x896xf32> to vector<14x448xf32>
    %81 = arith.maximumf %79, %80 : vector<14x448xf32>
    %82 = vector.extract_strided_slice %81 {offsets = [0, 0], sizes = [1, 448], strides = [1, 1]} : vector<14x448xf32> to vector<1x448xf32>
    %83 = vector.extract_strided_slice %81 {offsets = [2, 0], sizes = [1, 448], strides = [1, 1]} : vector<14x448xf32> to vector<1x448xf32>
    %84 = vector.extract_strided_slice %81 {offsets = [4, 0], sizes = [1, 448], strides = [1, 1]} : vector<14x448xf32> to vector<1x448xf32>
    %85 = vector.extract_strided_slice %81 {offsets = [6, 0], sizes = [1, 448], strides = [1, 1]} : vector<14x448xf32> to vector<1x448xf32>
    %86 = vector.extract_strided_slice %81 {offsets = [8, 0], sizes = [1, 448], strides = [1, 1]} : vector<14x448xf32> to vector<1x448xf32>
    %87 = vector.extract_strided_slice %81 {offsets = [10, 0], sizes = [1, 448], strides = [1, 1]} : vector<14x448xf32> to vector<1x448xf32>
    %88 = vector.extract_strided_slice %81 {offsets = [12, 0], sizes = [1, 448], strides = [1, 1]} : vector<14x448xf32> to vector<1x448xf32>
    %89 = tpu.concatenate %82, %83, %84, %85, %86, %87, %88 in 0 : vector<1x448xf32>, vector<1x448xf32>, vector<1x448xf32>, vector<1x448xf32>, vector<1x448xf32>, vector<1x448xf32>, vector<1x448xf32> -> vector<7x448xf32>
    %90 = vector.extract_strided_slice %81 {offsets = [1, 0], sizes = [1, 448], strides = [1, 1]} : vector<14x448xf32> to vector<1x448xf32>
    %91 = vector.extract_strided_slice %81 {offsets = [3, 0], sizes = [1, 448], strides = [1, 1]} : vector<14x448xf32> to vector<1x448xf32>
    %92 = vector.extract_strided_slice %81 {offsets = [5, 0], sizes = [1, 448], strides = [1, 1]} : vector<14x448xf32> to vector<1x448xf32>
    %93 = vector.extract_strided_slice %81 {offsets = [7, 0], sizes = [1, 448], strides = [1, 1]} : vector<14x448xf32> to vector<1x448xf32>
    %94 = vector.extract_strided_slice %81 {offsets = [9, 0], sizes = [1, 448], strides = [1, 1]} : vector<14x448xf32> to vector<1x448xf32>
    %95 = vector.extract_strided_slice %81 {offsets = [11, 0], sizes = [1, 448], strides = [1, 1]} : vector<14x448xf32> to vector<1x448xf32>
    %96 = vector.extract_strided_slice %81 {offsets = [13, 0], sizes = [1, 448], strides = [1, 1]} : vector<14x448xf32> to vector<1x448xf32>
    %97 = tpu.concatenate %90, %91, %92, %93, %94, %95, %96 in 0 : vector<1x448xf32>, vector<1x448xf32>, vector<1x448xf32>, vector<1x448xf32>, vector<1x448xf32>, vector<1x448xf32>, vector<1x448xf32> -> vector<7x448xf32>
    %98 = arith.maximumf %89, %97 : vector<7x448xf32>
    %c0_50 = arith.constant 0 : index
    %c0_51 = arith.constant 0 : index
    %99 = vector.load %arg5[%c0_50, %c0_51] : memref<1x448xf32, #tpu.memory_space<vmem>>, vector<1x448xf32>
    %100 = vector.broadcast %99 : vector<1x448xf32> to vector<7x448xf32>
    %101 = arith.addf %98, %100 : vector<7x448xf32>
    %cst_52 = arith.constant 0.000000e+00 : f32
    %102 = vector.broadcast %cst_52 : f32 to vector<7x448xf32>
    %103 = arith.maximumf %101, %102 : vector<7x448xf32>
    %104 = arith.truncf %103 : vector<7x448xf32> to vector<7x448xbf16>
    %c0_53 = arith.constant 0 : index
    %c0_54 = arith.constant 0 : index
    %c0_55 = arith.constant 0 : index
    %105 = vector.load %arg6[%c0_53, %c0_54, %c0_55] : memref<1x7x448xbf16, #tpu.memory_space<vmem>>, vector<1x7x448xbf16>
    %106 = vector.shape_cast %105 : vector<1x7x448xbf16> to vector<7x448xbf16>
    %107 = vector.shape_cast %104 : vector<7x448xbf16> to vector<1x7x448xbf16>
    tpu.vector_store %arg6[%c0_53, %c0_54, %c0_55], %107 {strides = array<i32>} : memref<1x7x448xbf16, #tpu.memory_space<vmem>>, vector<1x7x448xbf16>,
    return
  }
  func.func @transform_0(%arg0: i32) -> (i32, i32, i32) {
    %c0_i32 = arith.constant 0 : i32
    %c0_i32_0 = arith.constant 0 : i32
    %c0_i32_1 = arith.constant 0 : i32
    return %arg0, %c0_i32, %c0_i32_0 : i32, i32, i32
  }
  func.func @transform_1(%arg0: i32) -> (i32, i32, i32) {
    %c0_i32 = arith.constant 0 : i32
    %c0_i32_0 = arith.constant 0 : i32
    %c0_i32_1 = arith.constant 0 : i32
    %c0_i32_2 = arith.constant 0 : i32
    return %c0_i32, %c0_i32_0, %c0_i32_1 : i32, i32, i32
  }
  func.func @transform_2(%arg0: i32) -> (i32, i32) {
    %c0_i32 = arith.constant 0 : i32
    %c0_i32_0 = arith.constant 0 : i32
    %c0_i32_1 = arith.constant 0 : i32
    return %c0_i32, %c0_i32_0 : i32, i32
  }
  func.func @transform_3(%arg0: i32) -> (i32, i32, i32) {
    %c0_i32 = arith.constant 0 : i32
    %c0_i32_0 = arith.constant 0 : i32
    %c0_i32_1 = arith.constant 0 : i32
    %c0_i32_2 = arith.constant 0 : i32
    return %c0_i32, %c0_i32_0, %c0_i32_1 : i32, i32, i32
  }
  func.func @transform_4(%arg0: i32) -> (i32, i32) {
    %c0_i32 = arith.constant 0 : i32
    %c0_i32_0 = arith.constant 0 : i32
    %c0_i32_1 = arith.constant 0 : i32
    return %c0_i32, %c0_i32_0 : i32, i32
  }
  func.func @transform_5(%arg0: i32) -> (i32, i32, i32) {
    %c0_i32 = arith.constant 0 : i32
    %c0_i32_0 = arith.constant 0 : i32
    %c0_i32_1 = arith.constant 0 : i32
    return %arg0, %c0_i32, %c0_i32_0 : i32, i32, i32
  }
}

module attributes {stable_mosaic.version = 11 : i64} {
  func.func @_fc_fused_kernel(%arg0: i32, %arg1: memref<2x3136xbf16, #tpu.memory_space<vmem>>, %arg2: memref<3136x128xbf16, #tpu.memory_space<vmem>>, %arg3: memref<1x128xf32, #tpu.memory_space<vmem>>, %arg4: memref<128x10xf32, #tpu.memory_space<vmem>>, %arg5: memref<1x10xf32, #tpu.memory_space<vmem>>, %arg6: memref<2x10xf32, #tpu.memory_space<vmem>>) attributes {dimension_semantics = [#tpu.dimension_semantics<parallel>], iteration_bounds = array<i64: 1>, scalar_prefetch = 0 : i64, scratch_operands = 0 : i64, tpu.core_type = #tpu.core_type<tc>, window_params = [{transform_indices = @transform_0, window_bounds = array<i64: 2, 3136>}, {pipeline_mode = #tpu.pipeline_mode<synchronous>, transform_indices = @transform_1, window_bounds = array<i64: 3136, 128>}, {pipeline_mode = #tpu.pipeline_mode<synchronous>, transform_indices = @transform_2, window_bounds = array<i64: 1, 128>}, {pipeline_mode = #tpu.pipeline_mode<synchronous>, transform_indices = @transform_3, window_bounds = array<i64: 128, 10>}, {pipeline_mode = #tpu.pipeline_mode<synchronous>, transform_indices = @transform_4, window_bounds = array<i64: 1, 10>}, {transform_indices = @transform_5, window_bounds = array<i64: 2, 10>}]} {
    %c0 = arith.constant 0 : index
    %c0_0 = arith.constant 0 : index
    %0 = vector.load %arg1[%c0, %c0_0] : memref<2x3136xbf16, #tpu.memory_space<vmem>>, vector<2x3136xbf16>
    %c0_1 = arith.constant 0 : index
    %c0_2 = arith.constant 0 : index
    %1 = vector.load %arg2[%c0_1, %c0_2] : memref<3136x128xbf16, #tpu.memory_space<vmem>>, vector<3136x128xbf16>
    %cst = arith.constant dense<0.000000e+00> : vector<2x128xf32>
    %2 = tpu.matmul %0, %1, %cst {dimension_numbers = #tpu.dot_dimension_numbers<[1], [0], [0], [1], [0, 0, 1, 1], [], []>} : vector<2x3136xbf16>, vector<3136x128xbf16>, vector<2x128xf32> -> vector<2x128xf32>
    %c0_3 = arith.constant 0 : index
    %c0_4 = arith.constant 0 : index
    %3 = vector.load %arg3[%c0_3, %c0_4] : memref<1x128xf32, #tpu.memory_space<vmem>>, vector<1x128xf32>
    %4 = vector.broadcast %3 : vector<1x128xf32> to vector<2x128xf32>
    %5 = arith.addf %2, %4 : vector<2x128xf32>
    %cst_5 = arith.constant 0.000000e+00 : f32
    %6 = vector.broadcast %cst_5 : f32 to vector<2x128xf32>
    %7 = arith.maximumf %5, %6 : vector<2x128xf32>
    %c0_6 = arith.constant 0 : index
    %c0_7 = arith.constant 0 : index
    %8 = vector.load %arg4[%c0_6, %c0_7] : memref<128x10xf32, #tpu.memory_space<vmem>>, vector<128x10xf32>
    %cst_8 = arith.constant dense<0.000000e+00> : vector<2x10xf32>
    %9 = tpu.matmul %7, %8, %cst_8 {dimension_numbers = #tpu.dot_dimension_numbers<[1], [0], [0], [1], [0, 0, 1, 1], [], []>} : vector<2x128xf32>, vector<128x10xf32>, vector<2x10xf32> -> vector<2x10xf32>
    %c0_9 = arith.constant 0 : index
    %c0_10 = arith.constant 0 : index
    %10 = vector.load %arg5[%c0_9, %c0_10] : memref<1x10xf32, #tpu.memory_space<vmem>>, vector<1x10xf32>
    %11 = vector.broadcast %10 : vector<1x10xf32> to vector<2x10xf32>
    %12 = arith.addf %9, %11 : vector<2x10xf32>
    %c0_11 = arith.constant 0 : index
    %c0_12 = arith.constant 0 : index
    %13 = vector.load %arg6[%c0_11, %c0_12] : memref<2x10xf32, #tpu.memory_space<vmem>>, vector<2x10xf32>
    tpu.vector_store %arg6[%c0_11, %c0_12], %12 {strides = array<i32>} : memref<2x10xf32, #tpu.memory_space<vmem>>, vector<2x10xf32>,
    return
  }
  func.func @transform_0(%arg0: i32) -> (i32, i32) {
    %c0_i32 = arith.constant 0 : i32
    %c0_i32_0 = arith.constant 0 : i32
    return %arg0, %c0_i32 : i32, i32
  }
  func.func @transform_1(%arg0: i32) -> (i32, i32) {
    %c0_i32 = arith.constant 0 : i32
    %c0_i32_0 = arith.constant 0 : i32
    %c0_i32_1 = arith.constant 0 : i32
    return %c0_i32, %c0_i32_0 : i32, i32
  }
  func.func @transform_2(%arg0: i32) -> (i32, i32) {
    %c0_i32 = arith.constant 0 : i32
    %c0_i32_0 = arith.constant 0 : i32
    %c0_i32_1 = arith.constant 0 : i32
    return %c0_i32, %c0_i32_0 : i32, i32
  }
  func.func @transform_3(%arg0: i32) -> (i32, i32) {
    %c0_i32 = arith.constant 0 : i32
    %c0_i32_0 = arith.constant 0 : i32
    %c0_i32_1 = arith.constant 0 : i32
    return %c0_i32, %c0_i32_0 : i32, i32
  }
  func.func @transform_4(%arg0: i32) -> (i32, i32) {
    %c0_i32 = arith.constant 0 : i32
    %c0_i32_0 = arith.constant 0 : i32
    %c0_i32_1 = arith.constant 0 : i32
    return %c0_i32, %c0_i32_0 : i32, i32
  }
  func.func @transform_5(%arg0: i32) -> (i32, i32) {
    %c0_i32 = arith.constant 0 : i32
    %c0_i32_0 = arith.constant 0 : i32
    return %arg0, %c0_i32 : i32, i32
  }
}

</mosaic_0001>

<llo_original>
// kernel: cnn_forward.3
$region0: #{cnn_forward.3}
  #allocation0 [shape = 'u32[]', space=smem, size = 0x4, offset = 0x4, fixed_abs, tag = 'smem constant byte address 0x4 - core index']
  #allocation1 [shape = 'u32[144,128]{1,0:T(1,128)}', space=vmem, size = 0x12000, scoped, tag = 'internal scratch']
  %s0 = inlined_call_operand.vmem [shape: bf16[2,3136], index: 0, kind: input, shape index: {}]
  %s1 = inlined_call_operand.vmem [shape: bf16[3136,128], index: 1, kind: input, shape index: {}]
  %s2 = inlined_call_operand.vmem [shape: f32[1,128], index: 2, kind: input, shape index: {}]
  %s3 = inlined_call_operand.vmem [shape: f32[128,10], index: 3, kind: input, shape index: {}]
  %s4 = inlined_call_operand.vmem [shape: f32[1,10], index: 4, kind: input, shape index: {}]
  %s5 = inlined_call_operand.hbm [shape: f32[2,10], index: 5, kind: output, shape index: {}]
  %s6 = sld [smem:[#allocation0]]
  $region30: #{cnn_forward.3} parent=0
    _
  %s8 = ssub.s32 1, %s6
  %s9 = scalar_select 0, %s8, %s6
  $region1: #{cnn_forward.3} parent=0
    #allocation2 [shape = 'u8[1024]{0}', space=vmem, size = 0x400, scoped, tag = 'output window, operand 0, single buffered']
    #allocation3 [shape = 's32[1]{0}', space=sflag, size = 0x4, scoped, tag = 'scoped memory for cnn_forward.3']
    %10 = vsyncpa [#allocation3], 0
    // Predicated region
    $region2: #{cnn_forward.3} parent=1 // pred_check
      _
    $region3: #{cnn_forward.3} parent=1 // pred_check_branch
      %12 = sbr.rel (0) target = $region5
    $region4: #{cnn_forward.3} parent=1 // pred_region
      _
    $region5: #{cnn_forward.3} parent=1 // pred_fallthru
      _
    // Predicated region
    $region6: #{cnn_forward.3} parent=1 // pred_check
      _
    $region7: #{cnn_forward.3} parent=1 // pred_check_branch
      %14 = sbr.rel (0) target = $region9
    $region8: #{cnn_forward.3} parent=1 // pred_region
      _
    $region9: #{cnn_forward.3} parent=1 // pred_fallthru
      _
    // Predicated region
    $region10: #{cnn_forward.3} parent=1 // pred_check
      _
    $region11: #{cnn_forward.3} parent=1 // pred_check_branch
      %16 = sbr.rel (0) target = $region13
    $region12: #{cnn_forward.3} parent=1 // pred_region
      _
    $region13: #{cnn_forward.3} parent=1 // pred_fallthru
      _
    // Predicated region
    $region14: #{cnn_forward.3} parent=1 // pred_check
      _
    $region15: #{cnn_forward.3} parent=1 // pred_check_branch
      %18 = sbr.rel (0) target = $region17
    $region16: #{cnn_forward.3} parent=1 // pred_region
      _
    $region17: #{cnn_forward.3} parent=1 // pred_fallthru
      _
    // Predicated region
    $region18: #{cnn_forward.3} parent=1 // pred_check
      _
    $region19: #{cnn_forward.3} parent=1 // pred_check_branch
      %20 = sbr.rel (0) target = $region21
    $region20: #{cnn_forward.3} parent=1 // pred_region
      _
    $region21: #{cnn_forward.3} parent=1 // pred_fallthru
      _
    %v22 = vld [vmem:[%s0] sm:$0xff]
    %v23 = vld [vmem:[%s0 + $0x8] sm:$0xff]
    %v24 = vld [vmem:[%s0 + $0x10] sm:$0xff]
    %v25 = vld [vmem:[%s0 + $0x18] sm:$0x1]
    %v26 = vld [vmem:[%s1] sm:$0xf]
    %v27 = vld [vmem:[%s1 + $0x4] sm:$0xf]
    %v28 = vld [vmem:[%s1 + $0x8] sm:$0xf]
    %v29 = vld [vmem:[%s1 + $0xc] sm:$0xf]
    %v30 = vld [vmem:[%s1 + $0x10] sm:$0xf]
    %v31 = vld [vmem:[%s1 + $0x14] sm:$0xf]
    %v32 = vld [vmem:[%s1 + $0x18] sm:$0xf]
    %v33 = vld [vmem:[%s1 + $0x1c] sm:$0xf]
    %v34 = vld [vmem:[%s1 + $0x20] sm:$0xf]
    %v35 = vld [vmem:[%s1 + $0x24] sm:$0xf]
    %v36 = vld [vmem:[%s1 + $0x28] sm:$0xf]
    %v37 = vld [vmem:[%s1 + $0x2c] sm:$0xf]
    %v38 = vld [vmem:[%s1 + $0x30] sm:$0xf]
    %v39 = vld [vmem:[%s1 + $0x34] sm:$0xf]
    %v40 = vld [vmem:[%s1 + $0x38] sm:$0xf]
    %v41 = vld [vmem:[%s1 + $0x3c] sm:$0xf]
    %v42 = vld [vmem:[%s1 + $0x40] sm:$0xf]
    %v43 = vld [vmem:[%s1 + $0x44] sm:$0xf]
    %v44 = vld [vmem:[%s1 + $0x48] sm:$0xf]
    %v45 = vld [vmem:[%s1 + $0x4c] sm:$0xf]
    %v46 = vld [vmem:[%s1 + $0x50] sm:$0xf]
    %v47 = vld [vmem:[%s1 + $0x54] sm:$0xf]
    %v48 = vld [vmem:[%s1 + $0x58] sm:$0xf]
    %v49 = vld [vmem:[%s1 + $0x5c] sm:$0xf]
    %v50 = vld [vmem:[%s1 + $0x60] sm:$0xf]
    %v51 = vld [vmem:[%s1 + $0x64] sm:$0xf]
    %v52 = vld [vmem:[%s1 + $0x68] sm:$0xf]
    %v53 = vld [vmem:[%s1 + $0x6c] sm:$0xf]
    %v54 = vld [vmem:[%s1 + $0x70] sm:$0xf]
    %v55 = vld [vmem:[%s1 + $0x74] sm:$0xf]
    %v56 = vld [vmem:[%s1 + $0x78] sm:$0xf]
    %v57 = vld [vmem:[%s1 + $0x7c] sm:$0xf]
    %v58 = vld [vmem:[%s1 + $0x80] sm:$0xf]
    %v59 = vld [vmem:[%s1 + $0x84] sm:$0xf]
    %v60 = vld [vmem:[%s1 + $0x88] sm:$0xf]
    %v61 = vld [vmem:[%s1 + $0x8c] sm:$0xf]
    %v62 = vld [vmem:[%s1 + $0x90] sm:$0xf]
    %v63 = vld [vmem:[%s1 + $0x94] sm:$0xf]
    %v64 = vld [vmem:[%s1 + $0x98] sm:$0xf]
    %v65 = vld [vmem:[%s1 + $0x9c] sm:$0xf]
    %v66 = vld [vmem:[%s1 + $0xa0] sm:$0xf]
    %v67 = vld [vmem:[%s1 + $0xa4] sm:$0xf]
    %v68 = vld [vmem:[%s1 + $0xa8] sm:$0xf]
    %v69 = vld [vmem:[%s1 + $0xac] sm:$0xf]
    %v70 = vld [vmem:[%s1 + $0xb0] sm:$0xf]
    %v71 = vld [vmem:[%s1 + $0xb4] sm:$0xf]
    %v72 = vld [vmem:[%s1 + $0xb8] sm:$0xf]
    %v73 = vld [vmem:[%s1 + $0xbc] sm:$0xf]
    %v74 = vld [vmem:[%s1 + $0xc0] sm:$0xf]
    %v75 = vld [vmem:[%s1 + $0xc4] sm:$0xf]
    %v76 = vld [vmem:[%s1 + $0xc8] sm:$0xf]
    %v77 = vld [vmem:[%s1 + $0xcc] sm:$0xf]
    %v78 = vld [vmem:[%s1 + $0xd0] sm:$0xf]
    %v79 = vld [vmem:[%s1 + $0xd4] sm:$0xf]
    %v80 = vld [vmem:[%s1 + $0xd8] sm:$0xf]
    %v81 = vld [vmem:[%s1 + $0xdc] sm:$0xf]
    %v82 = vld [vmem:[%s1 + $0xe0] sm:$0xf]
    %v83 = vld [vmem:[%s1 + $0xe4] sm:$0xf]
    %v84 = vld [vmem:[%s1 + $0xe8] sm:$0xf]
    %v85 = vld [vmem:[%s1 + $0xec] sm:$0xf]
    %v86 = vld [vmem:[%s1 + $0xf0] sm:$0xf]
    %v87 = vld [vmem:[%s1 + $0xf4] sm:$0xf]
    %v88 = vld [vmem:[%s1 + $0xf8] sm:$0xf]
    %v89 = vld [vmem:[%s1 + $0xfc] sm:$0xf]
    %v90 = vld [vmem:[%s1 + $0x100] sm:$0xf]
    %v91 = vld [vmem:[%s1 + $0x104] sm:$0xf]
    %v92 = vld [vmem:[%s1 + $0x108] sm:$0xf]
    %v93 = vld [vmem:[%s1 + $0x10c] sm:$0xf]
    %v94 = vld [vmem:[%s1 + $0x110] sm:$0xf]
    %v95 = vld [vmem:[%s1 + $0x114] sm:$0xf]
    %v96 = vld [vmem:[%s1 + $0x118] sm:$0xf]
    %v97 = vld [vmem:[%s1 + $0x11c] sm:$0xf]
    %v98 = vld [vmem:[%s1 + $0x120] sm:$0xf]
    %v99 = vld [vmem:[%s1 + $0x124] sm:$0xf]
    %v100 = vld [vmem:[%s1 + $0x128] sm:$0xf]
    %v101 = vld [vmem:[%s1 + $0x12c] sm:$0xf]
    %v102 = vld [vmem:[%s1 + $0x130] sm:$0xf]
    %v103 = vld [vmem:[%s1 + $0x134] sm:$0xf]
    %v104 = vld [vmem:[%s1 + $0x138] sm:$0xf]
    %v105 = vld [vmem:[%s1 + $0x13c] sm:$0xf]
    %v106 = vld [vmem:[%s1 + $0x140] sm:$0xf]
    %v107 = vld [vmem:[%s1 + $0x144] sm:$0xf]
    %v108 = vld [vmem:[%s1 + $0x148] sm:$0xf]
    %v109 = vld [vmem:[%s1 + $0x14c] sm:$0xf]
    %v110 = vld [vmem:[%s1 + $0x150] sm:$0xf]
    %v111 = vld [vmem:[%s1 + $0x154] sm:$0xf]
    %v112 = vld [vmem:[%s1 + $0x158] sm:$0xf]
    %v113 = vld [vmem:[%s1 + $0x15c] sm:$0xf]
    %v114 = vld [vmem:[%s1 + $0x160] sm:$0xf]
    %v115 = vld [vmem:[%s1 + $0x164] sm:$0xf]
    %v116 = vld [vmem:[%s1 + $0x168] sm:$0xf]
    %v117 = vld [vmem:[%s1 + $0x16c] sm:$0xf]
    %v118 = vld [vmem:[%s1 + $0x170] sm:$0xf]
    %v119 = vld [vmem:[%s1 + $0x174] sm:$0xf]
    %v120 = vld [vmem:[%s1 + $0x178] sm:$0xf]
    %v121 = vld [vmem:[%s1 + $0x17c] sm:$0xf]
    %v122 = vld [vmem:[%s1 + $0x180] sm:$0xf]
    %v123 = vld [vmem:[%s1 + $0x184] sm:$0xf]
    %v124 = vld [vmem:[%s1 + $0x188] sm:$0xf]
    %v125 = vld [vmem:[%s1 + $0x18c] sm:$0xf]
    %v126 = vld [vmem:[%s1 + $0x190] sm:$0xf]
    %v127 = vld [vmem:[%s1 + $0x194] sm:$0xf]
    %v128 = vld [vmem:[%s1 + $0x198] sm:$0xf]
    %v129 = vld [vmem:[%s1 + $0x19c] sm:$0xf]
    %v130 = vld [vmem:[%s1 + $0x1a0] sm:$0xf]
    %v131 = vld [vmem:[%s1 + $0x1a4] sm:$0xf]
    %v132 = vld [vmem:[%s1 + $0x1a8] sm:$0xf]
    %v133 = vld [vmem:[%s1 + $0x1ac] sm:$0xf]
    %v134 = vld [vmem:[%s1 + $0x1b0] sm:$0xf]
    %v135 = vld [vmem:[%s1 + $0x1b4] sm:$0xf]
    %v136 = vld [vmem:[%s1 + $0x1b8] sm:$0xf]
    %v137 = vld [vmem:[%s1 + $0x1bc] sm:$0xf]
    %v138 = vld [vmem:[%s1 + $0x1c0] sm:$0xf]
    %v139 = vld [vmem:[%s1 + $0x1c4] sm:$0xf]
    %v140 = vld [vmem:[%s1 + $0x1c8] sm:$0xf]
    %v141 = vld [vmem:[%s1 + $0x1cc] sm:$0xf]
    %v142 = vld [vmem:[%s1 + $0x1d0] sm:$0xf]
    %v143 = vld [vmem:[%s1 + $0x1d4] sm:$0xf]
    %v144 = vld [vmem:[%s1 + $0x1d8] sm:$0xf]
    %v145 = vld [vmem:[%s1 + $0x1dc] sm:$0xf]
    %v146 = vld [vmem:[%s1 + $0x1e0] sm:$0xf]
    %v147 = vld [vmem:[%s1 + $0x1e4] sm:$0xf]
    %v148 = vld [vmem:[%s1 + $0x1e8] sm:$0xf]
    %v149 = vld [vmem:[%s1 + $0x1ec] sm:$0xf]
    %v150 = vld [vmem:[%s1 + $0x1f0] sm:$0xf]
    %v151 = vld [vmem:[%s1 + $0x1f4] sm:$0xf]
    %v152 = vld [vmem:[%s1 + $0x1f8] sm:$0xf]
    %v153 = vld [vmem:[%s1 + $0x1fc] sm:$0xf]
    %v154 = vld [vmem:[%s1 + $0x200] sm:$0xf]
    %v155 = vld [vmem:[%s1 + $0x204] sm:$0xf]
    %v156 = vld [vmem:[%s1 + $0x208] sm:$0xf]
    %v157 = vld [vmem:[%s1 + $0x20c] sm:$0xf]
    %v158 = vld [vmem:[%s1 + $0x210] sm:$0xf]
    %v159 = vld [vmem:[%s1 + $0x214] sm:$0xf]
    %v160 = vld [vmem:[%s1 + $0x218] sm:$0xf]
    %v161 = vld [vmem:[%s1 + $0x21c] sm:$0xf]
    %v162 = vld [vmem:[%s1 + $0x220] sm:$0xf]
    %v163 = vld [vmem:[%s1 + $0x224] sm:$0xf]
    %v164 = vld [vmem:[%s1 + $0x228] sm:$0xf]
    %v165 = vld [vmem:[%s1 + $0x22c] sm:$0xf]
    %v166 = vld [vmem:[%s1 + $0x230] sm:$0xf]
    %v167 = vld [vmem:[%s1 + $0x234] sm:$0xf]
    %v168 = vld [vmem:[%s1 + $0x238] sm:$0xf]
    %v169 = vld [vmem:[%s1 + $0x23c] sm:$0xf]
    %v170 = vld [vmem:[%s1 + $0x240] sm:$0xf]
    %v171 = vld [vmem:[%s1 + $0x244] sm:$0xf]
    %v172 = vld [vmem:[%s1 + $0x248] sm:$0xf]
    %v173 = vld [vmem:[%s1 + $0x24c] sm:$0xf]
    %v174 = vld [vmem:[%s1 + $0x250] sm:$0xf]
    %v175 = vld [vmem:[%s1 + $0x254] sm:$0xf]
    %v176 = vld [vmem:[%s1 + $0x258] sm:$0xf]
    %v177 = vld [vmem:[%s1 + $0x25c] sm:$0xf]
    %v178 = vld [vmem:[%s1 + $0x260] sm:$0xf]
    %v179 = vld [vmem:[%s1 + $0x264] sm:$0xf]
    %v180 = vld [vmem:[%s1 + $0x268] sm:$0xf]
    %v181 = vld [vmem:[%s1 + $0x26c] sm:$0xf]
    %v182 = vld [vmem:[%s1 + $0x270] sm:$0xf]
    %v183 = vld [vmem:[%s1 + $0x274] sm:$0xf]
    %v184 = vld [vmem:[%s1 + $0x278] sm:$0xf]
    %v185 = vld [vmem:[%s1 + $0x27c] sm:$0xf]
    %v186 = vld [vmem:[%s1 + $0x280] sm:$0xf]
    %v187 = vld [vmem:[%s1 + $0x284] sm:$0xf]
    %v188 = vld [vmem:[%s1 + $0x288] sm:$0xf]
    %v189 = vld [vmem:[%s1 + $0x28c] sm:$0xf]
    %v190 = vld [vmem:[%s1 + $0x290] sm:$0xf]
    %v191 = vld [vmem:[%s1 + $0x294] sm:$0xf]
    %v192 = vld [vmem:[%s1 + $0x298] sm:$0xf]
    %v193 = vld [vmem:[%s1 + $0x29c] sm:$0xf]
    %v194 = vld [vmem:[%s1 + $0x2a0] sm:$0xf]
    %v195 = vld [vmem:[%s1 + $0x2a4] sm:$0xf]
    %v196 = vld [vmem:[%s1 + $0x2a8] sm:$0xf]
    %v197 = vld [vmem:[%s1 + $0x2ac] sm:$0xf]
    %v198 = vld [vmem:[%s1 + $0x2b0] sm:$0xf]
    %v199 = vld [vmem:[%s1 + $0x2b4] sm:$0xf]
    %v200 = vld [vmem:[%s1 + $0x2b8] sm:$0xf]
    %v201 = vld [vmem:[%s1 + $0x2bc] sm:$0xf]
    %v202 = vld [vmem:[%s1 + $0x2c0] sm:$0xf]
    %v203 = vld [vmem:[%s1 + $0x2c4] sm:$0xf]
    %v204 = vld [vmem:[%s1 + $0x2c8] sm:$0xf]
    %v205 = vld [vmem:[%s1 + $0x2cc] sm:$0xf]
    %v206 = vld [vmem:[%s1 + $0x2d0] sm:$0xf]
    %v207 = vld [vmem:[%s1 + $0x2d4] sm:$0xf]
    %v208 = vld [vmem:[%s1 + $0x2d8] sm:$0xf]
    %v209 = vld [vmem:[%s1 + $0x2dc] sm:$0xf]
    %v210 = vld [vmem:[%s1 + $0x2e0] sm:$0xf]
    %v211 = vld [vmem:[%s1 + $0x2e4] sm:$0xf]
    %v212 = vld [vmem:[%s1 + $0x2e8] sm:$0xf]
    %v213 = vld [vmem:[%s1 + $0x2ec] sm:$0xf]
    %v214 = vld [vmem:[%s1 + $0x2f0] sm:$0xf]
    %v215 = vld [vmem:[%s1 + $0x2f4] sm:$0xf]
    %v216 = vld [vmem:[%s1 + $0x2f8] sm:$0xf]
    %v217 = vld [vmem:[%s1 + $0x2fc] sm:$0xf]
    %v218 = vld [vmem:[%s1 + $0x300] sm:$0xf]
    %v219 = vld [vmem:[%s1 + $0x304] sm:$0xf]
    %v220 = vld [vmem:[%s1 + $0x308] sm:$0xf]
    %v221 = vld [vmem:[%s1 + $0x30c] sm:$0xf]
    %v222 = vld [vmem:[%s1 + $0x310] sm:$0xf]
    %v223 = vld [vmem:[%s1 + $0x314] sm:$0xf]
    %v224 = vld [vmem:[%s1 + $0x318] sm:$0xf]
    %v225 = vld [vmem:[%s1 + $0x31c] sm:$0xf]
    %v226 = vld [vmem:[%s1 + $0x320] sm:$0xf]
    %v227 = vld [vmem:[%s1 + $0x324] sm:$0xf]
    %v228 = vld [vmem:[%s1 + $0x328] sm:$0xf]
    %v229 = vld [vmem:[%s1 + $0x32c] sm:$0xf]
    %v230 = vld [vmem:[%s1 + $0x330] sm:$0xf]
    %v231 = vld [vmem:[%s1 + $0x334] sm:$0xf]
    %v232 = vld [vmem:[%s1 + $0x338] sm:$0xf]
    %v233 = vld [vmem:[%s1 + $0x33c] sm:$0xf]
    %v234 = vld [vmem:[%s1 + $0x340] sm:$0xf]
    %v235 = vld [vmem:[%s1 + $0x344] sm:$0xf]
    %v236 = vld [vmem:[%s1 + $0x348] sm:$0xf]
    %v237 = vld [vmem:[%s1 + $0x34c] sm:$0xf]
    %v238 = vld [vmem:[%s1 + $0x350] sm:$0xf]
    %v239 = vld [vmem:[%s1 + $0x354] sm:$0xf]
    %v240 = vld [vmem:[%s1 + $0x358] sm:$0xf]
    %v241 = vld [vmem:[%s1 + $0x35c] sm:$0xf]
    %v242 = vld [vmem:[%s1 + $0x360] sm:$0xf]
    %v243 = vld [vmem:[%s1 + $0x364] sm:$0xf]
    %v244 = vld [vmem:[%s1 + $0x368] sm:$0xf]
    %v245 = vld [vmem:[%s1 + $0x36c] sm:$0xf]
    %v246 = vld [vmem:[%s1 + $0x370] sm:$0xf]
    %v247 = vld [vmem:[%s1 + $0x374] sm:$0xf]
    %v248 = vld [vmem:[%s1 + $0x378] sm:$0xf]
    %v249 = vld [vmem:[%s1 + $0x37c] sm:$0xf]
    %v250 = vld [vmem:[%s1 + $0x380] sm:$0xf]
    %v251 = vld [vmem:[%s1 + $0x384] sm:$0xf]
    %v252 = vld [vmem:[%s1 + $0x388] sm:$0xf]
    %v253 = vld [vmem:[%s1 + $0x38c] sm:$0xf]
    %v254 = vld [vmem:[%s1 + $0x390] sm:$0xf]
    %v255 = vld [vmem:[%s1 + $0x394] sm:$0xf]
    %v256 = vld [vmem:[%s1 + $0x398] sm:$0xf]
    %v257 = vld [vmem:[%s1 + $0x39c] sm:$0xf]
    %v258 = vld [vmem:[%s1 + $0x3a0] sm:$0xf]
    %v259 = vld [vmem:[%s1 + $0x3a4] sm:$0xf]
    %v260 = vld [vmem:[%s1 + $0x3a8] sm:$0xf]
    %v261 = vld [vmem:[%s1 + $0x3ac] sm:$0xf]
    %v262 = vld [vmem:[%s1 + $0x3b0] sm:$0xf]
    %v263 = vld [vmem:[%s1 + $0x3b4] sm:$0xf]
    %v264 = vld [vmem:[%s1 + $0x3b8] sm:$0xf]
    %v265 = vld [vmem:[%s1 + $0x3bc] sm:$0xf]
    %v266 = vld [vmem:[%s1 + $0x3c0] sm:$0xf]
    %v267 = vld [vmem:[%s1 + $0x3c4] sm:$0xf]
    %v268 = vld [vmem:[%s1 + $0x3c8] sm:$0xf]
    %v269 = vld [vmem:[%s1 + $0x3cc] sm:$0xf]
    %v270 = vld [vmem:[%s1 + $0x3d0] sm:$0xf]
    %v271 = vld [vmem:[%s1 + $0x3d4] sm:$0xf]
    %v272 = vld [vmem:[%s1 + $0x3d8] sm:$0xf]
    %v273 = vld [vmem:[%s1 + $0x3dc] sm:$0xf]
    %v274 = vld [vmem:[%s1 + $0x3e0] sm:$0xf]
    %v275 = vld [vmem:[%s1 + $0x3e4] sm:$0xf]
    %v276 = vld [vmem:[%s1 + $0x3e8] sm:$0xf]
    %v277 = vld [vmem:[%s1 + $0x3ec] sm:$0xf]
    %v278 = vld [vmem:[%s1 + $0x3f0] sm:$0xf]
    %v279 = vld [vmem:[%s1 + $0x3f4] sm:$0xf]
    %v280 = vld [vmem:[%s1 + $0x3f8] sm:$0xf]
    %v281 = vld [vmem:[%s1 + $0x3fc] sm:$0xf]
    %v282 = vld [vmem:[%s1 + $0x400] sm:$0xf]
    %v283 = vld [vmem:[%s1 + $0x404] sm:$0xf]
    %v284 = vld [vmem:[%s1 + $0x408] sm:$0xf]
    %v285 = vld [vmem:[%s1 + $0x40c] sm:$0xf]
    %v286 = vld [vmem:[%s1 + $0x410] sm:$0xf]
    %v287 = vld [vmem:[%s1 + $0x414] sm:$0xf]
    %v288 = vld [vmem:[%s1 + $0x418] sm:$0xf]
    %v289 = vld [vmem:[%s1 + $0x41c] sm:$0xf]
    %v290 = vld [vmem:[%s1 + $0x420] sm:$0xf]
    %v291 = vld [vmem:[%s1 + $0x424] sm:$0xf]
    %v292 = vld [vmem:[%s1 + $0x428] sm:$0xf]
    %v293 = vld [vmem:[%s1 + $0x42c] sm:$0xf]
    %v294 = vld [vmem:[%s1 + $0x430] sm:$0xf]
    %v295 = vld [vmem:[%s1 + $0x434] sm:$0xf]
    %v296 = vld [vmem:[%s1 + $0x438] sm:$0xf]
    %v297 = vld [vmem:[%s1 + $0x43c] sm:$0xf]
    %v298 = vld [vmem:[%s1 + $0x440] sm:$0xf]
    %v299 = vld [vmem:[%s1 + $0x444] sm:$0xf]
    %v300 = vld [vmem:[%s1 + $0x448] sm:$0xf]
    %v301 = vld [vmem:[%s1 + $0x44c] sm:$0xf]
    %v302 = vld [vmem:[%s1 + $0x450] sm:$0xf]
    %v303 = vld [vmem:[%s1 + $0x454] sm:$0xf]
    %v304 = vld [vmem:[%s1 + $0x458] sm:$0xf]
    %v305 = vld [vmem:[%s1 + $0x45c] sm:$0xf]
    %v306 = vld [vmem:[%s1 + $0x460] sm:$0xf]
    %v307 = vld [vmem:[%s1 + $0x464] sm:$0xf]
    %v308 = vld [vmem:[%s1 + $0x468] sm:$0xf]
    %v309 = vld [vmem:[%s1 + $0x46c] sm:$0xf]
    %v310 = vld [vmem:[%s1 + $0x470] sm:$0xf]
    %v311 = vld [vmem:[%s1 + $0x474] sm:$0xf]
    %v312 = vld [vmem:[%s1 + $0x478] sm:$0xf]
    %v313 = vld [vmem:[%s1 + $0x47c] sm:$0xf]
    %v314 = vld [vmem:[%s1 + $0x480] sm:$0xf]
    %v315 = vld [vmem:[%s1 + $0x484] sm:$0xf]
    %v316 = vld [vmem:[%s1 + $0x488] sm:$0xf]
    %v317 = vld [vmem:[%s1 + $0x48c] sm:$0xf]
    %v318 = vld [vmem:[%s1 + $0x490] sm:$0xf]
    %v319 = vld [vmem:[%s1 + $0x494] sm:$0xf]
    %v320 = vld [vmem:[%s1 + $0x498] sm:$0xf]
    %v321 = vld [vmem:[%s1 + $0x49c] sm:$0xf]
    %v322 = vld [vmem:[%s1 + $0x4a0] sm:$0xf]
    %v323 = vld [vmem:[%s1 + $0x4a4] sm:$0xf]
    %v324 = vld [vmem:[%s1 + $0x4a8] sm:$0xf]
    %v325 = vld [vmem:[%s1 + $0x4ac] sm:$0xf]
    %v326 = vld [vmem:[%s1 + $0x4b0] sm:$0xf]
    %v327 = vld [vmem:[%s1 + $0x4b4] sm:$0xf]
    %v328 = vld [vmem:[%s1 + $0x4b8] sm:$0xf]
    %v329 = vld [vmem:[%s1 + $0x4bc] sm:$0xf]
    %v330 = vld [vmem:[%s1 + $0x4c0] sm:$0xf]
    %v331 = vld [vmem:[%s1 + $0x4c4] sm:$0xf]
    %v332 = vld [vmem:[%s1 + $0x4c8] sm:$0xf]
    %v333 = vld [vmem:[%s1 + $0x4cc] sm:$0xf]
    %v334 = vld [vmem:[%s1 + $0x4d0] sm:$0xf]
    %v335 = vld [vmem:[%s1 + $0x4d4] sm:$0xf]
    %v336 = vld [vmem:[%s1 + $0x4d8] sm:$0xf]
    %v337 = vld [vmem:[%s1 + $0x4dc] sm:$0xf]
    %v338 = vld [vmem:[%s1 + $0x4e0] sm:$0xf]
    %v339 = vld [vmem:[%s1 + $0x4e4] sm:$0xf]
    %v340 = vld [vmem:[%s1 + $0x4e8] sm:$0xf]
    %v341 = vld [vmem:[%s1 + $0x4ec] sm:$0xf]
    %v342 = vld [vmem:[%s1 + $0x4f0] sm:$0xf]
    %v343 = vld [vmem:[%s1 + $0x4f4] sm:$0xf]
    %v344 = vld [vmem:[%s1 + $0x4f8] sm:$0xf]
    %v345 = vld [vmem:[%s1 + $0x4fc] sm:$0xf]
    %v346 = vld [vmem:[%s1 + $0x500] sm:$0xf]
    %v347 = vld [vmem:[%s1 + $0x504] sm:$0xf]
    %v348 = vld [vmem:[%s1 + $0x508] sm:$0xf]
    %v349 = vld [vmem:[%s1 + $0x50c] sm:$0xf]
    %v350 = vld [vmem:[%s1 + $0x510] sm:$0xf]
    %v351 = vld [vmem:[%s1 + $0x514] sm:$0xf]
    %v352 = vld [vmem:[%s1 + $0x518] sm:$0xf]
    %v353 = vld [vmem:[%s1 + $0x51c] sm:$0xf]
    %v354 = vld [vmem:[%s1 + $0x520] sm:$0xf]
    %v355 = vld [vmem:[%s1 + $0x524] sm:$0xf]
    %v356 = vld [vmem:[%s1 + $0x528] sm:$0xf]
    %v357 = vld [vmem:[%s1 + $0x52c] sm:$0xf]
    %v358 = vld [vmem:[%s1 + $0x530] sm:$0xf]
    %v359 = vld [vmem:[%s1 + $0x534] sm:$0xf]
    %v360 = vld [vmem:[%s1 + $0x538] sm:$0xf]
    %v361 = vld [vmem:[%s1 + $0x53c] sm:$0xf]
    %v362 = vld [vmem:[%s1 + $0x540] sm:$0xf]
    %v363 = vld [vmem:[%s1 + $0x544] sm:$0xf]
    %v364 = vld [vmem:[%s1 + $0x548] sm:$0xf]
    %v365 = vld [vmem:[%s1 + $0x54c] sm:$0xf]
    %v366 = vld [vmem:[%s1 + $0x550] sm:$0xf]
    %v367 = vld [vmem:[%s1 + $0x554] sm:$0xf]
    %v368 = vld [vmem:[%s1 + $0x558] sm:$0xf]
    %v369 = vld [vmem:[%s1 + $0x55c] sm:$0xf]
    %v370 = vld [vmem:[%s1 + $0x560] sm:$0xf]
    %v371 = vld [vmem:[%s1 + $0x564] sm:$0xf]
    %v372 = vld [vmem:[%s1 + $0x568] sm:$0xf]
    %v373 = vld [vmem:[%s1 + $0x56c] sm:$0xf]
    %v374 = vld [vmem:[%s1 + $0x570] sm:$0xf]
    %v375 = vld [vmem:[%s1 + $0x574] sm:$0xf]
    %v376 = vld [vmem:[%s1 + $0x578] sm:$0xf]
    %v377 = vld [vmem:[%s1 + $0x57c] sm:$0xf]
    %v378 = vld [vmem:[%s1 + $0x580] sm:$0xf]
    %v379 = vld [vmem:[%s1 + $0x584] sm:$0xf]
    %v380 = vld [vmem:[%s1 + $0x588] sm:$0xf]
    %v381 = vld [vmem:[%s1 + $0x58c] sm:$0xf]
    %v382 = vld [vmem:[%s1 + $0x590] sm:$0xf]
    %v383 = vld [vmem:[%s1 + $0x594] sm:$0xf]
    %v384 = vld [vmem:[%s1 + $0x598] sm:$0xf]
    %v385 = vld [vmem:[%s1 + $0x59c] sm:$0xf]
    %v386 = vld [vmem:[%s1 + $0x5a0] sm:$0xf]
    %v387 = vld [vmem:[%s1 + $0x5a4] sm:$0xf]
    %v388 = vld [vmem:[%s1 + $0x5a8] sm:$0xf]
    %v389 = vld [vmem:[%s1 + $0x5ac] sm:$0xf]
    %v390 = vld [vmem:[%s1 + $0x5b0] sm:$0xf]
    %v391 = vld [vmem:[%s1 + $0x5b4] sm:$0xf]
    %v392 = vld [vmem:[%s1 + $0x5b8] sm:$0xf]
    %v393 = vld [vmem:[%s1 + $0x5bc] sm:$0xf]
    %v394 = vld [vmem:[%s1 + $0x5c0] sm:$0xf]
    %v395 = vld [vmem:[%s1 + $0x5c4] sm:$0xf]
    %v396 = vld [vmem:[%s1 + $0x5c8] sm:$0xf]
    %v397 = vld [vmem:[%s1 + $0x5cc] sm:$0xf]
    %v398 = vld [vmem:[%s1 + $0x5d0] sm:$0xf]
    %v399 = vld [vmem:[%s1 + $0x5d4] sm:$0xf]
    %v400 = vld [vmem:[%s1 + $0x5d8] sm:$0xf]
    %v401 = vld [vmem:[%s1 + $0x5dc] sm:$0xf]
    %v402 = vld [vmem:[%s1 + $0x5e0] sm:$0xf]
    %v403 = vld [vmem:[%s1 + $0x5e4] sm:$0xf]
    %v404 = vld [vmem:[%s1 + $0x5e8] sm:$0xf]
    %v405 = vld [vmem:[%s1 + $0x5ec] sm:$0xf]
    %v406 = vld [vmem:[%s1 + $0x5f0] sm:$0xf]
    %v407 = vld [vmem:[%s1 + $0x5f4] sm:$0xf]
    %v408 = vld [vmem:[%s1 + $0x5f8] sm:$0xf]
    %v409 = vld [vmem:[%s1 + $0x5fc] sm:$0xf]
    %v410 = vld [vmem:[%s1 + $0x600] sm:$0xf]
    %v411 = vld [vmem:[%s1 + $0x604] sm:$0xf]
    %v412 = vld [vmem:[%s1 + $0x608] sm:$0xf]
    %v413 = vld [vmem:[%s1 + $0x60c] sm:$0xf]
    %v414 = vld [vmem:[%s1 + $0x610] sm:$0xf]
    %v415 = vld [vmem:[%s1 + $0x614] sm:$0xf]
    %v416 = vld [vmem:[%s1 + $0x618] sm:$0xf]
    %v417 = vld [vmem:[%s1 + $0x61c] sm:$0xf]
    %v418 = vld [vmem:[%s2] sm:$0x1]
    %v420 = vlaneseq
    %v421 = vshrl.u32 %v420, 7
    %v422 = vsub.s32 0, %v421
    %v423 = vrot.slane %v418, %v422
    %v429 = vcombine.high %v22, %v22
    %v431 = vunpack.c.l.s4 1966171168
    %v432 = vunpack.c.0.s8 %v431
    %v433 = vlaneseq
    %v434 = vshrl.u32 %v433, 7
    %v435 = vsub.s32 %v432, %v434
    %v436 = vrot.slane %v22, %v435
    %v438 = vunpack.c.l.s4 1966171168
    %v439 = vunpack.c.0.s8 %v438
    %v440 = vlaneseq
    %v441 = vshrl.u32 %v440, 7
    %v442 = vsub.s32 %v439, %v441
    %v443 = vrot.slane %v429, %v442
    %v444 = vcombine.high %v436, %v436
    %v445 = vcombine.high %v443, %v443
    %v447 = vunpack.c.l.s4 1966171168
    %v448 = vunpack.c.0.s8 %v447
    %v449 = vlaneseq
    %v450 = vshrl.u32 %v449, 7
    %v451 = vsub.s32 %v448, %v450
    %v452 = vrot.slane %v436, %v451
    %v454 = vunpack.c.l.s4 1966171168
    %v455 = vunpack.c.0.s8 %v454
    %v456 = vlaneseq
    %v457 = vshrl.u32 %v456, 7
    %v458 = vsub.s32 %v455, %v457
    %v459 = vrot.slane %v443, %v458
    %v461 = vunpack.c.l.s4 1966171168
    %v462 = vunpack.c.0.s8 %v461
    %v463 = vlaneseq
    %v464 = vshrl.u32 %v463, 7
    %v465 = vsub.s32 %v462, %v464
    %v466 = vrot.slane %v444, %v465
    %v468 = vunpack.c.l.s4 1966171168
    %v469 = vunpack.c.0.s8 %v468
    %v470 = vlaneseq
    %v471 = vshrl.u32 %v470, 7
    %v472 = vsub.s32 %v469, %v471
    %v473 = vrot.slane %v445, %v472
    %v474 = vcombine.high %v452, %v452
    %v475 = vcombine.high %v459, %v459
    %v476 = vcombine.high %v466, %v466
    %v477 = vcombine.high %v473, %v473
    %v478 = vcombine.high %v23, %v23
    %v480 = vunpack.c.l.s4 1966171168
    %v481 = vunpack.c.0.s8 %v480
    %v482 = vlaneseq
    %v483 = vshrl.u32 %v482, 7
    %v484 = vsub.s32 %v481, %v483
    %v485 = vrot.slane %v23, %v484
    %v487 = vunpack.c.l.s4 1966171168
    %v488 = vunpack.c.0.s8 %v487
    %v489 = vlaneseq
    %v490 = vshrl.u32 %v489, 7
    %v491 = vsub.s32 %v488, %v490
    %v492 = vrot.slane %v478, %v491
    %v493 = vcombine.high %v485, %v485
    %v494 = vcombine.high %v492, %v492
    %v496 = vunpack.c.l.s4 1966171168
    %v497 = vunpack.c.0.s8 %v496
    %v498 = vlaneseq
    %v499 = vshrl.u32 %v498, 7
    %v500 = vsub.s32 %v497, %v499
    %v501 = vrot.slane %v485, %v500
    %v503 = vunpack.c.l.s4 1966171168
    %v504 = vunpack.c.0.s8 %v503
    %v505 = vlaneseq
    %v506 = vshrl.u32 %v505, 7
    %v507 = vsub.s32 %v504, %v506
    %v508 = vrot.slane %v492, %v507
    %v510 = vunpack.c.l.s4 1966171168
    %v511 = vunpack.c.0.s8 %v510
    %v512 = vlaneseq
    %v513 = vshrl.u32 %v512, 7
    %v514 = vsub.s32 %v511, %v513
    %v515 = vrot.slane %v493, %v514
    %v517 = vunpack.c.l.s4 1966171168
    %v518 = vunpack.c.0.s8 %v517
    %v519 = vlaneseq
    %v520 = vshrl.u32 %v519, 7
    %v521 = vsub.s32 %v518, %v520
    %v522 = vrot.slane %v494, %v521
    %v523 = vcombine.high %v501, %v501
    %v524 = vcombine.high %v508, %v508
    %v525 = vcombine.high %v515, %v515
    %v526 = vcombine.high %v522, %v522
    %v527 = vcombine.high %v24, %v24
    %v529 = vunpack.c.l.s4 1966171168
    %v530 = vunpack.c.0.s8 %v529
    %v531 = vlaneseq
    %v532 = vshrl.u32 %v531, 7
    %v533 = vsub.s32 %v530, %v532
    %v534 = vrot.slane %v24, %v533
    %v536 = vunpack.c.l.s4 1966171168
    %v537 = vunpack.c.0.s8 %v536
    %v538 = vlaneseq
    %v539 = vshrl.u32 %v538, 7
    %v540 = vsub.s32 %v537, %v539
    %v541 = vrot.slane %v527, %v540
    %v542 = vcombine.high %v534, %v534
    %v543 = vcombine.high %v541, %v541
    %v545 = vunpack.c.l.s4 1966171168
    %v546 = vunpack.c.0.s8 %v545
    %v547 = vlaneseq
    %v548 = vshrl.u32 %v547, 7
    %v549 = vsub.s32 %v546, %v548
    %v550 = vrot.slane %v534, %v549
    %v552 = vunpack.c.l.s4 1966171168
    %v553 = vunpack.c.0.s8 %v552
    %v554 = vlaneseq
    %v555 = vshrl.u32 %v554, 7
    %v556 = vsub.s32 %v553, %v555
    %v557 = vrot.slane %v541, %v556
    %v559 = vunpack.c.l.s4 1966171168
    %v560 = vunpack.c.0.s8 %v559
    %v561 = vlaneseq
    %v562 = vshrl.u32 %v561, 7
    %v563 = vsub.s32 %v560, %v562
    %v564 = vrot.slane %v542, %v563
    %v566 = vunpack.c.l.s4 1966171168
    %v567 = vunpack.c.0.s8 %v566
    %v568 = vlaneseq
    %v569 = vshrl.u32 %v568, 7
    %v570 = vsub.s32 %v567, %v569
    %v571 = vrot.slane %v543, %v570
    %v572 = vcombine.high %v550, %v550
    %v573 = vcombine.high %v557, %v557
    %v574 = vcombine.high %v564, %v564
    %v575 = vcombine.high %v571, %v571
    %v577 = vunpack.c.l.s4 1966171168
    %v578 = vunpack.c.0.s8 %v577
    %v579 = vlaneseq
    %v580 = vshrl.u32 %v579, 7
    %v581 = vsub.s32 %v578, %v580
    %v582 = vrot.slane %v25, %v581
    %v584 = vunpack.c.l.s4 1966171168
    %v585 = vunpack.c.0.s8 %v584
    %v586 = vlaneseq
    %v587 = vshrl.u32 %v586, 7
    %v588 = vsub.s32 %v585, %v587
    %v589 = vrot.slane %v582, %v588
    %v1006 = vunpack.c.l.b16 %v26
    %v1007 = vunpack.c.l.b16 %v27
    %v1008 = vunpack.c.l.b16 %v28
    %v1009 = vunpack.c.l.b16 %v29
    %v1010 = vunpack.c.l.b16 %v30
    %v1011 = vunpack.c.l.b16 %v31
    %v1012 = vunpack.c.l.b16 %v32
    %v1013 = vunpack.c.l.b16 %v33
    %v1014 = vunpack.c.l.b16 %v34
    %v1015 = vunpack.c.l.b16 %v35
    %v1016 = vunpack.c.l.b16 %v36
    %v1017 = vunpack.c.l.b16 %v37
    %v1018 = vunpack.c.l.b16 %v38
    %v1019 = vunpack.c.l.b16 %v39
    %v1020 = vunpack.c.l.b16 %v40
    %v1021 = vunpack.c.l.b16 %v41
    %v1022 = vunpack.c.l.b16 %v42
    %v1023 = vunpack.c.l.b16 %v43
    %v1024 = vunpack.c.l.b16 %v44
    %v1025 = vunpack.c.l.b16 %v45
    %v1026 = vunpack.c.l.b16 %v46
    %v1027 = vunpack.c.l.b16 %v47
    %v1028 = vunpack.c.l.b16 %v48
    %v1029 = vunpack.c.l.b16 %v49
    %v1030 = vunpack.c.l.b16 %v50
    %v1031 = vunpack.c.l.b16 %v51
    %v1032 = vunpack.c.l.b16 %v52
    %v1033 = vunpack.c.l.b16 %v53
    %v1034 = vunpack.c.l.b16 %v54
    %v1035 = vunpack.c.l.b16 %v55
    %v1036 = vunpack.c.l.b16 %v56
    %v1037 = vunpack.c.l.b16 %v57
    %v1038 = vunpack.c.l.b16 %v58
    %v1039 = vunpack.c.l.b16 %v59
    %v1040 = vunpack.c.l.b16 %v60
    %v1041 = vunpack.c.l.b16 %v61
    %v1042 = vunpack.c.l.b16 %v62
    %v1043 = vunpack.c.l.b16 %v63
    %v1044 = vunpack.c.l.b16 %v64
    %v1045 = vunpack.c.l.b16 %v65
    %v1046 = vunpack.c.l.b16 %v66
    %v1047 = vunpack.c.l.b16 %v67
    %v1048 = vunpack.c.l.b16 %v68
    %v1049 = vunpack.c.l.b16 %v69
    %v1050 = vunpack.c.l.b16 %v70
    %v1051 = vunpack.c.l.b16 %v71
    %v1052 = vunpack.c.l.b16 %v72
    %v1053 = vunpack.c.l.b16 %v73
    %v1054 = vunpack.c.l.b16 %v74
    %v1055 = vunpack.c.l.b16 %v75
    %v1056 = vunpack.c.l.b16 %v76
    %v1057 = vunpack.c.l.b16 %v77
    %v1058 = vunpack.c.l.b16 %v78
    %v1059 = vunpack.c.l.b16 %v79
    %v1060 = vunpack.c.l.b16 %v80
    %v1061 = vunpack.c.l.b16 %v81
    %v1062 = vunpack.c.l.b16 %v82
    %v1063 = vunpack.c.l.b16 %v83
    %v1064 = vunpack.c.l.b16 %v84
    %v1065 = vunpack.c.l.b16 %v85
    %v1066 = vunpack.c.l.b16 %v86
    %v1067 = vunpack.c.l.b16 %v87
    %v1068 = vunpack.c.l.b16 %v88
    %v1069 = vunpack.c.l.b16 %v89
    %v1070 = vunpack.c.l.b16 %v90
    %v1071 = vunpack.c.l.b16 %v91
    %v1072 = vunpack.c.l.b16 %v92
    %v1073 = vunpack.c.l.b16 %v93
    %v1074 = vunpack.c.l.b16 %v94
    %v1075 = vunpack.c.l.b16 %v95
    %v1076 = vunpack.c.l.b16 %v96
    %v1077 = vunpack.c.l.b16 %v97
    %v1078 = vunpack.c.l.b16 %v98
    %v1079 = vunpack.c.l.b16 %v99
    %v1080 = vunpack.c.l.b16 %v100
    %v1081 = vunpack.c.l.b16 %v101
    %v1082 = vunpack.c.l.b16 %v102
    %v1083 = vunpack.c.l.b16 %v103
    %v1084 = vunpack.c.l.b16 %v104
    %v1085 = vunpack.c.l.b16 %v105
    %v1086 = vunpack.c.l.b16 %v106
    %v1087 = vunpack.c.l.b16 %v107
    %v1088 = vunpack.c.l.b16 %v108
    %v1089 = vunpack.c.l.b16 %v109
    %v1090 = vunpack.c.l.b16 %v110
    %v1091 = vunpack.c.l.b16 %v111
    %v1092 = vunpack.c.l.b16 %v112
    %v1093 = vunpack.c.l.b16 %v113
    %v1094 = vunpack.c.l.b16 %v114
    %v1095 = vunpack.c.l.b16 %v115
    %v1096 = vunpack.c.l.b16 %v116
    %v1097 = vunpack.c.l.b16 %v117
    %v1098 = vunpack.c.l.b16 %v118
    %v1099 = vunpack.c.l.b16 %v119
    %v1100 = vunpack.c.l.b16 %v120
    %v1101 = vunpack.c.l.b16 %v121
    %v1102 = vunpack.c.l.b16 %v122
    %v1103 = vunpack.c.l.b16 %v123
    %v1104 = vunpack.c.l.b16 %v124
    %v1105 = vunpack.c.l.b16 %v125
    %v1106 = vunpack.c.l.b16 %v126
    %v1107 = vunpack.c.l.b16 %v127
    %v1108 = vunpack.c.l.b16 %v128
    %v1109 = vunpack.c.l.b16 %v129
    %v1110 = vunpack.c.l.b16 %v130
    %v1111 = vunpack.c.l.b16 %v131
    %v1112 = vunpack.c.l.b16 %v132
    %v1113 = vunpack.c.l.b16 %v133
    %v1114 = vunpack.c.l.b16 %v134
    %v1115 = vunpack.c.l.b16 %v135
    %v1116 = vunpack.c.l.b16 %v136
    %v1117 = vunpack.c.l.b16 %v137
    %v1118 = vunpack.c.l.b16 %v138
    %v1119 = vunpack.c.l.b16 %v139
    %v1120 = vunpack.c.l.b16 %v140
    %v1121 = vunpack.c.l.b16 %v141
    %v1122 = vunpack.c.l.b16 %v142
    %v1123 = vunpack.c.l.b16 %v143
    %v1124 = vunpack.c.l.b16 %v144
    %v1125 = vunpack.c.l.b16 %v145
    %v1126 = vunpack.c.l.b16 %v146
    %v1127 = vunpack.c.l.b16 %v147
    %v1128 = vunpack.c.l.b16 %v148
    %v1129 = vunpack.c.l.b16 %v149
    %v1130 = vunpack.c.l.b16 %v150
    %v1131 = vunpack.c.l.b16 %v151
    %v1132 = vunpack.c.l.b16 %v152
    %v1133 = vunpack.c.l.b16 %v153
    %v1134 = vunpack.c.l.b16 %v154
    %v1135 = vunpack.c.l.b16 %v155
    %v1136 = vunpack.c.l.b16 %v156
    %v1137 = vunpack.c.l.b16 %v157
    %v1138 = vunpack.c.l.b16 %v158
    %v1139 = vunpack.c.l.b16 %v159
    %v1140 = vunpack.c.l.b16 %v160
    %v1141 = vunpack.c.l.b16 %v161
    %v1142 = vunpack.c.l.b16 %v162
    %v1143 = vunpack.c.l.b16 %v163
    %v1144 = vunpack.c.l.b16 %v164
    %v1145 = vunpack.c.l.b16 %v165
    %v1146 = vunpack.c.l.b16 %v166
    %v1147 = vunpack.c.l.b16 %v167
    %v1148 = vunpack.c.l.b16 %v168
    %v1149 = vunpack.c.l.b16 %v169
    %v1150 = vunpack.c.l.b16 %v170
    %v1151 = vunpack.c.l.b16 %v171
    %v1152 = vunpack.c.l.b16 %v172
    %v1153 = vunpack.c.l.b16 %v173
    %v1154 = vunpack.c.l.b16 %v174
    %v1155 = vunpack.c.l.b16 %v175
    %v1156 = vunpack.c.l.b16 %v176
    %v1157 = vunpack.c.l.b16 %v177
    %v1158 = vunpack.c.l.b16 %v178
    %v1159 = vunpack.c.l.b16 %v179
    %v1160 = vunpack.c.l.b16 %v180
    %v1161 = vunpack.c.l.b16 %v181
    %v1162 = vunpack.c.l.b16 %v182
    %v1163 = vunpack.c.l.b16 %v183
    %v1164 = vunpack.c.l.b16 %v184
    %v1165 = vunpack.c.l.b16 %v185
    %v1166 = vunpack.c.l.b16 %v186
    %v1167 = vunpack.c.l.b16 %v187
    %v1168 = vunpack.c.l.b16 %v188
    %v1169 = vunpack.c.l.b16 %v189
    %v1170 = vunpack.c.l.b16 %v190
    %v1171 = vunpack.c.l.b16 %v191
    %v1172 = vunpack.c.l.b16 %v192
    %v1173 = vunpack.c.l.b16 %v193
    %v1174 = vunpack.c.l.b16 %v194
    %v1175 = vunpack.c.l.b16 %v195
    %v1176 = vunpack.c.l.b16 %v196
    %v1177 = vunpack.c.l.b16 %v197
    %v1178 = vunpack.c.l.b16 %v198
    %v1179 = vunpack.c.l.b16 %v199
    %v1180 = vunpack.c.l.b16 %v200
    %v1181 = vunpack.c.l.b16 %v201
    %v1182 = vunpack.c.l.b16 %v202
    %v1183 = vunpack.c.l.b16 %v203
    %v1184 = vunpack.c.l.b16 %v204
    %v1185 = vunpack.c.l.b16 %v205
    %v1186 = vunpack.c.l.b16 %v206
    %v1187 = vunpack.c.l.b16 %v207
    %v1188 = vunpack.c.l.b16 %v208
    %v1189 = vunpack.c.l.b16 %v209
    %v1190 = vunpack.c.l.b16 %v210
    %v1191 = vunpack.c.l.b16 %v211
    %v1192 = vunpack.c.l.b16 %v212
    %v1193 = vunpack.c.l.b16 %v213
    %v1194 = vunpack.c.l.b16 %v214
    %v1195 = vunpack.c.l.b16 %v215
    %v1196 = vunpack.c.l.b16 %v216
    %v1197 = vunpack.c.l.b16 %v217
    %v1198 = vunpack.c.l.b16 %v218
    %v1199 = vunpack.c.l.b16 %v219
    %v1200 = vunpack.c.l.b16 %v220
    %v1201 = vunpack.c.l.b16 %v221
    %v1202 = vunpack.c.l.b16 %v222
    %v1203 = vunpack.c.l.b16 %v223
    %v1204 = vunpack.c.l.b16 %v224
    %v1205 = vunpack.c.l.b16 %v225
    %v1206 = vunpack.c.l.b16 %v226
    %v1207 = vunpack.c.l.b16 %v227
    %v1208 = vunpack.c.l.b16 %v228
    %v1209 = vunpack.c.l.b16 %v229
    %v1210 = vunpack.c.l.b16 %v230
    %v1211 = vunpack.c.l.b16 %v231
    %v1212 = vunpack.c.l.b16 %v232
    %v1213 = vunpack.c.l.b16 %v233
    %v1214 = vunpack.c.l.b16 %v234
    %v1215 = vunpack.c.l.b16 %v235
    %v1216 = vunpack.c.l.b16 %v236
    %v1217 = vunpack.c.l.b16 %v237
    %v1218 = vunpack.c.l.b16 %v238
    %v1219 = vunpack.c.l.b16 %v239
    %v1220 = vunpack.c.l.b16 %v240
    %v1221 = vunpack.c.l.b16 %v241
    %v1222 = vunpack.c.l.b16 %v242
    %v1223 = vunpack.c.l.b16 %v243
    %v1224 = vunpack.c.l.b16 %v244
    %v1225 = vunpack.c.l.b16 %v245
    %v1226 = vunpack.c.l.b16 %v246
    %v1227 = vunpack.c.l.b16 %v247
    %v1228 = vunpack.c.l.b16 %v248
    %v1229 = vunpack.c.l.b16 %v249
    %v1230 = vunpack.c.l.b16 %v250
    %v1231 = vunpack.c.l.b16 %v251
    %v1232 = vunpack.c.l.b16 %v252
    %v1233 = vunpack.c.l.b16 %v253
    %v1234 = vunpack.c.l.b16 %v254
    %v1235 = vunpack.c.l.b16 %v255
    %v1236 = vunpack.c.l.b16 %v256
    %v1237 = vunpack.c.l.b16 %v257
    %v1238 = vunpack.c.l.b16 %v258
    %v1239 = vunpack.c.l.b16 %v259
    %v1240 = vunpack.c.l.b16 %v260
    %v1241 = vunpack.c.l.b16 %v261
    %v1242 = vunpack.c.l.b16 %v262
    %v1243 = vunpack.c.l.b16 %v263
    %v1244 = vunpack.c.l.b16 %v264
    %v1245 = vunpack.c.l.b16 %v265
    %v1246 = vunpack.c.l.b16 %v266
    %v1247 = vunpack.c.l.b16 %v267
    %v1248 = vunpack.c.l.b16 %v268
    %v1249 = vunpack.c.l.b16 %v269
    %v1250 = vunpack.c.l.b16 %v270
    %v1251 = vunpack.c.l.b16 %v271
    %v1252 = vunpack.c.l.b16 %v272
    %v1253 = vunpack.c.l.b16 %v273
    %v1254 = vunpack.c.l.b16 %v274
    %v1255 = vunpack.c.l.b16 %v275
    %v1256 = vunpack.c.l.b16 %v276
    %v1257 = vunpack.c.l.b16 %v277
    %v1258 = vunpack.c.l.b16 %v278
    %v1259 = vunpack.c.l.b16 %v279
    %v1260 = vunpack.c.l.b16 %v280
    %v1261 = vunpack.c.l.b16 %v281
    %v1262 = vunpack.c.l.b16 %v282
    %v1263 = vunpack.c.l.b16 %v283
    %v1264 = vunpack.c.l.b16 %v284
    %v1265 = vunpack.c.l.b16 %v285
    %v1266 = vunpack.c.l.b16 %v286
    %v1267 = vunpack.c.l.b16 %v287
    %v1268 = vunpack.c.l.b16 %v288
    %v1269 = vunpack.c.l.b16 %v289
    %v1270 = vunpack.c.l.b16 %v290
    %v1271 = vunpack.c.l.b16 %v291
    %v1272 = vunpack.c.l.b16 %v292
    %v1273 = vunpack.c.l.b16 %v293
    %v1274 = vunpack.c.l.b16 %v294
    %v1275 = vunpack.c.l.b16 %v295
    %v1276 = vunpack.c.l.b16 %v296
    %v1277 = vunpack.c.l.b16 %v297
    %v1278 = vunpack.c.l.b16 %v298
    %v1279 = vunpack.c.l.b16 %v299
    %v1280 = vunpack.c.l.b16 %v300
    %v1281 = vunpack.c.l.b16 %v301
    %v1282 = vunpack.c.l.b16 %v302
    %v1283 = vunpack.c.l.b16 %v303
    %v1284 = vunpack.c.l.b16 %v304
    %v1285 = vunpack.c.l.b16 %v305
    %v1286 = vunpack.c.l.b16 %v306
    %v1287 = vunpack.c.l.b16 %v307
    %v1288 = vunpack.c.l.b16 %v308
    %v1289 = vunpack.c.l.b16 %v309
    %v1290 = vunpack.c.l.b16 %v310
    %v1291 = vunpack.c.l.b16 %v311
    %v1292 = vunpack.c.l.b16 %v312
    %v1293 = vunpack.c.l.b16 %v313
    %v1294 = vunpack.c.l.b16 %v314
    %v1295 = vunpack.c.l.b16 %v315
    %v1296 = vunpack.c.l.b16 %v316
    %v1297 = vunpack.c.l.b16 %v317
    %v1298 = vunpack.c.l.b16 %v318
    %v1299 = vunpack.c.l.b16 %v319
    %v1300 = vunpack.c.l.b16 %v320
    %v1301 = vunpack.c.l.b16 %v321
    %v1302 = vunpack.c.l.b16 %v322
    %v1303 = vunpack.c.l.b16 %v323
    %v1304 = vunpack.c.l.b16 %v324
    %v1305 = vunpack.c.l.b16 %v325
    %v1306 = vunpack.c.l.b16 %v326
    %v1307 = vunpack.c.l.b16 %v327
    %v1308 = vunpack.c.l.b16 %v328
    %v1309 = vunpack.c.l.b16 %v329
    %v1310 = vunpack.c.l.b16 %v330
    %v1311 = vunpack.c.l.b16 %v331
    %v1312 = vunpack.c.l.b16 %v332
    %v1313 = vunpack.c.l.b16 %v333
    %v1314 = vunpack.c.l.b16 %v334
    %v1315 = vunpack.c.l.b16 %v335
    %v1316 = vunpack.c.l.b16 %v336
    %v1317 = vunpack.c.l.b16 %v337
    %v1318 = vunpack.c.l.b16 %v338
    %v1319 = vunpack.c.l.b16 %v339
    %v1320 = vunpack.c.l.b16 %v340
    %v1321 = vunpack.c.l.b16 %v341
    %v1322 = vunpack.c.l.b16 %v342
    %v1323 = vunpack.c.l.b16 %v343
    %v1324 = vunpack.c.l.b16 %v344
    %v1325 = vunpack.c.l.b16 %v345
    %v1326 = vunpack.c.l.b16 %v346
    %v1327 = vunpack.c.l.b16 %v347
    %v1328 = vunpack.c.l.b16 %v348
    %v1329 = vunpack.c.l.b16 %v349
    %v1330 = vunpack.c.l.b16 %v350
    %v1331 = vunpack.c.l.b16 %v351
    %v1332 = vunpack.c.l.b16 %v352
    %v1333 = vunpack.c.l.b16 %v353
    %v1334 = vunpack.c.l.b16 %v354
    %v1335 = vunpack.c.l.b16 %v355
    %v1336 = vunpack.c.l.b16 %v356
    %v1337 = vunpack.c.l.b16 %v357
    %v1338 = vunpack.c.l.b16 %v358
    %v1339 = vunpack.c.l.b16 %v359
    %v1340 = vunpack.c.l.b16 %v360
    %v1341 = vunpack.c.l.b16 %v361
    %v1342 = vunpack.c.l.b16 %v362
    %v1343 = vunpack.c.l.b16 %v363
    %v1344 = vunpack.c.l.b16 %v364
    %v1345 = vunpack.c.l.b16 %v365
    %v1346 = vunpack.c.l.b16 %v366
    %v1347 = vunpack.c.l.b16 %v367
    %v1348 = vunpack.c.l.b16 %v368
    %v1349 = vunpack.c.l.b16 %v369
    %v1350 = vunpack.c.l.b16 %v370
    %v1351 = vunpack.c.l.b16 %v371
    %v1352 = vunpack.c.l.b16 %v372
    %v1353 = vunpack.c.l.b16 %v373
    %v1354 = vunpack.c.l.b16 %v374
    %v1355 = vunpack.c.l.b16 %v375
    %v1356 = vunpack.c.l.b16 %v376
    %v1357 = vunpack.c.l.b16 %v377
    %v1358 = vunpack.c.l.b16 %v378
    %v1359 = vunpack.c.l.b16 %v379
    %v1360 = vunpack.c.l.b16 %v380
    %v1361 = vunpack.c.l.b16 %v381
    %v1362 = vunpack.c.l.b16 %v382
    %v1363 = vunpack.c.l.b16 %v383
    %v1364 = vunpack.c.l.b16 %v384
    %v1365 = vunpack.c.l.b16 %v385
    %v1366 = vunpack.c.l.b16 %v386
    %v1367 = vunpack.c.l.b16 %v387
    %v1368 = vunpack.c.l.b16 %v388
    %v1369 = vunpack.c.l.b16 %v389
    %v1370 = vunpack.c.l.b16 %v390
    %v1371 = vunpack.c.l.b16 %v391
    %v1372 = vunpack.c.l.b16 %v392
    %v1373 = vunpack.c.l.b16 %v393
    %v1374 = vunpack.c.l.b16 %v394
    %v1375 = vunpack.c.l.b16 %v395
    %v1376 = vunpack.c.l.b16 %v396
    %v1377 = vunpack.c.l.b16 %v397
    %v1378 = vunpack.c.l.b16 %v398
    %v1379 = vunpack.c.l.b16 %v399
    %v1380 = vunpack.c.l.b16 %v400
    %v1381 = vunpack.c.l.b16 %v401
    %v1382 = vunpack.c.l.b16 %v402
    %v1383 = vunpack.c.l.b16 %v403
    %v1384 = vunpack.c.l.b16 %v404
    %v1385 = vunpack.c.l.b16 %v405
    %v1386 = vunpack.c.l.b16 %v406
    %v1387 = vunpack.c.l.b16 %v407
    %v1388 = vunpack.c.l.b16 %v408
    %v1389 = vunpack.c.l.b16 %v409
    %v1390 = vunpack.c.l.b16 %v410
    %v1391 = vunpack.c.l.b16 %v411
    %v1392 = vunpack.c.l.b16 %v412
    %v1393 = vunpack.c.l.b16 %v413
    %v1394 = vunpack.c.l.b16 %v414
    %v1395 = vunpack.c.l.b16 %v415
    %v1396 = vunpack.c.l.b16 %v416
    %v1397 = vunpack.c.l.b16 %v417
    %v1398 = vpack.c.b16 %v1007, %v1006
    %v1399 = vpack.c.b16 %v1009, %v1008
    %v1400 = vpack.c.b16 %v1011, %v1010
    %v1401 = vpack.c.b16 %v1013, %v1012
    %v1402 = vpack.c.b16 %v1015, %v1014
    %v1403 = vpack.c.b16 %v1017, %v1016
    %v1404 = vpack.c.b16 %v1019, %v1018
    %v1405 = vpack.c.b16 %v1021, %v1020
    %v1406 = vpack.c.b16 %v1023, %v1022
    %v1407 = vpack.c.b16 %v1025, %v1024
    %v1408 = vpack.c.b16 %v1027, %v1026
    %v1409 = vpack.c.b16 %v1029, %v1028
    %v1410 = vpack.c.b16 %v1031, %v1030
    %v1411 = vpack.c.b16 %v1033, %v1032
    %v1412 = vpack.c.b16 %v1035, %v1034
    %v1413 = vpack.c.b16 %v1037, %v1036
    %v1414 = vpack.c.b16 %v1039, %v1038
    %v1415 = vpack.c.b16 %v1041, %v1040
    %v1416 = vpack.c.b16 %v1043, %v1042
    %v1417 = vpack.c.b16 %v1045, %v1044
    %v1418 = vpack.c.b16 %v1047, %v1046
    %v1419 = vpack.c.b16 %v1049, %v1048
    %v1420 = vpack.c.b16 %v1051, %v1050
    %v1421 = vpack.c.b16 %v1053, %v1052
    %v1422 = vpack.c.b16 %v1055, %v1054
    %v1423 = vpack.c.b16 %v1057, %v1056
    %v1424 = vpack.c.b16 %v1059, %v1058
    %v1425 = vpack.c.b16 %v1061, %v1060
    %v1426 = vpack.c.b16 %v1063, %v1062
    %v1427 = vpack.c.b16 %v1065, %v1064
    %v1428 = vpack.c.b16 %v1067, %v1066
    %v1429 = vpack.c.b16 %v1069, %v1068
    %v1430 = vpack.c.b16 %v1071, %v1070
    %v1431 = vpack.c.b16 %v1073, %v1072
    %v1432 = vpack.c.b16 %v1075, %v1074
    %v1433 = vpack.c.b16 %v1077, %v1076
    %v1434 = vpack.c.b16 %v1079, %v1078
    %v1435 = vpack.c.b16 %v1081, %v1080
    %v1436 = vpack.c.b16 %v1083, %v1082
    %v1437 = vpack.c.b16 %v1085, %v1084
    %v1438 = vpack.c.b16 %v1087, %v1086
    %v1439 = vpack.c.b16 %v1089, %v1088
    %v1440 = vpack.c.b16 %v1091, %v1090
    %v1441 = vpack.c.b16 %v1093, %v1092
    %v1442 = vpack.c.b16 %v1095, %v1094
    %v1443 = vpack.c.b16 %v1097, %v1096
    %v1444 = vpack.c.b16 %v1099, %v1098
    %v1445 = vpack.c.b16 %v1101, %v1100
    %v1446 = vpack.c.b16 %v1103, %v1102
    %v1447 = vpack.c.b16 %v1105, %v1104
    %v1448 = vpack.c.b16 %v1107, %v1106
    %v1449 = vpack.c.b16 %v1109, %v1108
    %v1450 = vpack.c.b16 %v1111, %v1110
    %v1451 = vpack.c.b16 %v1113, %v1112
    %v1452 = vpack.c.b16 %v1115, %v1114
    %v1453 = vpack.c.b16 %v1117, %v1116
    %v1454 = vpack.c.b16 %v1119, %v1118
    %v1455 = vpack.c.b16 %v1121, %v1120
    %v1456 = vpack.c.b16 %v1123, %v1122
    %v1457 = vpack.c.b16 %v1125, %v1124
    %v1458 = vpack.c.b16 %v1127, %v1126
    %v1459 = vpack.c.b16 %v1129, %v1128
    %v1460 = vpack.c.b16 %v1131, %v1130
    %v1461 = vpack.c.b16 %v1133, %v1132
    %v1462 = vpack.c.b16 %v1135, %v1134
    %v1463 = vpack.c.b16 %v1137, %v1136
    %v1464 = vpack.c.b16 %v1139, %v1138
    %v1465 = vpack.c.b16 %v1141, %v1140
    %v1466 = vpack.c.b16 %v1143, %v1142
    %v1467 = vpack.c.b16 %v1145, %v1144
    %v1468 = vpack.c.b16 %v1147, %v1146
    %v1469 = vpack.c.b16 %v1149, %v1148
    %v1470 = vpack.c.b16 %v1151, %v1150
    %v1471 = vpack.c.b16 %v1153, %v1152
    %v1472 = vpack.c.b16 %v1155, %v1154
    %v1473 = vpack.c.b16 %v1157, %v1156
    %v1474 = vpack.c.b16 %v1159, %v1158
    %v1475 = vpack.c.b16 %v1161, %v1160
    %v1476 = vpack.c.b16 %v1163, %v1162
    %v1477 = vpack.c.b16 %v1165, %v1164
    %v1478 = vpack.c.b16 %v1167, %v1166
    %v1479 = vpack.c.b16 %v1169, %v1168
    %v1480 = vpack.c.b16 %v1171, %v1170
    %v1481 = vpack.c.b16 %v1173, %v1172
    %v1482 = vpack.c.b16 %v1175, %v1174
    %v1483 = vpack.c.b16 %v1177, %v1176
    %v1484 = vpack.c.b16 %v1179, %v1178
    %v1485 = vpack.c.b16 %v1181, %v1180
    %v1486 = vpack.c.b16 %v1183, %v1182
    %v1487 = vpack.c.b16 %v1185, %v1184
    %v1488 = vpack.c.b16 %v1187, %v1186
    %v1489 = vpack.c.b16 %v1189, %v1188
    %v1490 = vpack.c.b16 %v1191, %v1190
    %v1491 = vpack.c.b16 %v1193, %v1192
    %v1492 = vpack.c.b16 %v1195, %v1194
    %v1493 = vpack.c.b16 %v1197, %v1196
    %v1494 = vpack.c.b16 %v1199, %v1198
    %v1495 = vpack.c.b16 %v1201, %v1200
    %v1496 = vpack.c.b16 %v1203, %v1202
    %v1497 = vpack.c.b16 %v1205, %v1204
    %v1498 = vpack.c.b16 %v1207, %v1206
    %v1499 = vpack.c.b16 %v1209, %v1208
    %v1500 = vpack.c.b16 %v1211, %v1210
    %v1501 = vpack.c.b16 %v1213, %v1212
    %v1502 = vpack.c.b16 %v1215, %v1214
    %v1503 = vpack.c.b16 %v1217, %v1216
    %v1504 = vpack.c.b16 %v1219, %v1218
    %v1505 = vpack.c.b16 %v1221, %v1220
    %v1506 = vpack.c.b16 %v1223, %v1222
    %v1507 = vpack.c.b16 %v1225, %v1224
    %v1508 = vpack.c.b16 %v1227, %v1226
    %v1509 = vpack.c.b16 %v1229, %v1228
    %v1510 = vpack.c.b16 %v1231, %v1230
    %v1511 = vpack.c.b16 %v1233, %v1232
    %v1512 = vpack.c.b16 %v1235, %v1234
    %v1513 = vpack.c.b16 %v1237, %v1236
    %v1514 = vpack.c.b16 %v1239, %v1238
    %v1515 = vpack.c.b16 %v1241, %v1240
    %v1516 = vpack.c.b16 %v1243, %v1242
    %v1517 = vpack.c.b16 %v1245, %v1244
    %v1518 = vpack.c.b16 %v1247, %v1246
    %v1519 = vpack.c.b16 %v1249, %v1248
    %v1520 = vpack.c.b16 %v1251, %v1250
    %v1521 = vpack.c.b16 %v1253, %v1252
    %v1522 = vpack.c.b16 %v1255, %v1254
    %v1523 = vpack.c.b16 %v1257, %v1256
    %v1524 = vpack.c.b16 %v1259, %v1258
    %v1525 = vpack.c.b16 %v1261, %v1260
    %v1526 = vpack.c.b16 %v1263, %v1262
    %v1527 = vpack.c.b16 %v1265, %v1264
    %v1528 = vpack.c.b16 %v1267, %v1266
    %v1529 = vpack.c.b16 %v1269, %v1268
    %v1530 = vpack.c.b16 %v1271, %v1270
    %v1531 = vpack.c.b16 %v1273, %v1272
    %v1532 = vpack.c.b16 %v1275, %v1274
    %v1533 = vpack.c.b16 %v1277, %v1276
    %v1534 = vpack.c.b16 %v1279, %v1278
    %v1535 = vpack.c.b16 %v1281, %v1280
    %v1536 = vpack.c.b16 %v1283, %v1282
    %v1537 = vpack.c.b16 %v1285, %v1284
    %v1538 = vpack.c.b16 %v1287, %v1286
    %v1539 = vpack.c.b16 %v1289, %v1288
    %v1540 = vpack.c.b16 %v1291, %v1290
    %v1541 = vpack.c.b16 %v1293, %v1292
    %v1542 = vpack.c.b16 %v1295, %v1294
    %v1543 = vpack.c.b16 %v1297, %v1296
    %v1544 = vpack.c.b16 %v1299, %v1298
    %v1545 = vpack.c.b16 %v1301, %v1300
    %v1546 = vpack.c.b16 %v1303, %v1302
    %v1547 = vpack.c.b16 %v1305, %v1304
    %v1548 = vpack.c.b16 %v1307, %v1306
    %v1549 = vpack.c.b16 %v1309, %v1308
    %v1550 = vpack.c.b16 %v1311, %v1310
    %v1551 = vpack.c.b16 %v1313, %v1312
    %v1552 = vpack.c.b16 %v1315, %v1314
    %v1553 = vpack.c.b16 %v1317, %v1316
    %v1554 = vpack.c.b16 %v1319, %v1318
    %v1555 = vpack.c.b16 %v1321, %v1320
    %v1556 = vpack.c.b16 %v1323, %v1322
    %v1557 = vpack.c.b16 %v1325, %v1324
    %v1558 = vpack.c.b16 %v1327, %v1326
    %v1559 = vpack.c.b16 %v1329, %v1328
    %v1560 = vpack.c.b16 %v1331, %v1330
    %v1561 = vpack.c.b16 %v1333, %v1332
    %v1562 = vpack.c.b16 %v1335, %v1334
    %v1563 = vpack.c.b16 %v1337, %v1336
    %v1564 = vpack.c.b16 %v1339, %v1338
    %v1565 = vpack.c.b16 %v1341, %v1340
    %v1566 = vpack.c.b16 %v1343, %v1342
    %v1567 = vpack.c.b16 %v1345, %v1344
    %v1568 = vpack.c.b16 %v1347, %v1346
    %v1569 = vpack.c.b16 %v1349, %v1348
    %v1570 = vpack.c.b16 %v1351, %v1350
    %v1571 = vpack.c.b16 %v1353, %v1352
    %v1572 = vpack.c.b16 %v1355, %v1354
    %v1573 = vpack.c.b16 %v1357, %v1356
    %v1574 = vpack.c.b16 %v1359, %v1358
    %v1575 = vpack.c.b16 %v1361, %v1360
    %v1576 = vpack.c.b16 %v1363, %v1362
    %v1577 = vpack.c.b16 %v1365, %v1364
    %v1578 = vpack.c.b16 %v1367, %v1366
    %v1579 = vpack.c.b16 %v1369, %v1368
    %v1580 = vpack.c.b16 %v1371, %v1370
    %v1581 = vpack.c.b16 %v1373, %v1372
    %v1582 = vpack.c.b16 %v1375, %v1374
    %v1583 = vpack.c.b16 %v1377, %v1376
    %v1584 = vpack.c.b16 %v1379, %v1378
    %v1585 = vpack.c.b16 %v1381, %v1380
    %v1586 = vpack.c.b16 %v1383, %v1382
    %v1587 = vpack.c.b16 %v1385, %v1384
    %v1588 = vpack.c.b16 %v1387, %v1386
    %v1589 = vpack.c.b16 %v1389, %v1388
    %v1590 = vpack.c.b16 %v1391, %v1390
    %v1591 = vpack.c.b16 %v1393, %v1392
    %v1592 = vpack.c.b16 %v1395, %v1394
    %v1593 = vpack.c.b16 %v1397, %v1396
    %vm1790 = vcmask 523264
    %v1792 = vsel %vm1790, %v589, 0
    %1794 = vmatprep.subr.bf16.mxu0 0
    %1795 = vmatpush1.bf16.msra.mxu0 %v1398
    %1796 = vmatprep.subr.bf16.mxu0 0
    %1797 = vmatpush1.bf16.msra.mxu0 %v1399
    %1798 = vmatprep.subr.bf16.mxu0 0
    %1799 = vmatpush1.bf16.msra.mxu0 %v1400
    %1800 = vmatprep.subr.bf16.mxu0 0
    %1801 = vmatpush1.bf16.msra.mxu0 %v1401
    %1802 = vmatprep.subr.bf16.mxu0 0
    %1803 = vmatpush1.bf16.msra.mxu0 %v1402
    %1804 = vmatprep.subr.bf16.mxu0 0
    %1805 = vmatpush1.bf16.msra.mxu0 %v1403
    %1806 = vmatprep.subr.bf16.mxu0 0
    %1807 = vmatpush1.bf16.msra.mxu0 %v1404
    %1808 = vmatprep.subr.bf16.mxu0 0
    %1809 = vmatpush1.bf16.msra.mxu0 %v1405
    %1810 = vmatprep.subr.bf16.mxu0 0
    %1811 = vmatpush1.bf16.msra.mxu0 %v1406
    %1812 = vmatprep.subr.bf16.mxu0 0
    %1813 = vmatpush1.bf16.msra.mxu0 %v1407
    %1814 = vmatprep.subr.bf16.mxu0 0
    %1815 = vmatpush1.bf16.msra.mxu0 %v1408
    %1816 = vmatprep.subr.bf16.mxu0 0
    %1817 = vmatpush1.bf16.msra.mxu0 %v1409
    %1818 = vmatprep.subr.bf16.mxu0 0
    %1819 = vmatpush1.bf16.msra.mxu0 %v1410
    %1820 = vmatprep.subr.bf16.mxu0 0
    %1821 = vmatpush1.bf16.msra.mxu0 %v1411
    %1822 = vmatprep.subr.bf16.mxu0 0
    %1823 = vmatpush1.bf16.msra.mxu0 %v1412
    %1824 = vmatprep.subr.bf16.mxu0 0
    %1825 = vmatpush1.bf16.msra.mxu0 %v1413
    %1826 = vmatprep.mubr.bf16.mxu0 %v466
    %1827 = vmatmul.mubr.bf16.gmra.mrb[0].mxu0 %v452
    %v1828 = vpop.f32.mrb[0].mxu0
    %v1829 = vadd.f32 %v423, %v1828
    %v1830 = vpop.f32.mrb[0].mxu0
    %v1831 = vpop.f32.mrb[0].mxu0
    %v1832 = vpop.f32.mrb[0].mxu0
    %1833 = vdwg.mxu0
    %1834 = vmatprep.subr.bf16.mxu0 0
    %1835 = vmatpush1.bf16.msra.mxu0 %v1414
    %1836 = vmatprep.subr.bf16.mxu0 0
    %1837 = vmatpush1.bf16.msra.mxu0 %v1415
    %1838 = vmatprep.subr.bf16.mxu0 0
    %1839 = vmatpush1.bf16.msra.mxu0 %v1416
    %1840 = vmatprep.subr.bf16.mxu0 0
    %1841 = vmatpush1.bf16.msra.mxu0 %v1417
    %1842 = vmatprep.subr.bf16.mxu0 0
    %1843 = vmatpush1.bf16.msra.mxu0 %v1418
    %1844 = vmatprep.subr.bf16.mxu0 0
    %1845 = vmatpush1.bf16.msra.mxu0 %v1419
    %1846 = vmatprep.subr.bf16.mxu0 0
    %1847 = vmatpush1.bf16.msra.mxu0 %v1420
    %1848 = vmatprep.subr.bf16.mxu0 0
    %1849 = vmatpush1.bf16.msra.mxu0 %v1421
    %1850 = vmatprep.subr.bf16.mxu0 0
    %1851 = vmatpush1.bf16.msra.mxu0 %v1422
    %1852 = vmatprep.subr.bf16.mxu0 0
    %1853 = vmatpush1.bf16.msra.mxu0 %v1423
    %1854 = vmatprep.subr.bf16.mxu0 0
    %1855 = vmatpush1.bf16.msra.mxu0 %v1424
    %1856 = vmatprep.subr.bf16.mxu0 0
    %1857 = vmatpush1.bf16.msra.mxu0 %v1425
    %1858 = vmatprep.subr.bf16.mxu0 0
    %1859 = vmatpush1.bf16.msra.mxu0 %v1426
    %1860 = vmatprep.subr.bf16.mxu0 0
    %1861 = vmatpush1.bf16.msra.mxu0 %v1427
    %1862 = vmatprep.subr.bf16.mxu0 0
    %1863 = vmatpush1.bf16.msra.mxu0 %v1428
    %1864 = vmatprep.subr.bf16.mxu0 0
    %1865 = vmatpush1.bf16.msra.mxu0 %v1429
    %1866 = vmatprep.mubr.bf16.mxu0 %v476
    %1867 = vmatmul.mubr.bf16.gmra.mrb[0].mxu0 %v474
    %v1868 = vpop.f32.mrb[0].mxu0
    %v1869 = vadd.f32 %v1829, %v1868
    %v1870 = vpop.f32.mrb[0].mxu0
    %v1871 = vpop.f32.mrb[0].mxu0
    %v1872 = vpop.f32.mrb[0].mxu0
    %1873 = vdwg.mxu0
    %1874 = vmatprep.subr.bf16.mxu0 0
    %1875 = vmatpush1.bf16.msra.mxu0 %v1430
    %1876 = vmatprep.subr.bf16.mxu0 0
    %1877 = vmatpush1.bf16.msra.mxu0 %v1431
    %1878 = vmatprep.subr.bf16.mxu0 0
    %1879 = vmatpush1.bf16.msra.mxu0 %v1432
    %1880 = vmatprep.subr.bf16.mxu0 0
    %1881 = vmatpush1.bf16.msra.mxu0 %v1433
    %1882 = vmatprep.subr.bf16.mxu0 0
    %1883 = vmatpush1.bf16.msra.mxu0 %v1434
    %1884 = vmatprep.subr.bf16.mxu0 0
    %1885 = vmatpush1.bf16.msra.mxu0 %v1435
    %1886 = vmatprep.subr.bf16.mxu0 0
    %1887 = vmatpush1.bf16.msra.mxu0 %v1436
    %1888 = vmatprep.subr.bf16.mxu0 0
    %1889 = vmatpush1.bf16.msra.mxu0 %v1437
    %1890 = vmatprep.subr.bf16.mxu0 0
    %1891 = vmatpush1.bf16.msra.mxu0 %v1438
    %1892 = vmatprep.subr.bf16.mxu0 0
    %1893 = vmatpush1.bf16.msra.mxu0 %v1439
    %1894 = vmatprep.subr.bf16.mxu0 0
    %1895 = vmatpush1.bf16.msra.mxu0 %v1440
    %1896 = vmatprep.subr.bf16.mxu0 0
    %1897 = vmatpush1.bf16.msra.mxu0 %v1441
    %1898 = vmatprep.subr.bf16.mxu0 0
    %1899 = vmatpush1.bf16.msra.mxu0 %v1442
    %1900 = vmatprep.subr.bf16.mxu0 0
    %1901 = vmatpush1.bf16.msra.mxu0 %v1443
    %1902 = vmatprep.subr.bf16.mxu0 0
    %1903 = vmatpush1.bf16.msra.mxu0 %v1444
    %1904 = vmatprep.subr.bf16.mxu0 0
    %1905 = vmatpush1.bf16.msra.mxu0 %v1445
    %1906 = vmatprep.mubr.bf16.mxu0 %v473
    %1907 = vmatmul.mubr.bf16.gmra.mrb[0].mxu0 %v459
    %v1908 = vpop.f32.mrb[0].mxu0
    %v1909 = vadd.f32 %v1869, %v1908
    %v1910 = vpop.f32.mrb[0].mxu0
    %v1911 = vpop.f32.mrb[0].mxu0
    %v1912 = vpop.f32.mrb[0].mxu0
    %1913 = vdwg.mxu0
    %1914 = vmatprep.subr.bf16.mxu0 0
    %1915 = vmatpush1.bf16.msra.mxu0 %v1446
    %1916 = vmatprep.subr.bf16.mxu0 0
    %1917 = vmatpush1.bf16.msra.mxu0 %v1447
    %1918 = vmatprep.subr.bf16.mxu0 0
    %1919 = vmatpush1.bf16.msra.mxu0 %v1448
    %1920 = vmatprep.subr.bf16.mxu0 0
    %1921 = vmatpush1.bf16.msra.mxu0 %v1449
    %1922 = vmatprep.subr.bf16.mxu0 0
    %1923 = vmatpush1.bf16.msra.mxu0 %v1450
    %1924 = vmatprep.subr.bf16.mxu0 0
    %1925 = vmatpush1.bf16.msra.mxu0 %v1451
    %1926 = vmatprep.subr.bf16.mxu0 0
    %1927 = vmatpush1.bf16.msra.mxu0 %v1452
    %1928 = vmatprep.subr.bf16.mxu0 0
    %1929 = vmatpush1.bf16.msra.mxu0 %v1453
    %1930 = vmatprep.subr.bf16.mxu0 0
    %1931 = vmatpush1.bf16.msra.mxu0 %v1454
    %1932 = vmatprep.subr.bf16.mxu0 0
    %1933 = vmatpush1.bf16.msra.mxu0 %v1455
    %1934 = vmatprep.subr.bf16.mxu0 0
    %1935 = vmatpush1.bf16.msra.mxu0 %v1456
    %1936 = vmatprep.subr.bf16.mxu0 0
    %1937 = vmatpush1.bf16.msra.mxu0 %v1457
    %1938 = vmatprep.subr.bf16.mxu0 0
    %1939 = vmatpush1.bf16.msra.mxu0 %v1458
    %1940 = vmatprep.subr.bf16.mxu0 0
    %1941 = vmatpush1.bf16.msra.mxu0 %v1459
    %1942 = vmatprep.subr.bf16.mxu0 0
    %1943 = vmatpush1.bf16.msra.mxu0 %v1460
    %1944 = vmatprep.subr.bf16.mxu0 0
    %1945 = vmatpush1.bf16.msra.mxu0 %v1461
    %1946 = vmatprep.mubr.bf16.mxu0 %v477
    %1947 = vmatmul.mubr.bf16.gmra.mrb[0].mxu0 %v475
    %v1948 = vpop.f32.mrb[0].mxu0
    %v1949 = vadd.f32 %v1909, %v1948
    %v1950 = vpop.f32.mrb[0].mxu0
    %v1951 = vpop.f32.mrb[0].mxu0
    %v1952 = vpop.f32.mrb[0].mxu0
    %1953 = vdwg.mxu0
    %1954 = vmatprep.subr.bf16.mxu0 0
    %1955 = vmatpush1.bf16.msra.mxu0 %v1462
    %1956 = vmatprep.subr.bf16.mxu0 0
    %1957 = vmatpush1.bf16.msra.mxu0 %v1463
    %1958 = vmatprep.subr.bf16.mxu0 0
    %1959 = vmatpush1.bf16.msra.mxu0 %v1464
    %1960 = vmatprep.subr.bf16.mxu0 0
    %1961 = vmatpush1.bf16.msra.mxu0 %v1465
    %1962 = vmatprep.subr.bf16.mxu0 0
    %1963 = vmatpush1.bf16.msra.mxu0 %v1466
    %1964 = vmatprep.subr.bf16.mxu0 0
    %1965 = vmatpush1.bf16.msra.mxu0 %v1467
    %1966 = vmatprep.subr.bf16.mxu0 0
    %1967 = vmatpush1.bf16.msra.mxu0 %v1468
    %1968 = vmatprep.subr.bf16.mxu0 0
    %1969 = vmatpush1.bf16.msra.mxu0 %v1469
    %1970 = vmatprep.subr.bf16.mxu0 0
    %1971 = vmatpush1.bf16.msra.mxu0 %v1470
    %1972 = vmatprep.subr.bf16.mxu0 0
    %1973 = vmatpush1.bf16.msra.mxu0 %v1471
    %1974 = vmatprep.subr.bf16.mxu0 0
    %1975 = vmatpush1.bf16.msra.mxu0 %v1472
    %1976 = vmatprep.subr.bf16.mxu0 0
    %1977 = vmatpush1.bf16.msra.mxu0 %v1473
    %1978 = vmatprep.subr.bf16.mxu0 0
    %1979 = vmatpush1.bf16.msra.mxu0 %v1474
    %1980 = vmatprep.subr.bf16.mxu0 0
    %1981 = vmatpush1.bf16.msra.mxu0 %v1475
    %1982 = vmatprep.subr.bf16.mxu0 0
    %1983 = vmatpush1.bf16.msra.mxu0 %v1476
    %1984 = vmatprep.subr.bf16.mxu0 0
    %1985 = vmatpush1.bf16.msra.mxu0 %v1477
    %1986 = vmatprep.mubr.bf16.mxu0 %v515
    %1987 = vmatmul.mubr.bf16.gmra.mrb[0].mxu0 %v501
    %v1988 = vpop.f32.mrb[0].mxu0
    %v1989 = vadd.f32 %v1949, %v1988
    %v1990 = vpop.f32.mrb[0].mxu0
    %v1991 = vpop.f32.mrb[0].mxu0
    %v1992 = vpop.f32.mrb[0].mxu0
    %1993 = vdwg.mxu0
    %1994 = vmatprep.subr.bf16.mxu0 0
    %1995 = vmatpush1.bf16.msra.mxu0 %v1478
    %1996 = vmatprep.subr.bf16.mxu0 0
    %1997 = vmatpush1.bf16.msra.mxu0 %v1479
    %1998 = vmatprep.subr.bf16.mxu0 0
    %1999 = vmatpush1.bf16.msra.mxu0 %v1480
    %2000 = vmatprep.subr.bf16.mxu0 0
    %2001 = vmatpush1.bf16.msra.mxu0 %v1481
    %2002 = vmatprep.subr.bf16.mxu0 0
    %2003 = vmatpush1.bf16.msra.mxu0 %v1482
    %2004 = vmatprep.subr.bf16.mxu0 0
    %2005 = vmatpush1.bf16.msra.mxu0 %v1483
    %2006 = vmatprep.subr.bf16.mxu0 0
    %2007 = vmatpush1.bf16.msra.mxu0 %v1484
    %2008 = vmatprep.subr.bf16.mxu0 0
    %2009 = vmatpush1.bf16.msra.mxu0 %v1485
    %2010 = vmatprep.subr.bf16.mxu0 0
    %2011 = vmatpush1.bf16.msra.mxu0 %v1486
    %2012 = vmatprep.subr.bf16.mxu0 0
    %2013 = vmatpush1.bf16.msra.mxu0 %v1487
    %2014 = vmatprep.subr.bf16.mxu0 0
    %2015 = vmatpush1.bf16.msra.mxu0 %v1488
    %2016 = vmatprep.subr.bf16.mxu0 0
    %2017 = vmatpush1.bf16.msra.mxu0 %v1489
    %2018 = vmatprep.subr.bf16.mxu0 0
    %2019 = vmatpush1.bf16.msra.mxu0 %v1490
    %2020 = vmatprep.subr.bf16.mxu0 0
    %2021 = vmatpush1.bf16.msra.mxu0 %v1491
    %2022 = vmatprep.subr.bf16.mxu0 0
    %2023 = vmatpush1.bf16.msra.mxu0 %v1492
    %2024 = vmatprep.subr.bf16.mxu0 0
    %2025 = vmatpush1.bf16.msra.mxu0 %v1493
    %2026 = vmatprep.mubr.bf16.mxu0 %v525
    %2027 = vmatmul.mubr.bf16.gmra.mrb[0].mxu0 %v523
    %v2028 = vpop.f32.mrb[0].mxu0
    %v2029 = vadd.f32 %v1989, %v2028
    %v2030 = vpop.f32.mrb[0].mxu0
    %v2031 = vpop.f32.mrb[0].mxu0
    %v2032 = vpop.f32.mrb[0].mxu0
    %2033 = vdwg.mxu0
    %2034 = vmatprep.subr.bf16.mxu0 0
    %2035 = vmatpush1.bf16.msra.mxu0 %v1494
    %2036 = vmatprep.subr.bf16.mxu0 0
    %2037 = vmatpush1.bf16.msra.mxu0 %v1495
    %2038 = vmatprep.subr.bf16.mxu0 0
    %2039 = vmatpush1.bf16.msra.mxu0 %v1496
    %2040 = vmatprep.subr.bf16.mxu0 0
    %2041 = vmatpush1.bf16.msra.mxu0 %v1497
    %2042 = vmatprep.subr.bf16.mxu0 0
    %2043 = vmatpush1.bf16.msra.mxu0 %v1498
    %2044 = vmatprep.subr.bf16.mxu0 0
    %2045 = vmatpush1.bf16.msra.mxu0 %v1499
    %2046 = vmatprep.subr.bf16.mxu0 0
    %2047 = vmatpush1.bf16.msra.mxu0 %v1500
    %2048 = vmatprep.subr.bf16.mxu0 0
    %2049 = vmatpush1.bf16.msra.mxu0 %v1501
    %2050 = vmatprep.subr.bf16.mxu0 0
    %2051 = vmatpush1.bf16.msra.mxu0 %v1502
    %2052 = vmatprep.subr.bf16.mxu0 0
    %2053 = vmatpush1.bf16.msra.mxu0 %v1503
    %2054 = vmatprep.subr.bf16.mxu0 0
    %2055 = vmatpush1.bf16.msra.mxu0 %v1504
    %2056 = vmatprep.subr.bf16.mxu0 0
    %2057 = vmatpush1.bf16.msra.mxu0 %v1505
    %2058 = vmatprep.subr.bf16.mxu0 0
    %2059 = vmatpush1.bf16.msra.mxu0 %v1506
    %2060 = vmatprep.subr.bf16.mxu0 0
    %2061 = vmatpush1.bf16.msra.mxu0 %v1507
    %2062 = vmatprep.subr.bf16.mxu0 0
    %2063 = vmatpush1.bf16.msra.mxu0 %v1508
    %2064 = vmatprep.subr.bf16.mxu0 0
    %2065 = vmatpush1.bf16.msra.mxu0 %v1509
    %2066 = vmatprep.mubr.bf16.mxu0 %v522
    %2067 = vmatmul.mubr.bf16.gmra.mrb[0].mxu0 %v508
    %v2068 = vpop.f32.mrb[0].mxu0
    %v2069 = vadd.f32 %v2029, %v2068
    %v2070 = vpop.f32.mrb[0].mxu0
    %v2071 = vpop.f32.mrb[0].mxu0
    %v2072 = vpop.f32.mrb[0].mxu0
    %2073 = vdwg.mxu0
    %2074 = vmatprep.subr.bf16.mxu0 0
    %2075 = vmatpush1.bf16.msra.mxu0 %v1510
    %2076 = vmatprep.subr.bf16.mxu0 0
    %2077 = vmatpush1.bf16.msra.mxu0 %v1511
    %2078 = vmatprep.subr.bf16.mxu0 0
    %2079 = vmatpush1.bf16.msra.mxu0 %v1512
    %2080 = vmatprep.subr.bf16.mxu0 0
    %2081 = vmatpush1.bf16.msra.mxu0 %v1513
    %2082 = vmatprep.subr.bf16.mxu0 0
    %2083 = vmatpush1.bf16.msra.mxu0 %v1514
    %2084 = vmatprep.subr.bf16.mxu0 0
    %2085 = vmatpush1.bf16.msra.mxu0 %v1515
    %2086 = vmatprep.subr.bf16.mxu0 0
    %2087 = vmatpush1.bf16.msra.mxu0 %v1516
    %2088 = vmatprep.subr.bf16.mxu0 0
    %2089 = vmatpush1.bf16.msra.mxu0 %v1517
    %2090 = vmatprep.subr.bf16.mxu0 0
    %2091 = vmatpush1.bf16.msra.mxu0 %v1518
    %2092 = vmatprep.subr.bf16.mxu0 0
    %2093 = vmatpush1.bf16.msra.mxu0 %v1519
    %2094 = vmatprep.subr.bf16.mxu0 0
    %2095 = vmatpush1.bf16.msra.mxu0 %v1520
    %2096 = vmatprep.subr.bf16.mxu0 0
    %2097 = vmatpush1.bf16.msra.mxu0 %v1521
    %2098 = vmatprep.subr.bf16.mxu0 0
    %2099 = vmatpush1.bf16.msra.mxu0 %v1522
    %2100 = vmatprep.subr.bf16.mxu0 0
    %2101 = vmatpush1.bf16.msra.mxu0 %v1523
    %2102 = vmatprep.subr.bf16.mxu0 0
    %2103 = vmatpush1.bf16.msra.mxu0 %v1524
    %2104 = vmatprep.subr.bf16.mxu0 0
    %2105 = vmatpush1.bf16.msra.mxu0 %v1525
    %2106 = vmatprep.mubr.bf16.mxu0 %v526
    %2107 = vmatmul.mubr.bf16.gmra.mrb[0].mxu0 %v524
    %v2108 = vpop.f32.mrb[0].mxu0
    %v2109 = vadd.f32 %v2069, %v2108
    %v2110 = vpop.f32.mrb[0].mxu0
    %v2111 = vpop.f32.mrb[0].mxu0
    %v2112 = vpop.f32.mrb[0].mxu0
    %2113 = vdwg.mxu0
    %2114 = vmatprep.subr.bf16.mxu0 0
    %2115 = vmatpush1.bf16.msra.mxu0 %v1526
    %2116 = vmatprep.subr.bf16.mxu0 0
    %2117 = vmatpush1.bf16.msra.mxu0 %v1527
    %2118 = vmatprep.subr.bf16.mxu0 0
    %2119 = vmatpush1.bf16.msra.mxu0 %v1528
    %2120 = vmatprep.subr.bf16.mxu0 0
    %2121 = vmatpush1.bf16.msra.mxu0 %v1529
    %2122 = vmatprep.subr.bf16.mxu0 0
    %2123 = vmatpush1.bf16.msra.mxu0 %v1530
    %2124 = vmatprep.subr.bf16.mxu0 0
    %2125 = vmatpush1.bf16.msra.mxu0 %v1531
    %2126 = vmatprep.subr.bf16.mxu0 0
    %2127 = vmatpush1.bf16.msra.mxu0 %v1532
    %2128 = vmatprep.subr.bf16.mxu0 0
    %2129 = vmatpush1.bf16.msra.mxu0 %v1533
    %2130 = vmatprep.subr.bf16.mxu0 0
    %2131 = vmatpush1.bf16.msra.mxu0 %v1534
    %2132 = vmatprep.subr.bf16.mxu0 0
    %2133 = vmatpush1.bf16.msra.mxu0 %v1535
    %2134 = vmatprep.subr.bf16.mxu0 0
    %2135 = vmatpush1.bf16.msra.mxu0 %v1536
    %2136 = vmatprep.subr.bf16.mxu0 0
    %2137 = vmatpush1.bf16.msra.mxu0 %v1537
    %2138 = vmatprep.subr.bf16.mxu0 0
    %2139 = vmatpush1.bf16.msra.mxu0 %v1538
    %2140 = vmatprep.subr.bf16.mxu0 0
    %2141 = vmatpush1.bf16.msra.mxu0 %v1539
    %2142 = vmatprep.subr.bf16.mxu0 0
    %2143 = vmatpush1.bf16.msra.mxu0 %v1540
    %2144 = vmatprep.subr.bf16.mxu0 0
    %2145 = vmatpush1.bf16.msra.mxu0 %v1541
    %2146 = vmatprep.mubr.bf16.mxu0 %v564
    %2147 = vmatmul.mubr.bf16.gmra.mrb[0].mxu0 %v550
    %v2148 = vpop.f32.mrb[0].mxu0
    %v2149 = vadd.f32 %v2109, %v2148
    %v2150 = vpop.f32.mrb[0].mxu0
    %v2151 = vpop.f32.mrb[0].mxu0
    %v2152 = vpop.f32.mrb[0].mxu0
    %2153 = vdwg.mxu0
    %2154 = vmatprep.subr.bf16.mxu0 0
    %2155 = vmatpush1.bf16.msra.mxu0 %v1542
    %2156 = vmatprep.subr.bf16.mxu0 0
    %2157 = vmatpush1.bf16.msra.mxu0 %v1543
    %2158 = vmatprep.subr.bf16.mxu0 0
    %2159 = vmatpush1.bf16.msra.mxu0 %v1544
    %2160 = vmatprep.subr.bf16.mxu0 0
    %2161 = vmatpush1.bf16.msra.mxu0 %v1545
    %2162 = vmatprep.subr.bf16.mxu0 0
    %2163 = vmatpush1.bf16.msra.mxu0 %v1546
    %2164 = vmatprep.subr.bf16.mxu0 0
    %2165 = vmatpush1.bf16.msra.mxu0 %v1547
    %2166 = vmatprep.subr.bf16.mxu0 0
    %2167 = vmatpush1.bf16.msra.mxu0 %v1548
    %2168 = vmatprep.subr.bf16.mxu0 0
    %2169 = vmatpush1.bf16.msra.mxu0 %v1549
    %2170 = vmatprep.subr.bf16.mxu0 0
    %2171 = vmatpush1.bf16.msra.mxu0 %v1550
    %2172 = vmatprep.subr.bf16.mxu0 0
    %2173 = vmatpush1.bf16.msra.mxu0 %v1551
    %2174 = vmatprep.subr.bf16.mxu0 0
    %2175 = vmatpush1.bf16.msra.mxu0 %v1552
    %2176 = vmatprep.subr.bf16.mxu0 0
    %2177 = vmatpush1.bf16.msra.mxu0 %v1553
    %2178 = vmatprep.subr.bf16.mxu0 0
    %2179 = vmatpush1.bf16.msra.mxu0 %v1554
    %2180 = vmatprep.subr.bf16.mxu0 0
    %2181 = vmatpush1.bf16.msra.mxu0 %v1555
    %2182 = vmatprep.subr.bf16.mxu0 0
    %2183 = vmatpush1.bf16.msra.mxu0 %v1556
    %2184 = vmatprep.subr.bf16.mxu0 0
    %2185 = vmatpush1.bf16.msra.mxu0 %v1557
    %2186 = vmatprep.mubr.bf16.mxu0 %v574
    %2187 = vmatmul.mubr.bf16.gmra.mrb[0].mxu0 %v572
    %v2188 = vpop.f32.mrb[0].mxu0
    %v2189 = vadd.f32 %v2149, %v2188
    %v2190 = vpop.f32.mrb[0].mxu0
    %v2191 = vpop.f32.mrb[0].mxu0
    %v2192 = vpop.f32.mrb[0].mxu0
    %2193 = vdwg.mxu0
    %2194 = vmatprep.subr.bf16.mxu0 0
    %2195 = vmatpush1.bf16.msra.mxu0 %v1558
    %2196 = vmatprep.subr.bf16.mxu0 0
    %2197 = vmatpush1.bf16.msra.mxu0 %v1559
    %2198 = vmatprep.subr.bf16.mxu0 0
    %2199 = vmatpush1.bf16.msra.mxu0 %v1560
    %2200 = vmatprep.subr.bf16.mxu0 0
    %2201 = vmatpush1.bf16.msra.mxu0 %v1561
    %2202 = vmatprep.subr.bf16.mxu0 0
    %2203 = vmatpush1.bf16.msra.mxu0 %v1562
    %2204 = vmatprep.subr.bf16.mxu0 0
    %2205 = vmatpush1.bf16.msra.mxu0 %v1563
    %2206 = vmatprep.subr.bf16.mxu0 0
    %2207 = vmatpush1.bf16.msra.mxu0 %v1564
    %2208 = vmatprep.subr.bf16.mxu0 0
    %2209 = vmatpush1.bf16.msra.mxu0 %v1565
    %2210 = vmatprep.subr.bf16.mxu0 0
    %2211 = vmatpush1.bf16.msra.mxu0 %v1566
    %2212 = vmatprep.subr.bf16.mxu0 0
    %2213 = vmatpush1.bf16.msra.mxu0 %v1567
    %2214 = vmatprep.subr.bf16.mxu0 0
    %2215 = vmatpush1.bf16.msra.mxu0 %v1568
    %2216 = vmatprep.subr.bf16.mxu0 0
    %2217 = vmatpush1.bf16.msra.mxu0 %v1569
    %2218 = vmatprep.subr.bf16.mxu0 0
    %2219 = vmatpush1.bf16.msra.mxu0 %v1570
    %2220 = vmatprep.subr.bf16.mxu0 0
    %2221 = vmatpush1.bf16.msra.mxu0 %v1571
    %2222 = vmatprep.subr.bf16.mxu0 0
    %2223 = vmatpush1.bf16.msra.mxu0 %v1572
    %2224 = vmatprep.subr.bf16.mxu0 0
    %2225 = vmatpush1.bf16.msra.mxu0 %v1573
    %2226 = vmatprep.mubr.bf16.mxu0 %v571
    %2227 = vmatmul.mubr.bf16.gmra.mrb[0].mxu0 %v557
    %v2228 = vpop.f32.mrb[0].mxu0
    %v2229 = vadd.f32 %v2189, %v2228
    %v2230 = vpop.f32.mrb[0].mxu0
    %v2231 = vpop.f32.mrb[0].mxu0
    %v2232 = vpop.f32.mrb[0].mxu0
    %2233 = vdwg.mxu0
    %2234 = vmatprep.subr.bf16.mxu0 0
    %2235 = vmatpush1.bf16.msra.mxu0 %v1574
    %2236 = vmatprep.subr.bf16.mxu0 0
    %2237 = vmatpush1.bf16.msra.mxu0 %v1575
    %2238 = vmatprep.subr.bf16.mxu0 0
    %2239 = vmatpush1.bf16.msra.mxu0 %v1576
    %2240 = vmatprep.subr.bf16.mxu0 0
    %2241 = vmatpush1.bf16.msra.mxu0 %v1577
    %2242 = vmatprep.subr.bf16.mxu0 0
    %2243 = vmatpush1.bf16.msra.mxu0 %v1578
    %2244 = vmatprep.subr.bf16.mxu0 0
    %2245 = vmatpush1.bf16.msra.mxu0 %v1579
    %2246 = vmatprep.subr.bf16.mxu0 0
    %2247 = vmatpush1.bf16.msra.mxu0 %v1580
    %2248 = vmatprep.subr.bf16.mxu0 0
    %2249 = vmatpush1.bf16.msra.mxu0 %v1581
    %2250 = vmatprep.subr.bf16.mxu0 0
    %2251 = vmatpush1.bf16.msra.mxu0 %v1582
    %2252 = vmatprep.subr.bf16.mxu0 0
    %2253 = vmatpush1.bf16.msra.mxu0 %v1583
    %2254 = vmatprep.subr.bf16.mxu0 0
    %2255 = vmatpush1.bf16.msra.mxu0 %v1584
    %2256 = vmatprep.subr.bf16.mxu0 0
    %2257 = vmatpush1.bf16.msra.mxu0 %v1585
    %2258 = vmatprep.subr.bf16.mxu0 0
    %2259 = vmatpush1.bf16.msra.mxu0 %v1586
    %2260 = vmatprep.subr.bf16.mxu0 0
    %2261 = vmatpush1.bf16.msra.mxu0 %v1587
    %2262 = vmatprep.subr.bf16.mxu0 0
    %2263 = vmatpush1.bf16.msra.mxu0 %v1588
    %2264 = vmatprep.subr.bf16.mxu0 0
    %2265 = vmatpush1.bf16.msra.mxu0 %v1589
    %2266 = vmatprep.mubr.bf16.mxu0 %v575
    %2267 = vmatmul.mubr.bf16.gmra.mrb[0].mxu0 %v573
    %v2268 = vpop.f32.mrb[0].mxu0
    %v2269 = vadd.f32 %v2229, %v2268
    %v2270 = vpop.f32.mrb[0].mxu0
    %v2271 = vpop.f32.mrb[0].mxu0
    %v2272 = vpop.f32.mrb[0].mxu0
    %2273 = vdwg.mxu0
    %2274 = vmatprep.subr.bf16.mxu0 0
    %2275 = vmatpush1.bf16.msra.mxu0 %v1590
    %2276 = vmatprep.subr.bf16.mxu0 0
    %2277 = vmatpush1.bf16.msra.mxu0 %v1591
    %2278 = vmatprep.subr.bf16.mxu0 0
    %2279 = vmatpush1.bf16.msra.mxu0 %v1592
    %2280 = vmatprep.subr.bf16.mxu0 0
    %2281 = vmatpush1.bf16.msra.mxu0 %v1593
    %2282 = vmatprep.subr.bf16.mxu0 0
    %2283 = vmatpush1.bf16.msra.mxu0 0
    %2284 = vmatprep.subr.bf16.mxu0 0
    %2285 = vmatpush1.bf16.msra.mxu0 0
    %2286 = vmatprep.subr.bf16.mxu0 0
    %2287 = vmatpush1.bf16.msra.mxu0 0
    %2288 = vmatprep.subr.bf16.mxu0 0
    %2289 = vmatpush1.bf16.msra.mxu0 0
    %2290 = vmatprep.subr.bf16.mxu0 0
    %2291 = vmatpush1.bf16.msra.mxu0 0
    %2292 = vmatprep.subr.bf16.mxu0 0
    %2293 = vmatpush1.bf16.msra.mxu0 0
    %2294 = vmatprep.subr.bf16.mxu0 0
    %2295 = vmatpush1.bf16.msra.mxu0 0
    %2296 = vmatprep.subr.bf16.mxu0 0
    %2297 = vmatpush1.bf16.msra.mxu0 0
    %2298 = vmatprep.subr.bf16.mxu0 0
    %2299 = vmatpush1.bf16.msra.mxu0 0
    %2300 = vmatprep.subr.bf16.mxu0 0
    %2301 = vmatpush1.bf16.msra.mxu0 0
    %2302 = vmatprep.subr.bf16.mxu0 0
    %2303 = vmatpush1.bf16.msra.mxu0 0
    %2304 = vmatprep.subr.bf16.mxu0 0
    %2305 = vmatpush1.bf16.msra.mxu0 0
    %2306 = vmatprep.mubr.bf16.mxu0 0
    %2307 = vmatmul.mubr.bf16.gmra.mrb[0].mxu0 %v1792
    %v2308 = vpop.f32.mrb[0].mxu0
    %v2309 = vadd.f32 %v2269, %v2308
    %v2310 = vpop.f32.mrb[0].mxu0
    %v2311 = vpop.f32.mrb[0].mxu0
    %v2312 = vpop.f32.mrb[0].mxu0
    %2313 = vdwg.mxu0
    %v2314 = vmax.f32 %v2309, 0.0
    %v2315 = vld [vmem:[%s3] sm:$0xff]
    %v2316 = vld [vmem:[%s3 + $0x8] sm:$0xff]
    %v2317 = vld [vmem:[%s3 + $0x10] sm:$0xff]
    %v2318 = vld [vmem:[%s3 + $0x18] sm:$0xff]
    %v2319 = vld [vmem:[%s3 + $0x20] sm:$0xff]
    %v2320 = vld [vmem:[%s3 + $0x28] sm:$0xff]
    %v2321 = vld [vmem:[%s3 + $0x30] sm:$0xff]
    %v2322 = vld [vmem:[%s3 + $0x38] sm:$0xff]
    %v2323 = vld [vmem:[%s3 + $0x40] sm:$0xff]
    %v2324 = vld [vmem:[%s3 + $0x48] sm:$0xff]
    %v2325 = vld [vmem:[%s3 + $0x50] sm:$0xff]
    %v2326 = vld [vmem:[%s3 + $0x58] sm:$0xff]
    %v2327 = vld [vmem:[%s3 + $0x60] sm:$0xff]
    %v2328 = vld [vmem:[%s3 + $0x68] sm:$0xff]
    %v2329 = vld [vmem:[%s3 + $0x70] sm:$0xff]
    %v2330 = vld [vmem:[%s3 + $0x78] sm:$0xff]
    %v2331 = vld [vmem:[%s4] sm:$0x1]
    %v2333 = vlaneseq
    %v2334 = vshrl.u32 %v2333, 7
    %v2335 = vsub.s32 0, %v2334
    %v2336 = vrot.slane %v2331, %v2335
    %2338 = vmatprep.subr.mxu0 0.0
    %2339 = vmatpush1.msra.mxu0 %v2315
    %2340 = vmatprep.subr.mxu0 0.0
    %2341 = vmatpush1.msra.mxu0 %v2316
    %2342 = vmatprep.subr.mxu0 0.0
    %2343 = vmatpush1.msra.mxu0 %v2317
    %2344 = vmatprep.subr.mxu0 0.0
    %2345 = vmatpush1.msra.mxu0 %v2318
    %2346 = vmatprep.subr.mxu0 0.0
    %2347 = vmatpush1.msra.mxu0 %v2319
    %2348 = vmatprep.subr.mxu0 0.0
    %2349 = vmatpush1.msra.mxu0 %v2320
    %2350 = vmatprep.subr.mxu0 0.0
    %2351 = vmatpush1.msra.mxu0 %v2321
    %2352 = vmatprep.subr.mxu0 0.0
    %2353 = vmatpush1.msra.mxu0 %v2322
    %2354 = vmatprep.subr.mxu0 0.0
    %2355 = vmatpush1.msra.mxu0 %v2323
    %2356 = vmatprep.subr.mxu0 0.0
    %2357 = vmatpush1.msra.mxu0 %v2324
    %2358 = vmatprep.subr.mxu0 0.0
    %2359 = vmatpush1.msra.mxu0 %v2325
    %2360 = vmatprep.subr.mxu0 0.0
    %2361 = vmatpush1.msra.mxu0 %v2326
    %2362 = vmatprep.subr.mxu0 0.0
    %2363 = vmatpush1.msra.mxu0 %v2327
    %2364 = vmatprep.subr.mxu0 0.0
    %2365 = vmatpush1.msra.mxu0 %v2328
    %2366 = vmatprep.subr.mxu0 0.0
    %2367 = vmatpush1.msra.mxu0 %v2329
    %2368 = vmatprep.subr.mxu0 0.0
    %2369 = vmatpush1.msra.mxu0 %v2330
    %2370 = vmatprep.subr.mxu0 0.0
    %2371 = vmatpush1.msra.mxu0 0.0
    %2372 = vmatprep.subr.mxu0 0.0
    %2373 = vmatpush1.msra.mxu0 0.0
    %2374 = vmatprep.subr.mxu0 0.0
    %2375 = vmatpush1.msra.mxu0 0.0
    %2376 = vmatprep.subr.mxu0 0.0
    %2377 = vmatpush1.msra.mxu0 0.0
    %2378 = vmatprep.subr.mxu0 0.0
    %2379 = vmatpush1.msra.mxu0 0.0
    %2380 = vmatprep.subr.mxu0 0.0
    %2381 = vmatpush1.msra.mxu0 0.0
    %2382 = vmatprep.subr.mxu0 0.0
    %2383 = vmatpush1.msra.mxu0 0.0
    %2384 = vmatprep.subr.mxu0 0.0
    %2385 = vmatpush1.msra.mxu0 0.0
    %2386 = vmatprep.subr.mxu0 0.0
    %2387 = vmatpush1.msra.mxu0 0.0
    %2388 = vmatprep.subr.mxu0 0.0
    %2389 = vmatpush1.msra.mxu0 0.0
    %2390 = vmatprep.subr.mxu0 0.0
    %2391 = vmatpush1.msra.mxu0 0.0
    %2392 = vmatprep.subr.mxu0 0.0
    %2393 = vmatpush1.msra.mxu0 0.0
    %2394 = vmatprep.subr.mxu0 0.0
    %2395 = vmatpush1.msra.mxu0 0.0
    %2396 = vmatprep.subr.mxu0 0.0
    %2397 = vmatpush1.msra.mxu0 0.0
    %2398 = vmatprep.subr.mxu0 0.0
    %2399 = vmatpush1.msra.mxu0 0.0
    %2400 = vmatprep.subr.mxu0 0.0
    %2401 = vmatpush1.msra.mxu0 0.0
    %2402 = vmatprep.mubr.f32.mxu0 0.0
    %2403 = vmatmul.mubr.f32.gmra.mrb[0].mxu0 %v2314
    %v2404 = vpop.f32.mrb[0].mxu0
    %v2405 = vadd.f32 %v2336, %v2404
    %v2406 = vpop.f32.mrb[0].mxu0
    %2407 = vdwg.mxu0
    %vm2408 = vcmask 74752
    %2409 = vst.msk [vmem:[#allocation2] sm:$0x3] %vm2408, %v2405
    // Predicated region
    $region22: #{cnn_forward.3} parent=1 // pred_check
      _
    $region23: #{cnn_forward.3} parent=1 // pred_check_branch
      %2411 = sbr.rel (0) target = $region25
    $region24: #{cnn_forward.3} parent=1 // pred_region
      %s2413 = ssub.s32 32, 32
      %2414 = vsyncadd [#allocation3], %s2413
      %s2416 = sshll.u32 [#allocation2], 4
      %s2417 = int_to_ptr.vmem [resolvable:$true] %s2416
      %2419 = dma.vmem_to_hbm [thread:$0]  %s2417, 32, %s5, [#allocation3]
    $region25: #{cnn_forward.3} parent=1 // pred_fallthru
      _
    // Predicated region
    $region26: #{cnn_forward.3} parent=1 // pred_check
      _
    $region27: #{cnn_forward.3} parent=1 // pred_check_branch
      %2421 = sbr.rel (0) target = $region29
    $region28: #{cnn_forward.3} parent=1 // pred_region
      %2422 = dma.done [#allocation3], 32
    $region29: #{cnn_forward.3} parent=1 // pred_fallthru
      _
    %2423 = vsyncpa [#allocation3], 1

// kernel: cnn_forward.2
$region0: #{cnn_forward.2}
  #allocation0 [shape = 'u32[]', space=smem, size = 0x4, offset = 0x4, fixed_abs, tag = 'smem constant byte address 0x4 - core index']
  #allocation1 [shape = 'u32[144,128]{1,0:T(1,128)}', space=vmem, size = 0x12000, scoped, tag = 'internal scratch']
  #allocation2 [shape = 'bf16[30,28]{1,0:T(8,128)(2,1)}', space=vmem, size = 0x2000, scoped, tag = 'scratch operand']
  #allocation3 [shape = 'bf16[16,448]{1,0:T(16,128)(2,1)}', space=vmem, size = 0x4000, scoped, tag = 'scratch operand']
  %s0 = inlined_call_operand.vmem [shape: f32[2,28,28], index: 0, kind: input, shape index: {}]
  %s1 = inlined_call_operand.hbm [shape: bf16[3,28,896], index: 1, kind: input, shape index: {}]
  %s2 = inlined_call_operand.hbm [shape: f32[1,448], index: 2, kind: input, shape index: {}]
  %s3 = inlined_call_operand.hbm [shape: bf16[3,448,896], index: 3, kind: input, shape index: {}]
  %s4 = inlined_call_operand.hbm [shape: f32[1,448], index: 4, kind: input, shape index: {}]
  %s5 = inlined_call_operand.vmem [shape: bf16[2,7,448], index: 5, kind: output, shape index: {}]
  %s6 = sld [smem:[#allocation0]]
  $region69: #{cnn_forward.2} parent=0
    _
  %s8 = ssub.s32 1, %s6
  %s9 = scalar_select 0, %s8, %s6
  $region1: #{cnn_forward.2} parent=0
    #allocation4 [shape = 'u8[172032]{0}', space=vmem, size = 0x2a000, scoped, tag = 'input window, operand 1, single buffered']
    #allocation5 [shape = 's32[2]{0}', space=sflag, size = 0x8, scoped, tag = 'scoped memory for cnn_forward.2']
    #allocation6 [shape = 'u8[2048]{0}', space=vmem, size = 0x800, scoped, tag = 'input window, operand 2, single buffered']
    #allocation7 [shape = 's32[1]{0}', space=sflag, size = 0x4, scoped, tag = 'scoped memory for cnn_forward.2']
    #allocation8 [shape = 'u8[2408448]{0}', space=vmem, size = 0x24c000, scoped, tag = 'input window, operand 3, single buffered']
    #allocation9 [shape = 'u8[2048]{0}', space=vmem, size = 0x800, scoped, tag = 'input window, operand 4, single buffered']
    #allocation10 [shape = 's32[1]{0}', space=sflag, size = 0x4, scoped, tag = 'scoped memory for cnn_forward.2']
    %10 = vsyncpa [#allocation5], 0
    %11 = vsyncpa [#allocation7], 0
    %12 = vsyncpa [#allocation10], 0
    loop: start=0, step=1, limit=4
    $region2: #{cnn_forward.2} parent=1 // loop_pre_header
      _
    $region3: #{cnn_forward.2} parent=1 // loop_header
      %s14 = sphi 0, %s18
      %p15 = scmp.ge.s32.totalorder %s14, 4
      %s24 = sphi 0, %s26
      %s27 = sphi 0, %s24
      %s28 = sphi 0, %s27
      %s44 = sphi 0, %s28
      %s48 = sphi 0, %s48
      %s50 = sphi 0, %s48
      %s51 = sphi 0, %s50
      %s65 = sphi 0, %s51
      %s69 = sphi 0, %s69
      %s71 = sphi 0, %s69
      %s72 = sphi 0, %s71
      %s86 = sphi 0, %s72
      %s90 = sphi 0, %s90
      %s92 = sphi 0, %s90
      %s93 = sphi 0, %s92
      %s107 = sphi 0, %s93
      %s111 = sphi 0, %s111
      %s113 = sphi 0, %s111
      %s114 = sphi 0, %s113
      %s128 = sphi 0, %s114
      %s134 = sphi 0, %s136
      %s137 = sphi 0, %s134
      %s138 = sphi 0, %s137
      %s154 = sphi 0, %s138
    $region4: #{cnn_forward.2} parent=1 // loop_header_branch
      %17 = sbr.rel (%p15) target = $region8
    $region5: #{cnn_forward.2} parent=1 // loop_body
      %s19 = ssub.s32 %s14, 1
      %s20 = ssub.s32 %s14, 2
      %s21 = sadd.s32 %s14, 1
      %s22 = ssub.s32 %s14, %s21
      %p23 = scmp.eq.s32.totalorder %s22, 0
      %s25 = sadd.s32 %s24, 1
      %s26 = scalar_select %p23, %s24, %s25
      %p29 = pneg %p23
      %p30 = scmp.eq.s32.totalorder %s14, 1
      %p31 = por %p29, %p30
      %p32 = scmp.ne.s32.totalorder %s24, %s27
      %p33 = scmp.eq.s32.totalorder %s14, 0
      %p34 = por %p32, %p33
      %p35 = scmp.ne.s32.totalorder %s24, %s27
      %p36 = scmp.eq.s32.totalorder %s19, 1
      %p37 = por %p35, %p36
      %p38 = scmp.ne.s32.totalorder %s27, %s28
      %p39 = scmp.eq.s32.totalorder %s19, 0
      %p40 = por %p38, %p39
      %p41 = scmp.ne.s32.totalorder %s27, %s28
      %p42 = scmp.eq.s32.totalorder %s20, 1
      %p43 = por %p41, %p42
      %p45 = scmp.ne.s32.totalorder %s28, %s44
      %p46 = scmp.eq.s32.totalorder %s20, 0
      %p47 = por %p45, %p46
      %s49 = sadd.s32 %s48, 1
      %p52 = scmp.eq.s32.totalorder %s14, 1
      %p53 = scmp.ne.s32.totalorder %s48, %s50
      %p54 = scmp.eq.s32.totalorder %s14, 0
      %p55 = por %p53, %p54
      %p56 = scmp.ne.s32.totalorder %s48, %s50
      %p57 = scmp.eq.s32.totalorder %s19, 1
      %p58 = por %p56, %p57
      %p59 = scmp.ne.s32.totalorder %s50, %s51
      %p60 = scmp.eq.s32.totalorder %s19, 0
      %p61 = por %p59, %p60
      %p62 = scmp.ne.s32.totalorder %s50, %s51
      %p63 = scmp.eq.s32.totalorder %s20, 1
      %p64 = por %p62, %p63
      %p66 = scmp.ne.s32.totalorder %s51, %s65
      %p67 = scmp.eq.s32.totalorder %s20, 0
      %p68 = por %p66, %p67
      %s70 = sadd.s32 %s69, 1
      %p73 = scmp.eq.s32.totalorder %s14, 1
      %p74 = scmp.ne.s32.totalorder %s69, %s71
      %p75 = scmp.eq.s32.totalorder %s14, 0
      %p76 = por %p74, %p75
      %p77 = scmp.ne.s32.totalorder %s69, %s71
      %p78 = scmp.eq.s32.totalorder %s19, 1
      %p79 = por %p77, %p78
      %p80 = scmp.ne.s32.totalorder %s71, %s72
      %p81 = scmp.eq.s32.totalorder %s19, 0
      %p82 = por %p80, %p81
      %p83 = scmp.ne.s32.totalorder %s71, %s72
      %p84 = scmp.eq.s32.totalorder %s20, 1
      %p85 = por %p83, %p84
      %p87 = scmp.ne.s32.totalorder %s72, %s86
      %p88 = scmp.eq.s32.totalorder %s20, 0
      %p89 = por %p87, %p88
      %s91 = sadd.s32 %s90, 1
      %p94 = scmp.eq.s32.totalorder %s14, 1
      %p95 = scmp.ne.s32.totalorder %s90, %s92
      %p96 = scmp.eq.s32.totalorder %s14, 0
      %p97 = por %p95, %p96
      %p98 = scmp.ne.s32.totalorder %s90, %s92
      %p99 = scmp.eq.s32.totalorder %s19, 1
      %p100 = por %p98, %p99
      %p101 = scmp.ne.s32.totalorder %s92, %s93
      %p102 = scmp.eq.s32.totalorder %s19, 0
      %p103 = por %p101, %p102
      %p104 = scmp.ne.s32.totalorder %s92, %s93
      %p105 = scmp.eq.s32.totalorder %s20, 1
      %p106 = por %p104, %p105
      %p108 = scmp.ne.s32.totalorder %s93, %s107
      %p109 = scmp.eq.s32.totalorder %s20, 0
      %p110 = por %p108, %p109
      %s112 = sadd.s32 %s111, 1
      %p115 = scmp.eq.s32.totalorder %s14, 1
      %p116 = scmp.ne.s32.totalorder %s111, %s113
      %p117 = scmp.eq.s32.totalorder %s14, 0
      %p118 = por %p116, %p117
      %p119 = scmp.ne.s32.totalorder %s111, %s113
      %p120 = scmp.eq.s32.totalorder %s19, 1
      %p121 = por %p119, %p120
      %p122 = scmp.ne.s32.totalorder %s113, %s114
      %p123 = scmp.eq.s32.totalorder %s19, 0
      %p124 = por %p122, %p123
      %p125 = scmp.ne.s32.totalorder %s113, %s114
      %p126 = scmp.eq.s32.totalorder %s20, 1
      %p127 = por %p125, %p126
      %p129 = scmp.ne.s32.totalorder %s114, %s128
      %p130 = scmp.eq.s32.totalorder %s20, 0
      %p131 = por %p129, %p130
      %s132 = ssub.s32 %s14, %s21
      %p133 = scmp.eq.s32.totalorder %s132, 0
      %s135 = sadd.s32 %s134, 1
      %s136 = scalar_select %p133, %s134, %s135
      %p139 = pneg %p133
      %p140 = scmp.eq.s32.totalorder %s14, 1
      %p141 = por %p139, %p140
      %p142 = scmp.ne.s32.totalorder %s134, %s137
      %p143 = scmp.eq.s32.totalorder %s14, 0
      %p144 = por %p142, %p143
      %p145 = scmp.ne.s32.totalorder %s134, %s137
      %p146 = scmp.eq.s32.totalorder %s19, 1
      %p147 = por %p145, %p146
      %p148 = scmp.ne.s32.totalorder %s137, %s138
      %p149 = scmp.eq.s32.totalorder %s19, 0
      %p150 = por %p148, %p149
      %p151 = scmp.ne.s32.totalorder %s137, %s138
      %p152 = scmp.eq.s32.totalorder %s20, 1
      %p153 = por %p151, %p152
      %p155 = scmp.ne.s32.totalorder %s138, %s154
      %p156 = scmp.eq.s32.totalorder %s20, 0
      %p157 = por %p155, %p156
      %p158 = scmp.le.s32.totalorder 1, %s14
      %p159 = scmp.lt.s32.totalorder %s14, 3
      %p160 = pnand %p158, %p159
      %p161 = pneg %p160
      // Predicated region
      $region9: #{cnn_forward.2} parent=5 // pred_check
        _
      $region10: #{cnn_forward.2} parent=5 // pred_check_branch
        %163 = sbr.rel (%p160) target = $region12
      $region11: #{cnn_forward.2} parent=5 // pred_region
        %s164 = ssub.s32 %s14, 1
        // Predicated region
        $region13: #{cnn_forward.2} parent=11 // pred_check
          %p165 = pneg %p61
        $region14: #{cnn_forward.2} parent=11 // pred_check_branch
          %167 = sbr.rel (%p165) target = $region16
        $region15: #{cnn_forward.2} parent=11 // pred_region
          %s169 = ssub.s32 5376, 5376
          %170 = vsyncadd [#allocation5], %s169
          %s171 = sshll.u32 [#allocation4], 4
          %s172 = int_to_ptr.vmem [resolvable:$true] %s171
          %177 = dma.hbm_to_vmem [thread:$0]  %s1, 5376, %s172, [#allocation5], 448, 448, 28
        $region16: #{cnn_forward.2} parent=11 // pred_fallthru
          _
        // Predicated region
        $region17: #{cnn_forward.2} parent=11 // pred_check
          %p178 = pneg %p82
        $region18: #{cnn_forward.2} parent=11 // pred_check_branch
          %180 = sbr.rel (%p178) target = $region20
        $region19: #{cnn_forward.2} parent=11 // pred_region
          %s182 = ssub.s32 64, 64
          %183 = vsyncadd [#allocation7], %s182
          %s185 = sshll.u32 [#allocation6], 4
          %s186 = int_to_ptr.vmem [resolvable:$true] %s185
          %188 = dma.hbm_to_vmem [thread:$0]  %s2, 64, %s186, [#allocation7]
        $region20: #{cnn_forward.2} parent=11 // pred_fallthru
          _
        // Predicated region
        $region21: #{cnn_forward.2} parent=11 // pred_check
          %p189 = pneg %p103
        $region22: #{cnn_forward.2} parent=11 // pred_check_branch
          %191 = sbr.rel (%p189) target = $region24
        $region23: #{cnn_forward.2} parent=11 // pred_region
          %s193 = ssub.s32 75264, 75264
          %194 = vsyncadd [#allocation7], %s193
          %s195 = sshll.u32 [#allocation8], 4
          %s196 = int_to_ptr.vmem [resolvable:$true] %s195
          %201 = dma.hbm_to_vmem [thread:$0]  %s3, 75264, %s196, [#allocation7], 448, 448, 28
        $region24: #{cnn_forward.2} parent=11 // pred_fallthru
          _
        // Predicated region
        $region25: #{cnn_forward.2} parent=11 // pred_check
          %p202 = pneg %p124
        $region26: #{cnn_forward.2} parent=11 // pred_check_branch
          %204 = sbr.rel (%p202) target = $region28
        $region27: #{cnn_forward.2} parent=11 // pred_region
          %s206 = ssub.s32 64, 64
          %207 = vsyncadd [#allocation10], %s206
          %s209 = sshll.u32 [#allocation9], 4
          %s210 = int_to_ptr.vmem [resolvable:$true] %s209
          %212 = dma.hbm_to_vmem [thread:$0]  %s4, 64, %s210, [#allocation10]
        $region28: #{cnn_forward.2} parent=11 // pred_fallthru
          _
      $region12: #{cnn_forward.2} parent=5 // pred_fallthru
        _
      %p213 = scmp.lt.s32.totalorder %s14, 2
      // Predicated region
      $region29: #{cnn_forward.2} parent=5 // pred_check
        %p214 = pneg %p213
      $region30: #{cnn_forward.2} parent=5 // pred_check_branch
        %216 = sbr.rel (%p214) target = $region32
      $region31: #{cnn_forward.2} parent=5 // pred_region
        // Predicated region
        $region33: #{cnn_forward.2} parent=31 // pred_check
          %p217 = pneg %p34
        $region34: #{cnn_forward.2} parent=31 // pred_check_branch
          %219 = sbr.rel (%p217) target = $region36
        $region35: #{cnn_forward.2} parent=31 // pred_region
          %p220 = scmp.lt.s32.totalorder %s14, 1
          %s221 = scalar_select %p220, %s14, 1
          %s222 = smul.addr %s221, 4
          %s223 = smul.addr %s222, 8
          %s224 = scalar_lea.vmem %s0, %s223
        $region36: #{cnn_forward.2} parent=31 // pred_fallthru
          _
      $region32: #{cnn_forward.2} parent=5 // pred_fallthru
        _
      %p225 = scmp.le.s32.totalorder 1, %s14
      %p226 = scmp.lt.s32.totalorder %s14, 3
      %p227 = pnand %p225, %p226
      %p228 = pneg %p227
      // Predicated region
      $region37: #{cnn_forward.2} parent=5 // pred_check
        _
      $region38: #{cnn_forward.2} parent=5 // pred_check_branch
        %230 = sbr.rel (%p227) target = $region40
      $region39: #{cnn_forward.2} parent=5 // pred_region
        %s231 = ssub.s32 %s14, 1
        // Predicated region
        $region41: #{cnn_forward.2} parent=39 // pred_check
          %p232 = pneg %p61
        $region42: #{cnn_forward.2} parent=39 // pred_check_branch
          %234 = sbr.rel (%p232) target = $region44
        $region43: #{cnn_forward.2} parent=39 // pred_region
          %235 = dma.done [#allocation5], 5376
        $region44: #{cnn_forward.2} parent=39 // pred_fallthru
          _
        // Predicated region
        $region45: #{cnn_forward.2} parent=39 // pred_check
          %p236 = pneg %p82
        $region46: #{cnn_forward.2} parent=39 // pred_check_branch
          %238 = sbr.rel (%p236) target = $region48
        $region47: #{cnn_forward.2} parent=39 // pred_region
          %239 = dma.done [#allocation7], 64
        $region48: #{cnn_forward.2} parent=39 // pred_fallthru
          _
        // Predicated region
        $region49: #{cnn_forward.2} parent=39 // pred_check
          %p240 = pneg %p103
        $region50: #{cnn_forward.2} parent=39 // pred_check_branch
          %242 = sbr.rel (%p240) target = $region52
        $region51: #{cnn_forward.2} parent=39 // pred_region
          %243 = dma.done [#allocation7], 75264
        $region52: #{cnn_forward.2} parent=39 // pred_fallthru
          _
        // Predicated region
        $region53: #{cnn_forward.2} parent=39 // pred_check
          %p244 = pneg %p124
        $region54: #{cnn_forward.2} parent=39 // pred_check_branch
          %246 = sbr.rel (%p244) target = $region56
        $region55: #{cnn_forward.2} parent=39 // pred_region
          %247 = dma.done [#allocation10], 64
        $region56: #{cnn_forward.2} parent=39 // pred_fallthru
          _
        %p248 = scmp.lt.s32.totalorder %s19, 1
        %s249 = scalar_select %p248, %s19, 1
        %s250 = smul.addr %s249, 4
        %s251 = smul.addr %s250, 8
        %s252 = scalar_lea.vmem %s0, %s251
        %p253 = pneg %p40
        %p254 = pneg %p37
        %p255 = pneg %p61
        %p256 = pneg %p58
        %p257 = pneg %p82
        %p258 = pneg %p79
        %p259 = pneg %p103
        %p260 = pneg %p100
        %p261 = pneg %p124
        %p262 = pneg %p121
        %p263 = pneg %p150
        %p264 = pneg %p147
        %p265 = scmp.lt.s32.totalorder %s19, 1
        %s266 = scalar_select %p265, %s19, 1
        %s267 = smul.addr %s266, 4
        %s268 = smul.addr %s267, 4
        %s269 = scalar_lea.vmem %s5, %s268
        %p270 = scmp.lt.s32.totalorder %s19, 1
        %s271 = scalar_select %p270, %s19, 1
        %s272 = smul.addr %s271, 4
        %s273 = smul.addr %s272, 8
        %s274 = scalar_lea.vmem %s0, %s273
        %p275 = scmp.lt.s32.totalorder %s19, 1
        %s276 = scalar_select %p275, %s19, 1
        %s277 = smul.addr %s276, 4
        %s278 = smul.addr %s277, 4
        %s279 = scalar_lea.vmem %s5, %s278
        %vm281 = vcmask 221184
        %vm282 = vsmask.f32 256
        %vm283 = vmand %vm281, %vm282
        %v284 = vld [vmem:[#allocation2] sm:$0x1]
        %v285 = vsel %vm283, 0, %v284
        %286 = vst [vmem:[#allocation2] sm:$0x1] %v285
        %vm287 = vcmask 223234
        %vm288 = vsmask.f32 7946
        %vm289 = vmand %vm287, %vm288
        %v290 = vld [vmem:[#allocation2 + $0xc] sm:$0x4]
        %v291 = vsel %vm289, 0, %v290
        %292 = vst [vmem:[#allocation2 + $0xc] sm:$0x4] %v291
        %v293 = vld [vmem:[%s274] sm:$0xff]
        %v294 = vld [vmem:[%s274 + $0x8] sm:$0xff]
        %v295 = vld [vmem:[%s274 + $0x10] sm:$0xff]
        %v296 = vld [vmem:[%s274 + $0x18] sm:$0xf]
        %v297 = vpack.c.bf16 %v294, %v293
        %v298 = vpack.c.bf16 %v296, %v295
        %v301 = vunpack.c.l.b16 %v297
        %v302 = vunpack.c.h.b16 %v297
        %v303 = vunpack.c.l.b16 %v298
        %v304 = vunpack.c.h.b16 %v298
        %v305 = vpack.c.b16 %v301, %v301
        %v306 = vpack.c.b16 %v302, %v302
        %v307 = vpack.c.b16 %v303, %v303
        %v308 = vpack.c.b16 %v304, %v304
        %vm309 = vsmask.f32 4368
        %vm310 = vmor %vm282, %vm309
        %v312 = vshrl.u32 %v305, 16
        %v314 = vrot.slane %v312, 7
        %v315 = vshll.u32 %v305, 16
        %v317 = vor.u32 %v314, %v315
        %v318 = vrot.slane %v314, 4
        %v320 = vshrl.u32 %v306, 16
        %v322 = vrot.slane %v320, 7
        %v323 = vshll.u32 %v306, 16
        %v325 = vor.u32 %v322, %v323
        %v326 = vsel %vm310, %v318, %v325
        %v327 = vrot.slane %v322, 4
        %v329 = vshrl.u32 %v307, 16
        %v331 = vrot.slane %v329, 7
        %v332 = vshll.u32 %v307, 16
        %v334 = vor.u32 %v331, %v332
        %v335 = vsel %vm310, %v327, %v334
        %v336 = vrot.slane %v331, 4
        %v338 = vshrl.u32 %v308, 16
        %v340 = vrot.slane %v338, 7
        %v341 = vshll.u32 %v308, 16
        %v343 = vor.u32 %v340, %v341
        %v344 = vsel %vm310, %v336, %v343
        %vm349 = vcmask 224256
        %vm350 = vsmask.f32 7938
        %vm351 = vmand %vm349, %vm350
        %v352 = vld [vmem:[#allocation2] sm:$0xf]
        %v353 = vsel %vm351, %v317, %v352
        %354 = vst [vmem:[#allocation2] sm:$0xf] %v353
        %vm355 = vcmask 224256
        %356 = vst.msk [vmem:[#allocation2 + $0x4] sm:$0xf] %vm355, %v326
        %357 = vst.msk [vmem:[#allocation2 + $0x8] sm:$0xf] %vm355, %v335
        %vm358 = vcmask 223232
        %vm359 = vsmask.f32 2304
        %vm360 = vmand %vm358, %vm359
        %v361 = vld [vmem:[#allocation2 + $0xc] sm:$0x7]
        %v362 = vsel %vm360, %v344, %v361
        %363 = vst [vmem:[#allocation2 + $0xc] sm:$0x7] %v362
        %v364 = vld [vmem:[#allocation2] sm:$0xf]
        %v365 = vld [vmem:[#allocation2 + $0x4] sm:$0xf]
        %v366 = vld [vmem:[#allocation2 + $0x8] sm:$0xf]
        %v367 = vld [vmem:[#allocation2 + $0xc] sm:$0x3]
        %v368 = vld [vmem:[#allocation4] sm:$0xff]
        %v369 = vld [vmem:[#allocation4 + $0x8] sm:$0xff]
        %v370 = vld [vmem:[#allocation4 + $0x10] sm:$0xff]
        %v371 = vld [vmem:[#allocation4 + $0x18] sm:$0xf]
        %v372 = vld [vmem:[#allocation4 + $0x1c] sm:$0xff]
        %v373 = vld [vmem:[#allocation4 + $0x24] sm:$0xff]
        %v374 = vld [vmem:[#allocation4 + $0x2c] sm:$0xff]
        %v375 = vld [vmem:[#allocation4 + $0x34] sm:$0xf]
        %v376 = vld [vmem:[#allocation4 + $0x38] sm:$0xff]
        %v377 = vld [vmem:[#allocation4 + $0x40] sm:$0xff]
        %v378 = vld [vmem:[#allocation4 + $0x48] sm:$0xff]
        %v379 = vld [vmem:[#allocation4 + $0x50] sm:$0xf]
        %v380 = vld [vmem:[#allocation4 + $0x54] sm:$0x33]
        %v381 = vld [vmem:[#allocation4 + $0x5c] sm:$0x33]
        %v382 = vld [vmem:[#allocation4 + $0x64] sm:$0x33]
        %v383 = vld [vmem:[#allocation4 + $0x6c] sm:$0x3]
        %v384 = vld [vmem:[#allocation2 + $0xc] sm:$0x7]
        %s385 = scalar_lea.vmem [#allocation4], 112
        %v386 = vld [vmem:[%s385] sm:$0xff]
        %v387 = vld [vmem:[%s385 + $0x8] sm:$0xff]
        %v388 = vld [vmem:[%s385 + $0x10] sm:$0xff]
        %v389 = vld [vmem:[%s385 + $0x18] sm:$0xf]
        %v390 = vld [vmem:[%s385 + $0x1c] sm:$0xff]
        %v391 = vld [vmem:[%s385 + $0x24] sm:$0xff]
        %v392 = vld [vmem:[%s385 + $0x2c] sm:$0xff]
        %v393 = vld [vmem:[%s385 + $0x34] sm:$0xf]
        %v394 = vld [vmem:[%s385 + $0x38] sm:$0xff]
        %v395 = vld [vmem:[%s385 + $0x40] sm:$0xff]
        %v396 = vld [vmem:[%s385 + $0x48] sm:$0xff]
        %v397 = vld [vmem:[%s385 + $0x50] sm:$0xf]
        %v398 = vld [vmem:[%s385 + $0x54] sm:$0x33]
        %v399 = vld [vmem:[%s385 + $0x5c] sm:$0x33]
        %v400 = vld [vmem:[%s385 + $0x64] sm:$0x33]
        %v401 = vld [vmem:[%s385 + $0x6c] sm:$0x3]
        %v406 = vunpack.c.l.b16 %v364
        %v407 = vunpack.c.l.b16 %v365
        %v408 = vunpack.c.l.b16 %v366
        %v409 = vunpack.c.l.b16 %v384
        %v410 = vpack.c.b16 %v407, %v406
        %v411 = vpack.c.b16 %v409, %v408
        %vm412 = vsmask.f32 7424
        %v414 = vshrl.u32 %v410, 16
        %v416 = vshll.u32 %v410, 16
        %v418 = vrot.slane %v416, 1
        %v419 = vor.u32 %v414, %v418
        %v421 = vshll.u32 %v411, 16
        %v423 = vrot.slane %v421, 1
        %v424 = vsel %vm412, %v419, %v423
        %v425 = vshrl.u32 %v411, 16
        %v427 = vor.u32 %v425, %v423
        %v444 = vunpack.c.l.b16 %v386
        %v445 = vunpack.c.h.b16 %v386
        %v446 = vunpack.c.l.b16 %v387
        %v447 = vunpack.c.h.b16 %v387
        %v448 = vunpack.c.l.b16 %v388
        %v449 = vunpack.c.h.b16 %v388
        %v450 = vunpack.c.l.b16 %v389
        %v451 = vunpack.c.l.b16 %v390
        %v452 = vunpack.c.h.b16 %v390
        %v453 = vunpack.c.l.b16 %v391
        %v454 = vunpack.c.h.b16 %v391
        %v455 = vunpack.c.l.b16 %v392
        %v456 = vunpack.c.h.b16 %v392
        %v457 = vunpack.c.l.b16 %v393
        %v458 = vunpack.c.l.b16 %v394
        %v459 = vunpack.c.h.b16 %v394
        %v460 = vunpack.c.l.b16 %v395
        %v461 = vunpack.c.h.b16 %v395
        %v462 = vunpack.c.l.b16 %v396
        %v463 = vunpack.c.h.b16 %v396
        %v464 = vunpack.c.l.b16 %v397
        %v465 = vunpack.c.l.b16 %v398
        %v466 = vunpack.c.h.b16 %v398
        %v467 = vunpack.c.l.b16 %v399
        %v468 = vunpack.c.h.b16 %v399
        %v469 = vunpack.c.l.b16 %v400
        %v470 = vunpack.c.h.b16 %v400
        %v471 = vunpack.c.l.b16 %v401
        %v472 = vpack.c.b16 %v451, %v444
        %v473 = vpack.c.b16 %v452, %v445
        %v474 = vpack.c.b16 %v453, %v446
        %v475 = vpack.c.b16 %v454, %v447
        %v476 = vpack.c.b16 %v455, %v448
        %v477 = vpack.c.b16 %v456, %v449
        %v478 = vpack.c.b16 %v457, %v450
        %v479 = vpack.c.b16 %v465, %v458
        %v480 = vpack.c.b16 %v466, %v459
        %v481 = vpack.c.b16 %v467, %v460
        %v482 = vpack.c.b16 %v468, %v461
        %v483 = vpack.c.b16 %v469, %v462
        %v484 = vpack.c.b16 %v470, %v463
        %v485 = vpack.c.b16 %v471, %v464
        %vm493 = vcmask 228352
        %v495 = vsel %vm493, %v424, 0
        %v498 = vsel %vm493, %v427, 0
        %vm500 = vcmask 1045504
        %v502 = vsel %vm500, %v479, 0
        %v505 = vsel %vm500, %v480, 0
        %v508 = vsel %vm500, %v481, 0
        %v511 = vsel %vm500, %v482, 0
        %v514 = vsel %vm500, %v483, 0
        %v517 = vsel %vm500, %v484, 0
        %v520 = vsel %vm500, %v485, 0
        %522 = vmatprep.subr.bf16.mxu0 %v473
        %523 = vmatpush1.bf16.msra.mxu0 %v472
        %524 = vmatprep.subr.bf16.mxu0 %v505
        %525 = vmatpush1.bf16.msra.mxu0 %v502
        %526 = vmatprep.subr.bf16.mxu0 0
        %527 = vmatpush1.bf16.msra.mxu0 0
        %528 = vmatprep.subr.bf16.mxu0 0
        %529 = vmatpush1.bf16.msra.mxu0 0
        %530 = vmatprep.subr.bf16.mxu0 0
        %531 = vmatpush1.bf16.msra.mxu0 0
        %532 = vmatprep.subr.bf16.mxu0 0
        %533 = vmatpush1.bf16.msra.mxu0 0
        %534 = vmatprep.subr.bf16.mxu0 0
        %535 = vmatpush1.bf16.msra.mxu0 0
        %536 = vmatprep.subr.bf16.mxu0 0
        %537 = vmatpush1.bf16.msra.mxu0 0
        %538 = vmatprep.subr.bf16.mxu0 0
        %539 = vmatpush1.bf16.msra.mxu0 0
        %540 = vmatprep.subr.bf16.mxu0 0
        %541 = vmatpush1.bf16.msra.mxu0 0
        %542 = vmatprep.subr.bf16.mxu0 0
        %543 = vmatpush1.bf16.msra.mxu0 0
        %544 = vmatprep.subr.bf16.mxu0 0
        %545 = vmatpush1.bf16.msra.mxu0 0
        %546 = vmatprep.subr.bf16.mxu0 0
        %547 = vmatpush1.bf16.msra.mxu0 0
        %548 = vmatprep.subr.bf16.mxu0 0
        %549 = vmatpush1.bf16.msra.mxu0 0
        %550 = vmatprep.subr.bf16.mxu0 0
        %551 = vmatpush1.bf16.msra.mxu0 0
        %552 = vmatprep.subr.bf16.mxu0 0
        %553 = vmatpush1.bf16.msra.mxu0 0
        %554 = vmatprep.mubr.bf16.mxu0 0
        %555 = vmatmul.mubr.bf16.gmra.mrb[0].mxu0 %v495
        %v556 = vpop.f32.mrb[0].mxu0
        %v557 = vadd.f32 0.0, %v556
        %v558 = vpop.f32.mrb[0].mxu0
        %v559 = vadd.f32 0.0, %v558
        %v560 = vpop.f32.mrb[0].mxu0
        %v561 = vadd.f32 0.0, %v560
        %v562 = vpop.f32.mrb[0].mxu0
        %v563 = vadd.f32 0.0, %v562
        %564 = vmatprep.mubr.bf16.mxu0 0
        %565 = vmatmul.mubr.bf16.gmra.mrb[0].mxu0 %v498
        %v566 = vpop.f32.mrb[0].mxu0
        %v567 = vadd.f32 0.0, %v566
        %v568 = vpop.f32.mrb[0].mxu0
        %v569 = vadd.f32 0.0, %v568
        %v570 = vpop.f32.mrb[0].mxu0
        %v571 = vadd.f32 0.0, %v570
        %v572 = vpop.f32.mrb[0].mxu0
        %v573 = vadd.f32 0.0, %v572
        %574 = vdwg.mxu0
        %575 = vmatprep.subr.bf16.mxu0 %v475
        %576 = vmatpush1.bf16.msra.mxu0 %v474
        %577 = vmatprep.subr.bf16.mxu0 %v511
        %578 = vmatpush1.bf16.msra.mxu0 %v508
        %579 = vmatprep.subr.bf16.mxu0 0
        %580 = vmatpush1.bf16.msra.mxu0 0
        %581 = vmatprep.subr.bf16.mxu0 0
        %582 = vmatpush1.bf16.msra.mxu0 0
        %583 = vmatprep.subr.bf16.mxu0 0
        %584 = vmatpush1.bf16.msra.mxu0 0
        %585 = vmatprep.subr.bf16.mxu0 0
        %586 = vmatpush1.bf16.msra.mxu0 0
        %587 = vmatprep.subr.bf16.mxu0 0
        %588 = vmatpush1.bf16.msra.mxu0 0
        %589 = vmatprep.subr.bf16.mxu0 0
        %590 = vmatpush1.bf16.msra.mxu0 0
        %591 = vmatprep.subr.bf16.mxu0 0
        %592 = vmatpush1.bf16.msra.mxu0 0
        %593 = vmatprep.subr.bf16.mxu0 0
        %594 = vmatpush1.bf16.msra.mxu0 0
        %595 = vmatprep.subr.bf16.mxu0 0
        %596 = vmatpush1.bf16.msra.mxu0 0
        %597 = vmatprep.subr.bf16.mxu0 0
        %598 = vmatpush1.bf16.msra.mxu0 0
        %599 = vmatprep.subr.bf16.mxu0 0
        %600 = vmatpush1.bf16.msra.mxu0 0
        %601 = vmatprep.subr.bf16.mxu0 0
        %602 = vmatpush1.bf16.msra.mxu0 0
        %603 = vmatprep.subr.bf16.mxu0 0
        %604 = vmatpush1.bf16.msra.mxu0 0
        %605 = vmatprep.subr.bf16.mxu0 0
        %606 = vmatpush1.bf16.msra.mxu0 0
        %607 = vmatprep.mubr.bf16.mxu0 0
        %608 = vmatmul.mubr.bf16.gmra.mrb[0].mxu0 %v495
        %v609 = vpop.f32.mrb[0].mxu0
        %v610 = vadd.f32 0.0, %v609
        %v611 = vpop.f32.mrb[0].mxu0
        %v612 = vadd.f32 0.0, %v611
        %v613 = vpop.f32.mrb[0].mxu0
        %v614 = vadd.f32 0.0, %v613
        %v615 = vpop.f32.mrb[0].mxu0
        %v616 = vadd.f32 0.0, %v615
        %617 = vmatprep.mubr.bf16.mxu0 0
        %618 = vmatmul.mubr.bf16.gmra.mrb[0].mxu0 %v498
        %v619 = vpop.f32.mrb[0].mxu0
        %v620 = vadd.f32 0.0, %v619
        %v621 = vpop.f32.mrb[0].mxu0
        %v622 = vadd.f32 0.0, %v621
        %v623 = vpop.f32.mrb[0].mxu0
        %v624 = vadd.f32 0.0, %v623
        %v625 = vpop.f32.mrb[0].mxu0
        %v626 = vadd.f32 0.0, %v625
        %627 = vdwg.mxu0
        %628 = vmatprep.subr.bf16.mxu0 %v477
        %629 = vmatpush1.bf16.msra.mxu0 %v476
        %630 = vmatprep.subr.bf16.mxu0 %v517
        %631 = vmatpush1.bf16.msra.mxu0 %v514
        %632 = vmatprep.subr.bf16.mxu0 0
        %633 = vmatpush1.bf16.msra.mxu0 0
        %634 = vmatprep.subr.bf16.mxu0 0
        %635 = vmatpush1.bf16.msra.mxu0 0
        %636 = vmatprep.subr.bf16.mxu0 0
        %637 = vmatpush1.bf16.msra.mxu0 0
        %638 = vmatprep.subr.bf16.mxu0 0
        %639 = vmatpush1.bf16.msra.mxu0 0
        %640 = vmatprep.subr.bf16.mxu0 0
        %641 = vmatpush1.bf16.msra.mxu0 0
        %642 = vmatprep.subr.bf16.mxu0 0
        %643 = vmatpush1.bf16.msra.mxu0 0
        %644 = vmatprep.subr.bf16.mxu0 0
        %645 = vmatpush1.bf16.msra.mxu0 0
        %646 = vmatprep.subr.bf16.mxu0 0
        %647 = vmatpush1.bf16.msra.mxu0 0
        %648 = vmatprep.subr.bf16.mxu0 0
        %649 = vmatpush1.bf16.msra.mxu0 0
        %650 = vmatprep.subr.bf16.mxu0 0
        %651 = vmatpush1.bf16.msra.mxu0 0
        %652 = vmatprep.subr.bf16.mxu0 0
        %653 = vmatpush1.bf16.msra.mxu0 0
        %654 = vmatprep.subr.bf16.mxu0 0
        %655 = vmatpush1.bf16.msra.mxu0 0
        %656 = vmatprep.subr.bf16.mxu0 0
        %657 = vmatpush1.bf16.msra.mxu0 0
        %658 = vmatprep.subr.bf16.mxu0 0
        %659 = vmatpush1.bf16.msra.mxu0 0
        %660 = vmatprep.mubr.bf16.mxu0 0
        %661 = vmatmul.mubr.bf16.gmra.mrb[0].mxu0 %v495
        %v662 = vpop.f32.mrb[0].mxu0
        %v663 = vadd.f32 0.0, %v662
        %v664 = vpop.f32.mrb[0].mxu0
        %v665 = vadd.f32 0.0, %v664
        %v666 = vpop.f32.mrb[0].mxu0
        %v667 = vadd.f32 0.0, %v666
        %v668 = vpop.f32.mrb[0].mxu0
        %v669 = vadd.f32 0.0, %v668
        %670 = vmatprep.mubr.bf16.mxu0 0
        %671 = vmatmul.mubr.bf16.gmra.mrb[0].mxu0 %v498
        %v672 = vpop.f32.mrb[0].mxu0
        %v673 = vadd.f32 0.0, %v672
        %v674 = vpop.f32.mrb[0].mxu0
        %v675 = vadd.f32 0.0, %v674
        %v676 = vpop.f32.mrb[0].mxu0
        %v677 = vadd.f32 0.0, %v676
        %v678 = vpop.f32.mrb[0].mxu0
        %v679 = vadd.f32 0.0, %v678
        %680 = vdwg.mxu0
        %681 = vmatprep.subr.bf16.mxu0 0
        %682 = vmatpush1.bf16.msra.mxu0 %v478
        %683 = vmatprep.subr.bf16.mxu0 0
        %684 = vmatpush1.bf16.msra.mxu0 %v520
        %685 = vmatprep.subr.bf16.mxu0 0
        %686 = vmatpush1.bf16.msra.mxu0 0
        %687 = vmatprep.subr.bf16.mxu0 0
        %688 = vmatpush1.bf16.msra.mxu0 0
        %689 = vmatprep.subr.bf16.mxu0 0
        %690 = vmatpush1.bf16.msra.mxu0 0
        %691 = vmatprep.subr.bf16.mxu0 0
        %692 = vmatpush1.bf16.msra.mxu0 0
        %693 = vmatprep.subr.bf16.mxu0 0
        %694 = vmatpush1.bf16.msra.mxu0 0
        %695 = vmatprep.subr.bf16.mxu0 0
        %696 = vmatpush1.bf16.msra.mxu0 0
        %697 = vmatprep.subr.bf16.mxu0 0
        %698 = vmatpush1.bf16.msra.mxu0 0
        %699 = vmatprep.subr.bf16.mxu0 0
        %700 = vmatpush1.bf16.msra.mxu0 0
        %701 = vmatprep.subr.bf16.mxu0 0
        %702 = vmatpush1.bf16.msra.mxu0 0
        %703 = vmatprep.subr.bf16.mxu0 0
        %704 = vmatpush1.bf16.msra.mxu0 0
        %705 = vmatprep.subr.bf16.mxu0 0
        %706 = vmatpush1.bf16.msra.mxu0 0
        %707 = vmatprep.subr.bf16.mxu0 0
        %708 = vmatpush1.bf16.msra.mxu0 0
        %709 = vmatprep.subr.bf16.mxu0 0
        %710 = vmatpush1.bf16.msra.mxu0 0
        %711 = vmatprep.subr.bf16.mxu0 0
        %712 = vmatpush1.bf16.msra.mxu0 0
        %713 = vmatprep.mubr.bf16.mxu0 0
        %714 = vmatmul.mubr.bf16.gmra.mrb[0].mxu0 %v495
        %v715 = vpop.f32.mrb[0].mxu0
        %v716 = vadd.f32 0.0, %v715
        %v717 = vpop.f32.mrb[0].mxu0
        %v718 = vpop.f32.mrb[0].mxu0
        %v719 = vadd.f32 0.0, %v718
        %v720 = vpop.f32.mrb[0].mxu0
        %721 = vmatprep.mubr.bf16.mxu0 0
        %722 = vmatmul.mubr.bf16.gmra.mrb[0].mxu0 %v498
        %v723 = vpop.f32.mrb[0].mxu0
        %v724 = vadd.f32 0.0, %v723
        %v725 = vpop.f32.mrb[0].mxu0
        %v726 = vpop.f32.mrb[0].mxu0
        %v727 = vadd.f32 0.0, %v726
        %v728 = vpop.f32.mrb[0].mxu0
        %729 = vdwg.mxu0
        %v731 = vunpack.c.l.b16 %v367
        %v732 = vpack.c.b16 %v731, %v408
        %v749 = vunpack.c.l.b16 %v368
        %v750 = vunpack.c.h.b16 %v368
        %v751 = vunpack.c.l.b16 %v369
        %v752 = vunpack.c.h.b16 %v369
        %v753 = vunpack.c.l.b16 %v370
        %v754 = vunpack.c.h.b16 %v370
        %v755 = vunpack.c.l.b16 %v371
        %v756 = vunpack.c.l.b16 %v372
        %v757 = vunpack.c.h.b16 %v372
        %v758 = vunpack.c.l.b16 %v373
        %v759 = vunpack.c.h.b16 %v373
        %v760 = vunpack.c.l.b16 %v374
        %v761 = vunpack.c.h.b16 %v374
        %v762 = vunpack.c.l.b16 %v375
        %v763 = vunpack.c.l.b16 %v376
        %v764 = vunpack.c.h.b16 %v376
        %v765 = vunpack.c.l.b16 %v377
        %v766 = vunpack.c.h.b16 %v377
        %v767 = vunpack.c.l.b16 %v378
        %v768 = vunpack.c.h.b16 %v378
        %v769 = vunpack.c.l.b16 %v379
        %v770 = vunpack.c.l.b16 %v380
        %v771 = vunpack.c.h.b16 %v380
        %v772 = vunpack.c.l.b16 %v381
        %v773 = vunpack.c.h.b16 %v381
        %v774 = vunpack.c.l.b16 %v382
        %v775 = vunpack.c.h.b16 %v382
        %v776 = vunpack.c.l.b16 %v383
        %v777 = vpack.c.b16 %v756, %v749
        %v778 = vpack.c.b16 %v757, %v750
        %v779 = vpack.c.b16 %v758, %v751
        %v780 = vpack.c.b16 %v759, %v752
        %v781 = vpack.c.b16 %v760, %v753
        %v782 = vpack.c.b16 %v761, %v754
        %v783 = vpack.c.b16 %v762, %v755
        %v784 = vpack.c.b16 %v770, %v763
        %v785 = vpack.c.b16 %v771, %v764
        %v786 = vpack.c.b16 %v772, %v765
        %v787 = vpack.c.b16 %v773, %v766
        %v788 = vpack.c.b16 %v774, %v767
        %v789 = vpack.c.b16 %v775, %v768
        %v790 = vpack.c.b16 %v776, %v769
        %v798 = vsel %vm493, %v410, 0
        %v801 = vsel %vm493, %v732, 0
        %v804 = vsel %vm500, %v784, 0
        %v807 = vsel %vm500, %v785, 0
        %v810 = vsel %vm500, %v786, 0
        %v813 = vsel %vm500, %v787, 0
        %v816 = vsel %vm500, %v788, 0
        %v819 = vsel %vm500, %v789, 0
        %v822 = vsel %vm500, %v790, 0
        %824 = vmatprep.subr.bf16.mxu0 %v778
        %825 = vmatpush1.bf16.msra.mxu0 %v777
        %826 = vmatprep.subr.bf16.mxu0 %v807
        %827 = vmatpush1.bf16.msra.mxu0 %v804
        %828 = vmatprep.subr.bf16.mxu0 0
        %829 = vmatpush1.bf16.msra.mxu0 0
        %830 = vmatprep.subr.bf16.mxu0 0
        %831 = vmatpush1.bf16.msra.mxu0 0
        %832 = vmatprep.subr.bf16.mxu0 0
        %833 = vmatpush1.bf16.msra.mxu0 0
        %834 = vmatprep.subr.bf16.mxu0 0
        %835 = vmatpush1.bf16.msra.mxu0 0
        %836 = vmatprep.subr.bf16.mxu0 0
        %837 = vmatpush1.bf16.msra.mxu0 0
        %838 = vmatprep.subr.bf16.mxu0 0
        %839 = vmatpush1.bf16.msra.mxu0 0
        %840 = vmatprep.subr.bf16.mxu0 0
        %841 = vmatpush1.bf16.msra.mxu0 0
        %842 = vmatprep.subr.bf16.mxu0 0
        %843 = vmatpush1.bf16.msra.mxu0 0
        %844 = vmatprep.subr.bf16.mxu0 0
        %845 = vmatpush1.bf16.msra.mxu0 0
        %846 = vmatprep.subr.bf16.mxu0 0
        %847 = vmatpush1.bf16.msra.mxu0 0
        %848 = vmatprep.subr.bf16.mxu0 0
        %849 = vmatpush1.bf16.msra.mxu0 0
        %850 = vmatprep.subr.bf16.mxu0 0
        %851 = vmatpush1.bf16.msra.mxu0 0
        %852 = vmatprep.subr.bf16.mxu0 0
        %853 = vmatpush1.bf16.msra.mxu0 0
        %854 = vmatprep.subr.bf16.mxu0 0
        %855 = vmatpush1.bf16.msra.mxu0 0
        %856 = vmatprep.mubr.bf16.mxu0 0
        %857 = vmatmul.mubr.bf16.gmra.mrb[0].mxu0 %v798
        %v858 = vpop.f32.mrb[0].mxu0
        %v859 = vadd.f32 %v557, %v858
        %v860 = vpop.f32.mrb[0].mxu0
        %v861 = vadd.f32 %v559, %v860
        %v862 = vpop.f32.mrb[0].mxu0
        %v863 = vadd.f32 %v561, %v862
        %v864 = vpop.f32.mrb[0].mxu0
        %v865 = vadd.f32 %v563, %v864
        %866 = vmatprep.mubr.bf16.mxu0 0
        %867 = vmatmul.mubr.bf16.gmra.mrb[0].mxu0 %v801
        %v868 = vpop.f32.mrb[0].mxu0
        %v869 = vadd.f32 %v567, %v868
        %v870 = vpop.f32.mrb[0].mxu0
        %v871 = vadd.f32 %v569, %v870
        %v872 = vpop.f32.mrb[0].mxu0
        %v873 = vadd.f32 %v571, %v872
        %v874 = vpop.f32.mrb[0].mxu0
        %v875 = vadd.f32 %v573, %v874
        %876 = vdwg.mxu0
        %877 = vmatprep.subr.bf16.mxu0 %v780
        %878 = vmatpush1.bf16.msra.mxu0 %v779
        %879 = vmatprep.subr.bf16.mxu0 %v813
        %880 = vmatpush1.bf16.msra.mxu0 %v810
        %881 = vmatprep.subr.bf16.mxu0 0
        %882 = vmatpush1.bf16.msra.mxu0 0
        %883 = vmatprep.subr.bf16.mxu0 0
        %884 = vmatpush1.bf16.msra.mxu0 0
        %885 = vmatprep.subr.bf16.mxu0 0
        %886 = vmatpush1.bf16.msra.mxu0 0
        %887 = vmatprep.subr.bf16.mxu0 0
        %888 = vmatpush1.bf16.msra.mxu0 0
        %889 = vmatprep.subr.bf16.mxu0 0
        %890 = vmatpush1.bf16.msra.mxu0 0
        %891 = vmatprep.subr.bf16.mxu0 0
        %892 = vmatpush1.bf16.msra.mxu0 0
        %893 = vmatprep.subr.bf16.mxu0 0
        %894 = vmatpush1.bf16.msra.mxu0 0
        %895 = vmatprep.subr.bf16.mxu0 0
        %896 = vmatpush1.bf16.msra.mxu0 0
        %897 = vmatprep.subr.bf16.mxu0 0
        %898 = vmatpush1.bf16.msra.mxu0 0
        %899 = vmatprep.subr.bf16.mxu0 0
        %900 = vmatpush1.bf16.msra.mxu0 0
        %901 = vmatprep.subr.bf16.mxu0 0
        %902 = vmatpush1.bf16.msra.mxu0 0
        %903 = vmatprep.subr.bf16.mxu0 0
        %904 = vmatpush1.bf16.msra.mxu0 0
        %905 = vmatprep.subr.bf16.mxu0 0
        %906 = vmatpush1.bf16.msra.mxu0 0
        %907 = vmatprep.subr.bf16.mxu0 0
        %908 = vmatpush1.bf16.msra.mxu0 0
        %909 = vmatprep.mubr.bf16.mxu0 0
        %910 = vmatmul.mubr.bf16.gmra.mrb[0].mxu0 %v798
        %v911 = vpop.f32.mrb[0].mxu0
        %v912 = vadd.f32 %v610, %v911
        %v913 = vpop.f32.mrb[0].mxu0
        %v914 = vadd.f32 %v612, %v913
        %v915 = vpop.f32.mrb[0].mxu0
        %v916 = vadd.f32 %v614, %v915
        %v917 = vpop.f32.mrb[0].mxu0
        %v918 = vadd.f32 %v616, %v917
        %919 = vmatprep.mubr.bf16.mxu0 0
        %920 = vmatmul.mubr.bf16.gmra.mrb[0].mxu0 %v801
        %v921 = vpop.f32.mrb[0].mxu0
        %v922 = vadd.f32 %v620, %v921
        %v923 = vpop.f32.mrb[0].mxu0
        %v924 = vadd.f32 %v622, %v923
        %v925 = vpop.f32.mrb[0].mxu0
        %v926 = vadd.f32 %v624, %v925
        %v927 = vpop.f32.mrb[0].mxu0
        %v928 = vadd.f32 %v626, %v927
        %929 = vdwg.mxu0
        %930 = vmatprep.subr.bf16.mxu0 %v782
        %931 = vmatpush1.bf16.msra.mxu0 %v781
        %932 = vmatprep.subr.bf16.mxu0 %v819
        %933 = vmatpush1.bf16.msra.mxu0 %v816
        %934 = vmatprep.subr.bf16.mxu0 0
        %935 = vmatpush1.bf16.msra.mxu0 0
        %936 = vmatprep.subr.bf16.mxu0 0
        %937 = vmatpush1.bf16.msra.mxu0 0
        %938 = vmatprep.subr.bf16.mxu0 0
        %939 = vmatpush1.bf16.msra.mxu0 0
        %940 = vmatprep.subr.bf16.mxu0 0
        %941 = vmatpush1.bf16.msra.mxu0 0
        %942 = vmatprep.subr.bf16.mxu0 0
        %943 = vmatpush1.bf16.msra.mxu0 0
        %944 = vmatprep.subr.bf16.mxu0 0
        %945 = vmatpush1.bf16.msra.mxu0 0
        %946 = vmatprep.subr.bf16.mxu0 0
        %947 = vmatpush1.bf16.msra.mxu0 0
        %948 = vmatprep.subr.bf16.mxu0 0
        %949 = vmatpush1.bf16.msra.mxu0 0
        %950 = vmatprep.subr.bf16.mxu0 0
        %951 = vmatpush1.bf16.msra.mxu0 0
        %952 = vmatprep.subr.bf16.mxu0 0
        %953 = vmatpush1.bf16.msra.mxu0 0
        %954 = vmatprep.subr.bf16.mxu0 0
        %955 = vmatpush1.bf16.msra.mxu0 0
        %956 = vmatprep.subr.bf16.mxu0 0
        %957 = vmatpush1.bf16.msra.mxu0 0
        %958 = vmatprep.subr.bf16.mxu0 0
        %959 = vmatpush1.bf16.msra.mxu0 0
        %960 = vmatprep.subr.bf16.mxu0 0
        %961 = vmatpush1.bf16.msra.mxu0 0
        %962 = vmatprep.mubr.bf16.mxu0 0
        %963 = vmatmul.mubr.bf16.gmra.mrb[0].mxu0 %v798
        %v964 = vpop.f32.mrb[0].mxu0
        %v965 = vadd.f32 %v663, %v964
        %v966 = vpop.f32.mrb[0].mxu0
        %v967 = vadd.f32 %v665, %v966
        %v968 = vpop.f32.mrb[0].mxu0
        %v969 = vadd.f32 %v667, %v968
        %v970 = vpop.f32.mrb[0].mxu0
        %v971 = vadd.f32 %v669, %v970
        %972 = vmatprep.mubr.bf16.mxu0 0
        %973 = vmatmul.mubr.bf16.gmra.mrb[0].mxu0 %v801
        %v974 = vpop.f32.mrb[0].mxu0
        %v975 = vadd.f32 %v673, %v974
        %v976 = vpop.f32.mrb[0].mxu0
        %v977 = vadd.f32 %v675, %v976
        %v978 = vpop.f32.mrb[0].mxu0
        %v979 = vadd.f32 %v677, %v978
        %v980 = vpop.f32.mrb[0].mxu0
        %v981 = vadd.f32 %v679, %v980
        %982 = vdwg.mxu0
        %983 = vmatprep.subr.bf16.mxu0 0
        %984 = vmatpush1.bf16.msra.mxu0 %v783
        %985 = vmatprep.subr.bf16.mxu0 0
        %986 = vmatpush1.bf16.msra.mxu0 %v822
        %987 = vmatprep.subr.bf16.mxu0 0
        %988 = vmatpush1.bf16.msra.mxu0 0
        %989 = vmatprep.subr.bf16.mxu0 0
        %990 = vmatpush1.bf16.msra.mxu0 0
        %991 = vmatprep.subr.bf16.mxu0 0
        %992 = vmatpush1.bf16.msra.mxu0 0
        %993 = vmatprep.subr.bf16.mxu0 0
        %994 = vmatpush1.bf16.msra.mxu0 0
        %995 = vmatprep.subr.bf16.mxu0 0
        %996 = vmatpush1.bf16.msra.mxu0 0
        %997 = vmatprep.subr.bf16.mxu0 0
        %998 = vmatpush1.bf16.msra.mxu0 0
        %999 = vmatprep.subr.bf16.mxu0 0
        %1000 = vmatpush1.bf16.msra.mxu0 0
        %1001 = vmatprep.subr.bf16.mxu0 0
        %1002 = vmatpush1.bf16.msra.mxu0 0
        %1003 = vmatprep.subr.bf16.mxu0 0
        %1004 = vmatpush1.bf16.msra.mxu0 0
        %1005 = vmatprep.subr.bf16.mxu0 0
        %1006 = vmatpush1.bf16.msra.mxu0 0
        %1007 = vmatprep.subr.bf16.mxu0 0
        %1008 = vmatpush1.bf16.msra.mxu0 0
        %1009 = vmatprep.subr.bf16.mxu0 0
        %1010 = vmatpush1.bf16.msra.mxu0 0
        %1011 = vmatprep.subr.bf16.mxu0 0
        %1012 = vmatpush1.bf16.msra.mxu0 0
        %1013 = vmatprep.subr.bf16.mxu0 0
        %1014 = vmatpush1.bf16.msra.mxu0 0
        %1015 = vmatprep.mubr.bf16.mxu0 0
        %1016 = vmatmul.mubr.bf16.gmra.mrb[0].mxu0 %v798
        %v1017 = vpop.f32.mrb[0].mxu0
        %v1018 = vadd.f32 %v716, %v1017
        %v1019 = vpop.f32.mrb[0].mxu0
        %v1020 = vpop.f32.mrb[0].mxu0
        %v1021 = vadd.f32 %v719, %v1020
        %v1022 = vpop.f32.mrb[0].mxu0
        %1023 = vmatprep.mubr.bf16.mxu0 0
        %1024 = vmatmul.mubr.bf16.gmra.mrb[0].mxu0 %v801
        %v1025 = vpop.f32.mrb[0].mxu0
        %v1026 = vadd.f32 %v724, %v1025
        %v1027 = vpop.f32.mrb[0].mxu0
        %v1028 = vpop.f32.mrb[0].mxu0
        %v1029 = vadd.f32 %v727, %v1028
        %v1030 = vpop.f32.mrb[0].mxu0
        %1031 = vdwg.mxu0
        %v1032 = vld [vmem:[#allocation2] sm:$0xe]
        %s1033 = scalar_lea.vmem [#allocation4], 224
        %v1034 = vld [vmem:[%s1033] sm:$0xff]
        %v1035 = vld [vmem:[%s1033 + $0x8] sm:$0xff]
        %v1036 = vld [vmem:[%s1033 + $0x10] sm:$0xff]
        %v1037 = vld [vmem:[%s1033 + $0x18] sm:$0xf]
        %v1038 = vld [vmem:[%s1033 + $0x1c] sm:$0xff]
        %v1039 = vld [vmem:[%s1033 + $0x24] sm:$0xff]
        %v1040 = vld [vmem:[%s1033 + $0x2c] sm:$0xff]
        %v1041 = vld [vmem:[%s1033 + $0x34] sm:$0xf]
        %v1042 = vld [vmem:[%s1033 + $0x38] sm:$0xff]
        %v1043 = vld [vmem:[%s1033 + $0x40] sm:$0xff]
        %v1044 = vld [vmem:[%s1033 + $0x48] sm:$0xff]
        %v1045 = vld [vmem:[%s1033 + $0x50] sm:$0xf]
        %v1046 = vld [vmem:[%s1033 + $0x54] sm:$0x33]
        %v1047 = vld [vmem:[%s1033 + $0x5c] sm:$0x33]
        %v1048 = vld [vmem:[%s1033 + $0x64] sm:$0x33]
        %v1049 = vld [vmem:[%s1033 + $0x6c] sm:$0x3]
        %v1051 = vunpack.c.l.b16 %v1032
        %v1052 = vpack.c.b16 %v407, %v1051
        %vm1053 = vcmask 1046528
        %v1054 = vrot.slane %v1052, 1
        %v1055 = vrot.slane %v411, 1
        %v1056 = vsel %vm1053, %v1054, %v1055
        %v1073 = vunpack.c.l.b16 %v1034
        %v1074 = vunpack.c.h.b16 %v1034
        %v1075 = vunpack.c.l.b16 %v1035
        %v1076 = vunpack.c.h.b16 %v1035
        %v1077 = vunpack.c.l.b16 %v1036
        %v1078 = vunpack.c.h.b16 %v1036
        %v1079 = vunpack.c.l.b16 %v1037
        %v1080 = vunpack.c.l.b16 %v1038
        %v1081 = vunpack.c.h.b16 %v1038
        %v1082 = vunpack.c.l.b16 %v1039
        %v1083 = vunpack.c.h.b16 %v1039
        %v1084 = vunpack.c.l.b16 %v1040
        %v1085 = vunpack.c.h.b16 %v1040
        %v1086 = vunpack.c.l.b16 %v1041
        %v1087 = vunpack.c.l.b16 %v1042
        %v1088 = vunpack.c.h.b16 %v1042
        %v1089 = vunpack.c.l.b16 %v1043
        %v1090 = vunpack.c.h.b16 %v1043
        %v1091 = vunpack.c.l.b16 %v1044
        %v1092 = vunpack.c.h.b16 %v1044
        %v1093 = vunpack.c.l.b16 %v1045
        %v1094 = vunpack.c.l.b16 %v1046
        %v1095 = vunpack.c.h.b16 %v1046
        %v1096 = vunpack.c.l.b16 %v1047
        %v1097 = vunpack.c.h.b16 %v1047
        %v1098 = vunpack.c.l.b16 %v1048
        %v1099 = vunpack.c.h.b16 %v1048
        %v1100 = vunpack.c.l.b16 %v1049
        %v1101 = vpack.c.b16 %v1080, %v1073
        %v1102 = vpack.c.b16 %v1081, %v1074
        %v1103 = vpack.c.b16 %v1082, %v1075
        %v1104 = vpack.c.b16 %v1083, %v1076
        %v1105 = vpack.c.b16 %v1084, %v1077
        %v1106 = vpack.c.b16 %v1085, %v1078
        %v1107 = vpack.c.b16 %v1086, %v1079
        %v1108 = vpack.c.b16 %v1094, %v1087
        %v1109 = vpack.c.b16 %v1095, %v1088
        %v1110 = vpack.c.b16 %v1096, %v1089
        %v1111 = vpack.c.b16 %v1097, %v1090
        %v1112 = vpack.c.b16 %v1098, %v1091
        %v1113 = vpack.c.b16 %v1099, %v1092
        %v1114 = vpack.c.b16 %v1100, %v1093
        %v1123 = vsel %vm493, %v1056, 0
        %v1126 = vsel %vm493, %v1055, 0
        %v1129 = vsel %vm500, %v1108, 0
        %v1132 = vsel %vm500, %v1109, 0
        %v1135 = vsel %vm500, %v1110, 0
        %v1138 = vsel %vm500, %v1111, 0
        %v1141 = vsel %vm500, %v1112, 0
        %v1144 = vsel %vm500, %v1113, 0
        %v1147 = vsel %vm500, %v1114, 0
        %1149 = vmatprep.subr.bf16.mxu0 %v1102
        %1150 = vmatpush1.bf16.msra.mxu0 %v1101
        %1151 = vmatprep.subr.bf16.mxu0 %v1132
        %1152 = vmatpush1.bf16.msra.mxu0 %v1129
        %1153 = vmatprep.subr.bf16.mxu0 0
        %1154 = vmatpush1.bf16.msra.mxu0 0
        %1155 = vmatprep.subr.bf16.mxu0 0
        %1156 = vmatpush1.bf16.msra.mxu0 0
        %1157 = vmatprep.subr.bf16.mxu0 0
        %1158 = vmatpush1.bf16.msra.mxu0 0
        %1159 = vmatprep.subr.bf16.mxu0 0
        %1160 = vmatpush1.bf16.msra.mxu0 0
        %1161 = vmatprep.subr.bf16.mxu0 0
        %1162 = vmatpush1.bf16.msra.mxu0 0
        %1163 = vmatprep.subr.bf16.mxu0 0
        %1164 = vmatpush1.bf16.msra.mxu0 0
        %1165 = vmatprep.subr.bf16.mxu0 0
        %1166 = vmatpush1.bf16.msra.mxu0 0
        %1167 = vmatprep.subr.bf16.mxu0 0
        %1168 = vmatpush1.bf16.msra.mxu0 0
        %1169 = vmatprep.subr.bf16.mxu0 0
        %1170 = vmatpush1.bf16.msra.mxu0 0
        %1171 = vmatprep.subr.bf16.mxu0 0
        %1172 = vmatpush1.bf16.msra.mxu0 0
        %1173 = vmatprep.subr.bf16.mxu0 0
        %1174 = vmatpush1.bf16.msra.mxu0 0
        %1175 = vmatprep.subr.bf16.mxu0 0
        %1176 = vmatpush1.bf16.msra.mxu0 0
        %1177 = vmatprep.subr.bf16.mxu0 0
        %1178 = vmatpush1.bf16.msra.mxu0 0
        %1179 = vmatprep.subr.bf16.mxu0 0
        %1180 = vmatpush1.bf16.msra.mxu0 0
        %1181 = vmatprep.mubr.bf16.mxu0 0
        %1182 = vmatmul.mubr.bf16.gmra.mrb[0].mxu0 %v1123
        %v1183 = vpop.f32.mrb[0].mxu0
        %v1184 = vadd.f32 0.0, %v1183
        %v1185 = vpop.f32.mrb[0].mxu0
        %v1186 = vadd.f32 0.0, %v1185
        %v1187 = vpop.f32.mrb[0].mxu0
        %v1188 = vadd.f32 0.0, %v1187
        %v1189 = vpop.f32.mrb[0].mxu0
        %v1190 = vadd.f32 0.0, %v1189
        %1191 = vmatprep.mubr.bf16.mxu0 0
        %1192 = vmatmul.mubr.bf16.gmra.mrb[0].mxu0 %v1126
        %v1193 = vpop.f32.mrb[0].mxu0
        %v1194 = vadd.f32 0.0, %v1193
        %v1195 = vpop.f32.mrb[0].mxu0
        %v1196 = vadd.f32 0.0, %v1195
        %v1197 = vpop.f32.mrb[0].mxu0
        %v1198 = vadd.f32 0.0, %v1197
        %v1199 = vpop.f32.mrb[0].mxu0
        %v1200 = vadd.f32 0.0, %v1199
        %1201 = vdwg.mxu0
        %1202 = vmatprep.subr.bf16.mxu0 %v1104
        %1203 = vmatpush1.bf16.msra.mxu0 %v1103
        %1204 = vmatprep.subr.bf16.mxu0 %v1138
        %1205 = vmatpush1.bf16.msra.mxu0 %v1135
        %1206 = vmatprep.subr.bf16.mxu0 0
        %1207 = vmatpush1.bf16.msra.mxu0 0
        %1208 = vmatprep.subr.bf16.mxu0 0
        %1209 = vmatpush1.bf16.msra.mxu0 0
        %1210 = vmatprep.subr.bf16.mxu0 0
        %1211 = vmatpush1.bf16.msra.mxu0 0
        %1212 = vmatprep.subr.bf16.mxu0 0
        %1213 = vmatpush1.bf16.msra.mxu0 0
        %1214 = vmatprep.subr.bf16.mxu0 0
        %1215 = vmatpush1.bf16.msra.mxu0 0
        %1216 = vmatprep.subr.bf16.mxu0 0
        %1217 = vmatpush1.bf16.msra.mxu0 0
        %1218 = vmatprep.subr.bf16.mxu0 0
        %1219 = vmatpush1.bf16.msra.mxu0 0
        %1220 = vmatprep.subr.bf16.mxu0 0
        %1221 = vmatpush1.bf16.msra.mxu0 0
        %1222 = vmatprep.subr.bf16.mxu0 0
        %1223 = vmatpush1.bf16.msra.mxu0 0
        %1224 = vmatprep.subr.bf16.mxu0 0
        %1225 = vmatpush1.bf16.msra.mxu0 0
        %1226 = vmatprep.subr.bf16.mxu0 0
        %1227 = vmatpush1.bf16.msra.mxu0 0
        %1228 = vmatprep.subr.bf16.mxu0 0
        %1229 = vmatpush1.bf16.msra.mxu0 0
        %1230 = vmatprep.subr.bf16.mxu0 0
        %1231 = vmatpush1.bf16.msra.mxu0 0
        %1232 = vmatprep.subr.bf16.mxu0 0
        %1233 = vmatpush1.bf16.msra.mxu0 0
        %1234 = vmatprep.mubr.bf16.mxu0 0
        %1235 = vmatmul.mubr.bf16.gmra.mrb[0].mxu0 %v1123
        %v1236 = vpop.f32.mrb[0].mxu0
        %v1237 = vadd.f32 0.0, %v1236
        %v1238 = vpop.f32.mrb[0].mxu0
        %v1239 = vadd.f32 0.0, %v1238
        %v1240 = vpop.f32.mrb[0].mxu0
        %v1241 = vadd.f32 0.0, %v1240
        %v1242 = vpop.f32.mrb[0].mxu0
        %v1243 = vadd.f32 0.0, %v1242
        %1244 = vmatprep.mubr.bf16.mxu0 0
        %1245 = vmatmul.mubr.bf16.gmra.mrb[0].mxu0 %v1126
        %v1246 = vpop.f32.mrb[0].mxu0
        %v1247 = vadd.f32 0.0, %v1246
        %v1248 = vpop.f32.mrb[0].mxu0
        %v1249 = vadd.f32 0.0, %v1248
        %v1250 = vpop.f32.mrb[0].mxu0
        %v1251 = vadd.f32 0.0, %v1250
        %v1252 = vpop.f32.mrb[0].mxu0
        %v1253 = vadd.f32 0.0, %v1252
        %1254 = vdwg.mxu0
        %1255 = vmatprep.subr.bf16.mxu0 %v1106
        %1256 = vmatpush1.bf16.msra.mxu0 %v1105
        %1257 = vmatprep.subr.bf16.mxu0 %v1144
        %1258 = vmatpush1.bf16.msra.mxu0 %v1141
        %1259 = vmatprep.subr.bf16.mxu0 0
        %1260 = vmatpush1.bf16.msra.mxu0 0
        %1261 = vmatprep.subr.bf16.mxu0 0
        %1262 = vmatpush1.bf16.msra.mxu0 0
        %1263 = vmatprep.subr.bf16.mxu0 0
        %1264 = vmatpush1.bf16.msra.mxu0 0
        %1265 = vmatprep.subr.bf16.mxu0 0
        %1266 = vmatpush1.bf16.msra.mxu0 0
        %1267 = vmatprep.subr.bf16.mxu0 0
        %1268 = vmatpush1.bf16.msra.mxu0 0
        %1269 = vmatprep.subr.bf16.mxu0 0
        %1270 = vmatpush1.bf16.msra.mxu0 0
        %1271 = vmatprep.subr.bf16.mxu0 0
        %1272 = vmatpush1.bf16.msra.mxu0 0
        %1273 = vmatprep.subr.bf16.mxu0 0
        %1274 = vmatpush1.bf16.msra.mxu0 0
        %1275 = vmatprep.subr.bf16.mxu0 0
        %1276 = vmatpush1.bf16.msra.mxu0 0
        %1277 = vmatprep.subr.bf16.mxu0 0
        %1278 = vmatpush1.bf16.msra.mxu0 0
        %1279 = vmatprep.subr.bf16.mxu0 0
        %1280 = vmatpush1.bf16.msra.mxu0 0
        %1281 = vmatprep.subr.bf16.mxu0 0
        %1282 = vmatpush1.bf16.msra.mxu0 0
        %1283 = vmatprep.subr.bf16.mxu0 0
        %1284 = vmatpush1.bf16.msra.mxu0 0
        %1285 = vmatprep.subr.bf16.mxu0 0
        %1286 = vmatpush1.bf16.msra.mxu0 0
        %1287 = vmatprep.mubr.bf16.mxu0 0
        %1288 = vmatmul.mubr.bf16.gmra.mrb[0].mxu0 %v1123
        %v1289 = vpop.f32.mrb[0].mxu0
        %v1290 = vadd.f32 0.0, %v1289
        %v1291 = vpop.f32.mrb[0].mxu0
        %v1292 = vadd.f32 0.0, %v1291
        %v1293 = vpop.f32.mrb[0].mxu0
        %v1294 = vadd.f32 0.0, %v1293
        %v1295 = vpop.f32.mrb[0].mxu0
        %v1296 = vadd.f32 0.0, %v1295
        %1297 = vmatprep.mubr.bf16.mxu0 0
        %1298 = vmatmul.mubr.bf16.gmra.mrb[0].mxu0 %v1126
        %v1299 = vpop.f32.mrb[0].mxu0
        %v1300 = vadd.f32 0.0, %v1299
        %v1301 = vpop.f32.mrb[0].mxu0
        %v1302 = vadd.f32 0.0, %v1301
        %v1303 = vpop.f32.mrb[0].mxu0
        %v1304 = vadd.f32 0.0, %v1303
        %v1305 = vpop.f32.mrb[0].mxu0
        %v1306 = vadd.f32 0.0, %v1305
        %1307 = vdwg.mxu0
        %1308 = vmatprep.subr.bf16.mxu0 0
        %1309 = vmatpush1.bf16.msra.mxu0 %v1107
        %1310 = vmatprep.subr.bf16.mxu0 0
        %1311 = vmatpush1.bf16.msra.mxu0 %v1147
        %1312 = vmatprep.subr.bf16.mxu0 0
        %1313 = vmatpush1.bf16.msra.mxu0 0
        %1314 = vmatprep.subr.bf16.mxu0 0
        %1315 = vmatpush1.bf16.msra.mxu0 0
        %1316 = vmatprep.subr.bf16.mxu0 0
        %1317 = vmatpush1.bf16.msra.mxu0 0
        %1318 = vmatprep.subr.bf16.mxu0 0
        %1319 = vmatpush1.bf16.msra.mxu0 0
        %1320 = vmatprep.subr.bf16.mxu0 0
        %1321 = vmatpush1.bf16.msra.mxu0 0
        %1322 = vmatprep.subr.bf16.mxu0 0
        %1323 = vmatpush1.bf16.msra.mxu0 0
        %1324 = vmatprep.subr.bf16.mxu0 0
        %1325 = vmatpush1.bf16.msra.mxu0 0
        %1326 = vmatprep.subr.bf16.mxu0 0
        %1327 = vmatpush1.bf16.msra.mxu0 0
        %1328 = vmatprep.subr.bf16.mxu0 0
        %1329 = vmatpush1.bf16.msra.mxu0 0
        %1330 = vmatprep.subr.bf16.mxu0 0
        %1331 = vmatpush1.bf16.msra.mxu0 0
        %1332 = vmatprep.subr.bf16.mxu0 0
        %1333 = vmatpush1.bf16.msra.mxu0 0
        %1334 = vmatprep.subr.bf16.mxu0 0
        %1335 = vmatpush1.bf16.msra.mxu0 0
        %1336 = vmatprep.subr.bf16.mxu0 0
        %1337 = vmatpush1.bf16.msra.mxu0 0
        %1338 = vmatprep.subr.bf16.mxu0 0
        %1339 = vmatpush1.bf16.msra.mxu0 0
        %1340 = vmatprep.mubr.bf16.mxu0 0
        %1341 = vmatmul.mubr.bf16.gmra.mrb[0].mxu0 %v1123
        %v1342 = vpop.f32.mrb[0].mxu0
        %v1343 = vadd.f32 0.0, %v1342
        %v1344 = vpop.f32.mrb[0].mxu0
        %v1345 = vpop.f32.mrb[0].mxu0
        %v1346 = vadd.f32 0.0, %v1345
        %v1347 = vpop.f32.mrb[0].mxu0
        %1348 = vmatprep.mubr.bf16.mxu0 0
        %1349 = vmatmul.mubr.bf16.gmra.mrb[0].mxu0 %v1126
        %v1350 = vpop.f32.mrb[0].mxu0
        %v1351 = vadd.f32 0.0, %v1350
        %v1352 = vpop.f32.mrb[0].mxu0
        %v1353 = vpop.f32.mrb[0].mxu0
        %v1354 = vadd.f32 0.0, %v1353
        %v1355 = vpop.f32.mrb[0].mxu0
        %1356 = vdwg.mxu0
        %v1357 = vadd.f32 %v859, %v1184
        %v1358 = vadd.f32 %v861, %v1186
        %v1359 = vadd.f32 %v912, %v1237
        %v1360 = vadd.f32 %v914, %v1239
        %v1361 = vadd.f32 %v965, %v1290
        %v1362 = vadd.f32 %v967, %v1292
        %v1363 = vadd.f32 %v1018, %v1343
        %v1364 = vadd.f32 %v863, %v1188
        %v1365 = vadd.f32 %v865, %v1190
        %v1366 = vadd.f32 %v916, %v1241
        %v1367 = vadd.f32 %v918, %v1243
        %v1368 = vadd.f32 %v969, %v1294
        %v1369 = vadd.f32 %v971, %v1296
        %v1370 = vadd.f32 %v1021, %v1346
        %v1371 = vadd.f32 %v869, %v1194
        %v1372 = vadd.f32 %v871, %v1196
        %v1373 = vadd.f32 %v922, %v1247
        %v1374 = vadd.f32 %v924, %v1249
        %v1375 = vadd.f32 %v975, %v1300
        %v1376 = vadd.f32 %v977, %v1302
        %v1377 = vadd.f32 %v1026, %v1351
        %v1378 = vadd.f32 %v873, %v1198
        %v1379 = vadd.f32 %v875, %v1200
        %v1380 = vadd.f32 %v926, %v1251
        %v1381 = vadd.f32 %v928, %v1253
        %v1382 = vadd.f32 %v979, %v1304
        %v1383 = vadd.f32 %v981, %v1306
        %v1384 = vadd.f32 %v1029, %v1354
        %1401 = vrot.lane.b32.xlu0 %v1360, 64
        %v1402 = vpop.permute.xlu0 %1401
        %1403 = vrot.lane.b32.xlu0 %v1361, 64
        %v1404 = vpop.permute.xlu0 %1403
        %1405 = vrot.lane.b32.xlu0 %v1362, 64
        %v1406 = vpop.permute.xlu0 %1405
        %1407 = vrot.lane.b32.xlu0 %v1363, 64
        %v1408 = vpop.permute.xlu0 %1407
        %1409 = vrot.lane.b32.xlu0 %v1367, 64
        %v1410 = vpop.permute.xlu0 %1409
        %1411 = vrot.lane.b32.xlu0 %v1368, 64
        %v1412 = vpop.permute.xlu0 %1411
        %1413 = vrot.lane.b32.xlu0 %v1369, 64
        %v1414 = vpop.permute.xlu0 %1413
        %1415 = vrot.lane.b32.xlu0 %v1370, 64
        %v1416 = vpop.permute.xlu0 %1415
        %1417 = vrot.lane.b32.xlu0 %v1374, 64
        %v1418 = vpop.permute.xlu0 %1417
        %1419 = vrot.lane.b32.xlu0 %v1375, 64
        %v1420 = vpop.permute.xlu0 %1419
        %1421 = vrot.lane.b32.xlu0 %v1376, 64
        %v1422 = vpop.permute.xlu0 %1421
        %1423 = vrot.lane.b32.xlu0 %v1377, 64
        %v1424 = vpop.permute.xlu0 %1423
        %1425 = vrot.lane.b32.xlu0 %v1381, 64
        %v1426 = vpop.permute.xlu0 %1425
        %1427 = vrot.lane.b32.xlu0 %v1382, 64
        %v1428 = vpop.permute.xlu0 %1427
        %1429 = vrot.lane.b32.xlu0 %v1383, 64
        %v1430 = vpop.permute.xlu0 %1429
        %1431 = vrot.lane.b32.xlu0 %v1384, 64
        %v1432 = vpop.permute.xlu0 %1431
        %vm1433 = vcmask 523264
        %v1434 = vsel %vm1433, %v1402, %v1404
        %v1435 = vsel %vm1433, %v1404, %v1406
        %v1436 = vsel %vm1433, %v1406, %v1408
        %v1437 = vsel %vm1433, %v1410, %v1412
        %v1438 = vsel %vm1433, %v1412, %v1414
        %v1439 = vsel %vm1433, %v1414, %v1416
        %v1440 = vsel %vm1433, %v1418, %v1420
        %v1441 = vsel %vm1433, %v1420, %v1422
        %v1442 = vsel %vm1433, %v1422, %v1424
        %v1443 = vsel %vm1433, %v1426, %v1428
        %v1444 = vsel %vm1433, %v1428, %v1430
        %v1445 = vsel %vm1433, %v1430, %v1432
        %v1462 = vmax.f32 %v1357, %v1434
        %v1463 = vmax.f32 %v1358, %v1435
        %v1464 = vmax.f32 %v1359, %v1436
        %v1465 = vmax.f32 %v1360, %v1408
        %v1466 = vmax.f32 %v1364, %v1437
        %v1467 = vmax.f32 %v1365, %v1438
        %v1468 = vmax.f32 %v1366, %v1439
        %v1469 = vmax.f32 %v1367, %v1416
        %v1470 = vmax.f32 %v1371, %v1440
        %v1471 = vmax.f32 %v1372, %v1441
        %v1472 = vmax.f32 %v1373, %v1442
        %v1473 = vmax.f32 %v1374, %v1424
        %v1474 = vmax.f32 %v1378, %v1443
        %v1475 = vmax.f32 %v1379, %v1444
        %v1476 = vmax.f32 %v1380, %v1445
        %v1477 = vmax.f32 %v1381, %v1432
        %v1482 = vrot.slane %v1462, 1
        %v1483 = vrot.slane %v1463, 1
        %v1484 = vrot.slane %v1464, 1
        %v1485 = vrot.slane %v1465, 1
        %v1490 = vrot.slane %v1462, 2
        %v1491 = vrot.slane %v1463, 2
        %v1492 = vrot.slane %v1464, 2
        %v1493 = vrot.slane %v1465, 2
        %v1498 = vrot.slane %v1462, 3
        %v1499 = vrot.slane %v1463, 3
        %v1500 = vrot.slane %v1464, 3
        %v1501 = vrot.slane %v1465, 3
        %v1510 = vrot.slane %v1466, 4
        %v1511 = vrot.slane %v1467, 4
        %v1512 = vrot.slane %v1468, 4
        %v1513 = vrot.slane %v1469, 4
        %v1518 = vrot.slane %v1466, 5
        %v1519 = vrot.slane %v1467, 5
        %v1520 = vrot.slane %v1468, 5
        %v1521 = vrot.slane %v1469, 5
        %v1526 = vrot.slane %v1466, 6
        %v1527 = vrot.slane %v1467, 6
        %v1528 = vrot.slane %v1468, 6
        %v1529 = vrot.slane %v1469, 6
        %v1534 = vrot.slane %v1466, 7
        %v1535 = vrot.slane %v1467, 7
        %v1536 = vrot.slane %v1468, 7
        %v1537 = vrot.slane %v1469, 7
        %v1546 = vrot.slane %v1470, 1
        %v1547 = vrot.slane %v1471, 1
        %v1548 = vrot.slane %v1472, 1
        %v1549 = vrot.slane %v1473, 1
        %v1554 = vrot.slane %v1470, 2
        %v1555 = vrot.slane %v1471, 2
        %v1556 = vrot.slane %v1472, 2
        %v1557 = vrot.slane %v1473, 2
        %v1562 = vrot.slane %v1470, 3
        %v1563 = vrot.slane %v1471, 3
        %v1564 = vrot.slane %v1472, 3
        %v1565 = vrot.slane %v1473, 3
        %v1574 = vrot.slane %v1474, 4
        %v1575 = vrot.slane %v1475, 4
        %v1576 = vrot.slane %v1476, 4
        %v1577 = vrot.slane %v1477, 4
        %v1582 = vrot.slane %v1474, 5
        %v1583 = vrot.slane %v1475, 5
        %v1584 = vrot.slane %v1476, 5
        %v1585 = vrot.slane %v1477, 5
        %vm1590 = vcmask 1040384
        %v1591 = vsel %vm1590, %v1462, %v1482
        %v1592 = vsel %vm1590, %v1463, %v1483
        %v1593 = vsel %vm1590, %v1464, %v1484
        %v1594 = vsel %vm1590, %v1465, %v1485
        %vm1595 = vcmask 1041408
        %v1596 = vsel %vm1595, %v1591, %v1490
        %v1597 = vsel %vm1595, %v1592, %v1491
        %v1598 = vsel %vm1595, %v1593, %v1492
        %v1599 = vsel %vm1595, %v1594, %v1493
        %vm1600 = vcmask 1042432
        %v1601 = vsel %vm1600, %v1596, %v1498
        %v1602 = vsel %vm1600, %v1597, %v1499
        %v1603 = vsel %vm1600, %v1598, %v1500
        %v1604 = vsel %vm1600, %v1599, %v1501
        %vm1605 = vcmask 1043456
        %v1606 = vsel %vm1605, %v1601, %v1510
        %v1607 = vsel %vm1605, %v1602, %v1511
        %v1608 = vsel %vm1605, %v1603, %v1512
        %v1609 = vsel %vm1605, %v1604, %v1513
        %vm1610 = vcmask 1044480
        %v1611 = vsel %vm1610, %v1606, %v1518
        %v1612 = vsel %vm1610, %v1607, %v1519
        %v1613 = vsel %vm1610, %v1608, %v1520
        %v1614 = vsel %vm1610, %v1609, %v1521
        %v1615 = vsel %vm500, %v1611, %v1526
        %v1616 = vsel %vm500, %v1612, %v1527
        %v1617 = vsel %vm500, %v1613, %v1528
        %v1618 = vsel %vm500, %v1614, %v1529
        %vm1619 = vcmask 1046528
        %v1620 = vsel %vm1619, %v1615, %v1534
        %v1621 = vsel %vm1619, %v1616, %v1535
        %v1622 = vsel %vm1619, %v1617, %v1536
        %v1623 = vsel %vm1619, %v1618, %v1537
        %v1624 = vsel %vm1590, %v1470, %v1546
        %v1625 = vsel %vm1590, %v1471, %v1547
        %v1626 = vsel %vm1590, %v1472, %v1548
        %v1627 = vsel %vm1590, %v1473, %v1549
        %v1628 = vsel %vm1595, %v1624, %v1554
        %v1629 = vsel %vm1595, %v1625, %v1555
        %v1630 = vsel %vm1595, %v1626, %v1556
        %v1631 = vsel %vm1595, %v1627, %v1557
        %v1632 = vsel %vm1600, %v1628, %v1562
        %v1633 = vsel %vm1600, %v1629, %v1563
        %v1634 = vsel %vm1600, %v1630, %v1564
        %v1635 = vsel %vm1600, %v1631, %v1565
        %v1636 = vsel %vm1605, %v1632, %v1574
        %v1637 = vsel %vm1605, %v1633, %v1575
        %v1638 = vsel %vm1605, %v1634, %v1576
        %v1639 = vsel %vm1605, %v1635, %v1577
        %v1640 = vsel %vm1610, %v1636, %v1582
        %v1641 = vsel %vm1610, %v1637, %v1583
        %v1642 = vsel %vm1610, %v1638, %v1584
        %v1643 = vsel %vm1610, %v1639, %v1585
        %v1644 = vrot.slane %v1462, 4
        %v1645 = vrot.slane %v1463, 4
        %v1646 = vrot.slane %v1464, 4
        %v1647 = vrot.slane %v1465, 4
        %v1652 = vrot.slane %v1470, 4
        %v1653 = vrot.slane %v1471, 4
        %v1654 = vrot.slane %v1472, 4
        %v1655 = vrot.slane %v1473, 4
        %v1660 = vrot.slane %v1474, 6
        %v1661 = vrot.slane %v1475, 6
        %v1662 = vrot.slane %v1476, 6
        %v1663 = vrot.slane %v1477, 6
        %v1668 = vsel %vm1590, %v1482, %v1490
        %v1669 = vsel %vm1590, %v1483, %v1491
        %v1670 = vsel %vm1590, %v1484, %v1492
        %v1671 = vsel %vm1590, %v1485, %v1493
        %v1672 = vsel %vm1595, %v1668, %v1498
        %v1673 = vsel %vm1595, %v1669, %v1499
        %v1674 = vsel %vm1595, %v1670, %v1500
        %v1675 = vsel %vm1595, %v1671, %v1501
        %v1676 = vsel %vm1600, %v1672, %v1644
        %v1677 = vsel %vm1600, %v1673, %v1645
        %v1678 = vsel %vm1600, %v1674, %v1646
        %v1679 = vsel %vm1600, %v1675, %v1647
        %v1680 = vsel %vm1605, %v1676, %v1518
        %v1681 = vsel %vm1605, %v1677, %v1519
        %v1682 = vsel %vm1605, %v1678, %v1520
        %v1683 = vsel %vm1605, %v1679, %v1521
        %v1684 = vsel %vm1610, %v1680, %v1526
        %v1685 = vsel %vm1610, %v1681, %v1527
        %v1686 = vsel %vm1610, %v1682, %v1528
        %v1687 = vsel %vm1610, %v1683, %v1529
        %v1688 = vsel %vm500, %v1684, %v1534
        %v1689 = vsel %vm500, %v1685, %v1535
        %v1690 = vsel %vm500, %v1686, %v1536
        %v1691 = vsel %vm500, %v1687, %v1537
        %v1692 = vsel %vm1619, %v1688, %v1466
        %v1693 = vsel %vm1619, %v1689, %v1467
        %v1694 = vsel %vm1619, %v1690, %v1468
        %v1695 = vsel %vm1619, %v1691, %v1469
        %v1696 = vsel %vm1590, %v1546, %v1554
        %v1697 = vsel %vm1590, %v1547, %v1555
        %v1698 = vsel %vm1590, %v1548, %v1556
        %v1699 = vsel %vm1590, %v1549, %v1557
        %v1700 = vsel %vm1595, %v1696, %v1562
        %v1701 = vsel %vm1595, %v1697, %v1563
        %v1702 = vsel %vm1595, %v1698, %v1564
        %v1703 = vsel %vm1595, %v1699, %v1565
        %v1704 = vsel %vm1600, %v1700, %v1652
        %v1705 = vsel %vm1600, %v1701, %v1653
        %v1706 = vsel %vm1600, %v1702, %v1654
        %v1707 = vsel %vm1600, %v1703, %v1655
        %v1708 = vsel %vm1605, %v1704, %v1582
        %v1709 = vsel %vm1605, %v1705, %v1583
        %v1710 = vsel %vm1605, %v1706, %v1584
        %v1711 = vsel %vm1605, %v1707, %v1585
        %v1712 = vsel %vm1610, %v1708, %v1660
        %v1713 = vsel %vm1610, %v1709, %v1661
        %v1714 = vsel %vm1610, %v1710, %v1662
        %v1715 = vsel %vm1610, %v1711, %v1663
        %v1716 = vmax.f32 %v1620, %v1692
        %v1717 = vmax.f32 %v1621, %v1693
        %v1718 = vmax.f32 %v1622, %v1694
        %v1719 = vmax.f32 %v1623, %v1695
        %v1720 = vmax.f32 %v1640, %v1712
        %v1721 = vmax.f32 %v1641, %v1713
        %v1722 = vmax.f32 %v1642, %v1714
        %v1723 = vmax.f32 %v1643, %v1715
        %v1724 = vld [vmem:[#allocation6] sm:$0xf]
        %v1726 = vlaneseq
        %v1727 = vshrl.u32 %v1726, 7
        %v1728 = vsub.s32 0, %v1727
        %v1729 = vrot.slane %v1724, %v1728
        %v1730 = vlaneseq
        %v1731 = vshrl.u32 %v1730, 7
        %v1732 = vsub.s32 1, %v1731
        %v1733 = vrot.slane %v1724, %v1732
        %v1734 = vlaneseq
        %v1735 = vshrl.u32 %v1734, 7
        %v1736 = vsub.s32 2, %v1735
        %v1737 = vrot.slane %v1724, %v1736
        %v1738 = vlaneseq
        %v1739 = vshrl.u32 %v1738, 7
        %v1740 = vsub.s32 3, %v1739
        %v1741 = vrot.slane %v1724, %v1740
        %v1746 = vadd.f32 %v1716, %v1729
        %v1747 = vadd.f32 %v1717, %v1733
        %v1748 = vadd.f32 %v1718, %v1737
        %v1749 = vadd.f32 %v1719, %v1741
        %v1750 = vadd.f32 %v1720, %v1729
        %v1751 = vadd.f32 %v1721, %v1733
        %v1752 = vadd.f32 %v1722, %v1737
        %v1753 = vadd.f32 %v1723, %v1741
        %v1754 = vmax.f32 %v1746, 0.0
        %v1755 = vmax.f32 %v1747, 0.0
        %v1756 = vmax.f32 %v1748, 0.0
        %v1757 = vmax.f32 %v1749, 0.0
        %v1758 = vmax.f32 %v1750, 0.0
        %v1759 = vmax.f32 %v1751, 0.0
        %v1760 = vmax.f32 %v1752, 0.0
        %v1761 = vmax.f32 %v1753, 0.0
        %vm1762 = vcmask 1040384
        %vm1763 = vmand %vm1762, %vm282
        %v1764 = vld [vmem:[#allocation3] sm:$0x1]
        %v1765 = vsel %vm1763, 0, %v1764
        %1766 = vst [vmem:[#allocation3] sm:$0x1] %v1765
        %v1767 = vld [vmem:[#allocation3 + $0x8] sm:$0x1]
        %v1768 = vsel %vm1763, 0, %v1767
        %1769 = vst [vmem:[#allocation3 + $0x8] sm:$0x1] %v1768
        %v1770 = vld [vmem:[#allocation3 + $0x10] sm:$0x1]
        %v1771 = vsel %vm1763, 0, %v1770
        %1772 = vst [vmem:[#allocation3 + $0x10] sm:$0x1] %v1771
        %vm1773 = vcmask 516096
        %vm1774 = vmand %vm1773, %vm282
        %v1775 = vld [vmem:[#allocation3 + $0x18] sm:$0x1]
        %v1776 = vsel %vm1774, 0, %v1775
        %1777 = vst [vmem:[#allocation3 + $0x18] sm:$0x1] %v1776
        %vm1778 = vcmask 1047559
        %vm1779 = vsmask.f32 7966
        %vm1780 = vmand %vm1778, %vm1779
        %v1781 = vld [vmem:[#allocation3] sm:$0x80]
        %v1782 = vsel %vm1780, 0, %v1781
        %1783 = vst [vmem:[#allocation3] sm:$0x80] %v1782
        %v1784 = vld [vmem:[#allocation3 + $0x8] sm:$0x80]
        %v1785 = vsel %vm1780, 0, %v1784
        %1786 = vst [vmem:[#allocation3 + $0x8] sm:$0x80] %v1785
        %v1787 = vld [vmem:[#allocation3 + $0x10] sm:$0x80]
        %v1788 = vsel %vm1780, 0, %v1787
        %1789 = vst [vmem:[#allocation3 + $0x10] sm:$0x80] %v1788
        %vm1790 = vcmask 523271
        %vm1791 = vmand %vm1790, %vm1779
        %v1792 = vld [vmem:[#allocation3 + $0x18] sm:$0x80]
        %v1793 = vsel %vm1791, 0, %v1792
        %1794 = vst [vmem:[#allocation3 + $0x18] sm:$0x80] %v1793
        %v1795 = vpack.c.bf16 %v1758, %v1754
        %v1796 = vpack.c.bf16 %v1759, %v1755
        %v1797 = vpack.c.bf16 %v1760, %v1756
        %v1798 = vpack.c.bf16 %v1761, %v1757
        %v1800 = vshrl.u32 %v1795, 16
        %v1802 = vrot.slane %v1800, 7
        %v1803 = vshll.u32 %v1795, 16
        %v1805 = vor.u32 %v1802, %v1803
        %v1807 = vshrl.u32 %v1796, 16
        %v1809 = vrot.slane %v1807, 7
        %v1810 = vshll.u32 %v1796, 16
        %v1812 = vor.u32 %v1809, %v1810
        %v1814 = vshrl.u32 %v1797, 16
        %v1816 = vrot.slane %v1814, 7
        %v1817 = vshll.u32 %v1797, 16
        %v1819 = vor.u32 %v1816, %v1817
        %v1821 = vshrl.u32 %v1798, 16
        %v1823 = vrot.slane %v1821, 7
        %v1824 = vshll.u32 %v1798, 16
        %v1826 = vor.u32 %v1823, %v1824
        %vm1831 = vcmask 1047552
        %vm1832 = vsmask.f32 7426
        %vm1833 = vmand %vm1831, %vm1832
        %v1834 = vld [vmem:[#allocation3] sm:$0xff]
        %v1835 = vsel %vm1833, %v1805, %v1834
        %1836 = vst [vmem:[#allocation3] sm:$0xff] %v1835
        %v1837 = vld [vmem:[#allocation3 + $0x8] sm:$0xff]
        %v1838 = vsel %vm1833, %v1812, %v1837
        %1839 = vst [vmem:[#allocation3 + $0x8] sm:$0xff] %v1838
        %v1840 = vld [vmem:[#allocation3 + $0x10] sm:$0xff]
        %v1841 = vsel %vm1833, %v1819, %v1840
        %1842 = vst [vmem:[#allocation3 + $0x10] sm:$0xff] %v1841
        %vm1843 = vcmask 523264
        %vm1844 = vmand %vm1843, %vm1832
        %v1845 = vld [vmem:[#allocation3 + $0x18] sm:$0xff]
        %v1846 = vsel %vm1844, %v1826, %v1845
        %1847 = vst [vmem:[#allocation3 + $0x18] sm:$0xff] %v1846
        %v1848 = vld [vmem:[#allocation3] sm:$0x7f]
        %v1849 = vld [vmem:[#allocation3 + $0x8] sm:$0x7f]
        %v1850 = vld [vmem:[#allocation3 + $0x10] sm:$0x7f]
        %v1851 = vld [vmem:[#allocation3 + $0x18] sm:$0x7f]
        %v1852 = vld [vmem:[#allocation8] sm:$0xff]
        %v1853 = vld [vmem:[#allocation8 + $0x8] sm:$0xff]
        %v1854 = vld [vmem:[#allocation8 + $0x10] sm:$0xff]
        %v1855 = vld [vmem:[#allocation8 + $0x18] sm:$0xf]
        %v1856 = vld [vmem:[#allocation8 + $0x1c] sm:$0xff]
        %v1857 = vld [vmem:[#allocation8 + $0x24] sm:$0xff]
        %v1858 = vld [vmem:[#allocation8 + $0x2c] sm:$0xff]
        %v1859 = vld [vmem:[#allocation8 + $0x34] sm:$0xf]
        %v1860 = vld [vmem:[#allocation8 + $0x38] sm:$0xff]
        %v1861 = vld [vmem:[#allocation8 + $0x40] sm:$0xff]
        %v1862 = vld [vmem:[#allocation8 + $0x48] sm:$0xff]
        %v1863 = vld [vmem:[#allocation8 + $0x50] sm:$0xf]
        %v1864 = vld [vmem:[#allocation8 + $0x54] sm:$0xff]
        %v1865 = vld [vmem:[#allocation8 + $0x5c] sm:$0xff]
        %v1866 = vld [vmem:[#allocation8 + $0x64] sm:$0xff]
        %v1867 = vld [vmem:[#allocation8 + $0x6c] sm:$0xf]
        %v1868 = vld [vmem:[#allocation8 + $0x70] sm:$0xff]
        %v1869 = vld [vmem:[#allocation8 + $0x78] sm:$0xff]
        %v1870 = vld [vmem:[#allocation8 + $0x80] sm:$0xff]
        %v1871 = vld [vmem:[#allocation8 + $0x88] sm:$0xf]
        %v1872 = vld [vmem:[#allocation8 + $0x8c] sm:$0xff]
        %v1873 = vld [vmem:[#allocation8 + $0x94] sm:$0xff]
        %v1874 = vld [vmem:[#allocation8 + $0x9c] sm:$0xff]
        %v1875 = vld [vmem:[#allocation8 + $0xa4] sm:$0xf]
        %v1876 = vld [vmem:[#allocation8 + $0xa8] sm:$0xff]
        %v1877 = vld [vmem:[#allocation8 + $0xb0] sm:$0xff]
        %v1878 = vld [vmem:[#allocation8 + $0xb8] sm:$0xff]
        %v1879 = vld [vmem:[#allocation8 + $0xc0] sm:$0xf]
        %v1880 = vld [vmem:[#allocation8 + $0xc4] sm:$0xff]
        %v1881 = vld [vmem:[#allocation8 + $0xcc] sm:$0xff]
        %v1882 = vld [vmem:[#allocation8 + $0xd4] sm:$0xff]
        %v1883 = vld [vmem:[#allocation8 + $0xdc] sm:$0xf]
        %v1884 = vld [vmem:[#allocation8 + $0xe0] sm:$0xff]
        %v1885 = vld [vmem:[#allocation8 + $0xe8] sm:$0xff]
        %v1886 = vld [vmem:[#allocation8 + $0xf0] sm:$0xff]
        %v1887 = vld [vmem:[#allocation8 + $0xf8] sm:$0xf]
        %v1888 = vld [vmem:[#allocation8 + $0xfc] sm:$0xff]
        %v1889 = vld [vmem:[#allocation8 + $0x104] sm:$0xff]
        %v1890 = vld [vmem:[#allocation8 + $0x10c] sm:$0xff]
        %v1891 = vld [vmem:[#allocation8 + $0x114] sm:$0xf]
        %v1892 = vld [vmem:[#allocation8 + $0x118] sm:$0xff]
        %v1893 = vld [vmem:[#allocation8 + $0x120] sm:$0xff]
        %v1894 = vld [vmem:[#allocation8 + $0x128] sm:$0xff]
        %v1895 = vld [vmem:[#allocation8 + $0x130] sm:$0xf]
        %v1896 = vld [vmem:[#allocation8 + $0x134] sm:$0xff]
        %v1897 = vld [vmem:[#allocation8 + $0x13c] sm:$0xff]
        %v1898 = vld [vmem:[#allocation8 + $0x144] sm:$0xff]
        %v1899 = vld [vmem:[#allocation8 + $0x14c] sm:$0xf]
        %v1900 = vld [vmem:[#allocation8 + $0x150] sm:$0xff]
        %v1901 = vld [vmem:[#allocation8 + $0x158] sm:$0xff]
        %v1902 = vld [vmem:[#allocation8 + $0x160] sm:$0xff]
        %v1903 = vld [vmem:[#allocation8 + $0x168] sm:$0xf]
        %v1904 = vld [vmem:[#allocation8 + $0x16c] sm:$0xff]
        %v1905 = vld [vmem:[#allocation8 + $0x174] sm:$0xff]
        %v1906 = vld [vmem:[#allocation8 + $0x17c] sm:$0xff]
        %v1907 = vld [vmem:[#allocation8 + $0x184] sm:$0xf]
        %v1908 = vld [vmem:[#allocation8 + $0x188] sm:$0xff]
        %v1909 = vld [vmem:[#allocation8 + $0x190] sm:$0xff]
        %v1910 = vld [vmem:[#allocation8 + $0x198] sm:$0xff]
        %v1911 = vld [vmem:[#allocation8 + $0x1a0] sm:$0xf]
        %v1912 = vld [vmem:[#allocation8 + $0x1a4] sm:$0xff]
        %v1913 = vld [vmem:[#allocation8 + $0x1ac] sm:$0xff]
        %v1914 = vld [vmem:[#allocation8 + $0x1b4] sm:$0xff]
        %v1915 = vld [vmem:[#allocation8 + $0x1bc] sm:$0xf]
        %v1916 = vld [vmem:[#allocation8 + $0x1c0] sm:$0xff]
        %v1917 = vld [vmem:[#allocation8 + $0x1c8] sm:$0xff]
        %v1918 = vld [vmem:[#allocation8 + $0x1d0] sm:$0xff]
        %v1919 = vld [vmem:[#allocation8 + $0x1d8] sm:$0xf]
        %v1920 = vld [vmem:[#allocation8 + $0x1dc] sm:$0xff]
        %v1921 = vld [vmem:[#allocation8 + $0x1e4] sm:$0xff]
        %v1922 = vld [vmem:[#allocation8 + $0x1ec] sm:$0xff]
        %v1923 = vld [vmem:[#allocation8 + $0x1f4] sm:$0xf]
        %v1924 = vld [vmem:[#allocation8 + $0x1f8] sm:$0xff]
        %v1925 = vld [vmem:[#allocation8 + $0x200] sm:$0xff]
        %v1926 = vld [vmem:[#allocation8 + $0x208] sm:$0xff]
        %v1927 = vld [vmem:[#allocation8 + $0x210] sm:$0xf]
        %v1928 = vld [vmem:[#allocation8 + $0x214] sm:$0xff]
        %v1929 = vld [vmem:[#allocation8 + $0x21c] sm:$0xff]
        %v1930 = vld [vmem:[#allocation8 + $0x224] sm:$0xff]
        %v1931 = vld [vmem:[#allocation8 + $0x22c] sm:$0xf]
        %v1932 = vld [vmem:[#allocation8 + $0x230] sm:$0xff]
        %v1933 = vld [vmem:[#allocation8 + $0x238] sm:$0xff]
        %v1934 = vld [vmem:[#allocation8 + $0x240] sm:$0xff]
        %v1935 = vld [vmem:[#allocation8 + $0x248] sm:$0xf]
        %v1936 = vld [vmem:[#allocation8 + $0x24c] sm:$0xff]
        %v1937 = vld [vmem:[#allocation8 + $0x254] sm:$0xff]
        %v1938 = vld [vmem:[#allocation8 + $0x25c] sm:$0xff]
        %v1939 = vld [vmem:[#allocation8 + $0x264] sm:$0xf]
        %v1940 = vld [vmem:[#allocation8 + $0x268] sm:$0xff]
        %v1941 = vld [vmem:[#allocation8 + $0x270] sm:$0xff]
        %v1942 = vld [vmem:[#allocation8 + $0x278] sm:$0xff]
        %v1943 = vld [vmem:[#allocation8 + $0x280] sm:$0xf]
        %v1944 = vld [vmem:[#allocation8 + $0x284] sm:$0xff]
        %v1945 = vld [vmem:[#allocation8 + $0x28c] sm:$0xff]
        %v1946 = vld [vmem:[#allocation8 + $0x294] sm:$0xff]
        %v1947 = vld [vmem:[#allocation8 + $0x29c] sm:$0xf]
        %v1948 = vld [vmem:[#allocation8 + $0x2a0] sm:$0xff]
        %v1949 = vld [vmem:[#allocation8 + $0x2a8] sm:$0xff]
        %v1950 = vld [vmem:[#allocation8 + $0x2b0] sm:$0xff]
        %v1951 = vld [vmem:[#allocation8 + $0x2b8] sm:$0xf]
        %v1952 = vld [vmem:[#allocation8 + $0x2bc] sm:$0xff]
        %v1953 = vld [vmem:[#allocation8 + $0x2c4] sm:$0xff]
        %v1954 = vld [vmem:[#allocation8 + $0x2cc] sm:$0xff]
        %v1955 = vld [vmem:[#allocation8 + $0x2d4] sm:$0xf]
        %v1956 = vld [vmem:[#allocation8 + $0x2d8] sm:$0xff]
        %v1957 = vld [vmem:[#allocation8 + $0x2e0] sm:$0xff]
        %v1958 = vld [vmem:[#allocation8 + $0x2e8] sm:$0xff]
        %v1959 = vld [vmem:[#allocation8 + $0x2f0] sm:$0xf]
        %v1960 = vld [vmem:[#allocation8 + $0x2f4] sm:$0xff]
        %v1961 = vld [vmem:[#allocation8 + $0x2fc] sm:$0xff]
        %v1962 = vld [vmem:[#allocation8 + $0x304] sm:$0xff]
        %v1963 = vld [vmem:[#allocation8 + $0x30c] sm:$0xf]
        %v1964 = vld [vmem:[#allocation8 + $0x310] sm:$0xff]
        %v1965 = vld [vmem:[#allocation8 + $0x318] sm:$0xff]
        %v1966 = vld [vmem:[#allocation8 + $0x320] sm:$0xff]
        %v1967 = vld [vmem:[#allocation8 + $0x328] sm:$0xf]
        %v1968 = vld [vmem:[#allocation8 + $0x32c] sm:$0xff]
        %v1969 = vld [vmem:[#allocation8 + $0x334] sm:$0xff]
        %v1970 = vld [vmem:[#allocation8 + $0x33c] sm:$0xff]
        %v1971 = vld [vmem:[#allocation8 + $0x344] sm:$0xf]
        %v1972 = vld [vmem:[#allocation8 + $0x348] sm:$0xff]
        %v1973 = vld [vmem:[#allocation8 + $0x350] sm:$0xff]
        %v1974 = vld [vmem:[#allocation8 + $0x358] sm:$0xff]
        %v1975 = vld [vmem:[#allocation8 + $0x360] sm:$0xf]
        %v1976 = vld [vmem:[#allocation8 + $0x364] sm:$0xff]
        %v1977 = vld [vmem:[#allocation8 + $0x36c] sm:$0xff]
        %v1978 = vld [vmem:[#allocation8 + $0x374] sm:$0xff]
        %v1979 = vld [vmem:[#allocation8 + $0x37c] sm:$0xf]
        %v1980 = vld [vmem:[#allocation8 + $0x380] sm:$0xff]
        %v1981 = vld [vmem:[#allocation8 + $0x388] sm:$0xff]
        %v1982 = vld [vmem:[#allocation8 + $0x390] sm:$0xff]
        %v1983 = vld [vmem:[#allocation8 + $0x398] sm:$0xf]
        %v1984 = vld [vmem:[#allocation8 + $0x39c] sm:$0xff]
        %v1985 = vld [vmem:[#allocation8 + $0x3a4] sm:$0xff]
        %v1986 = vld [vmem:[#allocation8 + $0x3ac] sm:$0xff]
        %v1987 = vld [vmem:[#allocation8 + $0x3b4] sm:$0xf]
        %v1988 = vld [vmem:[#allocation8 + $0x3b8] sm:$0xff]
        %v1989 = vld [vmem:[#allocation8 + $0x3c0] sm:$0xff]
        %v1990 = vld [vmem:[#allocation8 + $0x3c8] sm:$0xff]
        %v1991 = vld [vmem:[#allocation8 + $0x3d0] sm:$0xf]
        %v1992 = vld [vmem:[#allocation8 + $0x3d4] sm:$0xff]
        %v1993 = vld [vmem:[#allocation8 + $0x3dc] sm:$0xff]
        %v1994 = vld [vmem:[#allocation8 + $0x3e4] sm:$0xff]
        %v1995 = vld [vmem:[#allocation8 + $0x3ec] sm:$0xf]
        %v1996 = vld [vmem:[#allocation8 + $0x3f0] sm:$0xff]
        %v1997 = vld [vmem:[#allocation8 + $0x3f8] sm:$0xff]
        %v1998 = vld [vmem:[#allocation8 + $0x400] sm:$0xff]
        %v1999 = vld [vmem:[#allocation8 + $0x408] sm:$0xf]
        %v2000 = vld [vmem:[#allocation8 + $0x40c] sm:$0xff]
        %v2001 = vld [vmem:[#allocation8 + $0x414] sm:$0xff]
        %v2002 = vld [vmem:[#allocation8 + $0x41c] sm:$0xff]
        %v2003 = vld [vmem:[#allocation8 + $0x424] sm:$0xf]
        %v2004 = vld [vmem:[#allocation8 + $0x428] sm:$0xff]
        %v2005 = vld [vmem:[#allocation8 + $0x430] sm:$0xff]
        %v2006 = vld [vmem:[#allocation8 + $0x438] sm:$0xff]
        %v2007 = vld [vmem:[#allocation8 + $0x440] sm:$0xf]
        %v2008 = vld [vmem:[#allocation8 + $0x444] sm:$0xff]
        %v2009 = vld [vmem:[#allocation8 + $0x44c] sm:$0xff]
        %v2010 = vld [vmem:[#allocation8 + $0x454] sm:$0xff]
        %v2011 = vld [vmem:[#allocation8 + $0x45c] sm:$0xf]
        %v2012 = vld [vmem:[#allocation8 + $0x460] sm:$0xff]
        %v2013 = vld [vmem:[#allocation8 + $0x468] sm:$0xff]
        %v2014 = vld [vmem:[#allocation8 + $0x470] sm:$0xff]
        %v2015 = vld [vmem:[#allocation8 + $0x478] sm:$0xf]
        %v2016 = vld [vmem:[#allocation8 + $0x47c] sm:$0xff]
        %v2017 = vld [vmem:[#allocation8 + $0x484] sm:$0xff]
        %v2018 = vld [vmem:[#allocation8 + $0x48c] sm:$0xff]
        %v2019 = vld [vmem:[#allocation8 + $0x494] sm:$0xf]
        %v2020 = vld [vmem:[#allocation8 + $0x498] sm:$0xff]
        %v2021 = vld [vmem:[#allocation8 + $0x4a0] sm:$0xff]
        %v2022 = vld [vmem:[#allocation8 + $0x4a8] sm:$0xff]
        %v2023 = vld [vmem:[#allocation8 + $0x4b0] sm:$0xf]
        %v2024 = vld [vmem:[#allocation8 + $0x4b4] sm:$0xff]
        %v2025 = vld [vmem:[#allocation8 + $0x4bc] sm:$0xff]
        %v2026 = vld [vmem:[#allocation8 + $0x4c4] sm:$0xff]
        %v2027 = vld [vmem:[#allocation8 + $0x4cc] sm:$0xf]
        %v2028 = vld [vmem:[#allocation8 + $0x4d0] sm:$0xff]
        %v2029 = vld [vmem:[#allocation8 + $0x4d8] sm:$0xff]
        %v2030 = vld [vmem:[#allocation8 + $0x4e0] sm:$0xff]
        %v2031 = vld [vmem:[#allocation8 + $0x4e8] sm:$0xf]
        %v2032 = vld [vmem:[#allocation8 + $0x4ec] sm:$0xff]
        %v2033 = vld [vmem:[#allocation8 + $0x4f4] sm:$0xff]
        %v2034 = vld [vmem:[#allocation8 + $0x4fc] sm:$0xff]
        %v2035 = vld [vmem:[#allocation8 + $0x504] sm:$0xf]
        %v2036 = vld [vmem:[#allocation8 + $0x508] sm:$0xff]
        %v2037 = vld [vmem:[#allocation8 + $0x510] sm:$0xff]
        %v2038 = vld [vmem:[#allocation8 + $0x518] sm:$0xff]
        %v2039 = vld [vmem:[#allocation8 + $0x520] sm:$0xf]
        %v2040 = vld [vmem:[#allocation8 + $0x524] sm:$0xff]
        %v2041 = vld [vmem:[#allocation8 + $0x52c] sm:$0xff]
        %v2042 = vld [vmem:[#allocation8 + $0x534] sm:$0xff]
        %v2043 = vld [vmem:[#allocation8 + $0x53c] sm:$0xf]
        %v2044 = vld [vmem:[#allocation8 + $0x540] sm:$0xff]
        %v2045 = vld [vmem:[#allocation8 + $0x548] sm:$0xff]
        %v2046 = vld [vmem:[#allocation8 + $0x550] sm:$0xff]
        %v2047 = vld [vmem:[#allocation8 + $0x558] sm:$0xf]
        %v2048 = vld [vmem:[#allocation8 + $0x55c] sm:$0xff]
        %v2049 = vld [vmem:[#allocation8 + $0x564] sm:$0xff]
        %v2050 = vld [vmem:[#allocation8 + $0x56c] sm:$0xff]
        %v2051 = vld [vmem:[#allocation8 + $0x574] sm:$0xf]
        %v2052 = vld [vmem:[#allocation8 + $0x578] sm:$0xff]
        %v2053 = vld [vmem:[#allocation8 + $0x580] sm:$0xff]
        %v2054 = vld [vmem:[#allocation8 + $0x588] sm:$0xff]
        %v2055 = vld [vmem:[#allocation8 + $0x590] sm:$0xf]
        %v2056 = vld [vmem:[#allocation8 + $0x594] sm:$0xff]
        %v2057 = vld [vmem:[#allocation8 + $0x59c] sm:$0xff]
        %v2058 = vld [vmem:[#allocation8 + $0x5a4] sm:$0xff]
        %v2059 = vld [vmem:[#allocation8 + $0x5ac] sm:$0xf]
        %v2060 = vld [vmem:[#allocation8 + $0x5b0] sm:$0xff]
        %v2061 = vld [vmem:[#allocation8 + $0x5b8] sm:$0xff]
        %v2062 = vld [vmem:[#allocation8 + $0x5c0] sm:$0xff]
        %v2063 = vld [vmem:[#allocation8 + $0x5c8] sm:$0xf]
        %v2064 = vld [vmem:[#allocation8 + $0x5cc] sm:$0xff]
        %v2065 = vld [vmem:[#allocation8 + $0x5d4] sm:$0xff]
        %v2066 = vld [vmem:[#allocation8 + $0x5dc] sm:$0xff]
        %v2067 = vld [vmem:[#allocation8 + $0x5e4] sm:$0xf]
        %v2068 = vld [vmem:[#allocation8 + $0x5e8] sm:$0xff]
        %v2069 = vld [vmem:[#allocation8 + $0x5f0] sm:$0xff]
        %v2070 = vld [vmem:[#allocation8 + $0x5f8] sm:$0xff]
        %v2071 = vld [vmem:[#allocation8 + $0x600] sm:$0xf]
        %v2072 = vld [vmem:[#allocation8 + $0x604] sm:$0xff]
        %v2073 = vld [vmem:[#allocation8 + $0x60c] sm:$0xff]
        %v2074 = vld [vmem:[#allocation8 + $0x614] sm:$0xff]
        %v2075 = vld [vmem:[#allocation8 + $0x61c] sm:$0xf]
        %v2076 = vld [vmem:[#allocation3] sm:$0xff]
        %v2077 = vld [vmem:[#allocation3 + $0x8] sm:$0xff]
        %v2078 = vld [vmem:[#allocation3 + $0x10] sm:$0xff]
        %v2079 = vld [vmem:[#allocation3 + $0x18] sm:$0xff]
        %s2080 = scalar_lea.vmem [#allocation8], 1568
        %v2081 = vld [vmem:[%s2080] sm:$0xff]
        %v2082 = vld [vmem:[%s2080 + $0x8] sm:$0xff]
        %v2083 = vld [vmem:[%s2080 + $0x10] sm:$0xff]
        %v2084 = vld [vmem:[%s2080 + $0x18] sm:$0xf]
        %v2085 = vld [vmem:[%s2080 + $0x1c] sm:$0xff]
        %v2086 = vld [vmem:[%s2080 + $0x24] sm:$0xff]
        %v2087 = vld [vmem:[%s2080 + $0x2c] sm:$0xff]
        %v2088 = vld [vmem:[%s2080 + $0x34] sm:$0xf]
        %v2089 = vld [vmem:[%s2080 + $0x38] sm:$0xff]
        %v2090 = vld [vmem:[%s2080 + $0x40] sm:$0xff]
        %v2091 = vld [vmem:[%s2080 + $0x48] sm:$0xff]
        %v2092 = vld [vmem:[%s2080 + $0x50] sm:$0xf]
        %v2093 = vld [vmem:[%s2080 + $0x54] sm:$0xff]
        %v2094 = vld [vmem:[%s2080 + $0x5c] sm:$0xff]
        %v2095 = vld [vmem:[%s2080 + $0x64] sm:$0xff]
        %v2096 = vld [vmem:[%s2080 + $0x6c] sm:$0xf]
        %v2097 = vld [vmem:[%s2080 + $0x70] sm:$0xff]
        %v2098 = vld [vmem:[%s2080 + $0x78] sm:$0xff]
        %v2099 = vld [vmem:[%s2080 + $0x80] sm:$0xff]
        %v2100 = vld [vmem:[%s2080 + $0x88] sm:$0xf]
        %v2101 = vld [vmem:[%s2080 + $0x8c] sm:$0xff]
        %v2102 = vld [vmem:[%s2080 + $0x94] sm:$0xff]
        %v2103 = vld [vmem:[%s2080 + $0x9c] sm:$0xff]
        %v2104 = vld [vmem:[%s2080 + $0xa4] sm:$0xf]
        %v2105 = vld [vmem:[%s2080 + $0xa8] sm:$0xff]
        %v2106 = vld [vmem:[%s2080 + $0xb0] sm:$0xff]
        %v2107 = vld [vmem:[%s2080 + $0xb8] sm:$0xff]
        %v2108 = vld [vmem:[%s2080 + $0xc0] sm:$0xf]
        %v2109 = vld [vmem:[%s2080 + $0xc4] sm:$0xff]
        %v2110 = vld [vmem:[%s2080 + $0xcc] sm:$0xff]
        %v2111 = vld [vmem:[%s2080 + $0xd4] sm:$0xff]
        %v2112 = vld [vmem:[%s2080 + $0xdc] sm:$0xf]
        %v2113 = vld [vmem:[%s2080 + $0xe0] sm:$0xff]
        %v2114 = vld [vmem:[%s2080 + $0xe8] sm:$0xff]
        %v2115 = vld [vmem:[%s2080 + $0xf0] sm:$0xff]
        %v2116 = vld [vmem:[%s2080 + $0xf8] sm:$0xf]
        %v2117 = vld [vmem:[%s2080 + $0xfc] sm:$0xff]
        %v2118 = vld [vmem:[%s2080 + $0x104] sm:$0xff]
        %v2119 = vld [vmem:[%s2080 + $0x10c] sm:$0xff]
        %v2120 = vld [vmem:[%s2080 + $0x114] sm:$0xf]
        %v2121 = vld [vmem:[%s2080 + $0x118] sm:$0xff]
        %v2122 = vld [vmem:[%s2080 + $0x120] sm:$0xff]
        %v2123 = vld [vmem:[%s2080 + $0x128] sm:$0xff]
        %v2124 = vld [vmem:[%s2080 + $0x130] sm:$0xf]
        %v2125 = vld [vmem:[%s2080 + $0x134] sm:$0xff]
        %v2126 = vld [vmem:[%s2080 + $0x13c] sm:$0xff]
        %v2127 = vld [vmem:[%s2080 + $0x144] sm:$0xff]
        %v2128 = vld [vmem:[%s2080 + $0x14c] sm:$0xf]
        %v2129 = vld [vmem:[%s2080 + $0x150] sm:$0xff]
        %v2130 = vld [vmem:[%s2080 + $0x158] sm:$0xff]
        %v2131 = vld [vmem:[%s2080 + $0x160] sm:$0xff]
        %v2132 = vld [vmem:[%s2080 + $0x168] sm:$0xf]
        %v2133 = vld [vmem:[%s2080 + $0x16c] sm:$0xff]
        %v2134 = vld [vmem:[%s2080 + $0x174] sm:$0xff]
        %v2135 = vld [vmem:[%s2080 + $0x17c] sm:$0xff]
        %v2136 = vld [vmem:[%s2080 + $0x184] sm:$0xf]
        %v2137 = vld [vmem:[%s2080 + $0x188] sm:$0xff]
        %v2138 = vld [vmem:[%s2080 + $0x190] sm:$0xff]
        %v2139 = vld [vmem:[%s2080 + $0x198] sm:$0xff]
        %v2140 = vld [vmem:[%s2080 + $0x1a0] sm:$0xf]
        %v2141 = vld [vmem:[%s2080 + $0x1a4] sm:$0xff]
        %v2142 = vld [vmem:[%s2080 + $0x1ac] sm:$0xff]
        %v2143 = vld [vmem:[%s2080 + $0x1b4] sm:$0xff]
        %v2144 = vld [vmem:[%s2080 + $0x1bc] sm:$0xf]
        %v2145 = vld [vmem:[%s2080 + $0x1c0] sm:$0xff]
        %v2146 = vld [vmem:[%s2080 + $0x1c8] sm:$0xff]
        %v2147 = vld [vmem:[%s2080 + $0x1d0] sm:$0xff]
        %v2148 = vld [vmem:[%s2080 + $0x1d8] sm:$0xf]
        %v2149 = vld [vmem:[%s2080 + $0x1dc] sm:$0xff]
        %v2150 = vld [vmem:[%s2080 + $0x1e4] sm:$0xff]
        %v2151 = vld [vmem:[%s2080 + $0x1ec] sm:$0xff]
        %v2152 = vld [vmem:[%s2080 + $0x1f4] sm:$0xf]
        %v2153 = vld [vmem:[%s2080 + $0x1f8] sm:$0xff]
        %v2154 = vld [vmem:[%s2080 + $0x200] sm:$0xff]
        %v2155 = vld [vmem:[%s2080 + $0x208] sm:$0xff]
        %v2156 = vld [vmem:[%s2080 + $0x210] sm:$0xf]
        %v2157 = vld [vmem:[%s2080 + $0x214] sm:$0xff]
        %v2158 = vld [vmem:[%s2080 + $0x21c] sm:$0xff]
        %v2159 = vld [vmem:[%s2080 + $0x224] sm:$0xff]
        %v2160 = vld [vmem:[%s2080 + $0x22c] sm:$0xf]
        %v2161 = vld [vmem:[%s2080 + $0x230] sm:$0xff]
        %v2162 = vld [vmem:[%s2080 + $0x238] sm:$0xff]
        %v2163 = vld [vmem:[%s2080 + $0x240] sm:$0xff]
        %v2164 = vld [vmem:[%s2080 + $0x248] sm:$0xf]
        %v2165 = vld [vmem:[%s2080 + $0x24c] sm:$0xff]
        %v2166 = vld [vmem:[%s2080 + $0x254] sm:$0xff]
        %v2167 = vld [vmem:[%s2080 + $0x25c] sm:$0xff]
        %v2168 = vld [vmem:[%s2080 + $0x264] sm:$0xf]
        %v2169 = vld [vmem:[%s2080 + $0x268] sm:$0xff]
        %v2170 = vld [vmem:[%s2080 + $0x270] sm:$0xff]
        %v2171 = vld [vmem:[%s2080 + $0x278] sm:$0xff]
        %v2172 = vld [vmem:[%s2080 + $0x280] sm:$0xf]
        %v2173 = vld [vmem:[%s2080 + $0x284] sm:$0xff]
        %v2174 = vld [vmem:[%s2080 + $0x28c] sm:$0xff]
        %v2175 = vld [vmem:[%s2080 + $0x294] sm:$0xff]
        %v2176 = vld [vmem:[%s2080 + $0x29c] sm:$0xf]
        %v2177 = vld [vmem:[%s2080 + $0x2a0] sm:$0xff]
        %v2178 = vld [vmem:[%s2080 + $0x2a8] sm:$0xff]
        %v2179 = vld [vmem:[%s2080 + $0x2b0] sm:$0xff]
        %v2180 = vld [vmem:[%s2080 + $0x2b8] sm:$0xf]
        %v2181 = vld [vmem:[%s2080 + $0x2bc] sm:$0xff]
        %v2182 = vld [vmem:[%s2080 + $0x2c4] sm:$0xff]
        %v2183 = vld [vmem:[%s2080 + $0x2cc] sm:$0xff]
        %v2184 = vld [vmem:[%s2080 + $0x2d4] sm:$0xf]
        %v2185 = vld [vmem:[%s2080 + $0x2d8] sm:$0xff]
        %v2186 = vld [vmem:[%s2080 + $0x2e0] sm:$0xff]
        %v2187 = vld [vmem:[%s2080 + $0x2e8] sm:$0xff]
        %v2188 = vld [vmem:[%s2080 + $0x2f0] sm:$0xf]
        %v2189 = vld [vmem:[%s2080 + $0x2f4] sm:$0xff]
        %v2190 = vld [vmem:[%s2080 + $0x2fc] sm:$0xff]
        %v2191 = vld [vmem:[%s2080 + $0x304] sm:$0xff]
        %v2192 = vld [vmem:[%s2080 + $0x30c] sm:$0xf]
        %v2193 = vld [vmem:[%s2080 + $0x310] sm:$0xff]
        %v2194 = vld [vmem:[%s2080 + $0x318] sm:$0xff]
        %v2195 = vld [vmem:[%s2080 + $0x320] sm:$0xff]
        %v2196 = vld [vmem:[%s2080 + $0x328] sm:$0xf]
        %v2197 = vld [vmem:[%s2080 + $0x32c] sm:$0xff]
        %v2198 = vld [vmem:[%s2080 + $0x334] sm:$0xff]
        %v2199 = vld [vmem:[%s2080 + $0x33c] sm:$0xff]
        %v2200 = vld [vmem:[%s2080 + $0x344] sm:$0xf]
        %v2201 = vld [vmem:[%s2080 + $0x348] sm:$0xff]
        %v2202 = vld [vmem:[%s2080 + $0x350] sm:$0xff]
        %v2203 = vld [vmem:[%s2080 + $0x358] sm:$0xff]
        %v2204 = vld [vmem:[%s2080 + $0x360] sm:$0xf]
        %v2205 = vld [vmem:[%s2080 + $0x364] sm:$0xff]
        %v2206 = vld [vmem:[%s2080 + $0x36c] sm:$0xff]
        %v2207 = vld [vmem:[%s2080 + $0x374] sm:$0xff]
        %v2208 = vld [vmem:[%s2080 + $0x37c] sm:$0xf]
        %v2209 = vld [vmem:[%s2080 + $0x380] sm:$0xff]
        %v2210 = vld [vmem:[%s2080 + $0x388] sm:$0xff]
        %v2211 = vld [vmem:[%s2080 + $0x390] sm:$0xff]
        %v2212 = vld [vmem:[%s2080 + $0x398] sm:$0xf]
        %v2213 = vld [vmem:[%s2080 + $0x39c] sm:$0xff]
        %v2214 = vld [vmem:[%s2080 + $0x3a4] sm:$0xff]
        %v2215 = vld [vmem:[%s2080 + $0x3ac] sm:$0xff]
        %v2216 = vld [vmem:[%s2080 + $0x3b4] sm:$0xf]
        %v2217 = vld [vmem:[%s2080 + $0x3b8] sm:$0xff]
        %v2218 = vld [vmem:[%s2080 + $0x3c0] sm:$0xff]
        %v2219 = vld [vmem:[%s2080 + $0x3c8] sm:$0xff]
        %v2220 = vld [vmem:[%s2080 + $0x3d0] sm:$0xf]
        %v2221 = vld [vmem:[%s2080 + $0x3d4] sm:$0xff]
        %v2222 = vld [vmem:[%s2080 + $0x3dc] sm:$0xff]
        %v2223 = vld [vmem:[%s2080 + $0x3e4] sm:$0xff]
        %v2224 = vld [vmem:[%s2080 + $0x3ec] sm:$0xf]
        %v2225 = vld [vmem:[%s2080 + $0x3f0] sm:$0xff]
        %v2226 = vld [vmem:[%s2080 + $0x3f8] sm:$0xff]
        %v2227 = vld [vmem:[%s2080 + $0x400] sm:$0xff]
        %v2228 = vld [vmem:[%s2080 + $0x408] sm:$0xf]
        %v2229 = vld [vmem:[%s2080 + $0x40c] sm:$0xff]
        %v2230 = vld [vmem:[%s2080 + $0x414] sm:$0xff]
        %v2231 = vld [vmem:[%s2080 + $0x41c] sm:$0xff]
        %v2232 = vld [vmem:[%s2080 + $0x424] sm:$0xf]
        %v2233 = vld [vmem:[%s2080 + $0x428] sm:$0xff]
        %v2234 = vld [vmem:[%s2080 + $0x430] sm:$0xff]
        %v2235 = vld [vmem:[%s2080 + $0x438] sm:$0xff]
        %v2236 = vld [vmem:[%s2080 + $0x440] sm:$0xf]
        %v2237 = vld [vmem:[%s2080 + $0x444] sm:$0xff]
        %v2238 = vld [vmem:[%s2080 + $0x44c] sm:$0xff]
        %v2239 = vld [vmem:[%s2080 + $0x454] sm:$0xff]
        %v2240 = vld [vmem:[%s2080 + $0x45c] sm:$0xf]
        %v2241 = vld [vmem:[%s2080 + $0x460] sm:$0xff]
        %v2242 = vld [vmem:[%s2080 + $0x468] sm:$0xff]
        %v2243 = vld [vmem:[%s2080 + $0x470] sm:$0xff]
        %v2244 = vld [vmem:[%s2080 + $0x478] sm:$0xf]
        %v2245 = vld [vmem:[%s2080 + $0x47c] sm:$0xff]
        %v2246 = vld [vmem:[%s2080 + $0x484] sm:$0xff]
        %v2247 = vld [vmem:[%s2080 + $0x48c] sm:$0xff]
        %v2248 = vld [vmem:[%s2080 + $0x494] sm:$0xf]
        %v2249 = vld [vmem:[%s2080 + $0x498] sm:$0xff]
        %v2250 = vld [vmem:[%s2080 + $0x4a0] sm:$0xff]
        %v2251 = vld [vmem:[%s2080 + $0x4a8] sm:$0xff]
        %v2252 = vld [vmem:[%s2080 + $0x4b0] sm:$0xf]
        %v2253 = vld [vmem:[%s2080 + $0x4b4] sm:$0xff]
        %v2254 = vld [vmem:[%s2080 + $0x4bc] sm:$0xff]
        %v2255 = vld [vmem:[%s2080 + $0x4c4] sm:$0xff]
        %v2256 = vld [vmem:[%s2080 + $0x4cc] sm:$0xf]
        %v2257 = vld [vmem:[%s2080 + $0x4d0] sm:$0xff]
        %v2258 = vld [vmem:[%s2080 + $0x4d8] sm:$0xff]
        %v2259 = vld [vmem:[%s2080 + $0x4e0] sm:$0xff]
        %v2260 = vld [vmem:[%s2080 + $0x4e8] sm:$0xf]
        %v2261 = vld [vmem:[%s2080 + $0x4ec] sm:$0xff]
        %v2262 = vld [vmem:[%s2080 + $0x4f4] sm:$0xff]
        %v2263 = vld [vmem:[%s2080 + $0x4fc] sm:$0xff]
        %v2264 = vld [vmem:[%s2080 + $0x504] sm:$0xf]
        %v2265 = vld [vmem:[%s2080 + $0x508] sm:$0xff]
        %v2266 = vld [vmem:[%s2080 + $0x510] sm:$0xff]
        %v2267 = vld [vmem:[%s2080 + $0x518] sm:$0xff]
        %v2268 = vld [vmem:[%s2080 + $0x520] sm:$0xf]
        %v2269 = vld [vmem:[%s2080 + $0x524] sm:$0xff]
        %v2270 = vld [vmem:[%s2080 + $0x52c] sm:$0xff]
        %v2271 = vld [vmem:[%s2080 + $0x534] sm:$0xff]
        %v2272 = vld [vmem:[%s2080 + $0x53c] sm:$0xf]
        %v2273 = vld [vmem:[%s2080 + $0x540] sm:$0xff]
        %v2274 = vld [vmem:[%s2080 + $0x548] sm:$0xff]
        %v2275 = vld [vmem:[%s2080 + $0x550] sm:$0xff]
        %v2276 = vld [vmem:[%s2080 + $0x558] sm:$0xf]
        %v2277 = vld [vmem:[%s2080 + $0x55c] sm:$0xff]
        %v2278 = vld [vmem:[%s2080 + $0x564] sm:$0xff]
        %v2279 = vld [vmem:[%s2080 + $0x56c] sm:$0xff]
        %v2280 = vld [vmem:[%s2080 + $0x574] sm:$0xf]
        %v2281 = vld [vmem:[%s2080 + $0x578] sm:$0xff]
        %v2282 = vld [vmem:[%s2080 + $0x580] sm:$0xff]
        %v2283 = vld [vmem:[%s2080 + $0x588] sm:$0xff]
        %v2284 = vld [vmem:[%s2080 + $0x590] sm:$0xf]
        %v2285 = vld [vmem:[%s2080 + $0x594] sm:$0xff]
        %v2286 = vld [vmem:[%s2080 + $0x59c] sm:$0xff]
        %v2287 = vld [vmem:[%s2080 + $0x5a4] sm:$0xff]
        %v2288 = vld [vmem:[%s2080 + $0x5ac] sm:$0xf]
        %v2289 = vld [vmem:[%s2080 + $0x5b0] sm:$0xff]
        %v2290 = vld [vmem:[%s2080 + $0x5b8] sm:$0xff]
        %v2291 = vld [vmem:[%s2080 + $0x5c0] sm:$0xff]
        %v2292 = vld [vmem:[%s2080 + $0x5c8] sm:$0xf]
        %v2293 = vld [vmem:[%s2080 + $0x5cc] sm:$0xff]
        %v2294 = vld [vmem:[%s2080 + $0x5d4] sm:$0xff]
        %v2295 = vld [vmem:[%s2080 + $0x5dc] sm:$0xff]
        %v2296 = vld [vmem:[%s2080 + $0x5e4] sm:$0xf]
        %v2297 = vld [vmem:[%s2080 + $0x5e8] sm:$0xff]
        %v2298 = vld [vmem:[%s2080 + $0x5f0] sm:$0xff]
        %v2299 = vld [vmem:[%s2080 + $0x5f8] sm:$0xff]
        %v2300 = vld [vmem:[%s2080 + $0x600] sm:$0xf]
        %v2301 = vld [vmem:[%s2080 + $0x604] sm:$0xff]
        %v2302 = vld [vmem:[%s2080 + $0x60c] sm:$0xff]
        %v2303 = vld [vmem:[%s2080 + $0x614] sm:$0xff]
        %v2304 = vld [vmem:[%s2080 + $0x61c] sm:$0xf]
        %v2306 = vshrl.u32 %v2076, 16
        %v2308 = vshll.u32 %v2076, 16
        %v2310 = vrot.slane %v2308, 1
        %v2311 = vor.u32 %v2306, %v2310
        %v2313 = vshrl.u32 %v2077, 16
        %v2315 = vshll.u32 %v2077, 16
        %v2317 = vrot.slane %v2315, 1
        %v2318 = vor.u32 %v2313, %v2317
        %v2320 = vshrl.u32 %v2078, 16
        %v2322 = vshll.u32 %v2078, 16
        %v2324 = vrot.slane %v2322, 1
        %v2325 = vor.u32 %v2320, %v2324
        %v2327 = vshrl.u32 %v2079, 16
        %v2329 = vshll.u32 %v2079, 16
        %v2331 = vrot.slane %v2329, 1
        %v2332 = vor.u32 %v2327, %v2331
        %v2560 = vunpack.c.l.b16 %v2081
        %v2561 = vunpack.c.h.b16 %v2081
        %v2562 = vunpack.c.l.b16 %v2082
        %v2563 = vunpack.c.h.b16 %v2082
        %v2564 = vunpack.c.l.b16 %v2083
        %v2565 = vunpack.c.h.b16 %v2083
        %v2566 = vunpack.c.l.b16 %v2084
        %v2567 = vunpack.c.l.b16 %v2085
        %v2568 = vunpack.c.h.b16 %v2085
        %v2569 = vunpack.c.l.b16 %v2086
        %v2570 = vunpack.c.h.b16 %v2086
        %v2571 = vunpack.c.l.b16 %v2087
        %v2572 = vunpack.c.h.b16 %v2087
        %v2573 = vunpack.c.l.b16 %v2088
        %v2574 = vunpack.c.l.b16 %v2089
        %v2575 = vunpack.c.h.b16 %v2089
        %v2576 = vunpack.c.l.b16 %v2090
        %v2577 = vunpack.c.h.b16 %v2090
        %v2578 = vunpack.c.l.b16 %v2091
        %v2579 = vunpack.c.h.b16 %v2091
        %v2580 = vunpack.c.l.b16 %v2092
        %v2581 = vunpack.c.l.b16 %v2093
        %v2582 = vunpack.c.h.b16 %v2093
        %v2583 = vunpack.c.l.b16 %v2094
        %v2584 = vunpack.c.h.b16 %v2094
        %v2585 = vunpack.c.l.b16 %v2095
        %v2586 = vunpack.c.h.b16 %v2095
        %v2587 = vunpack.c.l.b16 %v2096
        %v2588 = vunpack.c.l.b16 %v2097
        %v2589 = vunpack.c.h.b16 %v2097
        %v2590 = vunpack.c.l.b16 %v2098
        %v2591 = vunpack.c.h.b16 %v2098
        %v2592 = vunpack.c.l.b16 %v2099
        %v2593 = vunpack.c.h.b16 %v2099
        %v2594 = vunpack.c.l.b16 %v2100
        %v2595 = vunpack.c.l.b16 %v2101
        %v2596 = vunpack.c.h.b16 %v2101
        %v2597 = vunpack.c.l.b16 %v2102
        %v2598 = vunpack.c.h.b16 %v2102
        %v2599 = vunpack.c.l.b16 %v2103
        %v2600 = vunpack.c.h.b16 %v2103
        %v2601 = vunpack.c.l.b16 %v2104
        %v2602 = vunpack.c.l.b16 %v2105
        %v2603 = vunpack.c.h.b16 %v2105
        %v2604 = vunpack.c.l.b16 %v2106
        %v2605 = vunpack.c.h.b16 %v2106
        %v2606 = vunpack.c.l.b16 %v2107
        %v2607 = vunpack.c.h.b16 %v2107
        %v2608 = vunpack.c.l.b16 %v2108
        %v2609 = vunpack.c.l.b16 %v2109
        %v2610 = vunpack.c.h.b16 %v2109
        %v2611 = vunpack.c.l.b16 %v2110
        %v2612 = vunpack.c.h.b16 %v2110
        %v2613 = vunpack.c.l.b16 %v2111
        %v2614 = vunpack.c.h.b16 %v2111
        %v2615 = vunpack.c.l.b16 %v2112
        %v2616 = vunpack.c.l.b16 %v2113
        %v2617 = vunpack.c.h.b16 %v2113
        %v2618 = vunpack.c.l.b16 %v2114
        %v2619 = vunpack.c.h.b16 %v2114
        %v2620 = vunpack.c.l.b16 %v2115
        %v2621 = vunpack.c.h.b16 %v2115
        %v2622 = vunpack.c.l.b16 %v2116
        %v2623 = vunpack.c.l.b16 %v2117
        %v2624 = vunpack.c.h.b16 %v2117
        %v2625 = vunpack.c.l.b16 %v2118
        %v2626 = vunpack.c.h.b16 %v2118
        %v2627 = vunpack.c.l.b16 %v2119
        %v2628 = vunpack.c.h.b16 %v2119
        %v2629 = vunpack.c.l.b16 %v2120
        %v2630 = vunpack.c.l.b16 %v2121
        %v2631 = vunpack.c.h.b16 %v2121
        %v2632 = vunpack.c.l.b16 %v2122
        %v2633 = vunpack.c.h.b16 %v2122
        %v2634 = vunpack.c.l.b16 %v2123
        %v2635 = vunpack.c.h.b16 %v2123
        %v2636 = vunpack.c.l.b16 %v2124
        %v2637 = vunpack.c.l.b16 %v2125
        %v2638 = vunpack.c.h.b16 %v2125
        %v2639 = vunpack.c.l.b16 %v2126
        %v2640 = vunpack.c.h.b16 %v2126
        %v2641 = vunpack.c.l.b16 %v2127
        %v2642 = vunpack.c.h.b16 %v2127
        %v2643 = vunpack.c.l.b16 %v2128
        %v2644 = vunpack.c.l.b16 %v2129
        %v2645 = vunpack.c.h.b16 %v2129
        %v2646 = vunpack.c.l.b16 %v2130
        %v2647 = vunpack.c.h.b16 %v2130
        %v2648 = vunpack.c.l.b16 %v2131
        %v2649 = vunpack.c.h.b16 %v2131
        %v2650 = vunpack.c.l.b16 %v2132
        %v2651 = vunpack.c.l.b16 %v2133
        %v2652 = vunpack.c.h.b16 %v2133
        %v2653 = vunpack.c.l.b16 %v2134
        %v2654 = vunpack.c.h.b16 %v2134
        %v2655 = vunpack.c.l.b16 %v2135
        %v2656 = vunpack.c.h.b16 %v2135
        %v2657 = vunpack.c.l.b16 %v2136
        %v2658 = vunpack.c.l.b16 %v2137
        %v2659 = vunpack.c.h.b16 %v2137
        %v2660 = vunpack.c.l.b16 %v2138
        %v2661 = vunpack.c.h.b16 %v2138
        %v2662 = vunpack.c.l.b16 %v2139
        %v2663 = vunpack.c.h.b16 %v2139
        %v2664 = vunpack.c.l.b16 %v2140
        %v2665 = vunpack.c.l.b16 %v2141
        %v2666 = vunpack.c.h.b16 %v2141
        %v2667 = vunpack.c.l.b16 %v2142
        %v2668 = vunpack.c.h.b16 %v2142
        %v2669 = vunpack.c.l.b16 %v2143
        %v2670 = vunpack.c.h.b16 %v2143
        %v2671 = vunpack.c.l.b16 %v2144
        %v2672 = vunpack.c.l.b16 %v2145
        %v2673 = vunpack.c.h.b16 %v2145
        %v2674 = vunpack.c.l.b16 %v2146
        %v2675 = vunpack.c.h.b16 %v2146
        %v2676 = vunpack.c.l.b16 %v2147
        %v2677 = vunpack.c.h.b16 %v2147
        %v2678 = vunpack.c.l.b16 %v2148
        %v2679 = vunpack.c.l.b16 %v2149
        %v2680 = vunpack.c.h.b16 %v2149
        %v2681 = vunpack.c.l.b16 %v2150
        %v2682 = vunpack.c.h.b16 %v2150
        %v2683 = vunpack.c.l.b16 %v2151
        %v2684 = vunpack.c.h.b16 %v2151
        %v2685 = vunpack.c.l.b16 %v2152
        %v2686 = vunpack.c.l.b16 %v2153
        %v2687 = vunpack.c.h.b16 %v2153
        %v2688 = vunpack.c.l.b16 %v2154
        %v2689 = vunpack.c.h.b16 %v2154
        %v2690 = vunpack.c.l.b16 %v2155
        %v2691 = vunpack.c.h.b16 %v2155
        %v2692 = vunpack.c.l.b16 %v2156
        %v2693 = vunpack.c.l.b16 %v2157
        %v2694 = vunpack.c.h.b16 %v2157
        %v2695 = vunpack.c.l.b16 %v2158
        %v2696 = vunpack.c.h.b16 %v2158
        %v2697 = vunpack.c.l.b16 %v2159
        %v2698 = vunpack.c.h.b16 %v2159
        %v2699 = vunpack.c.l.b16 %v2160
        %v2700 = vunpack.c.l.b16 %v2161
        %v2701 = vunpack.c.h.b16 %v2161
        %v2702 = vunpack.c.l.b16 %v2162
        %v2703 = vunpack.c.h.b16 %v2162
        %v2704 = vunpack.c.l.b16 %v2163
        %v2705 = vunpack.c.h.b16 %v2163
        %v2706 = vunpack.c.l.b16 %v2164
        %v2707 = vunpack.c.l.b16 %v2165
        %v2708 = vunpack.c.h.b16 %v2165
        %v2709 = vunpack.c.l.b16 %v2166
        %v2710 = vunpack.c.h.b16 %v2166
        %v2711 = vunpack.c.l.b16 %v2167
        %v2712 = vunpack.c.h.b16 %v2167
        %v2713 = vunpack.c.l.b16 %v2168
        %v2714 = vunpack.c.l.b16 %v2169
        %v2715 = vunpack.c.h.b16 %v2169
        %v2716 = vunpack.c.l.b16 %v2170
        %v2717 = vunpack.c.h.b16 %v2170
        %v2718 = vunpack.c.l.b16 %v2171
        %v2719 = vunpack.c.h.b16 %v2171
        %v2720 = vunpack.c.l.b16 %v2172
        %v2721 = vunpack.c.l.b16 %v2173
        %v2722 = vunpack.c.h.b16 %v2173
        %v2723 = vunpack.c.l.b16 %v2174
        %v2724 = vunpack.c.h.b16 %v2174
        %v2725 = vunpack.c.l.b16 %v2175
        %v2726 = vunpack.c.h.b16 %v2175
        %v2727 = vunpack.c.l.b16 %v2176
        %v2728 = vunpack.c.l.b16 %v2177
        %v2729 = vunpack.c.h.b16 %v2177
        %v2730 = vunpack.c.l.b16 %v2178
        %v2731 = vunpack.c.h.b16 %v2178
        %v2732 = vunpack.c.l.b16 %v2179
        %v2733 = vunpack.c.h.b16 %v2179
        %v2734 = vunpack.c.l.b16 %v2180
        %v2735 = vunpack.c.l.b16 %v2181
        %v2736 = vunpack.c.h.b16 %v2181
        %v2737 = vunpack.c.l.b16 %v2182
        %v2738 = vunpack.c.h.b16 %v2182
        %v2739 = vunpack.c.l.b16 %v2183
        %v2740 = vunpack.c.h.b16 %v2183
        %v2741 = vunpack.c.l.b16 %v2184
        %v2742 = vunpack.c.l.b16 %v2185
        %v2743 = vunpack.c.h.b16 %v2185
        %v2744 = vunpack.c.l.b16 %v2186
        %v2745 = vunpack.c.h.b16 %v2186
        %v2746 = vunpack.c.l.b16 %v2187
        %v2747 = vunpack.c.h.b16 %v2187
        %v2748 = vunpack.c.l.b16 %v2188
        %v2749 = vunpack.c.l.b16 %v2189
        %v2750 = vunpack.c.h.b16 %v2189
        %v2751 = vunpack.c.l.b16 %v2190
        %v2752 = vunpack.c.h.b16 %v2190
        %v2753 = vunpack.c.l.b16 %v2191
        %v2754 = vunpack.c.h.b16 %v2191
        %v2755 = vunpack.c.l.b16 %v2192
        %v2756 = vunpack.c.l.b16 %v2193
        %v2757 = vunpack.c.h.b16 %v2193
        %v2758 = vunpack.c.l.b16 %v2194
        %v2759 = vunpack.c.h.b16 %v2194
        %v2760 = vunpack.c.l.b16 %v2195
        %v2761 = vunpack.c.h.b16 %v2195
        %v2762 = vunpack.c.l.b16 %v2196
        %v2763 = vunpack.c.l.b16 %v2197
        %v2764 = vunpack.c.h.b16 %v2197
        %v2765 = vunpack.c.l.b16 %v2198
        %v2766 = vunpack.c.h.b16 %v2198
        %v2767 = vunpack.c.l.b16 %v2199
        %v2768 = vunpack.c.h.b16 %v2199
        %v2769 = vunpack.c.l.b16 %v2200
        %v2770 = vunpack.c.l.b16 %v2201
        %v2771 = vunpack.c.h.b16 %v2201
        %v2772 = vunpack.c.l.b16 %v2202
        %v2773 = vunpack.c.h.b16 %v2202
        %v2774 = vunpack.c.l.b16 %v2203
        %v2775 = vunpack.c.h.b16 %v2203
        %v2776 = vunpack.c.l.b16 %v2204
        %v2777 = vunpack.c.l.b16 %v2205
        %v2778 = vunpack.c.h.b16 %v2205
        %v2779 = vunpack.c.l.b16 %v2206
        %v2780 = vunpack.c.h.b16 %v2206
        %v2781 = vunpack.c.l.b16 %v2207
        %v2782 = vunpack.c.h.b16 %v2207
        %v2783 = vunpack.c.l.b16 %v2208
        %v2784 = vunpack.c.l.b16 %v2209
        %v2785 = vunpack.c.h.b16 %v2209
        %v2786 = vunpack.c.l.b16 %v2210
        %v2787 = vunpack.c.h.b16 %v2210
        %v2788 = vunpack.c.l.b16 %v2211
        %v2789 = vunpack.c.h.b16 %v2211
        %v2790 = vunpack.c.l.b16 %v2212
        %v2791 = vunpack.c.l.b16 %v2213
        %v2792 = vunpack.c.h.b16 %v2213
        %v2793 = vunpack.c.l.b16 %v2214
        %v2794 = vunpack.c.h.b16 %v2214
        %v2795 = vunpack.c.l.b16 %v2215
        %v2796 = vunpack.c.h.b16 %v2215
        %v2797 = vunpack.c.l.b16 %v2216
        %v2798 = vunpack.c.l.b16 %v2217
        %v2799 = vunpack.c.h.b16 %v2217
        %v2800 = vunpack.c.l.b16 %v2218
        %v2801 = vunpack.c.h.b16 %v2218
        %v2802 = vunpack.c.l.b16 %v2219
        %v2803 = vunpack.c.h.b16 %v2219
        %v2804 = vunpack.c.l.b16 %v2220
        %v2805 = vunpack.c.l.b16 %v2221
        %v2806 = vunpack.c.h.b16 %v2221
        %v2807 = vunpack.c.l.b16 %v2222
        %v2808 = vunpack.c.h.b16 %v2222
        %v2809 = vunpack.c.l.b16 %v2223
        %v2810 = vunpack.c.h.b16 %v2223
        %v2811 = vunpack.c.l.b16 %v2224
        %v2812 = vunpack.c.l.b16 %v2225
        %v2813 = vunpack.c.h.b16 %v2225
        %v2814 = vunpack.c.l.b16 %v2226
        %v2815 = vunpack.c.h.b16 %v2226
        %v2816 = vunpack.c.l.b16 %v2227
        %v2817 = vunpack.c.h.b16 %v2227
        %v2818 = vunpack.c.l.b16 %v2228
        %v2819 = vunpack.c.l.b16 %v2229
        %v2820 = vunpack.c.h.b16 %v2229
        %v2821 = vunpack.c.l.b16 %v2230
        %v2822 = vunpack.c.h.b16 %v2230
        %v2823 = vunpack.c.l.b16 %v2231
        %v2824 = vunpack.c.h.b16 %v2231
        %v2825 = vunpack.c.l.b16 %v2232
        %v2826 = vunpack.c.l.b16 %v2233
        %v2827 = vunpack.c.h.b16 %v2233
        %v2828 = vunpack.c.l.b16 %v2234
        %v2829 = vunpack.c.h.b16 %v2234
        %v2830 = vunpack.c.l.b16 %v2235
        %v2831 = vunpack.c.h.b16 %v2235
        %v2832 = vunpack.c.l.b16 %v2236
        %v2833 = vunpack.c.l.b16 %v2237
        %v2834 = vunpack.c.h.b16 %v2237
        %v2835 = vunpack.c.l.b16 %v2238
        %v2836 = vunpack.c.h.b16 %v2238
        %v2837 = vunpack.c.l.b16 %v2239
        %v2838 = vunpack.c.h.b16 %v2239
        %v2839 = vunpack.c.l.b16 %v2240
        %v2840 = vunpack.c.l.b16 %v2241
        %v2841 = vunpack.c.h.b16 %v2241
        %v2842 = vunpack.c.l.b16 %v2242
        %v2843 = vunpack.c.h.b16 %v2242
        %v2844 = vunpack.c.l.b16 %v2243
        %v2845 = vunpack.c.h.b16 %v2243
        %v2846 = vunpack.c.l.b16 %v2244
        %v2847 = vunpack.c.l.b16 %v2245
        %v2848 = vunpack.c.h.b16 %v2245
        %v2849 = vunpack.c.l.b16 %v2246
        %v2850 = vunpack.c.h.b16 %v2246
        %v2851 = vunpack.c.l.b16 %v2247
        %v2852 = vunpack.c.h.b16 %v2247
        %v2853 = vunpack.c.l.b16 %v2248
        %v2854 = vunpack.c.l.b16 %v2249
        %v2855 = vunpack.c.h.b16 %v2249
        %v2856 = vunpack.c.l.b16 %v2250
        %v2857 = vunpack.c.h.b16 %v2250
        %v2858 = vunpack.c.l.b16 %v2251
        %v2859 = vunpack.c.h.b16 %v2251
        %v2860 = vunpack.c.l.b16 %v2252
        %v2861 = vunpack.c.l.b16 %v2253
        %v2862 = vunpack.c.h.b16 %v2253
        %v2863 = vunpack.c.l.b16 %v2254
        %v2864 = vunpack.c.h.b16 %v2254
        %v2865 = vunpack.c.l.b16 %v2255
        %v2866 = vunpack.c.h.b16 %v2255
        %v2867 = vunpack.c.l.b16 %v2256
        %v2868 = vunpack.c.l.b16 %v2257
        %v2869 = vunpack.c.h.b16 %v2257
        %v2870 = vunpack.c.l.b16 %v2258
        %v2871 = vunpack.c.h.b16 %v2258
        %v2872 = vunpack.c.l.b16 %v2259
        %v2873 = vunpack.c.h.b16 %v2259
        %v2874 = vunpack.c.l.b16 %v2260
        %v2875 = vunpack.c.l.b16 %v2261
        %v2876 = vunpack.c.h.b16 %v2261
        %v2877 = vunpack.c.l.b16 %v2262
        %v2878 = vunpack.c.h.b16 %v2262
        %v2879 = vunpack.c.l.b16 %v2263
        %v2880 = vunpack.c.h.b16 %v2263
        %v2881 = vunpack.c.l.b16 %v2264
        %v2882 = vunpack.c.l.b16 %v2265
        %v2883 = vunpack.c.h.b16 %v2265
        %v2884 = vunpack.c.l.b16 %v2266
        %v2885 = vunpack.c.h.b16 %v2266
        %v2886 = vunpack.c.l.b16 %v2267
        %v2887 = vunpack.c.h.b16 %v2267
        %v2888 = vunpack.c.l.b16 %v2268
        %v2889 = vunpack.c.l.b16 %v2269
        %v2890 = vunpack.c.h.b16 %v2269
        %v2891 = vunpack.c.l.b16 %v2270
        %v2892 = vunpack.c.h.b16 %v2270
        %v2893 = vunpack.c.l.b16 %v2271
        %v2894 = vunpack.c.h.b16 %v2271
        %v2895 = vunpack.c.l.b16 %v2272
        %v2896 = vunpack.c.l.b16 %v2273
        %v2897 = vunpack.c.h.b16 %v2273
        %v2898 = vunpack.c.l.b16 %v2274
        %v2899 = vunpack.c.h.b16 %v2274
        %v2900 = vunpack.c.l.b16 %v2275
        %v2901 = vunpack.c.h.b16 %v2275
        %v2902 = vunpack.c.l.b16 %v2276
        %v2903 = vunpack.c.l.b16 %v2277
        %v2904 = vunpack.c.h.b16 %v2277
        %v2905 = vunpack.c.l.b16 %v2278
        %v2906 = vunpack.c.h.b16 %v2278
        %v2907 = vunpack.c.l.b16 %v2279
        %v2908 = vunpack.c.h.b16 %v2279
        %v2909 = vunpack.c.l.b16 %v2280
        %v2910 = vunpack.c.l.b16 %v2281
        %v2911 = vunpack.c.h.b16 %v2281
        %v2912 = vunpack.c.l.b16 %v2282
        %v2913 = vunpack.c.h.b16 %v2282
        %v2914 = vunpack.c.l.b16 %v2283
        %v2915 = vunpack.c.h.b16 %v2283
        %v2916 = vunpack.c.l.b16 %v2284
        %v2917 = vunpack.c.l.b16 %v2285
        %v2918 = vunpack.c.h.b16 %v2285
        %v2919 = vunpack.c.l.b16 %v2286
        %v2920 = vunpack.c.h.b16 %v2286
        %v2921 = vunpack.c.l.b16 %v2287
        %v2922 = vunpack.c.h.b16 %v2287
        %v2923 = vunpack.c.l.b16 %v2288
        %v2924 = vunpack.c.l.b16 %v2289
        %v2925 = vunpack.c.h.b16 %v2289
        %v2926 = vunpack.c.l.b16 %v2290
        %v2927 = vunpack.c.h.b16 %v2290
        %v2928 = vunpack.c.l.b16 %v2291
        %v2929 = vunpack.c.h.b16 %v2291
        %v2930 = vunpack.c.l.b16 %v2292
        %v2931 = vunpack.c.l.b16 %v2293
        %v2932 = vunpack.c.h.b16 %v2293
        %v2933 = vunpack.c.l.b16 %v2294
        %v2934 = vunpack.c.h.b16 %v2294
        %v2935 = vunpack.c.l.b16 %v2295
        %v2936 = vunpack.c.h.b16 %v2295
        %v2937 = vunpack.c.l.b16 %v2296
        %v2938 = vunpack.c.l.b16 %v2297
        %v2939 = vunpack.c.h.b16 %v2297
        %v2940 = vunpack.c.l.b16 %v2298
        %v2941 = vunpack.c.h.b16 %v2298
        %v2942 = vunpack.c.l.b16 %v2299
        %v2943 = vunpack.c.h.b16 %v2299
        %v2944 = vunpack.c.l.b16 %v2300
        %v2945 = vunpack.c.l.b16 %v2301
        %v2946 = vunpack.c.h.b16 %v2301
        %v2947 = vunpack.c.l.b16 %v2302
        %v2948 = vunpack.c.h.b16 %v2302
        %v2949 = vunpack.c.l.b16 %v2303
        %v2950 = vunpack.c.h.b16 %v2303
        %v2951 = vunpack.c.l.b16 %v2304
        %v2952 = vpack.c.b16 %v2567, %v2560
        %v2953 = vpack.c.b16 %v2568, %v2561
        %v2954 = vpack.c.b16 %v2569, %v2562
        %v2955 = vpack.c.b16 %v2570, %v2563
        %v2956 = vpack.c.b16 %v2571, %v2564
        %v2957 = vpack.c.b16 %v2572, %v2565
        %v2958 = vpack.c.b16 %v2573, %v2566
        %v2959 = vpack.c.b16 %v2581, %v2574
        %v2960 = vpack.c.b16 %v2582, %v2575
        %v2961 = vpack.c.b16 %v2583, %v2576
        %v2962 = vpack.c.b16 %v2584, %v2577
        %v2963 = vpack.c.b16 %v2585, %v2578
        %v2964 = vpack.c.b16 %v2586, %v2579
        %v2965 = vpack.c.b16 %v2587, %v2580
        %v2966 = vpack.c.b16 %v2595, %v2588
        %v2967 = vpack.c.b16 %v2596, %v2589
        %v2968 = vpack.c.b16 %v2597, %v2590
        %v2969 = vpack.c.b16 %v2598, %v2591
        %v2970 = vpack.c.b16 %v2599, %v2592
        %v2971 = vpack.c.b16 %v2600, %v2593
        %v2972 = vpack.c.b16 %v2601, %v2594
        %v2973 = vpack.c.b16 %v2609, %v2602
        %v2974 = vpack.c.b16 %v2610, %v2603
        %v2975 = vpack.c.b16 %v2611, %v2604
        %v2976 = vpack.c.b16 %v2612, %v2605
        %v2977 = vpack.c.b16 %v2613, %v2606
        %v2978 = vpack.c.b16 %v2614, %v2607
        %v2979 = vpack.c.b16 %v2615, %v2608
        %v2980 = vpack.c.b16 %v2623, %v2616
        %v2981 = vpack.c.b16 %v2624, %v2617
        %v2982 = vpack.c.b16 %v2625, %v2618
        %v2983 = vpack.c.b16 %v2626, %v2619
        %v2984 = vpack.c.b16 %v2627, %v2620
        %v2985 = vpack.c.b16 %v2628, %v2621
        %v2986 = vpack.c.b16 %v2629, %v2622
        %v2987 = vpack.c.b16 %v2637, %v2630
        %v2988 = vpack.c.b16 %v2638, %v2631
        %v2989 = vpack.c.b16 %v2639, %v2632
        %v2990 = vpack.c.b16 %v2640, %v2633
        %v2991 = vpack.c.b16 %v2641, %v2634
        %v2992 = vpack.c.b16 %v2642, %v2635
        %v2993 = vpack.c.b16 %v2643, %v2636
        %v2994 = vpack.c.b16 %v2651, %v2644
        %v2995 = vpack.c.b16 %v2652, %v2645
        %v2996 = vpack.c.b16 %v2653, %v2646
        %v2997 = vpack.c.b16 %v2654, %v2647
        %v2998 = vpack.c.b16 %v2655, %v2648
        %v2999 = vpack.c.b16 %v2656, %v2649
        %v3000 = vpack.c.b16 %v2657, %v2650
        %v3001 = vpack.c.b16 %v2665, %v2658
        %v3002 = vpack.c.b16 %v2666, %v2659
        %v3003 = vpack.c.b16 %v2667, %v2660
        %v3004 = vpack.c.b16 %v2668, %v2661
        %v3005 = vpack.c.b16 %v2669, %v2662
        %v3006 = vpack.c.b16 %v2670, %v2663
        %v3007 = vpack.c.b16 %v2671, %v2664
        %v3008 = vpack.c.b16 %v2679, %v2672
        %v3009 = vpack.c.b16 %v2680, %v2673
        %v3010 = vpack.c.b16 %v2681, %v2674
        %v3011 = vpack.c.b16 %v2682, %v2675
        %v3012 = vpack.c.b16 %v2683, %v2676
        %v3013 = vpack.c.b16 %v2684, %v2677
        %v3014 = vpack.c.b16 %v2685, %v2678
        %v3015 = vpack.c.b16 %v2693, %v2686
        %v3016 = vpack.c.b16 %v2694, %v2687
        %v3017 = vpack.c.b16 %v2695, %v2688
        %v3018 = vpack.c.b16 %v2696, %v2689
        %v3019 = vpack.c.b16 %v2697, %v2690
        %v3020 = vpack.c.b16 %v2698, %v2691
        %v3021 = vpack.c.b16 %v2699, %v2692
        %v3022 = vpack.c.b16 %v2707, %v2700
        %v3023 = vpack.c.b16 %v2708, %v2701
        %v3024 = vpack.c.b16 %v2709, %v2702
        %v3025 = vpack.c.b16 %v2710, %v2703
        %v3026 = vpack.c.b16 %v2711, %v2704
        %v3027 = vpack.c.b16 %v2712, %v2705
        %v3028 = vpack.c.b16 %v2713, %v2706
        %v3029 = vpack.c.b16 %v2721, %v2714
        %v3030 = vpack.c.b16 %v2722, %v2715
        %v3031 = vpack.c.b16 %v2723, %v2716
        %v3032 = vpack.c.b16 %v2724, %v2717
        %v3033 = vpack.c.b16 %v2725, %v2718
        %v3034 = vpack.c.b16 %v2726, %v2719
        %v3035 = vpack.c.b16 %v2727, %v2720
        %v3036 = vpack.c.b16 %v2735, %v2728
        %v3037 = vpack.c.b16 %v2736, %v2729
        %v3038 = vpack.c.b16 %v2737, %v2730
        %v3039 = vpack.c.b16 %v2738, %v2731
        %v3040 = vpack.c.b16 %v2739, %v2732
        %v3041 = vpack.c.b16 %v2740, %v2733
        %v3042 = vpack.c.b16 %v2741, %v2734
        %v3043 = vpack.c.b16 %v2749, %v2742
        %v3044 = vpack.c.b16 %v2750, %v2743
        %v3045 = vpack.c.b16 %v2751, %v2744
        %v3046 = vpack.c.b16 %v2752, %v2745
        %v3047 = vpack.c.b16 %v2753, %v2746
        %v3048 = vpack.c.b16 %v2754, %v2747
        %v3049 = vpack.c.b16 %v2755, %v2748
        %v3050 = vpack.c.b16 %v2763, %v2756
        %v3051 = vpack.c.b16 %v2764, %v2757
        %v3052 = vpack.c.b16 %v2765, %v2758
        %v3053 = vpack.c.b16 %v2766, %v2759
        %v3054 = vpack.c.b16 %v2767, %v2760
        %v3055 = vpack.c.b16 %v2768, %v2761
        %v3056 = vpack.c.b16 %v2769, %v2762
        %v3057 = vpack.c.b16 %v2777, %v2770
        %v3058 = vpack.c.b16 %v2778, %v2771
        %v3059 = vpack.c.b16 %v2779, %v2772
        %v3060 = vpack.c.b16 %v2780, %v2773
        %v3061 = vpack.c.b16 %v2781, %v2774
        %v3062 = vpack.c.b16 %v2782, %v2775
        %v3063 = vpack.c.b16 %v2783, %v2776
        %v3064 = vpack.c.b16 %v2791, %v2784
        %v3065 = vpack.c.b16 %v2792, %v2785
        %v3066 = vpack.c.b16 %v2793, %v2786
        %v3067 = vpack.c.b16 %v2794, %v2787
        %v3068 = vpack.c.b16 %v2795, %v2788
        %v3069 = vpack.c.b16 %v2796, %v2789
        %v3070 = vpack.c.b16 %v2797, %v2790
        %v3071 = vpack.c.b16 %v2805, %v2798
        %v3072 = vpack.c.b16 %v2806, %v2799
        %v3073 = vpack.c.b16 %v2807, %v2800
        %v3074 = vpack.c.b16 %v2808, %v2801
        %v3075 = vpack.c.b16 %v2809, %v2802
        %v3076 = vpack.c.b16 %v2810, %v2803
        %v3077 = vpack.c.b16 %v2811, %v2804
        %v3078 = vpack.c.b16 %v2819, %v2812
        %v3079 = vpack.c.b16 %v2820, %v2813
        %v3080 = vpack.c.b16 %v2821, %v2814
        %v3081 = vpack.c.b16 %v2822, %v2815
        %v3082 = vpack.c.b16 %v2823, %v2816
        %v3083 = vpack.c.b16 %v2824, %v2817
        %v3084 = vpack.c.b16 %v2825, %v2818
        %v3085 = vpack.c.b16 %v2833, %v2826
        %v3086 = vpack.c.b16 %v2834, %v2827
        %v3087 = vpack.c.b16 %v2835, %v2828
        %v3088 = vpack.c.b16 %v2836, %v2829
        %v3089 = vpack.c.b16 %v2837, %v2830
        %v3090 = vpack.c.b16 %v2838, %v2831
        %v3091 = vpack.c.b16 %v2839, %v2832
        %v3092 = vpack.c.b16 %v2847, %v2840
        %v3093 = vpack.c.b16 %v2848, %v2841
        %v3094 = vpack.c.b16 %v2849, %v2842
        %v3095 = vpack.c.b16 %v2850, %v2843
        %v3096 = vpack.c.b16 %v2851, %v2844
        %v3097 = vpack.c.b16 %v2852, %v2845
        %v3098 = vpack.c.b16 %v2853, %v2846
        %v3099 = vpack.c.b16 %v2861, %v2854
        %v3100 = vpack.c.b16 %v2862, %v2855
        %v3101 = vpack.c.b16 %v2863, %v2856
        %v3102 = vpack.c.b16 %v2864, %v2857
        %v3103 = vpack.c.b16 %v2865, %v2858
        %v3104 = vpack.c.b16 %v2866, %v2859
        %v3105 = vpack.c.b16 %v2867, %v2860
        %v3106 = vpack.c.b16 %v2875, %v2868
        %v3107 = vpack.c.b16 %v2876, %v2869
        %v3108 = vpack.c.b16 %v2877, %v2870
        %v3109 = vpack.c.b16 %v2878, %v2871
        %v3110 = vpack.c.b16 %v2879, %v2872
        %v3111 = vpack.c.b16 %v2880, %v2873
        %v3112 = vpack.c.b16 %v2881, %v2874
        %v3113 = vpack.c.b16 %v2889, %v2882
        %v3114 = vpack.c.b16 %v2890, %v2883
        %v3115 = vpack.c.b16 %v2891, %v2884
        %v3116 = vpack.c.b16 %v2892, %v2885
        %v3117 = vpack.c.b16 %v2893, %v2886
        %v3118 = vpack.c.b16 %v2894, %v2887
        %v3119 = vpack.c.b16 %v2895, %v2888
        %v3120 = vpack.c.b16 %v2903, %v2896
        %v3121 = vpack.c.b16 %v2904, %v2897
        %v3122 = vpack.c.b16 %v2905, %v2898
        %v3123 = vpack.c.b16 %v2906, %v2899
        %v3124 = vpack.c.b16 %v2907, %v2900
        %v3125 = vpack.c.b16 %v2908, %v2901
        %v3126 = vpack.c.b16 %v2909, %v2902
        %v3127 = vpack.c.b16 %v2917, %v2910
        %v3128 = vpack.c.b16 %v2918, %v2911
        %v3129 = vpack.c.b16 %v2919, %v2912
        %v3130 = vpack.c.b16 %v2920, %v2913
        %v3131 = vpack.c.b16 %v2921, %v2914
        %v3132 = vpack.c.b16 %v2922, %v2915
        %v3133 = vpack.c.b16 %v2923, %v2916
        %v3134 = vpack.c.b16 %v2931, %v2924
        %v3135 = vpack.c.b16 %v2932, %v2925
        %v3136 = vpack.c.b16 %v2933, %v2926
        %v3137 = vpack.c.b16 %v2934, %v2927
        %v3138 = vpack.c.b16 %v2935, %v2928
        %v3139 = vpack.c.b16 %v2936, %v2929
        %v3140 = vpack.c.b16 %v2937, %v2930
        %v3141 = vpack.c.b16 %v2945, %v2938
        %v3142 = vpack.c.b16 %v2946, %v2939
        %v3143 = vpack.c.b16 %v2947, %v2940
        %v3144 = vpack.c.b16 %v2948, %v2941
        %v3145 = vpack.c.b16 %v2949, %v2942
        %v3146 = vpack.c.b16 %v2950, %v2943
        %v3147 = vpack.c.b16 %v2951, %v2944
        %v3345 = vsel %vm1433, %v2332, 0
        %3347 = vmatprep.subr.bf16.mxu0 %v2953
        %3348 = vmatpush1.bf16.msra.mxu0 %v2952
        %3349 = vmatprep.subr.bf16.mxu0 %v2960
        %3350 = vmatpush1.bf16.msra.mxu0 %v2959
        %3351 = vmatprep.subr.bf16.mxu0 %v2967
        %3352 = vmatpush1.bf16.msra.mxu0 %v2966
        %3353 = vmatprep.subr.bf16.mxu0 %v2974
        %3354 = vmatpush1.bf16.msra.mxu0 %v2973
        %3355 = vmatprep.subr.bf16.mxu0 %v2981
        %3356 = vmatpush1.bf16.msra.mxu0 %v2980
        %3357 = vmatprep.subr.bf16.mxu0 %v2988
        %3358 = vmatpush1.bf16.msra.mxu0 %v2987
        %3359 = vmatprep.subr.bf16.mxu0 %v2995
        %3360 = vmatpush1.bf16.msra.mxu0 %v2994
        %3361 = vmatprep.subr.bf16.mxu0 %v3002
        %3362 = vmatpush1.bf16.msra.mxu0 %v3001
        %3363 = vmatprep.subr.bf16.mxu0 %v3009
        %3364 = vmatpush1.bf16.msra.mxu0 %v3008
        %3365 = vmatprep.subr.bf16.mxu0 %v3016
        %3366 = vmatpush1.bf16.msra.mxu0 %v3015
        %3367 = vmatprep.subr.bf16.mxu0 %v3023
        %3368 = vmatpush1.bf16.msra.mxu0 %v3022
        %3369 = vmatprep.subr.bf16.mxu0 %v3030
        %3370 = vmatpush1.bf16.msra.mxu0 %v3029
        %3371 = vmatprep.subr.bf16.mxu0 %v3037
        %3372 = vmatpush1.bf16.msra.mxu0 %v3036
        %3373 = vmatprep.subr.bf16.mxu0 %v3044
        %3374 = vmatpush1.bf16.msra.mxu0 %v3043
        %3375 = vmatprep.subr.bf16.mxu0 %v3051
        %3376 = vmatpush1.bf16.msra.mxu0 %v3050
        %3377 = vmatprep.subr.bf16.mxu0 %v3058
        %3378 = vmatpush1.bf16.msra.mxu0 %v3057
        %3379 = vmatprep.mubr.bf16.mxu0 %v2318
        %3380 = vmatmul.mubr.bf16.gmra.mrb[0].mxu0 %v2311
        %v3381 = vpop.f32.mrb[0].mxu0
        %v3382 = vadd.f32 0.0, %v3381
        %v3383 = vpop.f32.mrb[0].mxu0
        %v3384 = vadd.f32 0.0, %v3383
        %v3385 = vpop.f32.mrb[0].mxu0
        %v3386 = vadd.f32 0.0, %v3385
        %v3387 = vpop.f32.mrb[0].mxu0
        %v3388 = vadd.f32 0.0, %v3387
        %3389 = vdwg.mxu0
        %3390 = vmatprep.subr.bf16.mxu0 %v3065
        %3391 = vmatpush1.bf16.msra.mxu0 %v3064
        %3392 = vmatprep.subr.bf16.mxu0 %v3072
        %3393 = vmatpush1.bf16.msra.mxu0 %v3071
        %3394 = vmatprep.subr.bf16.mxu0 %v3079
        %3395 = vmatpush1.bf16.msra.mxu0 %v3078
        %3396 = vmatprep.subr.bf16.mxu0 %v3086
        %3397 = vmatpush1.bf16.msra.mxu0 %v3085
        %3398 = vmatprep.subr.bf16.mxu0 %v3093
        %3399 = vmatpush1.bf16.msra.mxu0 %v3092
        %3400 = vmatprep.subr.bf16.mxu0 %v3100
        %3401 = vmatpush1.bf16.msra.mxu0 %v3099
        %3402 = vmatprep.subr.bf16.mxu0 %v3107
        %3403 = vmatpush1.bf16.msra.mxu0 %v3106
        %3404 = vmatprep.subr.bf16.mxu0 %v3114
        %3405 = vmatpush1.bf16.msra.mxu0 %v3113
        %3406 = vmatprep.subr.bf16.mxu0 %v3121
        %3407 = vmatpush1.bf16.msra.mxu0 %v3120
        %3408 = vmatprep.subr.bf16.mxu0 %v3128
        %3409 = vmatpush1.bf16.msra.mxu0 %v3127
        %3410 = vmatprep.subr.bf16.mxu0 %v3135
        %3411 = vmatpush1.bf16.msra.mxu0 %v3134
        %3412 = vmatprep.subr.bf16.mxu0 %v3142
        %3413 = vmatpush1.bf16.msra.mxu0 %v3141
        %3414 = vmatprep.subr.bf16.mxu0 0
        %3415 = vmatpush1.bf16.msra.mxu0 0
        %3416 = vmatprep.subr.bf16.mxu0 0
        %3417 = vmatpush1.bf16.msra.mxu0 0
        %3418 = vmatprep.subr.bf16.mxu0 0
        %3419 = vmatpush1.bf16.msra.mxu0 0
        %3420 = vmatprep.subr.bf16.mxu0 0
        %3421 = vmatpush1.bf16.msra.mxu0 0
        %3422 = vmatprep.mubr.bf16.mxu0 %v3345
        %3423 = vmatmul.mubr.bf16.gmra.mrb[0].mxu0 %v2325
        %v3424 = vpop.f32.mrb[0].mxu0
        %v3425 = vadd.f32 %v3382, %v3424
        %v3426 = vpop.f32.mrb[0].mxu0
        %v3427 = vadd.f32 %v3384, %v3426
        %v3428 = vpop.f32.mrb[0].mxu0
        %v3429 = vadd.f32 %v3386, %v3428
        %v3430 = vpop.f32.mrb[0].mxu0
        %v3431 = vadd.f32 %v3388, %v3430
        %3432 = vdwg.mxu0
        %3433 = vmatprep.subr.bf16.mxu0 %v2955
        %3434 = vmatpush1.bf16.msra.mxu0 %v2954
        %3435 = vmatprep.subr.bf16.mxu0 %v2962
        %3436 = vmatpush1.bf16.msra.mxu0 %v2961
        %3437 = vmatprep.subr.bf16.mxu0 %v2969
        %3438 = vmatpush1.bf16.msra.mxu0 %v2968
        %3439 = vmatprep.subr.bf16.mxu0 %v2976
        %3440 = vmatpush1.bf16.msra.mxu0 %v2975
        %3441 = vmatprep.subr.bf16.mxu0 %v2983
        %3442 = vmatpush1.bf16.msra.mxu0 %v2982
        %3443 = vmatprep.subr.bf16.mxu0 %v2990
        %3444 = vmatpush1.bf16.msra.mxu0 %v2989
        %3445 = vmatprep.subr.bf16.mxu0 %v2997
        %3446 = vmatpush1.bf16.msra.mxu0 %v2996
        %3447 = vmatprep.subr.bf16.mxu0 %v3004
        %3448 = vmatpush1.bf16.msra.mxu0 %v3003
        %3449 = vmatprep.subr.bf16.mxu0 %v3011
        %3450 = vmatpush1.bf16.msra.mxu0 %v3010
        %3451 = vmatprep.subr.bf16.mxu0 %v3018
        %3452 = vmatpush1.bf16.msra.mxu0 %v3017
        %3453 = vmatprep.subr.bf16.mxu0 %v3025
        %3454 = vmatpush1.bf16.msra.mxu0 %v3024
        %3455 = vmatprep.subr.bf16.mxu0 %v3032
        %3456 = vmatpush1.bf16.msra.mxu0 %v3031
        %3457 = vmatprep.subr.bf16.mxu0 %v3039
        %3458 = vmatpush1.bf16.msra.mxu0 %v3038
        %3459 = vmatprep.subr.bf16.mxu0 %v3046
        %3460 = vmatpush1.bf16.msra.mxu0 %v3045
        %3461 = vmatprep.subr.bf16.mxu0 %v3053
        %3462 = vmatpush1.bf16.msra.mxu0 %v3052
        %3463 = vmatprep.subr.bf16.mxu0 %v3060
        %3464 = vmatpush1.bf16.msra.mxu0 %v3059
        %3465 = vmatprep.mubr.bf16.mxu0 %v2318
        %3466 = vmatmul.mubr.bf16.gmra.mrb[0].mxu0 %v2311
        %v3467 = vpop.f32.mrb[0].mxu0
        %v3468 = vadd.f32 0.0, %v3467
        %v3469 = vpop.f32.mrb[0].mxu0
        %v3470 = vadd.f32 0.0, %v3469
        %v3471 = vpop.f32.mrb[0].mxu0
        %v3472 = vadd.f32 0.0, %v3471
        %v3473 = vpop.f32.mrb[0].mxu0
        %v3474 = vadd.f32 0.0, %v3473
        %3475 = vdwg.mxu0
        %3476 = vmatprep.subr.bf16.mxu0 %v3067
        %3477 = vmatpush1.bf16.msra.mxu0 %v3066
        %3478 = vmatprep.subr.bf16.mxu0 %v3074
        %3479 = vmatpush1.bf16.msra.mxu0 %v3073
        %3480 = vmatprep.subr.bf16.mxu0 %v3081
        %3481 = vmatpush1.bf16.msra.mxu0 %v3080
        %3482 = vmatprep.subr.bf16.mxu0 %v3088
        %3483 = vmatpush1.bf16.msra.mxu0 %v3087
        %3484 = vmatprep.subr.bf16.mxu0 %v3095
        %3485 = vmatpush1.bf16.msra.mxu0 %v3094
        %3486 = vmatprep.subr.bf16.mxu0 %v3102
        %3487 = vmatpush1.bf16.msra.mxu0 %v3101
        %3488 = vmatprep.subr.bf16.mxu0 %v3109
        %3489 = vmatpush1.bf16.msra.mxu0 %v3108
        %3490 = vmatprep.subr.bf16.mxu0 %v3116
        %3491 = vmatpush1.bf16.msra.mxu0 %v3115
        %3492 = vmatprep.subr.bf16.mxu0 %v3123
        %3493 = vmatpush1.bf16.msra.mxu0 %v3122
        %3494 = vmatprep.subr.bf16.mxu0 %v3130
        %3495 = vmatpush1.bf16.msra.mxu0 %v3129
        %3496 = vmatprep.subr.bf16.mxu0 %v3137
        %3497 = vmatpush1.bf16.msra.mxu0 %v3136
        %3498 = vmatprep.subr.bf16.mxu0 %v3144
        %3499 = vmatpush1.bf16.msra.mxu0 %v3143
        %3500 = vmatprep.subr.bf16.mxu0 0
        %3501 = vmatpush1.bf16.msra.mxu0 0
        %3502 = vmatprep.subr.bf16.mxu0 0
        %3503 = vmatpush1.bf16.msra.mxu0 0
        %3504 = vmatprep.subr.bf16.mxu0 0
        %3505 = vmatpush1.bf16.msra.mxu0 0
        %3506 = vmatprep.subr.bf16.mxu0 0
        %3507 = vmatpush1.bf16.msra.mxu0 0
        %3508 = vmatprep.mubr.bf16.mxu0 %v3345
        %3509 = vmatmul.mubr.bf16.gmra.mrb[0].mxu0 %v2325
        %v3510 = vpop.f32.mrb[0].mxu0
        %v3511 = vadd.f32 %v3468, %v3510
        %v3512 = vpop.f32.mrb[0].mxu0
        %v3513 = vadd.f32 %v3470, %v3512
        %v3514 = vpop.f32.mrb[0].mxu0
        %v3515 = vadd.f32 %v3472, %v3514
        %v3516 = vpop.f32.mrb[0].mxu0
        %v3517 = vadd.f32 %v3474, %v3516
        %3518 = vdwg.mxu0
        %3519 = vmatprep.subr.bf16.mxu0 %v2957
        %3520 = vmatpush1.bf16.msra.mxu0 %v2956
        %3521 = vmatprep.subr.bf16.mxu0 %v2964
        %3522 = vmatpush1.bf16.msra.mxu0 %v2963
        %3523 = vmatprep.subr.bf16.mxu0 %v2971
        %3524 = vmatpush1.bf16.msra.mxu0 %v2970
        %3525 = vmatprep.subr.bf16.mxu0 %v2978
        %3526 = vmatpush1.bf16.msra.mxu0 %v2977
        %3527 = vmatprep.subr.bf16.mxu0 %v2985
        %3528 = vmatpush1.bf16.msra.mxu0 %v2984
        %3529 = vmatprep.subr.bf16.mxu0 %v2992
        %3530 = vmatpush1.bf16.msra.mxu0 %v2991
        %3531 = vmatprep.subr.bf16.mxu0 %v2999
        %3532 = vmatpush1.bf16.msra.mxu0 %v2998
        %3533 = vmatprep.subr.bf16.mxu0 %v3006
        %3534 = vmatpush1.bf16.msra.mxu0 %v3005
        %3535 = vmatprep.subr.bf16.mxu0 %v3013
        %3536 = vmatpush1.bf16.msra.mxu0 %v3012
        %3537 = vmatprep.subr.bf16.mxu0 %v3020
        %3538 = vmatpush1.bf16.msra.mxu0 %v3019
        %3539 = vmatprep.subr.bf16.mxu0 %v3027
        %3540 = vmatpush1.bf16.msra.mxu0 %v3026
        %3541 = vmatprep.subr.bf16.mxu0 %v3034
        %3542 = vmatpush1.bf16.msra.mxu0 %v3033
        %3543 = vmatprep.subr.bf16.mxu0 %v3041
        %3544 = vmatpush1.bf16.msra.mxu0 %v3040
        %3545 = vmatprep.subr.bf16.mxu0 %v3048
        %3546 = vmatpush1.bf16.msra.mxu0 %v3047
        %3547 = vmatprep.subr.bf16.mxu0 %v3055
        %3548 = vmatpush1.bf16.msra.mxu0 %v3054
        %3549 = vmatprep.subr.bf16.mxu0 %v3062
        %3550 = vmatpush1.bf16.msra.mxu0 %v3061
        %3551 = vmatprep.mubr.bf16.mxu0 %v2318
        %3552 = vmatmul.mubr.bf16.gmra.mrb[0].mxu0 %v2311
        %v3553 = vpop.f32.mrb[0].mxu0
        %v3554 = vadd.f32 0.0, %v3553
        %v3555 = vpop.f32.mrb[0].mxu0
        %v3556 = vadd.f32 0.0, %v3555
        %v3557 = vpop.f32.mrb[0].mxu0
        %v3558 = vadd.f32 0.0, %v3557
        %v3559 = vpop.f32.mrb[0].mxu0
        %v3560 = vadd.f32 0.0, %v3559
        %3561 = vdwg.mxu0
        %3562 = vmatprep.subr.bf16.mxu0 %v3069
        %3563 = vmatpush1.bf16.msra.mxu0 %v3068
        %3564 = vmatprep.subr.bf16.mxu0 %v3076
        %3565 = vmatpush1.bf16.msra.mxu0 %v3075
        %3566 = vmatprep.subr.bf16.mxu0 %v3083
        %3567 = vmatpush1.bf16.msra.mxu0 %v3082
        %3568 = vmatprep.subr.bf16.mxu0 %v3090
        %3569 = vmatpush1.bf16.msra.mxu0 %v3089
        %3570 = vmatprep.subr.bf16.mxu0 %v3097
        %3571 = vmatpush1.bf16.msra.mxu0 %v3096
        %3572 = vmatprep.subr.bf16.mxu0 %v3104
        %3573 = vmatpush1.bf16.msra.mxu0 %v3103
        %3574 = vmatprep.subr.bf16.mxu0 %v3111
        %3575 = vmatpush1.bf16.msra.mxu0 %v3110
        %3576 = vmatprep.subr.bf16.mxu0 %v3118
        %3577 = vmatpush1.bf16.msra.mxu0 %v3117
        %3578 = vmatprep.subr.bf16.mxu0 %v3125
        %3579 = vmatpush1.bf16.msra.mxu0 %v3124
        %3580 = vmatprep.subr.bf16.mxu0 %v3132
        %3581 = vmatpush1.bf16.msra.mxu0 %v3131
        %3582 = vmatprep.subr.bf16.mxu0 %v3139
        %3583 = vmatpush1.bf16.msra.mxu0 %v3138
        %3584 = vmatprep.subr.bf16.mxu0 %v3146
        %3585 = vmatpush1.bf16.msra.mxu0 %v3145
        %3586 = vmatprep.subr.bf16.mxu0 0
        %3587 = vmatpush1.bf16.msra.mxu0 0
        %3588 = vmatprep.subr.bf16.mxu0 0
        %3589 = vmatpush1.bf16.msra.mxu0 0
        %3590 = vmatprep.subr.bf16.mxu0 0
        %3591 = vmatpush1.bf16.msra.mxu0 0
        %3592 = vmatprep.subr.bf16.mxu0 0
        %3593 = vmatpush1.bf16.msra.mxu0 0
        %3594 = vmatprep.mubr.bf16.mxu0 %v3345
        %3595 = vmatmul.mubr.bf16.gmra.mrb[0].mxu0 %v2325
        %v3596 = vpop.f32.mrb[0].mxu0
        %v3597 = vadd.f32 %v3554, %v3596
        %v3598 = vpop.f32.mrb[0].mxu0
        %v3599 = vadd.f32 %v3556, %v3598
        %v3600 = vpop.f32.mrb[0].mxu0
        %v3601 = vadd.f32 %v3558, %v3600
        %v3602 = vpop.f32.mrb[0].mxu0
        %v3603 = vadd.f32 %v3560, %v3602
        %3604 = vdwg.mxu0
        %3605 = vmatprep.subr.bf16.mxu0 0
        %3606 = vmatpush1.bf16.msra.mxu0 %v2958
        %3607 = vmatprep.subr.bf16.mxu0 0
        %3608 = vmatpush1.bf16.msra.mxu0 %v2965
        %3609 = vmatprep.subr.bf16.mxu0 0
        %3610 = vmatpush1.bf16.msra.mxu0 %v2972
        %3611 = vmatprep.subr.bf16.mxu0 0
        %3612 = vmatpush1.bf16.msra.mxu0 %v2979
        %3613 = vmatprep.subr.bf16.mxu0 0
        %3614 = vmatpush1.bf16.msra.mxu0 %v2986
        %3615 = vmatprep.subr.bf16.mxu0 0
        %3616 = vmatpush1.bf16.msra.mxu0 %v2993
        %3617 = vmatprep.subr.bf16.mxu0 0
        %3618 = vmatpush1.bf16.msra.mxu0 %v3000
        %3619 = vmatprep.subr.bf16.mxu0 0
        %3620 = vmatpush1.bf16.msra.mxu0 %v3007
        %3621 = vmatprep.subr.bf16.mxu0 0
        %3622 = vmatpush1.bf16.msra.mxu0 %v3014
        %3623 = vmatprep.subr.bf16.mxu0 0
        %3624 = vmatpush1.bf16.msra.mxu0 %v3021
        %3625 = vmatprep.subr.bf16.mxu0 0
        %3626 = vmatpush1.bf16.msra.mxu0 %v3028
        %3627 = vmatprep.subr.bf16.mxu0 0
        %3628 = vmatpush1.bf16.msra.mxu0 %v3035
        %3629 = vmatprep.subr.bf16.mxu0 0
        %3630 = vmatpush1.bf16.msra.mxu0 %v3042
        %3631 = vmatprep.subr.bf16.mxu0 0
        %3632 = vmatpush1.bf16.msra.mxu0 %v3049
        %3633 = vmatprep.subr.bf16.mxu0 0
        %3634 = vmatpush1.bf16.msra.mxu0 %v3056
        %3635 = vmatprep.subr.bf16.mxu0 0
        %3636 = vmatpush1.bf16.msra.mxu0 %v3063
        %3637 = vmatprep.mubr.bf16.mxu0 %v2318
        %3638 = vmatmul.mubr.bf16.gmra.mrb[0].mxu0 %v2311
        %v3639 = vpop.f32.mrb[0].mxu0
        %v3640 = vadd.f32 0.0, %v3639
        %v3641 = vpop.f32.mrb[0].mxu0
        %v3642 = vpop.f32.mrb[0].mxu0
        %v3643 = vadd.f32 0.0, %v3642
        %v3644 = vpop.f32.mrb[0].mxu0
        %3645 = vdwg.mxu0
        %3646 = vmatprep.subr.bf16.mxu0 0
        %3647 = vmatpush1.bf16.msra.mxu0 %v3070
        %3648 = vmatprep.subr.bf16.mxu0 0
        %3649 = vmatpush1.bf16.msra.mxu0 %v3077
        %3650 = vmatprep.subr.bf16.mxu0 0
        %3651 = vmatpush1.bf16.msra.mxu0 %v3084
        %3652 = vmatprep.subr.bf16.mxu0 0
        %3653 = vmatpush1.bf16.msra.mxu0 %v3091
        %3654 = vmatprep.subr.bf16.mxu0 0
        %3655 = vmatpush1.bf16.msra.mxu0 %v3098
        %3656 = vmatprep.subr.bf16.mxu0 0
        %3657 = vmatpush1.bf16.msra.mxu0 %v3105
        %3658 = vmatprep.subr.bf16.mxu0 0
        %3659 = vmatpush1.bf16.msra.mxu0 %v3112
        %3660 = vmatprep.subr.bf16.mxu0 0
        %3661 = vmatpush1.bf16.msra.mxu0 %v3119
        %3662 = vmatprep.subr.bf16.mxu0 0
        %3663 = vmatpush1.bf16.msra.mxu0 %v3126
        %3664 = vmatprep.subr.bf16.mxu0 0
        %3665 = vmatpush1.bf16.msra.mxu0 %v3133
        %3666 = vmatprep.subr.bf16.mxu0 0
        %3667 = vmatpush1.bf16.msra.mxu0 %v3140
        %3668 = vmatprep.subr.bf16.mxu0 0
        %3669 = vmatpush1.bf16.msra.mxu0 %v3147
        %3670 = vmatprep.subr.bf16.mxu0 0
        %3671 = vmatpush1.bf16.msra.mxu0 0
        %3672 = vmatprep.subr.bf16.mxu0 0
        %3673 = vmatpush1.bf16.msra.mxu0 0
        %3674 = vmatprep.subr.bf16.mxu0 0
        %3675 = vmatpush1.bf16.msra.mxu0 0
        %3676 = vmatprep.subr.bf16.mxu0 0
        %3677 = vmatpush1.bf16.msra.mxu0 0
        %3678 = vmatprep.mubr.bf16.mxu0 %v3345
        %3679 = vmatmul.mubr.bf16.gmra.mrb[0].mxu0 %v2325
        %v3680 = vpop.f32.mrb[0].mxu0
        %v3681 = vadd.f32 %v3640, %v3680
        %v3682 = vpop.f32.mrb[0].mxu0
        %v3683 = vpop.f32.mrb[0].mxu0
        %v3684 = vadd.f32 %v3643, %v3683
        %v3685 = vpop.f32.mrb[0].mxu0
        %3686 = vdwg.mxu0
        %v3911 = vunpack.c.l.b16 %v1852
        %v3912 = vunpack.c.h.b16 %v1852
        %v3913 = vunpack.c.l.b16 %v1853
        %v3914 = vunpack.c.h.b16 %v1853
        %v3915 = vunpack.c.l.b16 %v1854
        %v3916 = vunpack.c.h.b16 %v1854
        %v3917 = vunpack.c.l.b16 %v1855
        %v3918 = vunpack.c.l.b16 %v1856
        %v3919 = vunpack.c.h.b16 %v1856
        %v3920 = vunpack.c.l.b16 %v1857
        %v3921 = vunpack.c.h.b16 %v1857
        %v3922 = vunpack.c.l.b16 %v1858
        %v3923 = vunpack.c.h.b16 %v1858
        %v3924 = vunpack.c.l.b16 %v1859
        %v3925 = vunpack.c.l.b16 %v1860
        %v3926 = vunpack.c.h.b16 %v1860
        %v3927 = vunpack.c.l.b16 %v1861
        %v3928 = vunpack.c.h.b16 %v1861
        %v3929 = vunpack.c.l.b16 %v1862
        %v3930 = vunpack.c.h.b16 %v1862
        %v3931 = vunpack.c.l.b16 %v1863
        %v3932 = vunpack.c.l.b16 %v1864
        %v3933 = vunpack.c.h.b16 %v1864
        %v3934 = vunpack.c.l.b16 %v1865
        %v3935 = vunpack.c.h.b16 %v1865
        %v3936 = vunpack.c.l.b16 %v1866
        %v3937 = vunpack.c.h.b16 %v1866
        %v3938 = vunpack.c.l.b16 %v1867
        %v3939 = vunpack.c.l.b16 %v1868
        %v3940 = vunpack.c.h.b16 %v1868
        %v3941 = vunpack.c.l.b16 %v1869
        %v3942 = vunpack.c.h.b16 %v1869
        %v3943 = vunpack.c.l.b16 %v1870
        %v3944 = vunpack.c.h.b16 %v1870
        %v3945 = vunpack.c.l.b16 %v1871
        %v3946 = vunpack.c.l.b16 %v1872
        %v3947 = vunpack.c.h.b16 %v1872
        %v3948 = vunpack.c.l.b16 %v1873
        %v3949 = vunpack.c.h.b16 %v1873
        %v3950 = vunpack.c.l.b16 %v1874
        %v3951 = vunpack.c.h.b16 %v1874
        %v3952 = vunpack.c.l.b16 %v1875
        %v3953 = vunpack.c.l.b16 %v1876
        %v3954 = vunpack.c.h.b16 %v1876
        %v3955 = vunpack.c.l.b16 %v1877
        %v3956 = vunpack.c.h.b16 %v1877
        %v3957 = vunpack.c.l.b16 %v1878
        %v3958 = vunpack.c.h.b16 %v1878
        %v3959 = vunpack.c.l.b16 %v1879
        %v3960 = vunpack.c.l.b16 %v1880
        %v3961 = vunpack.c.h.b16 %v1880
        %v3962 = vunpack.c.l.b16 %v1881
        %v3963 = vunpack.c.h.b16 %v1881
        %v3964 = vunpack.c.l.b16 %v1882
        %v3965 = vunpack.c.h.b16 %v1882
        %v3966 = vunpack.c.l.b16 %v1883
        %v3967 = vunpack.c.l.b16 %v1884
        %v3968 = vunpack.c.h.b16 %v1884
        %v3969 = vunpack.c.l.b16 %v1885
        %v3970 = vunpack.c.h.b16 %v1885
        %v3971 = vunpack.c.l.b16 %v1886
        %v3972 = vunpack.c.h.b16 %v1886
        %v3973 = vunpack.c.l.b16 %v1887
        %v3974 = vunpack.c.l.b16 %v1888
        %v3975 = vunpack.c.h.b16 %v1888
        %v3976 = vunpack.c.l.b16 %v1889
        %v3977 = vunpack.c.h.b16 %v1889
        %v3978 = vunpack.c.l.b16 %v1890
        %v3979 = vunpack.c.h.b16 %v1890
        %v3980 = vunpack.c.l.b16 %v1891
        %v3981 = vunpack.c.l.b16 %v1892
        %v3982 = vunpack.c.h.b16 %v1892
        %v3983 = vunpack.c.l.b16 %v1893
        %v3984 = vunpack.c.h.b16 %v1893
        %v3985 = vunpack.c.l.b16 %v1894
        %v3986 = vunpack.c.h.b16 %v1894
        %v3987 = vunpack.c.l.b16 %v1895
        %v3988 = vunpack.c.l.b16 %v1896
        %v3989 = vunpack.c.h.b16 %v1896
        %v3990 = vunpack.c.l.b16 %v1897
        %v3991 = vunpack.c.h.b16 %v1897
        %v3992 = vunpack.c.l.b16 %v1898
        %v3993 = vunpack.c.h.b16 %v1898
        %v3994 = vunpack.c.l.b16 %v1899
        %v3995 = vunpack.c.l.b16 %v1900
        %v3996 = vunpack.c.h.b16 %v1900
        %v3997 = vunpack.c.l.b16 %v1901
        %v3998 = vunpack.c.h.b16 %v1901
        %v3999 = vunpack.c.l.b16 %v1902
        %v4000 = vunpack.c.h.b16 %v1902
        %v4001 = vunpack.c.l.b16 %v1903
        %v4002 = vunpack.c.l.b16 %v1904
        %v4003 = vunpack.c.h.b16 %v1904
        %v4004 = vunpack.c.l.b16 %v1905
        %v4005 = vunpack.c.h.b16 %v1905
        %v4006 = vunpack.c.l.b16 %v1906
        %v4007 = vunpack.c.h.b16 %v1906
        %v4008 = vunpack.c.l.b16 %v1907
        %v4009 = vunpack.c.l.b16 %v1908
        %v4010 = vunpack.c.h.b16 %v1908
        %v4011 = vunpack.c.l.b16 %v1909
        %v4012 = vunpack.c.h.b16 %v1909
        %v4013 = vunpack.c.l.b16 %v1910
        %v4014 = vunpack.c.h.b16 %v1910
        %v4015 = vunpack.c.l.b16 %v1911
        %v4016 = vunpack.c.l.b16 %v1912
        %v4017 = vunpack.c.h.b16 %v1912
        %v4018 = vunpack.c.l.b16 %v1913
        %v4019 = vunpack.c.h.b16 %v1913
        %v4020 = vunpack.c.l.b16 %v1914
        %v4021 = vunpack.c.h.b16 %v1914
        %v4022 = vunpack.c.l.b16 %v1915
        %v4023 = vunpack.c.l.b16 %v1916
        %v4024 = vunpack.c.h.b16 %v1916
        %v4025 = vunpack.c.l.b16 %v1917
        %v4026 = vunpack.c.h.b16 %v1917
        %v4027 = vunpack.c.l.b16 %v1918
        %v4028 = vunpack.c.h.b16 %v1918
        %v4029 = vunpack.c.l.b16 %v1919
        %v4030 = vunpack.c.l.b16 %v1920
        %v4031 = vunpack.c.h.b16 %v1920
        %v4032 = vunpack.c.l.b16 %v1921
        %v4033 = vunpack.c.h.b16 %v1921
        %v4034 = vunpack.c.l.b16 %v1922
        %v4035 = vunpack.c.h.b16 %v1922
        %v4036 = vunpack.c.l.b16 %v1923
        %v4037 = vunpack.c.l.b16 %v1924
        %v4038 = vunpack.c.h.b16 %v1924
        %v4039 = vunpack.c.l.b16 %v1925
        %v4040 = vunpack.c.h.b16 %v1925
        %v4041 = vunpack.c.l.b16 %v1926
        %v4042 = vunpack.c.h.b16 %v1926
        %v4043 = vunpack.c.l.b16 %v1927
        %v4044 = vunpack.c.l.b16 %v1928
        %v4045 = vunpack.c.h.b16 %v1928
        %v4046 = vunpack.c.l.b16 %v1929
        %v4047 = vunpack.c.h.b16 %v1929
        %v4048 = vunpack.c.l.b16 %v1930
        %v4049 = vunpack.c.h.b16 %v1930
        %v4050 = vunpack.c.l.b16 %v1931
        %v4051 = vunpack.c.l.b16 %v1932
        %v4052 = vunpack.c.h.b16 %v1932
        %v4053 = vunpack.c.l.b16 %v1933
        %v4054 = vunpack.c.h.b16 %v1933
        %v4055 = vunpack.c.l.b16 %v1934
        %v4056 = vunpack.c.h.b16 %v1934
        %v4057 = vunpack.c.l.b16 %v1935
        %v4058 = vunpack.c.l.b16 %v1936
        %v4059 = vunpack.c.h.b16 %v1936
        %v4060 = vunpack.c.l.b16 %v1937
        %v4061 = vunpack.c.h.b16 %v1937
        %v4062 = vunpack.c.l.b16 %v1938
        %v4063 = vunpack.c.h.b16 %v1938
        %v4064 = vunpack.c.l.b16 %v1939
        %v4065 = vunpack.c.l.b16 %v1940
        %v4066 = vunpack.c.h.b16 %v1940
        %v4067 = vunpack.c.l.b16 %v1941
        %v4068 = vunpack.c.h.b16 %v1941
        %v4069 = vunpack.c.l.b16 %v1942
        %v4070 = vunpack.c.h.b16 %v1942
        %v4071 = vunpack.c.l.b16 %v1943
        %v4072 = vunpack.c.l.b16 %v1944
        %v4073 = vunpack.c.h.b16 %v1944
        %v4074 = vunpack.c.l.b16 %v1945
        %v4075 = vunpack.c.h.b16 %v1945
        %v4076 = vunpack.c.l.b16 %v1946
        %v4077 = vunpack.c.h.b16 %v1946
        %v4078 = vunpack.c.l.b16 %v1947
        %v4079 = vunpack.c.l.b16 %v1948
        %v4080 = vunpack.c.h.b16 %v1948
        %v4081 = vunpack.c.l.b16 %v1949
        %v4082 = vunpack.c.h.b16 %v1949
        %v4083 = vunpack.c.l.b16 %v1950
        %v4084 = vunpack.c.h.b16 %v1950
        %v4085 = vunpack.c.l.b16 %v1951
        %v4086 = vunpack.c.l.b16 %v1952
        %v4087 = vunpack.c.h.b16 %v1952
        %v4088 = vunpack.c.l.b16 %v1953
        %v4089 = vunpack.c.h.b16 %v1953
        %v4090 = vunpack.c.l.b16 %v1954
        %v4091 = vunpack.c.h.b16 %v1954
        %v4092 = vunpack.c.l.b16 %v1955
        %v4093 = vunpack.c.l.b16 %v1956
        %v4094 = vunpack.c.h.b16 %v1956
        %v4095 = vunpack.c.l.b16 %v1957
        %v4096 = vunpack.c.h.b16 %v1957
        %v4097 = vunpack.c.l.b16 %v1958
        %v4098 = vunpack.c.h.b16 %v1958
        %v4099 = vunpack.c.l.b16 %v1959
        %v4100 = vunpack.c.l.b16 %v1960
        %v4101 = vunpack.c.h.b16 %v1960
        %v4102 = vunpack.c.l.b16 %v1961
        %v4103 = vunpack.c.h.b16 %v1961
        %v4104 = vunpack.c.l.b16 %v1962
        %v4105 = vunpack.c.h.b16 %v1962
        %v4106 = vunpack.c.l.b16 %v1963
        %v4107 = vunpack.c.l.b16 %v1964
        %v4108 = vunpack.c.h.b16 %v1964
        %v4109 = vunpack.c.l.b16 %v1965
        %v4110 = vunpack.c.h.b16 %v1965
        %v4111 = vunpack.c.l.b16 %v1966
        %v4112 = vunpack.c.h.b16 %v1966
        %v4113 = vunpack.c.l.b16 %v1967
        %v4114 = vunpack.c.l.b16 %v1968
        %v4115 = vunpack.c.h.b16 %v1968
        %v4116 = vunpack.c.l.b16 %v1969
        %v4117 = vunpack.c.h.b16 %v1969
        %v4118 = vunpack.c.l.b16 %v1970
        %v4119 = vunpack.c.h.b16 %v1970
        %v4120 = vunpack.c.l.b16 %v1971
        %v4121 = vunpack.c.l.b16 %v1972
        %v4122 = vunpack.c.h.b16 %v1972
        %v4123 = vunpack.c.l.b16 %v1973
        %v4124 = vunpack.c.h.b16 %v1973
        %v4125 = vunpack.c.l.b16 %v1974
        %v4126 = vunpack.c.h.b16 %v1974
        %v4127 = vunpack.c.l.b16 %v1975
        %v4128 = vunpack.c.l.b16 %v1976
        %v4129 = vunpack.c.h.b16 %v1976
        %v4130 = vunpack.c.l.b16 %v1977
        %v4131 = vunpack.c.h.b16 %v1977
        %v4132 = vunpack.c.l.b16 %v1978
        %v4133 = vunpack.c.h.b16 %v1978
        %v4134 = vunpack.c.l.b16 %v1979
        %v4135 = vunpack.c.l.b16 %v1980
        %v4136 = vunpack.c.h.b16 %v1980
        %v4137 = vunpack.c.l.b16 %v1981
        %v4138 = vunpack.c.h.b16 %v1981
        %v4139 = vunpack.c.l.b16 %v1982
        %v4140 = vunpack.c.h.b16 %v1982
        %v4141 = vunpack.c.l.b16 %v1983
        %v4142 = vunpack.c.l.b16 %v1984
        %v4143 = vunpack.c.h.b16 %v1984
        %v4144 = vunpack.c.l.b16 %v1985
        %v4145 = vunpack.c.h.b16 %v1985
        %v4146 = vunpack.c.l.b16 %v1986
        %v4147 = vunpack.c.h.b16 %v1986
        %v4148 = vunpack.c.l.b16 %v1987
        %v4149 = vunpack.c.l.b16 %v1988
        %v4150 = vunpack.c.h.b16 %v1988
        %v4151 = vunpack.c.l.b16 %v1989
        %v4152 = vunpack.c.h.b16 %v1989
        %v4153 = vunpack.c.l.b16 %v1990
        %v4154 = vunpack.c.h.b16 %v1990
        %v4155 = vunpack.c.l.b16 %v1991
        %v4156 = vunpack.c.l.b16 %v1992
        %v4157 = vunpack.c.h.b16 %v1992
        %v4158 = vunpack.c.l.b16 %v1993
        %v4159 = vunpack.c.h.b16 %v1993
        %v4160 = vunpack.c.l.b16 %v1994
        %v4161 = vunpack.c.h.b16 %v1994
        %v4162 = vunpack.c.l.b16 %v1995
        %v4163 = vunpack.c.l.b16 %v1996
        %v4164 = vunpack.c.h.b16 %v1996
        %v4165 = vunpack.c.l.b16 %v1997
        %v4166 = vunpack.c.h.b16 %v1997
        %v4167 = vunpack.c.l.b16 %v1998
        %v4168 = vunpack.c.h.b16 %v1998
        %v4169 = vunpack.c.l.b16 %v1999
        %v4170 = vunpack.c.l.b16 %v2000
        %v4171 = vunpack.c.h.b16 %v2000
        %v4172 = vunpack.c.l.b16 %v2001
        %v4173 = vunpack.c.h.b16 %v2001
        %v4174 = vunpack.c.l.b16 %v2002
        %v4175 = vunpack.c.h.b16 %v2002
        %v4176 = vunpack.c.l.b16 %v2003
        %v4177 = vunpack.c.l.b16 %v2004
        %v4178 = vunpack.c.h.b16 %v2004
        %v4179 = vunpack.c.l.b16 %v2005
        %v4180 = vunpack.c.h.b16 %v2005
        %v4181 = vunpack.c.l.b16 %v2006
        %v4182 = vunpack.c.h.b16 %v2006
        %v4183 = vunpack.c.l.b16 %v2007
        %v4184 = vunpack.c.l.b16 %v2008
        %v4185 = vunpack.c.h.b16 %v2008
        %v4186 = vunpack.c.l.b16 %v2009
        %v4187 = vunpack.c.h.b16 %v2009
        %v4188 = vunpack.c.l.b16 %v2010
        %v4189 = vunpack.c.h.b16 %v2010
        %v4190 = vunpack.c.l.b16 %v2011
        %v4191 = vunpack.c.l.b16 %v2012
        %v4192 = vunpack.c.h.b16 %v2012
        %v4193 = vunpack.c.l.b16 %v2013
        %v4194 = vunpack.c.h.b16 %v2013
        %v4195 = vunpack.c.l.b16 %v2014
        %v4196 = vunpack.c.h.b16 %v2014
        %v4197 = vunpack.c.l.b16 %v2015
        %v4198 = vunpack.c.l.b16 %v2016
        %v4199 = vunpack.c.h.b16 %v2016
        %v4200 = vunpack.c.l.b16 %v2017
        %v4201 = vunpack.c.h.b16 %v2017
        %v4202 = vunpack.c.l.b16 %v2018
        %v4203 = vunpack.c.h.b16 %v2018
        %v4204 = vunpack.c.l.b16 %v2019
        %v4205 = vunpack.c.l.b16 %v2020
        %v4206 = vunpack.c.h.b16 %v2020
        %v4207 = vunpack.c.l.b16 %v2021
        %v4208 = vunpack.c.h.b16 %v2021
        %v4209 = vunpack.c.l.b16 %v2022
        %v4210 = vunpack.c.h.b16 %v2022
        %v4211 = vunpack.c.l.b16 %v2023
        %v4212 = vunpack.c.l.b16 %v2024
        %v4213 = vunpack.c.h.b16 %v2024
        %v4214 = vunpack.c.l.b16 %v2025
        %v4215 = vunpack.c.h.b16 %v2025
        %v4216 = vunpack.c.l.b16 %v2026
        %v4217 = vunpack.c.h.b16 %v2026
        %v4218 = vunpack.c.l.b16 %v2027
        %v4219 = vunpack.c.l.b16 %v2028
        %v4220 = vunpack.c.h.b16 %v2028
        %v4221 = vunpack.c.l.b16 %v2029
        %v4222 = vunpack.c.h.b16 %v2029
        %v4223 = vunpack.c.l.b16 %v2030
        %v4224 = vunpack.c.h.b16 %v2030
        %v4225 = vunpack.c.l.b16 %v2031
        %v4226 = vunpack.c.l.b16 %v2032
        %v4227 = vunpack.c.h.b16 %v2032
        %v4228 = vunpack.c.l.b16 %v2033
        %v4229 = vunpack.c.h.b16 %v2033
        %v4230 = vunpack.c.l.b16 %v2034
        %v4231 = vunpack.c.h.b16 %v2034
        %v4232 = vunpack.c.l.b16 %v2035
        %v4233 = vunpack.c.l.b16 %v2036
        %v4234 = vunpack.c.h.b16 %v2036
        %v4235 = vunpack.c.l.b16 %v2037
        %v4236 = vunpack.c.h.b16 %v2037
        %v4237 = vunpack.c.l.b16 %v2038
        %v4238 = vunpack.c.h.b16 %v2038
        %v4239 = vunpack.c.l.b16 %v2039
        %v4240 = vunpack.c.l.b16 %v2040
        %v4241 = vunpack.c.h.b16 %v2040
        %v4242 = vunpack.c.l.b16 %v2041
        %v4243 = vunpack.c.h.b16 %v2041
        %v4244 = vunpack.c.l.b16 %v2042
        %v4245 = vunpack.c.h.b16 %v2042
        %v4246 = vunpack.c.l.b16 %v2043
        %v4247 = vunpack.c.l.b16 %v2044
        %v4248 = vunpack.c.h.b16 %v2044
        %v4249 = vunpack.c.l.b16 %v2045
        %v4250 = vunpack.c.h.b16 %v2045
        %v4251 = vunpack.c.l.b16 %v2046
        %v4252 = vunpack.c.h.b16 %v2046
        %v4253 = vunpack.c.l.b16 %v2047
        %v4254 = vunpack.c.l.b16 %v2048
        %v4255 = vunpack.c.h.b16 %v2048
        %v4256 = vunpack.c.l.b16 %v2049
        %v4257 = vunpack.c.h.b16 %v2049
        %v4258 = vunpack.c.l.b16 %v2050
        %v4259 = vunpack.c.h.b16 %v2050
        %v4260 = vunpack.c.l.b16 %v2051
        %v4261 = vunpack.c.l.b16 %v2052
        %v4262 = vunpack.c.h.b16 %v2052
        %v4263 = vunpack.c.l.b16 %v2053
        %v4264 = vunpack.c.h.b16 %v2053
        %v4265 = vunpack.c.l.b16 %v2054
        %v4266 = vunpack.c.h.b16 %v2054
        %v4267 = vunpack.c.l.b16 %v2055
        %v4268 = vunpack.c.l.b16 %v2056
        %v4269 = vunpack.c.h.b16 %v2056
        %v4270 = vunpack.c.l.b16 %v2057
        %v4271 = vunpack.c.h.b16 %v2057
        %v4272 = vunpack.c.l.b16 %v2058
        %v4273 = vunpack.c.h.b16 %v2058
        %v4274 = vunpack.c.l.b16 %v2059
        %v4275 = vunpack.c.l.b16 %v2060
        %v4276 = vunpack.c.h.b16 %v2060
        %v4277 = vunpack.c.l.b16 %v2061
        %v4278 = vunpack.c.h.b16 %v2061
        %v4279 = vunpack.c.l.b16 %v2062
        %v4280 = vunpack.c.h.b16 %v2062
        %v4281 = vunpack.c.l.b16 %v2063
        %v4282 = vunpack.c.l.b16 %v2064
        %v4283 = vunpack.c.h.b16 %v2064
        %v4284 = vunpack.c.l.b16 %v2065
        %v4285 = vunpack.c.h.b16 %v2065
        %v4286 = vunpack.c.l.b16 %v2066
        %v4287 = vunpack.c.h.b16 %v2066
        %v4288 = vunpack.c.l.b16 %v2067
        %v4289 = vunpack.c.l.b16 %v2068
        %v4290 = vunpack.c.h.b16 %v2068
        %v4291 = vunpack.c.l.b16 %v2069
        %v4292 = vunpack.c.h.b16 %v2069
        %v4293 = vunpack.c.l.b16 %v2070
        %v4294 = vunpack.c.h.b16 %v2070
        %v4295 = vunpack.c.l.b16 %v2071
        %v4296 = vunpack.c.l.b16 %v2072
        %v4297 = vunpack.c.h.b16 %v2072
        %v4298 = vunpack.c.l.b16 %v2073
        %v4299 = vunpack.c.h.b16 %v2073
        %v4300 = vunpack.c.l.b16 %v2074
        %v4301 = vunpack.c.h.b16 %v2074
        %v4302 = vunpack.c.l.b16 %v2075
        %v4303 = vpack.c.b16 %v3918, %v3911
        %v4304 = vpack.c.b16 %v3919, %v3912
        %v4305 = vpack.c.b16 %v3920, %v3913
        %v4306 = vpack.c.b16 %v3921, %v3914
        %v4307 = vpack.c.b16 %v3922, %v3915
        %v4308 = vpack.c.b16 %v3923, %v3916
        %v4309 = vpack.c.b16 %v3924, %v3917
        %v4310 = vpack.c.b16 %v3932, %v3925
        %v4311 = vpack.c.b16 %v3933, %v3926
        %v4312 = vpack.c.b16 %v3934, %v3927
        %v4313 = vpack.c.b16 %v3935, %v3928
        %v4314 = vpack.c.b16 %v3936, %v3929
        %v4315 = vpack.c.b16 %v3937, %v3930
        %v4316 = vpack.c.b16 %v3938, %v3931
        %v4317 = vpack.c.b16 %v3946, %v3939
        %v4318 = vpack.c.b16 %v3947, %v3940
        %v4319 = vpack.c.b16 %v3948, %v3941
        %v4320 = vpack.c.b16 %v3949, %v3942
        %v4321 = vpack.c.b16 %v3950, %v3943
        %v4322 = vpack.c.b16 %v3951, %v3944
        %v4323 = vpack.c.b16 %v3952, %v3945
        %v4324 = vpack.c.b16 %v3960, %v3953
        %v4325 = vpack.c.b16 %v3961, %v3954
        %v4326 = vpack.c.b16 %v3962, %v3955
        %v4327 = vpack.c.b16 %v3963, %v3956
        %v4328 = vpack.c.b16 %v3964, %v3957
        %v4329 = vpack.c.b16 %v3965, %v3958
        %v4330 = vpack.c.b16 %v3966, %v3959
        %v4331 = vpack.c.b16 %v3974, %v3967
        %v4332 = vpack.c.b16 %v3975, %v3968
        %v4333 = vpack.c.b16 %v3976, %v3969
        %v4334 = vpack.c.b16 %v3977, %v3970
        %v4335 = vpack.c.b16 %v3978, %v3971
        %v4336 = vpack.c.b16 %v3979, %v3972
        %v4337 = vpack.c.b16 %v3980, %v3973
        %v4338 = vpack.c.b16 %v3988, %v3981
        %v4339 = vpack.c.b16 %v3989, %v3982
        %v4340 = vpack.c.b16 %v3990, %v3983
        %v4341 = vpack.c.b16 %v3991, %v3984
        %v4342 = vpack.c.b16 %v3992, %v3985
        %v4343 = vpack.c.b16 %v3993, %v3986
        %v4344 = vpack.c.b16 %v3994, %v3987
        %v4345 = vpack.c.b16 %v4002, %v3995
        %v4346 = vpack.c.b16 %v4003, %v3996
        %v4347 = vpack.c.b16 %v4004, %v3997
        %v4348 = vpack.c.b16 %v4005, %v3998
        %v4349 = vpack.c.b16 %v4006, %v3999
        %v4350 = vpack.c.b16 %v4007, %v4000
        %v4351 = vpack.c.b16 %v4008, %v4001
        %v4352 = vpack.c.b16 %v4016, %v4009
        %v4353 = vpack.c.b16 %v4017, %v4010
        %v4354 = vpack.c.b16 %v4018, %v4011
        %v4355 = vpack.c.b16 %v4019, %v4012
        %v4356 = vpack.c.b16 %v4020, %v4013
        %v4357 = vpack.c.b16 %v4021, %v4014
        %v4358 = vpack.c.b16 %v4022, %v4015
        %v4359 = vpack.c.b16 %v4030, %v4023
        %v4360 = vpack.c.b16 %v4031, %v4024
        %v4361 = vpack.c.b16 %v4032, %v4025
        %v4362 = vpack.c.b16 %v4033, %v4026
        %v4363 = vpack.c.b16 %v4034, %v4027
        %v4364 = vpack.c.b16 %v4035, %v4028
        %v4365 = vpack.c.b16 %v4036, %v4029
        %v4366 = vpack.c.b16 %v4044, %v4037
        %v4367 = vpack.c.b16 %v4045, %v4038
        %v4368 = vpack.c.b16 %v4046, %v4039
        %v4369 = vpack.c.b16 %v4047, %v4040
        %v4370 = vpack.c.b16 %v4048, %v4041
        %v4371 = vpack.c.b16 %v4049, %v4042
        %v4372 = vpack.c.b16 %v4050, %v4043
        %v4373 = vpack.c.b16 %v4058, %v4051
        %v4374 = vpack.c.b16 %v4059, %v4052
        %v4375 = vpack.c.b16 %v4060, %v4053
        %v4376 = vpack.c.b16 %v4061, %v4054
        %v4377 = vpack.c.b16 %v4062, %v4055
        %v4378 = vpack.c.b16 %v4063, %v4056
        %v4379 = vpack.c.b16 %v4064, %v4057
        %v4380 = vpack.c.b16 %v4072, %v4065
        %v4381 = vpack.c.b16 %v4073, %v4066
        %v4382 = vpack.c.b16 %v4074, %v4067
        %v4383 = vpack.c.b16 %v4075, %v4068
        %v4384 = vpack.c.b16 %v4076, %v4069
        %v4385 = vpack.c.b16 %v4077, %v4070
        %v4386 = vpack.c.b16 %v4078, %v4071
        %v4387 = vpack.c.b16 %v4086, %v4079
        %v4388 = vpack.c.b16 %v4087, %v4080
        %v4389 = vpack.c.b16 %v4088, %v4081
        %v4390 = vpack.c.b16 %v4089, %v4082
        %v4391 = vpack.c.b16 %v4090, %v4083
        %v4392 = vpack.c.b16 %v4091, %v4084
        %v4393 = vpack.c.b16 %v4092, %v4085
        %v4394 = vpack.c.b16 %v4100, %v4093
        %v4395 = vpack.c.b16 %v4101, %v4094
        %v4396 = vpack.c.b16 %v4102, %v4095
        %v4397 = vpack.c.b16 %v4103, %v4096
        %v4398 = vpack.c.b16 %v4104, %v4097
        %v4399 = vpack.c.b16 %v4105, %v4098
        %v4400 = vpack.c.b16 %v4106, %v4099
        %v4401 = vpack.c.b16 %v4114, %v4107
        %v4402 = vpack.c.b16 %v4115, %v4108
        %v4403 = vpack.c.b16 %v4116, %v4109
        %v4404 = vpack.c.b16 %v4117, %v4110
        %v4405 = vpack.c.b16 %v4118, %v4111
        %v4406 = vpack.c.b16 %v4119, %v4112
        %v4407 = vpack.c.b16 %v4120, %v4113
        %v4408 = vpack.c.b16 %v4128, %v4121
        %v4409 = vpack.c.b16 %v4129, %v4122
        %v4410 = vpack.c.b16 %v4130, %v4123
        %v4411 = vpack.c.b16 %v4131, %v4124
        %v4412 = vpack.c.b16 %v4132, %v4125
        %v4413 = vpack.c.b16 %v4133, %v4126
        %v4414 = vpack.c.b16 %v4134, %v4127
        %v4415 = vpack.c.b16 %v4142, %v4135
        %v4416 = vpack.c.b16 %v4143, %v4136
        %v4417 = vpack.c.b16 %v4144, %v4137
        %v4418 = vpack.c.b16 %v4145, %v4138
        %v4419 = vpack.c.b16 %v4146, %v4139
        %v4420 = vpack.c.b16 %v4147, %v4140
        %v4421 = vpack.c.b16 %v4148, %v4141
        %v4422 = vpack.c.b16 %v4156, %v4149
        %v4423 = vpack.c.b16 %v4157, %v4150
        %v4424 = vpack.c.b16 %v4158, %v4151
        %v4425 = vpack.c.b16 %v4159, %v4152
        %v4426 = vpack.c.b16 %v4160, %v4153
        %v4427 = vpack.c.b16 %v4161, %v4154
        %v4428 = vpack.c.b16 %v4162, %v4155
        %v4429 = vpack.c.b16 %v4170, %v4163
        %v4430 = vpack.c.b16 %v4171, %v4164
        %v4431 = vpack.c.b16 %v4172, %v4165
        %v4432 = vpack.c.b16 %v4173, %v4166
        %v4433 = vpack.c.b16 %v4174, %v4167
        %v4434 = vpack.c.b16 %v4175, %v4168
        %v4435 = vpack.c.b16 %v4176, %v4169
        %v4436 = vpack.c.b16 %v4184, %v4177
        %v4437 = vpack.c.b16 %v4185, %v4178
        %v4438 = vpack.c.b16 %v4186, %v4179
        %v4439 = vpack.c.b16 %v4187, %v4180
        %v4440 = vpack.c.b16 %v4188, %v4181
        %v4441 = vpack.c.b16 %v4189, %v4182
        %v4442 = vpack.c.b16 %v4190, %v4183
        %v4443 = vpack.c.b16 %v4198, %v4191
        %v4444 = vpack.c.b16 %v4199, %v4192
        %v4445 = vpack.c.b16 %v4200, %v4193
        %v4446 = vpack.c.b16 %v4201, %v4194
        %v4447 = vpack.c.b16 %v4202, %v4195
        %v4448 = vpack.c.b16 %v4203, %v4196
        %v4449 = vpack.c.b16 %v4204, %v4197
        %v4450 = vpack.c.b16 %v4212, %v4205
        %v4451 = vpack.c.b16 %v4213, %v4206
        %v4452 = vpack.c.b16 %v4214, %v4207
        %v4453 = vpack.c.b16 %v4215, %v4208
        %v4454 = vpack.c.b16 %v4216, %v4209
        %v4455 = vpack.c.b16 %v4217, %v4210
        %v4456 = vpack.c.b16 %v4218, %v4211
        %v4457 = vpack.c.b16 %v4226, %v4219
        %v4458 = vpack.c.b16 %v4227, %v4220
        %v4459 = vpack.c.b16 %v4228, %v4221
        %v4460 = vpack.c.b16 %v4229, %v4222
        %v4461 = vpack.c.b16 %v4230, %v4223
        %v4462 = vpack.c.b16 %v4231, %v4224
        %v4463 = vpack.c.b16 %v4232, %v4225
        %v4464 = vpack.c.b16 %v4240, %v4233
        %v4465 = vpack.c.b16 %v4241, %v4234
        %v4466 = vpack.c.b16 %v4242, %v4235
        %v4467 = vpack.c.b16 %v4243, %v4236
        %v4468 = vpack.c.b16 %v4244, %v4237
        %v4469 = vpack.c.b16 %v4245, %v4238
        %v4470 = vpack.c.b16 %v4246, %v4239
        %v4471 = vpack.c.b16 %v4254, %v4247
        %v4472 = vpack.c.b16 %v4255, %v4248
        %v4473 = vpack.c.b16 %v4256, %v4249
        %v4474 = vpack.c.b16 %v4257, %v4250
        %v4475 = vpack.c.b16 %v4258, %v4251
        %v4476 = vpack.c.b16 %v4259, %v4252
        %v4477 = vpack.c.b16 %v4260, %v4253
        %v4478 = vpack.c.b16 %v4268, %v4261
        %v4479 = vpack.c.b16 %v4269, %v4262
        %v4480 = vpack.c.b16 %v4270, %v4263
        %v4481 = vpack.c.b16 %v4271, %v4264
        %v4482 = vpack.c.b16 %v4272, %v4265
        %v4483 = vpack.c.b16 %v4273, %v4266
        %v4484 = vpack.c.b16 %v4274, %v4267
        %v4485 = vpack.c.b16 %v4282, %v4275
        %v4486 = vpack.c.b16 %v4283, %v4276
        %v4487 = vpack.c.b16 %v4284, %v4277
        %v4488 = vpack.c.b16 %v4285, %v4278
        %v4489 = vpack.c.b16 %v4286, %v4279
        %v4490 = vpack.c.b16 %v4287, %v4280
        %v4491 = vpack.c.b16 %v4288, %v4281
        %v4492 = vpack.c.b16 %v4296, %v4289
        %v4493 = vpack.c.b16 %v4297, %v4290
        %v4494 = vpack.c.b16 %v4298, %v4291
        %v4495 = vpack.c.b16 %v4299, %v4292
        %v4496 = vpack.c.b16 %v4300, %v4293
        %v4497 = vpack.c.b16 %v4301, %v4294
        %v4498 = vpack.c.b16 %v4302, %v4295
        %v4696 = vsel %vm1433, %v1851, 0
        %4698 = vmatprep.subr.bf16.mxu0 %v4304
        %4699 = vmatpush1.bf16.msra.mxu0 %v4303
        %4700 = vmatprep.subr.bf16.mxu0 %v4311
        %4701 = vmatpush1.bf16.msra.mxu0 %v4310
        %4702 = vmatprep.subr.bf16.mxu0 %v4318
        %4703 = vmatpush1.bf16.msra.mxu0 %v4317
        %4704 = vmatprep.subr.bf16.mxu0 %v4325
        %4705 = vmatpush1.bf16.msra.mxu0 %v4324
        %4706 = vmatprep.subr.bf16.mxu0 %v4332
        %4707 = vmatpush1.bf16.msra.mxu0 %v4331
        %4708 = vmatprep.subr.bf16.mxu0 %v4339
        %4709 = vmatpush1.bf16.msra.mxu0 %v4338
        %4710 = vmatprep.subr.bf16.mxu0 %v4346
        %4711 = vmatpush1.bf16.msra.mxu0 %v4345
        %4712 = vmatprep.subr.bf16.mxu0 %v4353
        %4713 = vmatpush1.bf16.msra.mxu0 %v4352
        %4714 = vmatprep.subr.bf16.mxu0 %v4360
        %4715 = vmatpush1.bf16.msra.mxu0 %v4359
        %4716 = vmatprep.subr.bf16.mxu0 %v4367
        %4717 = vmatpush1.bf16.msra.mxu0 %v4366
        %4718 = vmatprep.subr.bf16.mxu0 %v4374
        %4719 = vmatpush1.bf16.msra.mxu0 %v4373
        %4720 = vmatprep.subr.bf16.mxu0 %v4381
        %4721 = vmatpush1.bf16.msra.mxu0 %v4380
        %4722 = vmatprep.subr.bf16.mxu0 %v4388
        %4723 = vmatpush1.bf16.msra.mxu0 %v4387
        %4724 = vmatprep.subr.bf16.mxu0 %v4395
        %4725 = vmatpush1.bf16.msra.mxu0 %v4394
        %4726 = vmatprep.subr.bf16.mxu0 %v4402
        %4727 = vmatpush1.bf16.msra.mxu0 %v4401
        %4728 = vmatprep.subr.bf16.mxu0 %v4409
        %4729 = vmatpush1.bf16.msra.mxu0 %v4408
        %4730 = vmatprep.mubr.bf16.mxu0 %v1849
        %4731 = vmatmul.mubr.bf16.gmra.mrb[0].mxu0 %v1848
        %v4732 = vpop.f32.mrb[0].mxu0
        %v4733 = vadd.f32 %v3425, %v4732
        %v4734 = vpop.f32.mrb[0].mxu0
        %v4735 = vadd.f32 %v3427, %v4734
        %v4736 = vpop.f32.mrb[0].mxu0
        %v4737 = vadd.f32 %v3429, %v4736
        %v4738 = vpop.f32.mrb[0].mxu0
        %v4739 = vadd.f32 %v3431, %v4738
        %4740 = vdwg.mxu0
        %4741 = vmatprep.subr.bf16.mxu0 %v4416
        %4742 = vmatpush1.bf16.msra.mxu0 %v4415
        %4743 = vmatprep.subr.bf16.mxu0 %v4423
        %4744 = vmatpush1.bf16.msra.mxu0 %v4422
        %4745 = vmatprep.subr.bf16.mxu0 %v4430
        %4746 = vmatpush1.bf16.msra.mxu0 %v4429
        %4747 = vmatprep.subr.bf16.mxu0 %v4437
        %4748 = vmatpush1.bf16.msra.mxu0 %v4436
        %4749 = vmatprep.subr.bf16.mxu0 %v4444
        %4750 = vmatpush1.bf16.msra.mxu0 %v4443
        %4751 = vmatprep.subr.bf16.mxu0 %v4451
        %4752 = vmatpush1.bf16.msra.mxu0 %v4450
        %4753 = vmatprep.subr.bf16.mxu0 %v4458
        %4754 = vmatpush1.bf16.msra.mxu0 %v4457
        %4755 = vmatprep.subr.bf16.mxu0 %v4465
        %4756 = vmatpush1.bf16.msra.mxu0 %v4464
        %4757 = vmatprep.subr.bf16.mxu0 %v4472
        %4758 = vmatpush1.bf16.msra.mxu0 %v4471
        %4759 = vmatprep.subr.bf16.mxu0 %v4479
        %4760 = vmatpush1.bf16.msra.mxu0 %v4478
        %4761 = vmatprep.subr.bf16.mxu0 %v4486
        %4762 = vmatpush1.bf16.msra.mxu0 %v4485
        %4763 = vmatprep.subr.bf16.mxu0 %v4493
        %4764 = vmatpush1.bf16.msra.mxu0 %v4492
        %4765 = vmatprep.subr.bf16.mxu0 0
        %4766 = vmatpush1.bf16.msra.mxu0 0
        %4767 = vmatprep.subr.bf16.mxu0 0
        %4768 = vmatpush1.bf16.msra.mxu0 0
        %4769 = vmatprep.subr.bf16.mxu0 0
        %4770 = vmatpush1.bf16.msra.mxu0 0
        %4771 = vmatprep.subr.bf16.mxu0 0
        %4772 = vmatpush1.bf16.msra.mxu0 0
        %4773 = vmatprep.mubr.bf16.mxu0 %v4696
        %4774 = vmatmul.mubr.bf16.gmra.mrb[0].mxu0 %v1850
        %v4775 = vpop.f32.mrb[0].mxu0
        %v4776 = vadd.f32 %v4733, %v4775
        %v4777 = vpop.f32.mrb[0].mxu0
        %v4778 = vadd.f32 %v4735, %v4777
        %v4779 = vpop.f32.mrb[0].mxu0
        %v4780 = vadd.f32 %v4737, %v4779
        %v4781 = vpop.f32.mrb[0].mxu0
        %v4782 = vadd.f32 %v4739, %v4781
        %4783 = vdwg.mxu0
        %4784 = vmatprep.subr.bf16.mxu0 %v4306
        %4785 = vmatpush1.bf16.msra.mxu0 %v4305
        %4786 = vmatprep.subr.bf16.mxu0 %v4313
        %4787 = vmatpush1.bf16.msra.mxu0 %v4312
        %4788 = vmatprep.subr.bf16.mxu0 %v4320
        %4789 = vmatpush1.bf16.msra.mxu0 %v4319
        %4790 = vmatprep.subr.bf16.mxu0 %v4327
        %4791 = vmatpush1.bf16.msra.mxu0 %v4326
        %4792 = vmatprep.subr.bf16.mxu0 %v4334
        %4793 = vmatpush1.bf16.msra.mxu0 %v4333
        %4794 = vmatprep.subr.bf16.mxu0 %v4341
        %4795 = vmatpush1.bf16.msra.mxu0 %v4340
        %4796 = vmatprep.subr.bf16.mxu0 %v4348
        %4797 = vmatpush1.bf16.msra.mxu0 %v4347
        %4798 = vmatprep.subr.bf16.mxu0 %v4355
        %4799 = vmatpush1.bf16.msra.mxu0 %v4354
        %4800 = vmatprep.subr.bf16.mxu0 %v4362
        %4801 = vmatpush1.bf16.msra.mxu0 %v4361
        %4802 = vmatprep.subr.bf16.mxu0 %v4369
        %4803 = vmatpush1.bf16.msra.mxu0 %v4368
        %4804 = vmatprep.subr.bf16.mxu0 %v4376
        %4805 = vmatpush1.bf16.msra.mxu0 %v4375
        %4806 = vmatprep.subr.bf16.mxu0 %v4383
        %4807 = vmatpush1.bf16.msra.mxu0 %v4382
        %4808 = vmatprep.subr.bf16.mxu0 %v4390
        %4809 = vmatpush1.bf16.msra.mxu0 %v4389
        %4810 = vmatprep.subr.bf16.mxu0 %v4397
        %4811 = vmatpush1.bf16.msra.mxu0 %v4396
        %4812 = vmatprep.subr.bf16.mxu0 %v4404
        %4813 = vmatpush1.bf16.msra.mxu0 %v4403
        %4814 = vmatprep.subr.bf16.mxu0 %v4411
        %4815 = vmatpush1.bf16.msra.mxu0 %v4410
        %4816 = vmatprep.mubr.bf16.mxu0 %v1849
        %4817 = vmatmul.mubr.bf16.gmra.mrb[0].mxu0 %v1848
        %v4818 = vpop.f32.mrb[0].mxu0
        %v4819 = vadd.f32 %v3511, %v4818
        %v4820 = vpop.f32.mrb[0].mxu0
        %v4821 = vadd.f32 %v3513, %v4820
        %v4822 = vpop.f32.mrb[0].mxu0
        %v4823 = vadd.f32 %v3515, %v4822
        %v4824 = vpop.f32.mrb[0].mxu0
        %v4825 = vadd.f32 %v3517, %v4824
        %4826 = vdwg.mxu0
        %4827 = vmatprep.subr.bf16.mxu0 %v4418
        %4828 = vmatpush1.bf16.msra.mxu0 %v4417
        %4829 = vmatprep.subr.bf16.mxu0 %v4425
        %4830 = vmatpush1.bf16.msra.mxu0 %v4424
        %4831 = vmatprep.subr.bf16.mxu0 %v4432
        %4832 = vmatpush1.bf16.msra.mxu0 %v4431
        %4833 = vmatprep.subr.bf16.mxu0 %v4439
        %4834 = vmatpush1.bf16.msra.mxu0 %v4438
        %4835 = vmatprep.subr.bf16.mxu0 %v4446
        %4836 = vmatpush1.bf16.msra.mxu0 %v4445
        %4837 = vmatprep.subr.bf16.mxu0 %v4453
        %4838 = vmatpush1.bf16.msra.mxu0 %v4452
        %4839 = vmatprep.subr.bf16.mxu0 %v4460
        %4840 = vmatpush1.bf16.msra.mxu0 %v4459
        %4841 = vmatprep.subr.bf16.mxu0 %v4467
        %4842 = vmatpush1.bf16.msra.mxu0 %v4466
        %4843 = vmatprep.subr.bf16.mxu0 %v4474
        %4844 = vmatpush1.bf16.msra.mxu0 %v4473
        %4845 = vmatprep.subr.bf16.mxu0 %v4481
        %4846 = vmatpush1.bf16.msra.mxu0 %v4480
        %4847 = vmatprep.subr.bf16.mxu0 %v4488
        %4848 = vmatpush1.bf16.msra.mxu0 %v4487
        %4849 = vmatprep.subr.bf16.mxu0 %v4495
        %4850 = vmatpush1.bf16.msra.mxu0 %v4494
        %4851 = vmatprep.subr.bf16.mxu0 0
        %4852 = vmatpush1.bf16.msra.mxu0 0
        %4853 = vmatprep.subr.bf16.mxu0 0
        %4854 = vmatpush1.bf16.msra.mxu0 0
        %4855 = vmatprep.subr.bf16.mxu0 0
        %4856 = vmatpush1.bf16.msra.mxu0 0
        %4857 = vmatprep.subr.bf16.mxu0 0
        %4858 = vmatpush1.bf16.msra.mxu0 0
        %4859 = vmatprep.mubr.bf16.mxu0 %v4696
        %4860 = vmatmul.mubr.bf16.gmra.mrb[0].mxu0 %v1850
        %v4861 = vpop.f32.mrb[0].mxu0
        %v4862 = vadd.f32 %v4819, %v4861
        %v4863 = vpop.f32.mrb[0].mxu0
        %v4864 = vadd.f32 %v4821, %v4863
        %v4865 = vpop.f32.mrb[0].mxu0
        %v4866 = vadd.f32 %v4823, %v4865
        %v4867 = vpop.f32.mrb[0].mxu0
        %v4868 = vadd.f32 %v4825, %v4867
        %4869 = vdwg.mxu0
        %4870 = vmatprep.subr.bf16.mxu0 %v4308
        %4871 = vmatpush1.bf16.msra.mxu0 %v4307
        %4872 = vmatprep.subr.bf16.mxu0 %v4315
        %4873 = vmatpush1.bf16.msra.mxu0 %v4314
        %4874 = vmatprep.subr.bf16.mxu0 %v4322
        %4875 = vmatpush1.bf16.msra.mxu0 %v4321
        %4876 = vmatprep.subr.bf16.mxu0 %v4329
        %4877 = vmatpush1.bf16.msra.mxu0 %v4328
        %4878 = vmatprep.subr.bf16.mxu0 %v4336
        %4879 = vmatpush1.bf16.msra.mxu0 %v4335
        %4880 = vmatprep.subr.bf16.mxu0 %v4343
        %4881 = vmatpush1.bf16.msra.mxu0 %v4342
        %4882 = vmatprep.subr.bf16.mxu0 %v4350
        %4883 = vmatpush1.bf16.msra.mxu0 %v4349
        %4884 = vmatprep.subr.bf16.mxu0 %v4357
        %4885 = vmatpush1.bf16.msra.mxu0 %v4356
        %4886 = vmatprep.subr.bf16.mxu0 %v4364
        %4887 = vmatpush1.bf16.msra.mxu0 %v4363
        %4888 = vmatprep.subr.bf16.mxu0 %v4371
        %4889 = vmatpush1.bf16.msra.mxu0 %v4370
        %4890 = vmatprep.subr.bf16.mxu0 %v4378
        %4891 = vmatpush1.bf16.msra.mxu0 %v4377
        %4892 = vmatprep.subr.bf16.mxu0 %v4385
        %4893 = vmatpush1.bf16.msra.mxu0 %v4384
        %4894 = vmatprep.subr.bf16.mxu0 %v4392
        %4895 = vmatpush1.bf16.msra.mxu0 %v4391
        %4896 = vmatprep.subr.bf16.mxu0 %v4399
        %4897 = vmatpush1.bf16.msra.mxu0 %v4398
        %4898 = vmatprep.subr.bf16.mxu0 %v4406
        %4899 = vmatpush1.bf16.msra.mxu0 %v4405
        %4900 = vmatprep.subr.bf16.mxu0 %v4413
        %4901 = vmatpush1.bf16.msra.mxu0 %v4412
        %4902 = vmatprep.mubr.bf16.mxu0 %v1849
        %4903 = vmatmul.mubr.bf16.gmra.mrb[0].mxu0 %v1848
        %v4904 = vpop.f32.mrb[0].mxu0
        %v4905 = vadd.f32 %v3597, %v4904
        %v4906 = vpop.f32.mrb[0].mxu0
        %v4907 = vadd.f32 %v3599, %v4906
        %v4908 = vpop.f32.mrb[0].mxu0
        %v4909 = vadd.f32 %v3601, %v4908
        %v4910 = vpop.f32.mrb[0].mxu0
        %v4911 = vadd.f32 %v3603, %v4910
        %4912 = vdwg.mxu0
        %4913 = vmatprep.subr.bf16.mxu0 %v4420
        %4914 = vmatpush1.bf16.msra.mxu0 %v4419
        %4915 = vmatprep.subr.bf16.mxu0 %v4427
        %4916 = vmatpush1.bf16.msra.mxu0 %v4426
        %4917 = vmatprep.subr.bf16.mxu0 %v4434
        %4918 = vmatpush1.bf16.msra.mxu0 %v4433
        %4919 = vmatprep.subr.bf16.mxu0 %v4441
        %4920 = vmatpush1.bf16.msra.mxu0 %v4440
        %4921 = vmatprep.subr.bf16.mxu0 %v4448
        %4922 = vmatpush1.bf16.msra.mxu0 %v4447
        %4923 = vmatprep.subr.bf16.mxu0 %v4455
        %4924 = vmatpush1.bf16.msra.mxu0 %v4454
        %4925 = vmatprep.subr.bf16.mxu0 %v4462
        %4926 = vmatpush1.bf16.msra.mxu0 %v4461
        %4927 = vmatprep.subr.bf16.mxu0 %v4469
        %4928 = vmatpush1.bf16.msra.mxu0 %v4468
        %4929 = vmatprep.subr.bf16.mxu0 %v4476
        %4930 = vmatpush1.bf16.msra.mxu0 %v4475
        %4931 = vmatprep.subr.bf16.mxu0 %v4483
        %4932 = vmatpush1.bf16.msra.mxu0 %v4482
        %4933 = vmatprep.subr.bf16.mxu0 %v4490
        %4934 = vmatpush1.bf16.msra.mxu0 %v4489
        %4935 = vmatprep.subr.bf16.mxu0 %v4497
        %4936 = vmatpush1.bf16.msra.mxu0 %v4496
        %4937 = vmatprep.subr.bf16.mxu0 0
        %4938 = vmatpush1.bf16.msra.mxu0 0
        %4939 = vmatprep.subr.bf16.mxu0 0
        %4940 = vmatpush1.bf16.msra.mxu0 0
        %4941 = vmatprep.subr.bf16.mxu0 0
        %4942 = vmatpush1.bf16.msra.mxu0 0
        %4943 = vmatprep.subr.bf16.mxu0 0
        %4944 = vmatpush1.bf16.msra.mxu0 0
        %4945 = vmatprep.mubr.bf16.mxu0 %v4696
        %4946 = vmatmul.mubr.bf16.gmra.mrb[0].mxu0 %v1850
        %v4947 = vpop.f32.mrb[0].mxu0
        %v4948 = vadd.f32 %v4905, %v4947
        %v4949 = vpop.f32.mrb[0].mxu0
        %v4950 = vadd.f32 %v4907, %v4949
        %v4951 = vpop.f32.mrb[0].mxu0
        %v4952 = vadd.f32 %v4909, %v4951
        %v4953 = vpop.f32.mrb[0].mxu0
        %v4954 = vadd.f32 %v4911, %v4953
        %4955 = vdwg.mxu0
        %4956 = vmatprep.subr.bf16.mxu0 0
        %4957 = vmatpush1.bf16.msra.mxu0 %v4309
        %4958 = vmatprep.subr.bf16.mxu0 0
        %4959 = vmatpush1.bf16.msra.mxu0 %v4316
        %4960 = vmatprep.subr.bf16.mxu0 0
        %4961 = vmatpush1.bf16.msra.mxu0 %v4323
        %4962 = vmatprep.subr.bf16.mxu0 0
        %4963 = vmatpush1.bf16.msra.mxu0 %v4330
        %4964 = vmatprep.subr.bf16.mxu0 0
        %4965 = vmatpush1.bf16.msra.mxu0 %v4337
        %4966 = vmatprep.subr.bf16.mxu0 0
        %4967 = vmatpush1.bf16.msra.mxu0 %v4344
        %4968 = vmatprep.subr.bf16.mxu0 0
        %4969 = vmatpush1.bf16.msra.mxu0 %v4351
        %4970 = vmatprep.subr.bf16.mxu0 0
        %4971 = vmatpush1.bf16.msra.mxu0 %v4358
        %4972 = vmatprep.subr.bf16.mxu0 0
        %4973 = vmatpush1.bf16.msra.mxu0 %v4365
        %4974 = vmatprep.subr.bf16.mxu0 0
        %4975 = vmatpush1.bf16.msra.mxu0 %v4372
        %4976 = vmatprep.subr.bf16.mxu0 0
        %4977 = vmatpush1.bf16.msra.mxu0 %v4379
        %4978 = vmatprep.subr.bf16.mxu0 0
        %4979 = vmatpush1.bf16.msra.mxu0 %v4386
        %4980 = vmatprep.subr.bf16.mxu0 0
        %4981 = vmatpush1.bf16.msra.mxu0 %v4393
        %4982 = vmatprep.subr.bf16.mxu0 0
        %4983 = vmatpush1.bf16.msra.mxu0 %v4400
        %4984 = vmatprep.subr.bf16.mxu0 0
        %4985 = vmatpush1.bf16.msra.mxu0 %v4407
        %4986 = vmatprep.subr.bf16.mxu0 0
        %4987 = vmatpush1.bf16.msra.mxu0 %v4414
        %4988 = vmatprep.mubr.bf16.mxu0 %v1849
        %4989 = vmatmul.mubr.bf16.gmra.mrb[0].mxu0 %v1848
        %v4990 = vpop.f32.mrb[0].mxu0
        %v4991 = vadd.f32 %v3681, %v4990
        %v4992 = vpop.f32.mrb[0].mxu0
        %v4993 = vpop.f32.mrb[0].mxu0
        %v4994 = vadd.f32 %v3684, %v4993
        %v4995 = vpop.f32.mrb[0].mxu0
        %4996 = vdwg.mxu0
        %4997 = vmatprep.subr.bf16.mxu0 0
        %4998 = vmatpush1.bf16.msra.mxu0 %v4421
        %4999 = vmatprep.subr.bf16.mxu0 0
        %5000 = vmatpush1.bf16.msra.mxu0 %v4428
        %5001 = vmatprep.subr.bf16.mxu0 0
        %5002 = vmatpush1.bf16.msra.mxu0 %v4435
        %5003 = vmatprep.subr.bf16.mxu0 0
        %5004 = vmatpush1.bf16.msra.mxu0 %v4442
        %5005 = vmatprep.subr.bf16.mxu0 0
        %5006 = vmatpush1.bf16.msra.mxu0 %v4449
        %5007 = vmatprep.subr.bf16.mxu0 0
        %5008 = vmatpush1.bf16.msra.mxu0 %v4456
        %5009 = vmatprep.subr.bf16.mxu0 0
        %5010 = vmatpush1.bf16.msra.mxu0 %v4463
        %5011 = vmatprep.subr.bf16.mxu0 0
        %5012 = vmatpush1.bf16.msra.mxu0 %v4470
        %5013 = vmatprep.subr.bf16.mxu0 0
        %5014 = vmatpush1.bf16.msra.mxu0 %v4477
        %5015 = vmatprep.subr.bf16.mxu0 0
        %5016 = vmatpush1.bf16.msra.mxu0 %v4484
        %5017 = vmatprep.subr.bf16.mxu0 0
        %5018 = vmatpush1.bf16.msra.mxu0 %v4491
        %5019 = vmatprep.subr.bf16.mxu0 0
        %5020 = vmatpush1.bf16.msra.mxu0 %v4498
        %5021 = vmatprep.subr.bf16.mxu0 0
        %5022 = vmatpush1.bf16.msra.mxu0 0
        %5023 = vmatprep.subr.bf16.mxu0 0
        %5024 = vmatpush1.bf16.msra.mxu0 0
        %5025 = vmatprep.subr.bf16.mxu0 0
        %5026 = vmatpush1.bf16.msra.mxu0 0
        %5027 = vmatprep.subr.bf16.mxu0 0
        %5028 = vmatpush1.bf16.msra.mxu0 0
        %5029 = vmatprep.mubr.bf16.mxu0 %v4696
        %5030 = vmatmul.mubr.bf16.gmra.mrb[0].mxu0 %v1850
        %v5031 = vpop.f32.mrb[0].mxu0
        %v5032 = vadd.f32 %v4991, %v5031
        %v5033 = vpop.f32.mrb[0].mxu0
        %v5034 = vpop.f32.mrb[0].mxu0
        %v5035 = vadd.f32 %v4994, %v5034
        %v5036 = vpop.f32.mrb[0].mxu0
        %5037 = vdwg.mxu0
        %v5038 = vld [vmem:[#allocation3] sm:$0xfe]
        %v5039 = vld [vmem:[#allocation3 + $0x8] sm:$0xfe]
        %v5040 = vld [vmem:[#allocation3 + $0x10] sm:$0xfe]
        %v5041 = vld [vmem:[#allocation3 + $0x18] sm:$0xfe]
        %s5042 = scalar_lea.vmem [#allocation8], 3136
        %v5043 = vld [vmem:[%s5042] sm:$0xff]
        %v5044 = vld [vmem:[%s5042 + $0x8] sm:$0xff]
        %v5045 = vld [vmem:[%s5042 + $0x10] sm:$0xff]
        %v5046 = vld [vmem:[%s5042 + $0x18] sm:$0xf]
        %v5047 = vld [vmem:[%s5042 + $0x1c] sm:$0xff]
        %v5048 = vld [vmem:[%s5042 + $0x24] sm:$0xff]
        %v5049 = vld [vmem:[%s5042 + $0x2c] sm:$0xff]
        %v5050 = vld [vmem:[%s5042 + $0x34] sm:$0xf]
        %v5051 = vld [vmem:[%s5042 + $0x38] sm:$0xff]
        %v5052 = vld [vmem:[%s5042 + $0x40] sm:$0xff]
        %v5053 = vld [vmem:[%s5042 + $0x48] sm:$0xff]
        %v5054 = vld [vmem:[%s5042 + $0x50] sm:$0xf]
        %v5055 = vld [vmem:[%s5042 + $0x54] sm:$0xff]
        %v5056 = vld [vmem:[%s5042 + $0x5c] sm:$0xff]
        %v5057 = vld [vmem:[%s5042 + $0x64] sm:$0xff]
        %v5058 = vld [vmem:[%s5042 + $0x6c] sm:$0xf]
        %v5059 = vld [vmem:[%s5042 + $0x70] sm:$0xff]
        %v5060 = vld [vmem:[%s5042 + $0x78] sm:$0xff]
        %v5061 = vld [vmem:[%s5042 + $0x80] sm:$0xff]
        %v5062 = vld [vmem:[%s5042 + $0x88] sm:$0xf]
        %v5063 = vld [vmem:[%s5042 + $0x8c] sm:$0xff]
        %v5064 = vld [vmem:[%s5042 + $0x94] sm:$0xff]
        %v5065 = vld [vmem:[%s5042 + $0x9c] sm:$0xff]
        %v5066 = vld [vmem:[%s5042 + $0xa4] sm:$0xf]
        %v5067 = vld [vmem:[%s5042 + $0xa8] sm:$0xff]
        %v5068 = vld [vmem:[%s5042 + $0xb0] sm:$0xff]
        %v5069 = vld [vmem:[%s5042 + $0xb8] sm:$0xff]
        %v5070 = vld [vmem:[%s5042 + $0xc0] sm:$0xf]
        %v5071 = vld [vmem:[%s5042 + $0xc4] sm:$0xff]
        %v5072 = vld [vmem:[%s5042 + $0xcc] sm:$0xff]
        %v5073 = vld [vmem:[%s5042 + $0xd4] sm:$0xff]
        %v5074 = vld [vmem:[%s5042 + $0xdc] sm:$0xf]
        %v5075 = vld [vmem:[%s5042 + $0xe0] sm:$0xff]
        %v5076 = vld [vmem:[%s5042 + $0xe8] sm:$0xff]
        %v5077 = vld [vmem:[%s5042 + $0xf0] sm:$0xff]
        %v5078 = vld [vmem:[%s5042 + $0xf8] sm:$0xf]
        %v5079 = vld [vmem:[%s5042 + $0xfc] sm:$0xff]
        %v5080 = vld [vmem:[%s5042 + $0x104] sm:$0xff]
        %v5081 = vld [vmem:[%s5042 + $0x10c] sm:$0xff]
        %v5082 = vld [vmem:[%s5042 + $0x114] sm:$0xf]
        %v5083 = vld [vmem:[%s5042 + $0x118] sm:$0xff]
        %v5084 = vld [vmem:[%s5042 + $0x120] sm:$0xff]
        %v5085 = vld [vmem:[%s5042 + $0x128] sm:$0xff]
        %v5086 = vld [vmem:[%s5042 + $0x130] sm:$0xf]
        %v5087 = vld [vmem:[%s5042 + $0x134] sm:$0xff]
        %v5088 = vld [vmem:[%s5042 + $0x13c] sm:$0xff]
        %v5089 = vld [vmem:[%s5042 + $0x144] sm:$0xff]
        %v5090 = vld [vmem:[%s5042 + $0x14c] sm:$0xf]
        %v5091 = vld [vmem:[%s5042 + $0x150] sm:$0xff]
        %v5092 = vld [vmem:[%s5042 + $0x158] sm:$0xff]
        %v5093 = vld [vmem:[%s5042 + $0x160] sm:$0xff]
        %v5094 = vld [vmem:[%s5042 + $0x168] sm:$0xf]
        %v5095 = vld [vmem:[%s5042 + $0x16c] sm:$0xff]
        %v5096 = vld [vmem:[%s5042 + $0x174] sm:$0xff]
        %v5097 = vld [vmem:[%s5042 + $0x17c] sm:$0xff]
        %v5098 = vld [vmem:[%s5042 + $0x184] sm:$0xf]
        %v5099 = vld [vmem:[%s5042 + $0x188] sm:$0xff]
        %v5100 = vld [vmem:[%s5042 + $0x190] sm:$0xff]
        %v5101 = vld [vmem:[%s5042 + $0x198] sm:$0xff]
        %v5102 = vld [vmem:[%s5042 + $0x1a0] sm:$0xf]
        %v5103 = vld [vmem:[%s5042 + $0x1a4] sm:$0xff]
        %v5104 = vld [vmem:[%s5042 + $0x1ac] sm:$0xff]
        %v5105 = vld [vmem:[%s5042 + $0x1b4] sm:$0xff]
        %v5106 = vld [vmem:[%s5042 + $0x1bc] sm:$0xf]
        %v5107 = vld [vmem:[%s5042 + $0x1c0] sm:$0xff]
        %v5108 = vld [vmem:[%s5042 + $0x1c8] sm:$0xff]
        %v5109 = vld [vmem:[%s5042 + $0x1d0] sm:$0xff]
        %v5110 = vld [vmem:[%s5042 + $0x1d8] sm:$0xf]
        %v5111 = vld [vmem:[%s5042 + $0x1dc] sm:$0xff]
        %v5112 = vld [vmem:[%s5042 + $0x1e4] sm:$0xff]
        %v5113 = vld [vmem:[%s5042 + $0x1ec] sm:$0xff]
        %v5114 = vld [vmem:[%s5042 + $0x1f4] sm:$0xf]
        %v5115 = vld [vmem:[%s5042 + $0x1f8] sm:$0xff]
        %v5116 = vld [vmem:[%s5042 + $0x200] sm:$0xff]
        %v5117 = vld [vmem:[%s5042 + $0x208] sm:$0xff]
        %v5118 = vld [vmem:[%s5042 + $0x210] sm:$0xf]
        %v5119 = vld [vmem:[%s5042 + $0x214] sm:$0xff]
        %v5120 = vld [vmem:[%s5042 + $0x21c] sm:$0xff]
        %v5121 = vld [vmem:[%s5042 + $0x224] sm:$0xff]
        %v5122 = vld [vmem:[%s5042 + $0x22c] sm:$0xf]
        %v5123 = vld [vmem:[%s5042 + $0x230] sm:$0xff]
        %v5124 = vld [vmem:[%s5042 + $0x238] sm:$0xff]
        %v5125 = vld [vmem:[%s5042 + $0x240] sm:$0xff]
        %v5126 = vld [vmem:[%s5042 + $0x248] sm:$0xf]
        %v5127 = vld [vmem:[%s5042 + $0x24c] sm:$0xff]
        %v5128 = vld [vmem:[%s5042 + $0x254] sm:$0xff]
        %v5129 = vld [vmem:[%s5042 + $0x25c] sm:$0xff]
        %v5130 = vld [vmem:[%s5042 + $0x264] sm:$0xf]
        %v5131 = vld [vmem:[%s5042 + $0x268] sm:$0xff]
        %v5132 = vld [vmem:[%s5042 + $0x270] sm:$0xff]
        %v5133 = vld [vmem:[%s5042 + $0x278] sm:$0xff]
        %v5134 = vld [vmem:[%s5042 + $0x280] sm:$0xf]
        %v5135 = vld [vmem:[%s5042 + $0x284] sm:$0xff]
        %v5136 = vld [vmem:[%s5042 + $0x28c] sm:$0xff]
        %v5137 = vld [vmem:[%s5042 + $0x294] sm:$0xff]
        %v5138 = vld [vmem:[%s5042 + $0x29c] sm:$0xf]
        %v5139 = vld [vmem:[%s5042 + $0x2a0] sm:$0xff]
        %v5140 = vld [vmem:[%s5042 + $0x2a8] sm:$0xff]
        %v5141 = vld [vmem:[%s5042 + $0x2b0] sm:$0xff]
        %v5142 = vld [vmem:[%s5042 + $0x2b8] sm:$0xf]
        %v5143 = vld [vmem:[%s5042 + $0x2bc] sm:$0xff]
        %v5144 = vld [vmem:[%s5042 + $0x2c4] sm:$0xff]
        %v5145 = vld [vmem:[%s5042 + $0x2cc] sm:$0xff]
        %v5146 = vld [vmem:[%s5042 + $0x2d4] sm:$0xf]
        %v5147 = vld [vmem:[%s5042 + $0x2d8] sm:$0xff]
        %v5148 = vld [vmem:[%s5042 + $0x2e0] sm:$0xff]
        %v5149 = vld [vmem:[%s5042 + $0x2e8] sm:$0xff]
        %v5150 = vld [vmem:[%s5042 + $0x2f0] sm:$0xf]
        %v5151 = vld [vmem:[%s5042 + $0x2f4] sm:$0xff]
        %v5152 = vld [vmem:[%s5042 + $0x2fc] sm:$0xff]
        %v5153 = vld [vmem:[%s5042 + $0x304] sm:$0xff]
        %v5154 = vld [vmem:[%s5042 + $0x30c] sm:$0xf]
        %v5155 = vld [vmem:[%s5042 + $0x310] sm:$0xff]
        %v5156 = vld [vmem:[%s5042 + $0x318] sm:$0xff]
        %v5157 = vld [vmem:[%s5042 + $0x320] sm:$0xff]
        %v5158 = vld [vmem:[%s5042 + $0x328] sm:$0xf]
        %v5159 = vld [vmem:[%s5042 + $0x32c] sm:$0xff]
        %v5160 = vld [vmem:[%s5042 + $0x334] sm:$0xff]
        %v5161 = vld [vmem:[%s5042 + $0x33c] sm:$0xff]
        %v5162 = vld [vmem:[%s5042 + $0x344] sm:$0xf]
        %v5163 = vld [vmem:[%s5042 + $0x348] sm:$0xff]
        %v5164 = vld [vmem:[%s5042 + $0x350] sm:$0xff]
        %v5165 = vld [vmem:[%s5042 + $0x358] sm:$0xff]
        %v5166 = vld [vmem:[%s5042 + $0x360] sm:$0xf]
        %v5167 = vld [vmem:[%s5042 + $0x364] sm:$0xff]
        %v5168 = vld [vmem:[%s5042 + $0x36c] sm:$0xff]
        %v5169 = vld [vmem:[%s5042 + $0x374] sm:$0xff]
        %v5170 = vld [vmem:[%s5042 + $0x37c] sm:$0xf]
        %v5171 = vld [vmem:[%s5042 + $0x380] sm:$0xff]
        %v5172 = vld [vmem:[%s5042 + $0x388] sm:$0xff]
        %v5173 = vld [vmem:[%s5042 + $0x390] sm:$0xff]
        %v5174 = vld [vmem:[%s5042 + $0x398] sm:$0xf]
        %v5175 = vld [vmem:[%s5042 + $0x39c] sm:$0xff]
        %v5176 = vld [vmem:[%s5042 + $0x3a4] sm:$0xff]
        %v5177 = vld [vmem:[%s5042 + $0x3ac] sm:$0xff]
        %v5178 = vld [vmem:[%s5042 + $0x3b4] sm:$0xf]
        %v5179 = vld [vmem:[%s5042 + $0x3b8] sm:$0xff]
        %v5180 = vld [vmem:[%s5042 + $0x3c0] sm:$0xff]
        %v5181 = vld [vmem:[%s5042 + $0x3c8] sm:$0xff]
        %v5182 = vld [vmem:[%s5042 + $0x3d0] sm:$0xf]
        %v5183 = vld [vmem:[%s5042 + $0x3d4] sm:$0xff]
        %v5184 = vld [vmem:[%s5042 + $0x3dc] sm:$0xff]
        %v5185 = vld [vmem:[%s5042 + $0x3e4] sm:$0xff]
        %v5186 = vld [vmem:[%s5042 + $0x3ec] sm:$0xf]
        %v5187 = vld [vmem:[%s5042 + $0x3f0] sm:$0xff]
        %v5188 = vld [vmem:[%s5042 + $0x3f8] sm:$0xff]
        %v5189 = vld [vmem:[%s5042 + $0x400] sm:$0xff]
        %v5190 = vld [vmem:[%s5042 + $0x408] sm:$0xf]
        %v5191 = vld [vmem:[%s5042 + $0x40c] sm:$0xff]
        %v5192 = vld [vmem:[%s5042 + $0x414] sm:$0xff]
        %v5193 = vld [vmem:[%s5042 + $0x41c] sm:$0xff]
        %v5194 = vld [vmem:[%s5042 + $0x424] sm:$0xf]
        %v5195 = vld [vmem:[%s5042 + $0x428] sm:$0xff]
        %v5196 = vld [vmem:[%s5042 + $0x430] sm:$0xff]
        %v5197 = vld [vmem:[%s5042 + $0x438] sm:$0xff]
        %v5198 = vld [vmem:[%s5042 + $0x440] sm:$0xf]
        %v5199 = vld [vmem:[%s5042 + $0x444] sm:$0xff]
        %v5200 = vld [vmem:[%s5042 + $0x44c] sm:$0xff]
        %v5201 = vld [vmem:[%s5042 + $0x454] sm:$0xff]
        %v5202 = vld [vmem:[%s5042 + $0x45c] sm:$0xf]
        %v5203 = vld [vmem:[%s5042 + $0x460] sm:$0xff]
        %v5204 = vld [vmem:[%s5042 + $0x468] sm:$0xff]
        %v5205 = vld [vmem:[%s5042 + $0x470] sm:$0xff]
        %v5206 = vld [vmem:[%s5042 + $0x478] sm:$0xf]
        %v5207 = vld [vmem:[%s5042 + $0x47c] sm:$0xff]
        %v5208 = vld [vmem:[%s5042 + $0x484] sm:$0xff]
        %v5209 = vld [vmem:[%s5042 + $0x48c] sm:$0xff]
        %v5210 = vld [vmem:[%s5042 + $0x494] sm:$0xf]
        %v5211 = vld [vmem:[%s5042 + $0x498] sm:$0xff]
        %v5212 = vld [vmem:[%s5042 + $0x4a0] sm:$0xff]
        %v5213 = vld [vmem:[%s5042 + $0x4a8] sm:$0xff]
        %v5214 = vld [vmem:[%s5042 + $0x4b0] sm:$0xf]
        %v5215 = vld [vmem:[%s5042 + $0x4b4] sm:$0xff]
        %v5216 = vld [vmem:[%s5042 + $0x4bc] sm:$0xff]
        %v5217 = vld [vmem:[%s5042 + $0x4c4] sm:$0xff]
        %v5218 = vld [vmem:[%s5042 + $0x4cc] sm:$0xf]
        %v5219 = vld [vmem:[%s5042 + $0x4d0] sm:$0xff]
        %v5220 = vld [vmem:[%s5042 + $0x4d8] sm:$0xff]
        %v5221 = vld [vmem:[%s5042 + $0x4e0] sm:$0xff]
        %v5222 = vld [vmem:[%s5042 + $0x4e8] sm:$0xf]
        %v5223 = vld [vmem:[%s5042 + $0x4ec] sm:$0xff]
        %v5224 = vld [vmem:[%s5042 + $0x4f4] sm:$0xff]
        %v5225 = vld [vmem:[%s5042 + $0x4fc] sm:$0xff]
        %v5226 = vld [vmem:[%s5042 + $0x504] sm:$0xf]
        %v5227 = vld [vmem:[%s5042 + $0x508] sm:$0xff]
        %v5228 = vld [vmem:[%s5042 + $0x510] sm:$0xff]
        %v5229 = vld [vmem:[%s5042 + $0x518] sm:$0xff]
        %v5230 = vld [vmem:[%s5042 + $0x520] sm:$0xf]
        %v5231 = vld [vmem:[%s5042 + $0x524] sm:$0xff]
        %v5232 = vld [vmem:[%s5042 + $0x52c] sm:$0xff]
        %v5233 = vld [vmem:[%s5042 + $0x534] sm:$0xff]
        %v5234 = vld [vmem:[%s5042 + $0x53c] sm:$0xf]
        %v5235 = vld [vmem:[%s5042 + $0x540] sm:$0xff]
        %v5236 = vld [vmem:[%s5042 + $0x548] sm:$0xff]
        %v5237 = vld [vmem:[%s5042 + $0x550] sm:$0xff]
        %v5238 = vld [vmem:[%s5042 + $0x558] sm:$0xf]
        %v5239 = vld [vmem:[%s5042 + $0x55c] sm:$0xff]
        %v5240 = vld [vmem:[%s5042 + $0x564] sm:$0xff]
        %v5241 = vld [vmem:[%s5042 + $0x56c] sm:$0xff]
        %v5242 = vld [vmem:[%s5042 + $0x574] sm:$0xf]
        %v5243 = vld [vmem:[%s5042 + $0x578] sm:$0xff]
        %v5244 = vld [vmem:[%s5042 + $0x580] sm:$0xff]
        %v5245 = vld [vmem:[%s5042 + $0x588] sm:$0xff]
        %v5246 = vld [vmem:[%s5042 + $0x590] sm:$0xf]
        %v5247 = vld [vmem:[%s5042 + $0x594] sm:$0xff]
        %v5248 = vld [vmem:[%s5042 + $0x59c] sm:$0xff]
        %v5249 = vld [vmem:[%s5042 + $0x5a4] sm:$0xff]
        %v5250 = vld [vmem:[%s5042 + $0x5ac] sm:$0xf]
        %v5251 = vld [vmem:[%s5042 + $0x5b0] sm:$0xff]
        %v5252 = vld [vmem:[%s5042 + $0x5b8] sm:$0xff]
        %v5253 = vld [vmem:[%s5042 + $0x5c0] sm:$0xff]
        %v5254 = vld [vmem:[%s5042 + $0x5c8] sm:$0xf]
        %v5255 = vld [vmem:[%s5042 + $0x5cc] sm:$0xff]
        %v5256 = vld [vmem:[%s5042 + $0x5d4] sm:$0xff]
        %v5257 = vld [vmem:[%s5042 + $0x5dc] sm:$0xff]
        %v5258 = vld [vmem:[%s5042 + $0x5e4] sm:$0xf]
        %v5259 = vld [vmem:[%s5042 + $0x5e8] sm:$0xff]
        %v5260 = vld [vmem:[%s5042 + $0x5f0] sm:$0xff]
        %v5261 = vld [vmem:[%s5042 + $0x5f8] sm:$0xff]
        %v5262 = vld [vmem:[%s5042 + $0x600] sm:$0xf]
        %v5263 = vld [vmem:[%s5042 + $0x604] sm:$0xff]
        %v5264 = vld [vmem:[%s5042 + $0x60c] sm:$0xff]
        %v5265 = vld [vmem:[%s5042 + $0x614] sm:$0xff]
        %v5266 = vld [vmem:[%s5042 + $0x61c] sm:$0xf]
        %v5271 = vrot.slane %v5038, 1
        %v5272 = vrot.slane %v5039, 1
        %v5273 = vrot.slane %v5040, 1
        %v5274 = vrot.slane %v5041, 1
        %v5502 = vunpack.c.l.b16 %v5043
        %v5503 = vunpack.c.h.b16 %v5043
        %v5504 = vunpack.c.l.b16 %v5044
        %v5505 = vunpack.c.h.b16 %v5044
        %v5506 = vunpack.c.l.b16 %v5045
        %v5507 = vunpack.c.h.b16 %v5045
        %v5508 = vunpack.c.l.b16 %v5046
        %v5509 = vunpack.c.l.b16 %v5047
        %v5510 = vunpack.c.h.b16 %v5047
        %v5511 = vunpack.c.l.b16 %v5048
        %v5512 = vunpack.c.h.b16 %v5048
        %v5513 = vunpack.c.l.b16 %v5049
        %v5514 = vunpack.c.h.b16 %v5049
        %v5515 = vunpack.c.l.b16 %v5050
        %v5516 = vunpack.c.l.b16 %v5051
        %v5517 = vunpack.c.h.b16 %v5051
        %v5518 = vunpack.c.l.b16 %v5052
        %v5519 = vunpack.c.h.b16 %v5052
        %v5520 = vunpack.c.l.b16 %v5053
        %v5521 = vunpack.c.h.b16 %v5053
        %v5522 = vunpack.c.l.b16 %v5054
        %v5523 = vunpack.c.l.b16 %v5055
        %v5524 = vunpack.c.h.b16 %v5055
        %v5525 = vunpack.c.l.b16 %v5056
        %v5526 = vunpack.c.h.b16 %v5056
        %v5527 = vunpack.c.l.b16 %v5057
        %v5528 = vunpack.c.h.b16 %v5057
        %v5529 = vunpack.c.l.b16 %v5058
        %v5530 = vunpack.c.l.b16 %v5059
        %v5531 = vunpack.c.h.b16 %v5059
        %v5532 = vunpack.c.l.b16 %v5060
        %v5533 = vunpack.c.h.b16 %v5060
        %v5534 = vunpack.c.l.b16 %v5061
        %v5535 = vunpack.c.h.b16 %v5061
        %v5536 = vunpack.c.l.b16 %v5062
        %v5537 = vunpack.c.l.b16 %v5063
        %v5538 = vunpack.c.h.b16 %v5063
        %v5539 = vunpack.c.l.b16 %v5064
        %v5540 = vunpack.c.h.b16 %v5064
        %v5541 = vunpack.c.l.b16 %v5065
        %v5542 = vunpack.c.h.b16 %v5065
        %v5543 = vunpack.c.l.b16 %v5066
        %v5544 = vunpack.c.l.b16 %v5067
        %v5545 = vunpack.c.h.b16 %v5067
        %v5546 = vunpack.c.l.b16 %v5068
        %v5547 = vunpack.c.h.b16 %v5068
        %v5548 = vunpack.c.l.b16 %v5069
        %v5549 = vunpack.c.h.b16 %v5069
        %v5550 = vunpack.c.l.b16 %v5070
        %v5551 = vunpack.c.l.b16 %v5071
        %v5552 = vunpack.c.h.b16 %v5071
        %v5553 = vunpack.c.l.b16 %v5072
        %v5554 = vunpack.c.h.b16 %v5072
        %v5555 = vunpack.c.l.b16 %v5073
        %v5556 = vunpack.c.h.b16 %v5073
        %v5557 = vunpack.c.l.b16 %v5074
        %v5558 = vunpack.c.l.b16 %v5075
        %v5559 = vunpack.c.h.b16 %v5075
        %v5560 = vunpack.c.l.b16 %v5076
        %v5561 = vunpack.c.h.b16 %v5076
        %v5562 = vunpack.c.l.b16 %v5077
        %v5563 = vunpack.c.h.b16 %v5077
        %v5564 = vunpack.c.l.b16 %v5078
        %v5565 = vunpack.c.l.b16 %v5079
        %v5566 = vunpack.c.h.b16 %v5079
        %v5567 = vunpack.c.l.b16 %v5080
        %v5568 = vunpack.c.h.b16 %v5080
        %v5569 = vunpack.c.l.b16 %v5081
        %v5570 = vunpack.c.h.b16 %v5081
        %v5571 = vunpack.c.l.b16 %v5082
        %v5572 = vunpack.c.l.b16 %v5083
        %v5573 = vunpack.c.h.b16 %v5083
        %v5574 = vunpack.c.l.b16 %v5084
        %v5575 = vunpack.c.h.b16 %v5084
        %v5576 = vunpack.c.l.b16 %v5085
        %v5577 = vunpack.c.h.b16 %v5085
        %v5578 = vunpack.c.l.b16 %v5086
        %v5579 = vunpack.c.l.b16 %v5087
        %v5580 = vunpack.c.h.b16 %v5087
        %v5581 = vunpack.c.l.b16 %v5088
        %v5582 = vunpack.c.h.b16 %v5088
        %v5583 = vunpack.c.l.b16 %v5089
        %v5584 = vunpack.c.h.b16 %v5089
        %v5585 = vunpack.c.l.b16 %v5090
        %v5586 = vunpack.c.l.b16 %v5091
        %v5587 = vunpack.c.h.b16 %v5091
        %v5588 = vunpack.c.l.b16 %v5092
        %v5589 = vunpack.c.h.b16 %v5092
        %v5590 = vunpack.c.l.b16 %v5093
        %v5591 = vunpack.c.h.b16 %v5093
        %v5592 = vunpack.c.l.b16 %v5094
        %v5593 = vunpack.c.l.b16 %v5095
        %v5594 = vunpack.c.h.b16 %v5095
        %v5595 = vunpack.c.l.b16 %v5096
        %v5596 = vunpack.c.h.b16 %v5096
        %v5597 = vunpack.c.l.b16 %v5097
        %v5598 = vunpack.c.h.b16 %v5097
        %v5599 = vunpack.c.l.b16 %v5098
        %v5600 = vunpack.c.l.b16 %v5099
        %v5601 = vunpack.c.h.b16 %v5099
        %v5602 = vunpack.c.l.b16 %v5100
        %v5603 = vunpack.c.h.b16 %v5100
        %v5604 = vunpack.c.l.b16 %v5101
        %v5605 = vunpack.c.h.b16 %v5101
        %v5606 = vunpack.c.l.b16 %v5102
        %v5607 = vunpack.c.l.b16 %v5103
        %v5608 = vunpack.c.h.b16 %v5103
        %v5609 = vunpack.c.l.b16 %v5104
        %v5610 = vunpack.c.h.b16 %v5104
        %v5611 = vunpack.c.l.b16 %v5105
        %v5612 = vunpack.c.h.b16 %v5105
        %v5613 = vunpack.c.l.b16 %v5106
        %v5614 = vunpack.c.l.b16 %v5107
        %v5615 = vunpack.c.h.b16 %v5107
        %v5616 = vunpack.c.l.b16 %v5108
        %v5617 = vunpack.c.h.b16 %v5108
        %v5618 = vunpack.c.l.b16 %v5109
        %v5619 = vunpack.c.h.b16 %v5109
        %v5620 = vunpack.c.l.b16 %v5110
        %v5621 = vunpack.c.l.b16 %v5111
        %v5622 = vunpack.c.h.b16 %v5111
        %v5623 = vunpack.c.l.b16 %v5112
        %v5624 = vunpack.c.h.b16 %v5112
        %v5625 = vunpack.c.l.b16 %v5113
        %v5626 = vunpack.c.h.b16 %v5113
        %v5627 = vunpack.c.l.b16 %v5114
        %v5628 = vunpack.c.l.b16 %v5115
        %v5629 = vunpack.c.h.b16 %v5115
        %v5630 = vunpack.c.l.b16 %v5116
        %v5631 = vunpack.c.h.b16 %v5116
        %v5632 = vunpack.c.l.b16 %v5117
        %v5633 = vunpack.c.h.b16 %v5117
        %v5634 = vunpack.c.l.b16 %v5118
        %v5635 = vunpack.c.l.b16 %v5119
        %v5636 = vunpack.c.h.b16 %v5119
        %v5637 = vunpack.c.l.b16 %v5120
        %v5638 = vunpack.c.h.b16 %v5120
        %v5639 = vunpack.c.l.b16 %v5121
        %v5640 = vunpack.c.h.b16 %v5121
        %v5641 = vunpack.c.l.b16 %v5122
        %v5642 = vunpack.c.l.b16 %v5123
        %v5643 = vunpack.c.h.b16 %v5123
        %v5644 = vunpack.c.l.b16 %v5124
        %v5645 = vunpack.c.h.b16 %v5124
        %v5646 = vunpack.c.l.b16 %v5125
        %v5647 = vunpack.c.h.b16 %v5125
        %v5648 = vunpack.c.l.b16 %v5126
        %v5649 = vunpack.c.l.b16 %v5127
        %v5650 = vunpack.c.h.b16 %v5127
        %v5651 = vunpack.c.l.b16 %v5128
        %v5652 = vunpack.c.h.b16 %v5128
        %v5653 = vunpack.c.l.b16 %v5129
        %v5654 = vunpack.c.h.b16 %v5129
        %v5655 = vunpack.c.l.b16 %v5130
        %v5656 = vunpack.c.l.b16 %v5131
        %v5657 = vunpack.c.h.b16 %v5131
        %v5658 = vunpack.c.l.b16 %v5132
        %v5659 = vunpack.c.h.b16 %v5132
        %v5660 = vunpack.c.l.b16 %v5133
        %v5661 = vunpack.c.h.b16 %v5133
        %v5662 = vunpack.c.l.b16 %v5134
        %v5663 = vunpack.c.l.b16 %v5135
        %v5664 = vunpack.c.h.b16 %v5135
        %v5665 = vunpack.c.l.b16 %v5136
        %v5666 = vunpack.c.h.b16 %v5136
        %v5667 = vunpack.c.l.b16 %v5137
        %v5668 = vunpack.c.h.b16 %v5137
        %v5669 = vunpack.c.l.b16 %v5138
        %v5670 = vunpack.c.l.b16 %v5139
        %v5671 = vunpack.c.h.b16 %v5139
        %v5672 = vunpack.c.l.b16 %v5140
        %v5673 = vunpack.c.h.b16 %v5140
        %v5674 = vunpack.c.l.b16 %v5141
        %v5675 = vunpack.c.h.b16 %v5141
        %v5676 = vunpack.c.l.b16 %v5142
        %v5677 = vunpack.c.l.b16 %v5143
        %v5678 = vunpack.c.h.b16 %v5143
        %v5679 = vunpack.c.l.b16 %v5144
        %v5680 = vunpack.c.h.b16 %v5144
        %v5681 = vunpack.c.l.b16 %v5145
        %v5682 = vunpack.c.h.b16 %v5145
        %v5683 = vunpack.c.l.b16 %v5146
        %v5684 = vunpack.c.l.b16 %v5147
        %v5685 = vunpack.c.h.b16 %v5147
        %v5686 = vunpack.c.l.b16 %v5148
        %v5687 = vunpack.c.h.b16 %v5148
        %v5688 = vunpack.c.l.b16 %v5149
        %v5689 = vunpack.c.h.b16 %v5149
        %v5690 = vunpack.c.l.b16 %v5150
        %v5691 = vunpack.c.l.b16 %v5151
        %v5692 = vunpack.c.h.b16 %v5151
        %v5693 = vunpack.c.l.b16 %v5152
        %v5694 = vunpack.c.h.b16 %v5152
        %v5695 = vunpack.c.l.b16 %v5153
        %v5696 = vunpack.c.h.b16 %v5153
        %v5697 = vunpack.c.l.b16 %v5154
        %v5698 = vunpack.c.l.b16 %v5155
        %v5699 = vunpack.c.h.b16 %v5155
        %v5700 = vunpack.c.l.b16 %v5156
        %v5701 = vunpack.c.h.b16 %v5156
        %v5702 = vunpack.c.l.b16 %v5157
        %v5703 = vunpack.c.h.b16 %v5157
        %v5704 = vunpack.c.l.b16 %v5158
        %v5705 = vunpack.c.l.b16 %v5159
        %v5706 = vunpack.c.h.b16 %v5159
        %v5707 = vunpack.c.l.b16 %v5160
        %v5708 = vunpack.c.h.b16 %v5160
        %v5709 = vunpack.c.l.b16 %v5161
        %v5710 = vunpack.c.h.b16 %v5161
        %v5711 = vunpack.c.l.b16 %v5162
        %v5712 = vunpack.c.l.b16 %v5163
        %v5713 = vunpack.c.h.b16 %v5163
        %v5714 = vunpack.c.l.b16 %v5164
        %v5715 = vunpack.c.h.b16 %v5164
        %v5716 = vunpack.c.l.b16 %v5165
        %v5717 = vunpack.c.h.b16 %v5165
        %v5718 = vunpack.c.l.b16 %v5166
        %v5719 = vunpack.c.l.b16 %v5167
        %v5720 = vunpack.c.h.b16 %v5167
        %v5721 = vunpack.c.l.b16 %v5168
        %v5722 = vunpack.c.h.b16 %v5168
        %v5723 = vunpack.c.l.b16 %v5169
        %v5724 = vunpack.c.h.b16 %v5169
        %v5725 = vunpack.c.l.b16 %v5170
        %v5726 = vunpack.c.l.b16 %v5171
        %v5727 = vunpack.c.h.b16 %v5171
        %v5728 = vunpack.c.l.b16 %v5172
        %v5729 = vunpack.c.h.b16 %v5172
        %v5730 = vunpack.c.l.b16 %v5173
        %v5731 = vunpack.c.h.b16 %v5173
        %v5732 = vunpack.c.l.b16 %v5174
        %v5733 = vunpack.c.l.b16 %v5175
        %v5734 = vunpack.c.h.b16 %v5175
        %v5735 = vunpack.c.l.b16 %v5176
        %v5736 = vunpack.c.h.b16 %v5176
        %v5737 = vunpack.c.l.b16 %v5177
        %v5738 = vunpack.c.h.b16 %v5177
        %v5739 = vunpack.c.l.b16 %v5178
        %v5740 = vunpack.c.l.b16 %v5179
        %v5741 = vunpack.c.h.b16 %v5179
        %v5742 = vunpack.c.l.b16 %v5180
        %v5743 = vunpack.c.h.b16 %v5180
        %v5744 = vunpack.c.l.b16 %v5181
        %v5745 = vunpack.c.h.b16 %v5181
        %v5746 = vunpack.c.l.b16 %v5182
        %v5747 = vunpack.c.l.b16 %v5183
        %v5748 = vunpack.c.h.b16 %v5183
        %v5749 = vunpack.c.l.b16 %v5184
        %v5750 = vunpack.c.h.b16 %v5184
        %v5751 = vunpack.c.l.b16 %v5185
        %v5752 = vunpack.c.h.b16 %v5185
        %v5753 = vunpack.c.l.b16 %v5186
        %v5754 = vunpack.c.l.b16 %v5187
        %v5755 = vunpack.c.h.b16 %v5187
        %v5756 = vunpack.c.l.b16 %v5188
        %v5757 = vunpack.c.h.b16 %v5188
        %v5758 = vunpack.c.l.b16 %v5189
        %v5759 = vunpack.c.h.b16 %v5189
        %v5760 = vunpack.c.l.b16 %v5190
        %v5761 = vunpack.c.l.b16 %v5191
        %v5762 = vunpack.c.h.b16 %v5191
        %v5763 = vunpack.c.l.b16 %v5192
        %v5764 = vunpack.c.h.b16 %v5192
        %v5765 = vunpack.c.l.b16 %v5193
        %v5766 = vunpack.c.h.b16 %v5193
        %v5767 = vunpack.c.l.b16 %v5194
        %v5768 = vunpack.c.l.b16 %v5195
        %v5769 = vunpack.c.h.b16 %v5195
        %v5770 = vunpack.c.l.b16 %v5196
        %v5771 = vunpack.c.h.b16 %v5196
        %v5772 = vunpack.c.l.b16 %v5197
        %v5773 = vunpack.c.h.b16 %v5197
        %v5774 = vunpack.c.l.b16 %v5198
        %v5775 = vunpack.c.l.b16 %v5199
        %v5776 = vunpack.c.h.b16 %v5199
        %v5777 = vunpack.c.l.b16 %v5200
        %v5778 = vunpack.c.h.b16 %v5200
        %v5779 = vunpack.c.l.b16 %v5201
        %v5780 = vunpack.c.h.b16 %v5201
        %v5781 = vunpack.c.l.b16 %v5202
        %v5782 = vunpack.c.l.b16 %v5203
        %v5783 = vunpack.c.h.b16 %v5203
        %v5784 = vunpack.c.l.b16 %v5204
        %v5785 = vunpack.c.h.b16 %v5204
        %v5786 = vunpack.c.l.b16 %v5205
        %v5787 = vunpack.c.h.b16 %v5205
        %v5788 = vunpack.c.l.b16 %v5206
        %v5789 = vunpack.c.l.b16 %v5207
        %v5790 = vunpack.c.h.b16 %v5207
        %v5791 = vunpack.c.l.b16 %v5208
        %v5792 = vunpack.c.h.b16 %v5208
        %v5793 = vunpack.c.l.b16 %v5209
        %v5794 = vunpack.c.h.b16 %v5209
        %v5795 = vunpack.c.l.b16 %v5210
        %v5796 = vunpack.c.l.b16 %v5211
        %v5797 = vunpack.c.h.b16 %v5211
        %v5798 = vunpack.c.l.b16 %v5212
        %v5799 = vunpack.c.h.b16 %v5212
        %v5800 = vunpack.c.l.b16 %v5213
        %v5801 = vunpack.c.h.b16 %v5213
        %v5802 = vunpack.c.l.b16 %v5214
        %v5803 = vunpack.c.l.b16 %v5215
        %v5804 = vunpack.c.h.b16 %v5215
        %v5805 = vunpack.c.l.b16 %v5216
        %v5806 = vunpack.c.h.b16 %v5216
        %v5807 = vunpack.c.l.b16 %v5217
        %v5808 = vunpack.c.h.b16 %v5217
        %v5809 = vunpack.c.l.b16 %v5218
        %v5810 = vunpack.c.l.b16 %v5219
        %v5811 = vunpack.c.h.b16 %v5219
        %v5812 = vunpack.c.l.b16 %v5220
        %v5813 = vunpack.c.h.b16 %v5220
        %v5814 = vunpack.c.l.b16 %v5221
        %v5815 = vunpack.c.h.b16 %v5221
        %v5816 = vunpack.c.l.b16 %v5222
        %v5817 = vunpack.c.l.b16 %v5223
        %v5818 = vunpack.c.h.b16 %v5223
        %v5819 = vunpack.c.l.b16 %v5224
        %v5820 = vunpack.c.h.b16 %v5224
        %v5821 = vunpack.c.l.b16 %v5225
        %v5822 = vunpack.c.h.b16 %v5225
        %v5823 = vunpack.c.l.b16 %v5226
        %v5824 = vunpack.c.l.b16 %v5227
        %v5825 = vunpack.c.h.b16 %v5227
        %v5826 = vunpack.c.l.b16 %v5228
        %v5827 = vunpack.c.h.b16 %v5228
        %v5828 = vunpack.c.l.b16 %v5229
        %v5829 = vunpack.c.h.b16 %v5229
        %v5830 = vunpack.c.l.b16 %v5230
        %v5831 = vunpack.c.l.b16 %v5231
        %v5832 = vunpack.c.h.b16 %v5231
        %v5833 = vunpack.c.l.b16 %v5232
        %v5834 = vunpack.c.h.b16 %v5232
        %v5835 = vunpack.c.l.b16 %v5233
        %v5836 = vunpack.c.h.b16 %v5233
        %v5837 = vunpack.c.l.b16 %v5234
        %v5838 = vunpack.c.l.b16 %v5235
        %v5839 = vunpack.c.h.b16 %v5235
        %v5840 = vunpack.c.l.b16 %v5236
        %v5841 = vunpack.c.h.b16 %v5236
        %v5842 = vunpack.c.l.b16 %v5237
        %v5843 = vunpack.c.h.b16 %v5237
        %v5844 = vunpack.c.l.b16 %v5238
        %v5845 = vunpack.c.l.b16 %v5239
        %v5846 = vunpack.c.h.b16 %v5239
        %v5847 = vunpack.c.l.b16 %v5240
        %v5848 = vunpack.c.h.b16 %v5240
        %v5849 = vunpack.c.l.b16 %v5241
        %v5850 = vunpack.c.h.b16 %v5241
        %v5851 = vunpack.c.l.b16 %v5242
        %v5852 = vunpack.c.l.b16 %v5243
        %v5853 = vunpack.c.h.b16 %v5243
        %v5854 = vunpack.c.l.b16 %v5244
        %v5855 = vunpack.c.h.b16 %v5244
        %v5856 = vunpack.c.l.b16 %v5245
        %v5857 = vunpack.c.h.b16 %v5245
        %v5858 = vunpack.c.l.b16 %v5246
        %v5859 = vunpack.c.l.b16 %v5247
        %v5860 = vunpack.c.h.b16 %v5247
        %v5861 = vunpack.c.l.b16 %v5248
        %v5862 = vunpack.c.h.b16 %v5248
        %v5863 = vunpack.c.l.b16 %v5249
        %v5864 = vunpack.c.h.b16 %v5249
        %v5865 = vunpack.c.l.b16 %v5250
        %v5866 = vunpack.c.l.b16 %v5251
        %v5867 = vunpack.c.h.b16 %v5251
        %v5868 = vunpack.c.l.b16 %v5252
        %v5869 = vunpack.c.h.b16 %v5252
        %v5870 = vunpack.c.l.b16 %v5253
        %v5871 = vunpack.c.h.b16 %v5253
        %v5872 = vunpack.c.l.b16 %v5254
        %v5873 = vunpack.c.l.b16 %v5255
        %v5874 = vunpack.c.h.b16 %v5255
        %v5875 = vunpack.c.l.b16 %v5256
        %v5876 = vunpack.c.h.b16 %v5256
        %v5877 = vunpack.c.l.b16 %v5257
        %v5878 = vunpack.c.h.b16 %v5257
        %v5879 = vunpack.c.l.b16 %v5258
        %v5880 = vunpack.c.l.b16 %v5259
        %v5881 = vunpack.c.h.b16 %v5259
        %v5882 = vunpack.c.l.b16 %v5260
        %v5883 = vunpack.c.h.b16 %v5260
        %v5884 = vunpack.c.l.b16 %v5261
        %v5885 = vunpack.c.h.b16 %v5261
        %v5886 = vunpack.c.l.b16 %v5262
        %v5887 = vunpack.c.l.b16 %v5263
        %v5888 = vunpack.c.h.b16 %v5263
        %v5889 = vunpack.c.l.b16 %v5264
        %v5890 = vunpack.c.h.b16 %v5264
        %v5891 = vunpack.c.l.b16 %v5265
        %v5892 = vunpack.c.h.b16 %v5265
        %v5893 = vunpack.c.l.b16 %v5266
        %v5894 = vpack.c.b16 %v5509, %v5502
        %v5895 = vpack.c.b16 %v5510, %v5503
        %v5896 = vpack.c.b16 %v5511, %v5504
        %v5897 = vpack.c.b16 %v5512, %v5505
        %v5898 = vpack.c.b16 %v5513, %v5506
        %v5899 = vpack.c.b16 %v5514, %v5507
        %v5900 = vpack.c.b16 %v5515, %v5508
        %v5901 = vpack.c.b16 %v5523, %v5516
        %v5902 = vpack.c.b16 %v5524, %v5517
        %v5903 = vpack.c.b16 %v5525, %v5518
        %v5904 = vpack.c.b16 %v5526, %v5519
        %v5905 = vpack.c.b16 %v5527, %v5520
        %v5906 = vpack.c.b16 %v5528, %v5521
        %v5907 = vpack.c.b16 %v5529, %v5522
        %v5908 = vpack.c.b16 %v5537, %v5530
        %v5909 = vpack.c.b16 %v5538, %v5531
        %v5910 = vpack.c.b16 %v5539, %v5532
        %v5911 = vpack.c.b16 %v5540, %v5533
        %v5912 = vpack.c.b16 %v5541, %v5534
        %v5913 = vpack.c.b16 %v5542, %v5535
        %v5914 = vpack.c.b16 %v5543, %v5536
        %v5915 = vpack.c.b16 %v5551, %v5544
        %v5916 = vpack.c.b16 %v5552, %v5545
        %v5917 = vpack.c.b16 %v5553, %v5546
        %v5918 = vpack.c.b16 %v5554, %v5547
        %v5919 = vpack.c.b16 %v5555, %v5548
        %v5920 = vpack.c.b16 %v5556, %v5549
        %v5921 = vpack.c.b16 %v5557, %v5550
        %v5922 = vpack.c.b16 %v5565, %v5558
        %v5923 = vpack.c.b16 %v5566, %v5559
        %v5924 = vpack.c.b16 %v5567, %v5560
        %v5925 = vpack.c.b16 %v5568, %v5561
        %v5926 = vpack.c.b16 %v5569, %v5562
        %v5927 = vpack.c.b16 %v5570, %v5563
        %v5928 = vpack.c.b16 %v5571, %v5564
        %v5929 = vpack.c.b16 %v5579, %v5572
        %v5930 = vpack.c.b16 %v5580, %v5573
        %v5931 = vpack.c.b16 %v5581, %v5574
        %v5932 = vpack.c.b16 %v5582, %v5575
        %v5933 = vpack.c.b16 %v5583, %v5576
        %v5934 = vpack.c.b16 %v5584, %v5577
        %v5935 = vpack.c.b16 %v5585, %v5578
        %v5936 = vpack.c.b16 %v5593, %v5586
        %v5937 = vpack.c.b16 %v5594, %v5587
        %v5938 = vpack.c.b16 %v5595, %v5588
        %v5939 = vpack.c.b16 %v5596, %v5589
        %v5940 = vpack.c.b16 %v5597, %v5590
        %v5941 = vpack.c.b16 %v5598, %v5591
        %v5942 = vpack.c.b16 %v5599, %v5592
        %v5943 = vpack.c.b16 %v5607, %v5600
        %v5944 = vpack.c.b16 %v5608, %v5601
        %v5945 = vpack.c.b16 %v5609, %v5602
        %v5946 = vpack.c.b16 %v5610, %v5603
        %v5947 = vpack.c.b16 %v5611, %v5604
        %v5948 = vpack.c.b16 %v5612, %v5605
        %v5949 = vpack.c.b16 %v5613, %v5606
        %v5950 = vpack.c.b16 %v5621, %v5614
        %v5951 = vpack.c.b16 %v5622, %v5615
        %v5952 = vpack.c.b16 %v5623, %v5616
        %v5953 = vpack.c.b16 %v5624, %v5617
        %v5954 = vpack.c.b16 %v5625, %v5618
        %v5955 = vpack.c.b16 %v5626, %v5619
        %v5956 = vpack.c.b16 %v5627, %v5620
        %v5957 = vpack.c.b16 %v5635, %v5628
        %v5958 = vpack.c.b16 %v5636, %v5629
        %v5959 = vpack.c.b16 %v5637, %v5630
        %v5960 = vpack.c.b16 %v5638, %v5631
        %v5961 = vpack.c.b16 %v5639, %v5632
        %v5962 = vpack.c.b16 %v5640, %v5633
        %v5963 = vpack.c.b16 %v5641, %v5634
        %v5964 = vpack.c.b16 %v5649, %v5642
        %v5965 = vpack.c.b16 %v5650, %v5643
        %v5966 = vpack.c.b16 %v5651, %v5644
        %v5967 = vpack.c.b16 %v5652, %v5645
        %v5968 = vpack.c.b16 %v5653, %v5646
        %v5969 = vpack.c.b16 %v5654, %v5647
        %v5970 = vpack.c.b16 %v5655, %v5648
        %v5971 = vpack.c.b16 %v5663, %v5656
        %v5972 = vpack.c.b16 %v5664, %v5657
        %v5973 = vpack.c.b16 %v5665, %v5658
        %v5974 = vpack.c.b16 %v5666, %v5659
        %v5975 = vpack.c.b16 %v5667, %v5660
        %v5976 = vpack.c.b16 %v5668, %v5661
        %v5977 = vpack.c.b16 %v5669, %v5662
        %v5978 = vpack.c.b16 %v5677, %v5670
        %v5979 = vpack.c.b16 %v5678, %v5671
        %v5980 = vpack.c.b16 %v5679, %v5672
        %v5981 = vpack.c.b16 %v5680, %v5673
        %v5982 = vpack.c.b16 %v5681, %v5674
        %v5983 = vpack.c.b16 %v5682, %v5675
        %v5984 = vpack.c.b16 %v5683, %v5676
        %v5985 = vpack.c.b16 %v5691, %v5684
        %v5986 = vpack.c.b16 %v5692, %v5685
        %v5987 = vpack.c.b16 %v5693, %v5686
        %v5988 = vpack.c.b16 %v5694, %v5687
        %v5989 = vpack.c.b16 %v5695, %v5688
        %v5990 = vpack.c.b16 %v5696, %v5689
        %v5991 = vpack.c.b16 %v5697, %v5690
        %v5992 = vpack.c.b16 %v5705, %v5698
        %v5993 = vpack.c.b16 %v5706, %v5699
        %v5994 = vpack.c.b16 %v5707, %v5700
        %v5995 = vpack.c.b16 %v5708, %v5701
        %v5996 = vpack.c.b16 %v5709, %v5702
        %v5997 = vpack.c.b16 %v5710, %v5703
        %v5998 = vpack.c.b16 %v5711, %v5704
        %v5999 = vpack.c.b16 %v5719, %v5712
        %v6000 = vpack.c.b16 %v5720, %v5713
        %v6001 = vpack.c.b16 %v5721, %v5714
        %v6002 = vpack.c.b16 %v5722, %v5715
        %v6003 = vpack.c.b16 %v5723, %v5716
        %v6004 = vpack.c.b16 %v5724, %v5717
        %v6005 = vpack.c.b16 %v5725, %v5718
        %v6006 = vpack.c.b16 %v5733, %v5726
        %v6007 = vpack.c.b16 %v5734, %v5727
        %v6008 = vpack.c.b16 %v5735, %v5728
        %v6009 = vpack.c.b16 %v5736, %v5729
        %v6010 = vpack.c.b16 %v5737, %v5730
        %v6011 = vpack.c.b16 %v5738, %v5731
        %v6012 = vpack.c.b16 %v5739, %v5732
        %v6013 = vpack.c.b16 %v5747, %v5740
        %v6014 = vpack.c.b16 %v5748, %v5741
        %v6015 = vpack.c.b16 %v5749, %v5742
        %v6016 = vpack.c.b16 %v5750, %v5743
        %v6017 = vpack.c.b16 %v5751, %v5744
        %v6018 = vpack.c.b16 %v5752, %v5745
        %v6019 = vpack.c.b16 %v5753, %v5746
        %v6020 = vpack.c.b16 %v5761, %v5754
        %v6021 = vpack.c.b16 %v5762, %v5755
        %v6022 = vpack.c.b16 %v5763, %v5756
        %v6023 = vpack.c.b16 %v5764, %v5757
        %v6024 = vpack.c.b16 %v5765, %v5758
        %v6025 = vpack.c.b16 %v5766, %v5759
        %v6026 = vpack.c.b16 %v5767, %v5760
        %v6027 = vpack.c.b16 %v5775, %v5768
        %v6028 = vpack.c.b16 %v5776, %v5769
        %v6029 = vpack.c.b16 %v5777, %v5770
        %v6030 = vpack.c.b16 %v5778, %v5771
        %v6031 = vpack.c.b16 %v5779, %v5772
        %v6032 = vpack.c.b16 %v5780, %v5773
        %v6033 = vpack.c.b16 %v5781, %v5774
        %v6034 = vpack.c.b16 %v5789, %v5782
        %v6035 = vpack.c.b16 %v5790, %v5783
        %v6036 = vpack.c.b16 %v5791, %v5784
        %v6037 = vpack.c.b16 %v5792, %v5785
        %v6038 = vpack.c.b16 %v5793, %v5786
        %v6039 = vpack.c.b16 %v5794, %v5787
        %v6040 = vpack.c.b16 %v5795, %v5788
        %v6041 = vpack.c.b16 %v5803, %v5796
        %v6042 = vpack.c.b16 %v5804, %v5797
        %v6043 = vpack.c.b16 %v5805, %v5798
        %v6044 = vpack.c.b16 %v5806, %v5799
        %v6045 = vpack.c.b16 %v5807, %v5800
        %v6046 = vpack.c.b16 %v5808, %v5801
        %v6047 = vpack.c.b16 %v5809, %v5802
        %v6048 = vpack.c.b16 %v5817, %v5810
        %v6049 = vpack.c.b16 %v5818, %v5811
        %v6050 = vpack.c.b16 %v5819, %v5812
        %v6051 = vpack.c.b16 %v5820, %v5813
        %v6052 = vpack.c.b16 %v5821, %v5814
        %v6053 = vpack.c.b16 %v5822, %v5815
        %v6054 = vpack.c.b16 %v5823, %v5816
        %v6055 = vpack.c.b16 %v5831, %v5824
        %v6056 = vpack.c.b16 %v5832, %v5825
        %v6057 = vpack.c.b16 %v5833, %v5826
        %v6058 = vpack.c.b16 %v5834, %v5827
        %v6059 = vpack.c.b16 %v5835, %v5828
        %v6060 = vpack.c.b16 %v5836, %v5829
        %v6061 = vpack.c.b16 %v5837, %v5830
        %v6062 = vpack.c.b16 %v5845, %v5838
        %v6063 = vpack.c.b16 %v5846, %v5839
        %v6064 = vpack.c.b16 %v5847, %v5840
        %v6065 = vpack.c.b16 %v5848, %v5841
        %v6066 = vpack.c.b16 %v5849, %v5842
        %v6067 = vpack.c.b16 %v5850, %v5843
        %v6068 = vpack.c.b16 %v5851, %v5844
        %v6069 = vpack.c.b16 %v5859, %v5852
        %v6070 = vpack.c.b16 %v5860, %v5853
        %v6071 = vpack.c.b16 %v5861, %v5854
        %v6072 = vpack.c.b16 %v5862, %v5855
        %v6073 = vpack.c.b16 %v5863, %v5856
        %v6074 = vpack.c.b16 %v5864, %v5857
        %v6075 = vpack.c.b16 %v5865, %v5858
        %v6076 = vpack.c.b16 %v5873, %v5866
        %v6077 = vpack.c.b16 %v5874, %v5867
        %v6078 = vpack.c.b16 %v5875, %v5868
        %v6079 = vpack.c.b16 %v5876, %v5869
        %v6080 = vpack.c.b16 %v5877, %v5870
        %v6081 = vpack.c.b16 %v5878, %v5871
        %v6082 = vpack.c.b16 %v5879, %v5872
        %v6083 = vpack.c.b16 %v5887, %v5880
        %v6084 = vpack.c.b16 %v5888, %v5881
        %v6085 = vpack.c.b16 %v5889, %v5882
        %v6086 = vpack.c.b16 %v5890, %v5883
        %v6087 = vpack.c.b16 %v5891, %v5884
        %v6088 = vpack.c.b16 %v5892, %v5885
        %v6089 = vpack.c.b16 %v5893, %v5886
        %v6287 = vsel %vm1433, %v5274, 0
        %6289 = vmatprep.subr.bf16.mxu0 %v5895
        %6290 = vmatpush1.bf16.msra.mxu0 %v5894
        %6291 = vmatprep.subr.bf16.mxu0 %v5902
        %6292 = vmatpush1.bf16.msra.mxu0 %v5901
        %6293 = vmatprep.subr.bf16.mxu0 %v5909
        %6294 = vmatpush1.bf16.msra.mxu0 %v5908
        %6295 = vmatprep.subr.bf16.mxu0 %v5916
        %6296 = vmatpush1.bf16.msra.mxu0 %v5915
        %6297 = vmatprep.subr.bf16.mxu0 %v5923
        %6298 = vmatpush1.bf16.msra.mxu0 %v5922
        %6299 = vmatprep.subr.bf16.mxu0 %v5930
        %6300 = vmatpush1.bf16.msra.mxu0 %v5929
        %6301 = vmatprep.subr.bf16.mxu0 %v5937
        %6302 = vmatpush1.bf16.msra.mxu0 %v5936
        %6303 = vmatprep.subr.bf16.mxu0 %v5944
        %6304 = vmatpush1.bf16.msra.mxu0 %v5943
        %6305 = vmatprep.subr.bf16.mxu0 %v5951
        %6306 = vmatpush1.bf16.msra.mxu0 %v5950
        %6307 = vmatprep.subr.bf16.mxu0 %v5958
        %6308 = vmatpush1.bf16.msra.mxu0 %v5957
        %6309 = vmatprep.subr.bf16.mxu0 %v5965
        %6310 = vmatpush1.bf16.msra.mxu0 %v5964
        %6311 = vmatprep.subr.bf16.mxu0 %v5972
        %6312 = vmatpush1.bf16.msra.mxu0 %v5971
        %6313 = vmatprep.subr.bf16.mxu0 %v5979
        %6314 = vmatpush1.bf16.msra.mxu0 %v5978
        %6315 = vmatprep.subr.bf16.mxu0 %v5986
        %6316 = vmatpush1.bf16.msra.mxu0 %v5985
        %6317 = vmatprep.subr.bf16.mxu0 %v5993
        %6318 = vmatpush1.bf16.msra.mxu0 %v5992
        %6319 = vmatprep.subr.bf16.mxu0 %v6000
        %6320 = vmatpush1.bf16.msra.mxu0 %v5999
        %6321 = vmatprep.mubr.bf16.mxu0 %v5272
        %6322 = vmatmul.mubr.bf16.gmra.mrb[0].mxu0 %v5271
        %v6323 = vpop.f32.mrb[0].mxu0
        %v6324 = vadd.f32 0.0, %v6323
        %v6325 = vpop.f32.mrb[0].mxu0
        %v6326 = vadd.f32 0.0, %v6325
        %v6327 = vpop.f32.mrb[0].mxu0
        %v6328 = vadd.f32 0.0, %v6327
        %v6329 = vpop.f32.mrb[0].mxu0
        %v6330 = vadd.f32 0.0, %v6329
        %6331 = vdwg.mxu0
        %6332 = vmatprep.subr.bf16.mxu0 %v6007
        %6333 = vmatpush1.bf16.msra.mxu0 %v6006
        %6334 = vmatprep.subr.bf16.mxu0 %v6014
        %6335 = vmatpush1.bf16.msra.mxu0 %v6013
        %6336 = vmatprep.subr.bf16.mxu0 %v6021
        %6337 = vmatpush1.bf16.msra.mxu0 %v6020
        %6338 = vmatprep.subr.bf16.mxu0 %v6028
        %6339 = vmatpush1.bf16.msra.mxu0 %v6027
        %6340 = vmatprep.subr.bf16.mxu0 %v6035
        %6341 = vmatpush1.bf16.msra.mxu0 %v6034
        %6342 = vmatprep.subr.bf16.mxu0 %v6042
        %6343 = vmatpush1.bf16.msra.mxu0 %v6041
        %6344 = vmatprep.subr.bf16.mxu0 %v6049
        %6345 = vmatpush1.bf16.msra.mxu0 %v6048
        %6346 = vmatprep.subr.bf16.mxu0 %v6056
        %6347 = vmatpush1.bf16.msra.mxu0 %v6055
        %6348 = vmatprep.subr.bf16.mxu0 %v6063
        %6349 = vmatpush1.bf16.msra.mxu0 %v6062
        %6350 = vmatprep.subr.bf16.mxu0 %v6070
        %6351 = vmatpush1.bf16.msra.mxu0 %v6069
        %6352 = vmatprep.subr.bf16.mxu0 %v6077
        %6353 = vmatpush1.bf16.msra.mxu0 %v6076
        %6354 = vmatprep.subr.bf16.mxu0 %v6084
        %6355 = vmatpush1.bf16.msra.mxu0 %v6083
        %6356 = vmatprep.subr.bf16.mxu0 0
        %6357 = vmatpush1.bf16.msra.mxu0 0
        %6358 = vmatprep.subr.bf16.mxu0 0
        %6359 = vmatpush1.bf16.msra.mxu0 0
        %6360 = vmatprep.subr.bf16.mxu0 0
        %6361 = vmatpush1.bf16.msra.mxu0 0
        %6362 = vmatprep.subr.bf16.mxu0 0
        %6363 = vmatpush1.bf16.msra.mxu0 0
        %6364 = vmatprep.mubr.bf16.mxu0 %v6287
        %6365 = vmatmul.mubr.bf16.gmra.mrb[0].mxu0 %v5273
        %v6366 = vpop.f32.mrb[0].mxu0
        %v6367 = vadd.f32 %v6324, %v6366
        %v6368 = vpop.f32.mrb[0].mxu0
        %v6369 = vadd.f32 %v6326, %v6368
        %v6370 = vpop.f32.mrb[0].mxu0
        %v6371 = vadd.f32 %v6328, %v6370
        %v6372 = vpop.f32.mrb[0].mxu0
        %v6373 = vadd.f32 %v6330, %v6372
        %6374 = vdwg.mxu0
        %6375 = vmatprep.subr.bf16.mxu0 %v5897
        %6376 = vmatpush1.bf16.msra.mxu0 %v5896
        %6377 = vmatprep.subr.bf16.mxu0 %v5904
        %6378 = vmatpush1.bf16.msra.mxu0 %v5903
        %6379 = vmatprep.subr.bf16.mxu0 %v5911
        %6380 = vmatpush1.bf16.msra.mxu0 %v5910
        %6381 = vmatprep.subr.bf16.mxu0 %v5918
        %6382 = vmatpush1.bf16.msra.mxu0 %v5917
        %6383 = vmatprep.subr.bf16.mxu0 %v5925
        %6384 = vmatpush1.bf16.msra.mxu0 %v5924
        %6385 = vmatprep.subr.bf16.mxu0 %v5932
        %6386 = vmatpush1.bf16.msra.mxu0 %v5931
        %6387 = vmatprep.subr.bf16.mxu0 %v5939
        %6388 = vmatpush1.bf16.msra.mxu0 %v5938
        %6389 = vmatprep.subr.bf16.mxu0 %v5946
        %6390 = vmatpush1.bf16.msra.mxu0 %v5945
        %6391 = vmatprep.subr.bf16.mxu0 %v5953
        %6392 = vmatpush1.bf16.msra.mxu0 %v5952
        %6393 = vmatprep.subr.bf16.mxu0 %v5960
        %6394 = vmatpush1.bf16.msra.mxu0 %v5959
        %6395 = vmatprep.subr.bf16.mxu0 %v5967
        %6396 = vmatpush1.bf16.msra.mxu0 %v5966
        %6397 = vmatprep.subr.bf16.mxu0 %v5974
        %6398 = vmatpush1.bf16.msra.mxu0 %v5973
        %6399 = vmatprep.subr.bf16.mxu0 %v5981
        %6400 = vmatpush1.bf16.msra.mxu0 %v5980
        %6401 = vmatprep.subr.bf16.mxu0 %v5988
        %6402 = vmatpush1.bf16.msra.mxu0 %v5987
        %6403 = vmatprep.subr.bf16.mxu0 %v5995
        %6404 = vmatpush1.bf16.msra.mxu0 %v5994
        %6405 = vmatprep.subr.bf16.mxu0 %v6002
        %6406 = vmatpush1.bf16.msra.mxu0 %v6001
        %6407 = vmatprep.mubr.bf16.mxu0 %v5272
        %6408 = vmatmul.mubr.bf16.gmra.mrb[0].mxu0 %v5271
        %v6409 = vpop.f32.mrb[0].mxu0
        %v6410 = vadd.f32 0.0, %v6409
        %v6411 = vpop.f32.mrb[0].mxu0
        %v6412 = vadd.f32 0.0, %v6411
        %v6413 = vpop.f32.mrb[0].mxu0
        %v6414 = vadd.f32 0.0, %v6413
        %v6415 = vpop.f32.mrb[0].mxu0
        %v6416 = vadd.f32 0.0, %v6415
        %6417 = vdwg.mxu0
        %6418 = vmatprep.subr.bf16.mxu0 %v6009
        %6419 = vmatpush1.bf16.msra.mxu0 %v6008
        %6420 = vmatprep.subr.bf16.mxu0 %v6016
        %6421 = vmatpush1.bf16.msra.mxu0 %v6015
        %6422 = vmatprep.subr.bf16.mxu0 %v6023
        %6423 = vmatpush1.bf16.msra.mxu0 %v6022
        %6424 = vmatprep.subr.bf16.mxu0 %v6030
        %6425 = vmatpush1.bf16.msra.mxu0 %v6029
        %6426 = vmatprep.subr.bf16.mxu0 %v6037
        %6427 = vmatpush1.bf16.msra.mxu0 %v6036
        %6428 = vmatprep.subr.bf16.mxu0 %v6044
        %6429 = vmatpush1.bf16.msra.mxu0 %v6043
        %6430 = vmatprep.subr.bf16.mxu0 %v6051
        %6431 = vmatpush1.bf16.msra.mxu0 %v6050
        %6432 = vmatprep.subr.bf16.mxu0 %v6058
        %6433 = vmatpush1.bf16.msra.mxu0 %v6057
        %6434 = vmatprep.subr.bf16.mxu0 %v6065
        %6435 = vmatpush1.bf16.msra.mxu0 %v6064
        %6436 = vmatprep.subr.bf16.mxu0 %v6072
        %6437 = vmatpush1.bf16.msra.mxu0 %v6071
        %6438 = vmatprep.subr.bf16.mxu0 %v6079
        %6439 = vmatpush1.bf16.msra.mxu0 %v6078
        %6440 = vmatprep.subr.bf16.mxu0 %v6086
        %6441 = vmatpush1.bf16.msra.mxu0 %v6085
        %6442 = vmatprep.subr.bf16.mxu0 0
        %6443 = vmatpush1.bf16.msra.mxu0 0
        %6444 = vmatprep.subr.bf16.mxu0 0
        %6445 = vmatpush1.bf16.msra.mxu0 0
        %6446 = vmatprep.subr.bf16.mxu0 0
        %6447 = vmatpush1.bf16.msra.mxu0 0
        %6448 = vmatprep.subr.bf16.mxu0 0
        %6449 = vmatpush1.bf16.msra.mxu0 0
        %6450 = vmatprep.mubr.bf16.mxu0 %v6287
        %6451 = vmatmul.mubr.bf16.gmra.mrb[0].mxu0 %v5273
        %v6452 = vpop.f32.mrb[0].mxu0
        %v6453 = vadd.f32 %v6410, %v6452
        %v6454 = vpop.f32.mrb[0].mxu0
        %v6455 = vadd.f32 %v6412, %v6454
        %v6456 = vpop.f32.mrb[0].mxu0
        %v6457 = vadd.f32 %v6414, %v6456
        %v6458 = vpop.f32.mrb[0].mxu0
        %v6459 = vadd.f32 %v6416, %v6458
        %6460 = vdwg.mxu0
        %6461 = vmatprep.subr.bf16.mxu0 %v5899
        %6462 = vmatpush1.bf16.msra.mxu0 %v5898
        %6463 = vmatprep.subr.bf16.mxu0 %v5906
        %6464 = vmatpush1.bf16.msra.mxu0 %v5905
        %6465 = vmatprep.subr.bf16.mxu0 %v5913
        %6466 = vmatpush1.bf16.msra.mxu0 %v5912
        %6467 = vmatprep.subr.bf16.mxu0 %v5920
        %6468 = vmatpush1.bf16.msra.mxu0 %v5919
        %6469 = vmatprep.subr.bf16.mxu0 %v5927
        %6470 = vmatpush1.bf16.msra.mxu0 %v5926
        %6471 = vmatprep.subr.bf16.mxu0 %v5934
        %6472 = vmatpush1.bf16.msra.mxu0 %v5933
        %6473 = vmatprep.subr.bf16.mxu0 %v5941
        %6474 = vmatpush1.bf16.msra.mxu0 %v5940
        %6475 = vmatprep.subr.bf16.mxu0 %v5948
        %6476 = vmatpush1.bf16.msra.mxu0 %v5947
        %6477 = vmatprep.subr.bf16.mxu0 %v5955
        %6478 = vmatpush1.bf16.msra.mxu0 %v5954
        %6479 = vmatprep.subr.bf16.mxu0 %v5962
        %6480 = vmatpush1.bf16.msra.mxu0 %v5961
        %6481 = vmatprep.subr.bf16.mxu0 %v5969
        %6482 = vmatpush1.bf16.msra.mxu0 %v5968
        %6483 = vmatprep.subr.bf16.mxu0 %v5976
        %6484 = vmatpush1.bf16.msra.mxu0 %v5975
        %6485 = vmatprep.subr.bf16.mxu0 %v5983
        %6486 = vmatpush1.bf16.msra.mxu0 %v5982
        %6487 = vmatprep.subr.bf16.mxu0 %v5990
        %6488 = vmatpush1.bf16.msra.mxu0 %v5989
        %6489 = vmatprep.subr.bf16.mxu0 %v5997
        %6490 = vmatpush1.bf16.msra.mxu0 %v5996
        %6491 = vmatprep.subr.bf16.mxu0 %v6004
        %6492 = vmatpush1.bf16.msra.mxu0 %v6003
        %6493 = vmatprep.mubr.bf16.mxu0 %v5272
        %6494 = vmatmul.mubr.bf16.gmra.mrb[0].mxu0 %v5271
        %v6495 = vpop.f32.mrb[0].mxu0
        %v6496 = vadd.f32 0.0, %v6495
        %v6497 = vpop.f32.mrb[0].mxu0
        %v6498 = vadd.f32 0.0, %v6497
        %v6499 = vpop.f32.mrb[0].mxu0
        %v6500 = vadd.f32 0.0, %v6499
        %v6501 = vpop.f32.mrb[0].mxu0
        %v6502 = vadd.f32 0.0, %v6501
        %6503 = vdwg.mxu0
        %6504 = vmatprep.subr.bf16.mxu0 %v6011
        %6505 = vmatpush1.bf16.msra.mxu0 %v6010
        %6506 = vmatprep.subr.bf16.mxu0 %v6018
        %6507 = vmatpush1.bf16.msra.mxu0 %v6017
        %6508 = vmatprep.subr.bf16.mxu0 %v6025
        %6509 = vmatpush1.bf16.msra.mxu0 %v6024
        %6510 = vmatprep.subr.bf16.mxu0 %v6032
        %6511 = vmatpush1.bf16.msra.mxu0 %v6031
        %6512 = vmatprep.subr.bf16.mxu0 %v6039
        %6513 = vmatpush1.bf16.msra.mxu0 %v6038
        %6514 = vmatprep.subr.bf16.mxu0 %v6046
        %6515 = vmatpush1.bf16.msra.mxu0 %v6045
        %6516 = vmatprep.subr.bf16.mxu0 %v6053
        %6517 = vmatpush1.bf16.msra.mxu0 %v6052
        %6518 = vmatprep.subr.bf16.mxu0 %v6060
        %6519 = vmatpush1.bf16.msra.mxu0 %v6059
        %6520 = vmatprep.subr.bf16.mxu0 %v6067
        %6521 = vmatpush1.bf16.msra.mxu0 %v6066
        %6522 = vmatprep.subr.bf16.mxu0 %v6074
        %6523 = vmatpush1.bf16.msra.mxu0 %v6073
        %6524 = vmatprep.subr.bf16.mxu0 %v6081
        %6525 = vmatpush1.bf16.msra.mxu0 %v6080
        %6526 = vmatprep.subr.bf16.mxu0 %v6088
        %6527 = vmatpush1.bf16.msra.mxu0 %v6087
        %6528 = vmatprep.subr.bf16.mxu0 0
        %6529 = vmatpush1.bf16.msra.mxu0 0
        %6530 = vmatprep.subr.bf16.mxu0 0
        %6531 = vmatpush1.bf16.msra.mxu0 0
        %6532 = vmatprep.subr.bf16.mxu0 0
        %6533 = vmatpush1.bf16.msra.mxu0 0
        %6534 = vmatprep.subr.bf16.mxu0 0
        %6535 = vmatpush1.bf16.msra.mxu0 0
        %6536 = vmatprep.mubr.bf16.mxu0 %v6287
        %6537 = vmatmul.mubr.bf16.gmra.mrb[0].mxu0 %v5273
        %v6538 = vpop.f32.mrb[0].mxu0
        %v6539 = vadd.f32 %v6496, %v6538
        %v6540 = vpop.f32.mrb[0].mxu0
        %v6541 = vadd.f32 %v6498, %v6540
        %v6542 = vpop.f32.mrb[0].mxu0
        %v6543 = vadd.f32 %v6500, %v6542
        %v6544 = vpop.f32.mrb[0].mxu0
        %v6545 = vadd.f32 %v6502, %v6544
        %6546 = vdwg.mxu0
        %6547 = vmatprep.subr.bf16.mxu0 0
        %6548 = vmatpush1.bf16.msra.mxu0 %v5900
        %6549 = vmatprep.subr.bf16.mxu0 0
        %6550 = vmatpush1.bf16.msra.mxu0 %v5907
        %6551 = vmatprep.subr.bf16.mxu0 0
        %6552 = vmatpush1.bf16.msra.mxu0 %v5914
        %6553 = vmatprep.subr.bf16.mxu0 0
        %6554 = vmatpush1.bf16.msra.mxu0 %v5921
        %6555 = vmatprep.subr.bf16.mxu0 0
        %6556 = vmatpush1.bf16.msra.mxu0 %v5928
        %6557 = vmatprep.subr.bf16.mxu0 0
        %6558 = vmatpush1.bf16.msra.mxu0 %v5935
        %6559 = vmatprep.subr.bf16.mxu0 0
        %6560 = vmatpush1.bf16.msra.mxu0 %v5942
        %6561 = vmatprep.subr.bf16.mxu0 0
        %6562 = vmatpush1.bf16.msra.mxu0 %v5949
        %6563 = vmatprep.subr.bf16.mxu0 0
        %6564 = vmatpush1.bf16.msra.mxu0 %v5956
        %6565 = vmatprep.subr.bf16.mxu0 0
        %6566 = vmatpush1.bf16.msra.mxu0 %v5963
        %6567 = vmatprep.subr.bf16.mxu0 0
        %6568 = vmatpush1.bf16.msra.mxu0 %v5970
        %6569 = vmatprep.subr.bf16.mxu0 0
        %6570 = vmatpush1.bf16.msra.mxu0 %v5977
        %6571 = vmatprep.subr.bf16.mxu0 0
        %6572 = vmatpush1.bf16.msra.mxu0 %v5984
        %6573 = vmatprep.subr.bf16.mxu0 0
        %6574 = vmatpush1.bf16.msra.mxu0 %v5991
        %6575 = vmatprep.subr.bf16.mxu0 0
        %6576 = vmatpush1.bf16.msra.mxu0 %v5998
        %6577 = vmatprep.subr.bf16.mxu0 0
        %6578 = vmatpush1.bf16.msra.mxu0 %v6005
        %6579 = vmatprep.mubr.bf16.mxu0 %v5272
        %6580 = vmatmul.mubr.bf16.gmra.mrb[0].mxu0 %v5271
        %v6581 = vpop.f32.mrb[0].mxu0
        %v6582 = vadd.f32 0.0, %v6581
        %v6583 = vpop.f32.mrb[0].mxu0
        %v6584 = vpop.f32.mrb[0].mxu0
        %v6585 = vadd.f32 0.0, %v6584
        %v6586 = vpop.f32.mrb[0].mxu0
        %6587 = vdwg.mxu0
        %6588 = vmatprep.subr.bf16.mxu0 0
        %6589 = vmatpush1.bf16.msra.mxu0 %v6012
        %6590 = vmatprep.subr.bf16.mxu0 0
        %6591 = vmatpush1.bf16.msra.mxu0 %v6019
        %6592 = vmatprep.subr.bf16.mxu0 0
        %6593 = vmatpush1.bf16.msra.mxu0 %v6026
        %6594 = vmatprep.subr.bf16.mxu0 0
        %6595 = vmatpush1.bf16.msra.mxu0 %v6033
        %6596 = vmatprep.subr.bf16.mxu0 0
        %6597 = vmatpush1.bf16.msra.mxu0 %v6040
        %6598 = vmatprep.subr.bf16.mxu0 0
        %6599 = vmatpush1.bf16.msra.mxu0 %v6047
        %6600 = vmatprep.subr.bf16.mxu0 0
        %6601 = vmatpush1.bf16.msra.mxu0 %v6054
        %6602 = vmatprep.subr.bf16.mxu0 0
        %6603 = vmatpush1.bf16.msra.mxu0 %v6061
        %6604 = vmatprep.subr.bf16.mxu0 0
        %6605 = vmatpush1.bf16.msra.mxu0 %v6068
        %6606 = vmatprep.subr.bf16.mxu0 0
        %6607 = vmatpush1.bf16.msra.mxu0 %v6075
        %6608 = vmatprep.subr.bf16.mxu0 0
        %6609 = vmatpush1.bf16.msra.mxu0 %v6082
        %6610 = vmatprep.subr.bf16.mxu0 0
        %6611 = vmatpush1.bf16.msra.mxu0 %v6089
        %6612 = vmatprep.subr.bf16.mxu0 0
        %6613 = vmatpush1.bf16.msra.mxu0 0
        %6614 = vmatprep.subr.bf16.mxu0 0
        %6615 = vmatpush1.bf16.msra.mxu0 0
        %6616 = vmatprep.subr.bf16.mxu0 0
        %6617 = vmatpush1.bf16.msra.mxu0 0
        %6618 = vmatprep.subr.bf16.mxu0 0
        %6619 = vmatpush1.bf16.msra.mxu0 0
        %6620 = vmatprep.mubr.bf16.mxu0 %v6287
        %6621 = vmatmul.mubr.bf16.gmra.mrb[0].mxu0 %v5273
        %v6622 = vpop.f32.mrb[0].mxu0
        %v6623 = vadd.f32 %v6582, %v6622
        %v6624 = vpop.f32.mrb[0].mxu0
        %v6625 = vpop.f32.mrb[0].mxu0
        %v6626 = vadd.f32 %v6585, %v6625
        %v6627 = vpop.f32.mrb[0].mxu0
        %6628 = vdwg.mxu0
        %v6629 = vadd.f32 %v4776, %v6367
        %v6630 = vadd.f32 %v4778, %v6369
        %v6631 = vadd.f32 %v4862, %v6453
        %v6632 = vadd.f32 %v4864, %v6455
        %v6633 = vadd.f32 %v4948, %v6539
        %v6634 = vadd.f32 %v4950, %v6541
        %v6635 = vadd.f32 %v5032, %v6623
        %v6636 = vadd.f32 %v4780, %v6371
        %v6637 = vadd.f32 %v4782, %v6373
        %v6638 = vadd.f32 %v4866, %v6457
        %v6639 = vadd.f32 %v4868, %v6459
        %v6640 = vadd.f32 %v4952, %v6543
        %v6641 = vadd.f32 %v4954, %v6545
        %v6642 = vadd.f32 %v5035, %v6626
        %6651 = vrot.lane.b32.xlu0 %v6632, 64
        %v6652 = vpop.permute.xlu0 %6651
        %6653 = vrot.lane.b32.xlu0 %v6633, 64
        %v6654 = vpop.permute.xlu0 %6653
        %6655 = vrot.lane.b32.xlu0 %v6634, 64
        %v6656 = vpop.permute.xlu0 %6655
        %6657 = vrot.lane.b32.xlu0 %v6635, 64
        %v6658 = vpop.permute.xlu0 %6657
        %6659 = vrot.lane.b32.xlu0 %v6639, 64
        %v6660 = vpop.permute.xlu0 %6659
        %6661 = vrot.lane.b32.xlu0 %v6640, 64
        %v6662 = vpop.permute.xlu0 %6661
        %6663 = vrot.lane.b32.xlu0 %v6641, 64
        %v6664 = vpop.permute.xlu0 %6663
        %6665 = vrot.lane.b32.xlu0 %v6642, 64
        %v6666 = vpop.permute.xlu0 %6665
        %v6667 = vsel %vm1433, %v6652, %v6654
        %v6668 = vsel %vm1433, %v6654, %v6656
        %v6669 = vsel %vm1433, %v6656, %v6658
        %v6670 = vsel %vm1433, %v6660, %v6662
        %v6671 = vsel %vm1433, %v6662, %v6664
        %v6672 = vsel %vm1433, %v6664, %v6666
        %v6681 = vmax.f32 %v6629, %v6667
        %v6682 = vmax.f32 %v6630, %v6668
        %v6683 = vmax.f32 %v6631, %v6669
        %v6684 = vmax.f32 %v6632, %v6658
        %v6685 = vmax.f32 %v6636, %v6670
        %v6686 = vmax.f32 %v6637, %v6671
        %v6687 = vmax.f32 %v6638, %v6672
        %v6688 = vmax.f32 %v6639, %v6666
        %v6693 = vrot.slane %v6681, 1
        %v6694 = vrot.slane %v6682, 1
        %v6695 = vrot.slane %v6683, 1
        %v6696 = vrot.slane %v6684, 1
        %v6701 = vrot.slane %v6681, 2
        %v6702 = vrot.slane %v6682, 2
        %v6703 = vrot.slane %v6683, 2
        %v6704 = vrot.slane %v6684, 2
        %v6709 = vrot.slane %v6681, 3
        %v6710 = vrot.slane %v6682, 3
        %v6711 = vrot.slane %v6683, 3
        %v6712 = vrot.slane %v6684, 3
        %v6721 = vrot.slane %v6685, 4
        %v6722 = vrot.slane %v6686, 4
        %v6723 = vrot.slane %v6687, 4
        %v6724 = vrot.slane %v6688, 4
        %v6729 = vrot.slane %v6685, 5
        %v6730 = vrot.slane %v6686, 5
        %v6731 = vrot.slane %v6687, 5
        %v6732 = vrot.slane %v6688, 5
        %v6737 = vrot.slane %v6685, 6
        %v6738 = vrot.slane %v6686, 6
        %v6739 = vrot.slane %v6687, 6
        %v6740 = vrot.slane %v6688, 6
        %v6745 = vsel %vm1590, %v6681, %v6693
        %v6746 = vsel %vm1590, %v6682, %v6694
        %v6747 = vsel %vm1590, %v6683, %v6695
        %v6748 = vsel %vm1590, %v6684, %v6696
        %v6749 = vsel %vm1595, %v6745, %v6701
        %v6750 = vsel %vm1595, %v6746, %v6702
        %v6751 = vsel %vm1595, %v6747, %v6703
        %v6752 = vsel %vm1595, %v6748, %v6704
        %v6753 = vsel %vm1600, %v6749, %v6709
        %v6754 = vsel %vm1600, %v6750, %v6710
        %v6755 = vsel %vm1600, %v6751, %v6711
        %v6756 = vsel %vm1600, %v6752, %v6712
        %v6757 = vsel %vm1605, %v6753, %v6721
        %v6758 = vsel %vm1605, %v6754, %v6722
        %v6759 = vsel %vm1605, %v6755, %v6723
        %v6760 = vsel %vm1605, %v6756, %v6724
        %v6761 = vsel %vm1610, %v6757, %v6729
        %v6762 = vsel %vm1610, %v6758, %v6730
        %v6763 = vsel %vm1610, %v6759, %v6731
        %v6764 = vsel %vm1610, %v6760, %v6732
        %v6765 = vsel %vm500, %v6761, %v6737
        %v6766 = vsel %vm500, %v6762, %v6738
        %v6767 = vsel %vm500, %v6763, %v6739
        %v6768 = vsel %vm500, %v6764, %v6740
        %v6769 = vrot.slane %v6681, 4
        %v6770 = vrot.slane %v6682, 4
        %v6771 = vrot.slane %v6683, 4
        %v6772 = vrot.slane %v6684, 4
        %v6777 = vrot.slane %v6685, 7
        %v6778 = vrot.slane %v6686, 7
        %v6779 = vrot.slane %v6687, 7
        %v6780 = vrot.slane %v6688, 7
        %v6785 = vsel %vm1590, %v6693, %v6701
        %v6786 = vsel %vm1590, %v6694, %v6702
        %v6787 = vsel %vm1590, %v6695, %v6703
        %v6788 = vsel %vm1590, %v6696, %v6704
        %v6789 = vsel %vm1595, %v6785, %v6709
        %v6790 = vsel %vm1595, %v6786, %v6710
        %v6791 = vsel %vm1595, %v6787, %v6711
        %v6792 = vsel %vm1595, %v6788, %v6712
        %v6793 = vsel %vm1600, %v6789, %v6769
        %v6794 = vsel %vm1600, %v6790, %v6770
        %v6795 = vsel %vm1600, %v6791, %v6771
        %v6796 = vsel %vm1600, %v6792, %v6772
        %v6797 = vsel %vm1605, %v6793, %v6729
        %v6798 = vsel %vm1605, %v6794, %v6730
        %v6799 = vsel %vm1605, %v6795, %v6731
        %v6800 = vsel %vm1605, %v6796, %v6732
        %v6801 = vsel %vm1610, %v6797, %v6737
        %v6802 = vsel %vm1610, %v6798, %v6738
        %v6803 = vsel %vm1610, %v6799, %v6739
        %v6804 = vsel %vm1610, %v6800, %v6740
        %v6805 = vsel %vm500, %v6801, %v6777
        %v6806 = vsel %vm500, %v6802, %v6778
        %v6807 = vsel %vm500, %v6803, %v6779
        %v6808 = vsel %vm500, %v6804, %v6780
        %v6809 = vmax.f32 %v6765, %v6805
        %v6810 = vmax.f32 %v6766, %v6806
        %v6811 = vmax.f32 %v6767, %v6807
        %v6812 = vmax.f32 %v6768, %v6808
        %v6813 = vld [vmem:[#allocation9] sm:$0xf]
        %v6815 = vlaneseq
        %v6816 = vshrl.u32 %v6815, 7
        %v6817 = vsub.s32 0, %v6816
        %v6818 = vrot.slane %v6813, %v6817
        %v6819 = vlaneseq
        %v6820 = vshrl.u32 %v6819, 7
        %v6821 = vsub.s32 1, %v6820
        %v6822 = vrot.slane %v6813, %v6821
        %v6823 = vlaneseq
        %v6824 = vshrl.u32 %v6823, 7
        %v6825 = vsub.s32 2, %v6824
        %v6826 = vrot.slane %v6813, %v6825
        %v6827 = vlaneseq
        %v6828 = vshrl.u32 %v6827, 7
        %v6829 = vsub.s32 3, %v6828
        %v6830 = vrot.slane %v6813, %v6829
        %v6835 = vadd.f32 %v6809, %v6818
        %v6836 = vadd.f32 %v6810, %v6822
        %v6837 = vadd.f32 %v6811, %v6826
        %v6838 = vadd.f32 %v6812, %v6830
        %v6839 = vmax.f32 %v6835, 0.0
        %v6840 = vmax.f32 %v6836, 0.0
        %v6841 = vmax.f32 %v6837, 0.0
        %v6842 = vmax.f32 %v6838, 0.0
        %v6843 = vpack.c.bf16 %v6839, %v6839
        %v6844 = vpack.c.bf16 %v6840, %v6840
        %v6845 = vpack.c.bf16 %v6841, %v6841
        %v6846 = vpack.c.bf16 %v6842, %v6842
        %v6851 = vunpack.c.l.b16 %v6843
        %v6852 = vunpack.c.l.b16 %v6844
        %v6853 = vunpack.c.l.b16 %v6845
        %v6854 = vunpack.c.l.b16 %v6846
        %v6855 = vpack.c.b16 %v6852, %v6851
        %v6856 = vpack.c.b16 %v6854, %v6853
        %vm6859 = vcmask 1043456
        %vm6860 = vsmask.f32 3328
        %vm6861 = vmand %vm6859, %vm6860
        %vm6862 = vcmask 1047556
        %vm6863 = vmand %vm6862, %vm412
        %vm6864 = vmor %vm6863, %vm6861
        %v6865 = vld [vmem:[%s279] sm:$0xff]
        %v6866 = vsel %vm6864, %v6855, %v6865
        %6867 = vst [vmem:[%s279] sm:$0xff] %v6866
        %vm6868 = vcmask 523268
        %vm6869 = vmand %vm6868, %vm412
        %vm6870 = vmor %vm6869, %vm6861
        %v6871 = vld [vmem:[%s279 + $0x8] sm:$0xff]
        %v6872 = vsel %vm6870, %v6856, %v6871
        %6873 = vst [vmem:[%s279 + $0x8] sm:$0xff] %v6872
        %p6874 = scmp.lt.s32.totalorder %s19, 1
        %s6875 = scalar_select %p6874, %s19, 1
        %s6876 = smul.addr %s6875, 4
        %s6877 = smul.addr %s6876, 4
        %s6878 = scalar_lea.vmem %s5, %s6877
        // Predicated region
        $region57: #{cnn_forward.2} parent=39 // pred_check
          %p6879 = pneg %p147
        $region58: #{cnn_forward.2} parent=39 // pred_check_branch
          %6881 = sbr.rel (%p6879) target = $region60
        $region59: #{cnn_forward.2} parent=39 // pred_region
          _
        $region60: #{cnn_forward.2} parent=39 // pred_fallthru
          _
      $region40: #{cnn_forward.2} parent=5 // pred_fallthru
        _
      %p6882 = scmp.le.s32.totalorder 2, %s14
      // Predicated region
      $region61: #{cnn_forward.2} parent=5 // pred_check
        %p6883 = pneg %p6882
      $region62: #{cnn_forward.2} parent=5 // pred_check_branch
        %6885 = sbr.rel (%p6883) target = $region64
      $region63: #{cnn_forward.2} parent=5 // pred_region
        %s6886 = ssub.s32 %s14, 2
        // Predicated region
        $region65: #{cnn_forward.2} parent=63 // pred_check
          %p6887 = pneg %p153
        $region66: #{cnn_forward.2} parent=63 // pred_check_branch
          %6889 = sbr.rel (%p6887) target = $region68
        $region67: #{cnn_forward.2} parent=63 // pred_region
          %p6890 = scmp.lt.s32.totalorder %s20, 1
          %s6891 = scalar_select %p6890, %s20, 1
          %s6892 = smul.addr %s6891, 4
          %s6893 = smul.addr %s6892, 4
          %s6894 = scalar_lea.vmem %s5, %s6893
        $region68: #{cnn_forward.2} parent=63 // pred_fallthru
          _
      $region64: #{cnn_forward.2} parent=5 // pred_fallthru
        _
    $region6: #{cnn_forward.2} parent=1 // loop_footer
      %s18 = sadd.s32 1, %s14
    $region7: #{cnn_forward.2} parent=1 // loop_footer_branch
      %13 = sbr.rel target = $region3
    $region8: #{cnn_forward.2} parent=1 // loop_exit
      _
    %6895 = vsyncpa [#allocation5], 1
    %s6896 = scalar_lea.sflag [#allocation5], 1
    %6897 = vsyncpa %s6896, 1
    %6898 = vsyncpa [#allocation7], 1
    %6899 = vsyncpa [#allocation10], 1

</llo_original>
